<compile_context>
chip_gen: v7x
topology: tpu7x:2x2x1
jax: 0.10.0
libtpu: 0.0.40
codegen_flags: <defaults>
</compile_context>

<pallas_src>
import jax
import jax.numpy as jnp
import numpy as np
from jax.experimental import pallas as pl
from jax.experimental.pallas import tpu as pltpu

INTERNAL_DIM = 768
NUM_SUBNETWORKS = 6                       # INTERNAL_DIM % NUM_SUBNETWORKS == 0
NUM_LAYERS = 2
HIDDEN = INTERNAL_DIM // NUM_SUBNETWORKS  # 128 -> lane aligned
BATCH = 8                                 # sublane aligned
LN_EPS = 1e-5                             # torch.nn.LayerNorm default


def _layernorm_ref(x, w, b, eps=LN_EPS):
    # Two-pass formulation, mirrors PyTorch LayerNorm (used by the reference).
    mean = jnp.mean(x, axis=-1, keepdims=True)
    var = jnp.mean(jnp.square(x - mean), axis=-1, keepdims=True)
    inv = jax.lax.rsqrt(var + eps)
    return (x - mean) * inv * w + b


def _layernorm_fast(x, w, b, eps=LN_EPS):
    # One-pass: the two reductions are independent, shortening the serial
    # cross-lane (XLU) chain; rsqrt lands on the EUP slot.
    n = x.shape[-1]
    s = jnp.sum(x, axis=-1, keepdims=True)
    s2 = jnp.sum(x * x, axis=-1, keepdims=True)
    mean = s * (1.0 / n)
    var = s2 * (1.0 / n) - mean * mean
    inv = jax.lax.rsqrt(var + eps)
    return (x - mean) * inv * w + b


# ---------------------------------------------------------------------------
# Single fused kernel: all subnetworks, all Hebbian layers, output Linear + LN.
# ---------------------------------------------------------------------------
def fused_kernel(x_ref, prev_ref, wh_ref, wr_ref,
                 lnr_w_ref, lnr_b_ref, lna_w_ref, lna_b_ref,
                 w_out_ref, b_out_ref, lno_w_ref, lno_b_ref,
                 out_ref):
    # x_ref:     (B, INTERNAL_DIM)
    # prev_ref:  (NUM_SUBNETWORKS, NUM_LAYERS, B, HIDDEN)
    # wh/wr_ref: (NUM_SUBNETWORKS, NUM_LAYERS, HIDDEN, HIDDEN)
    # ln*_ref:   (NUM_SUBNETWORKS, NUM_LAYERS, 1, HIDDEN)
    # w_out_ref: (INTERNAL_DIM, INTERNAL_DIM), b/lno*: (1, INTERNAL_DIM)
    B = x_ref.shape[0]
    x = x_ref[...].astype(jnp.float32)

    # --- Hoisted recurrent path: depends only on the prev state, not on h. ---
    rec_norm = []
    for i in range(NUM_SUBNETWORKS):
        per_layer = []
        for l in range(NUM_LAYERS):
            rec = jnp.dot(prev_ref[i, l], wr_ref[i, l],
                          preferred_element_type=jnp.float32)
            per_layer.append(
                _layernorm_fast(rec, lnr_w_ref[i, l], lnr_b_ref[i, l]))
        rec_norm.append(per_layer)

    # --- Sequential stim/relu/LN chains + fused output-matmul accumulation. ---
    y = jnp.broadcast_to(b_out_ref[...], (B, INTERNAL_DIM)).astype(jnp.float32)
    for i in range(NUM_SUBNETWORKS):
        h = x[:, i * HIDDEN:(i + 1) * HIDDEN]
        for l in range(NUM_LAYERS):
            stim = jnp.dot(h, wh_ref[i, l], preferred_element_type=jnp.float32)
            f = jnp.maximum(stim + rec_norm[i][l], 0.0)
            h = _layernorm_fast(f, lna_w_ref[i, l], lna_b_ref[i, l])
        # h @ w_out[i*128:(i+1)*128, :]  ==  this subnetwork's contribution to
        # the final Linear over the (virtual) concatenated activations.
        y = y + jnp.dot(h, w_out_ref[i * HIDDEN:(i + 1) * HIDDEN, :],
                        preferred_element_type=jnp.float32)

    out_ref[...] = _layernorm_fast(
        y, lno_w_ref[...], lno_b_ref[...]).astype(out_ref.dtype)


def neural_memory_forward(x, params):
    B = x.shape[0]
    vmem = pl.BlockSpec(memory_space=pltpu.MemorySpace.VMEM)
    return pl.pallas_call(
        fused_kernel,
        out_shape=jax.ShapeDtypeStruct((B, INTERNAL_DIM), jnp.float32),
        in_specs=[vmem] * (1 + len(params)),
        out_specs=vmem,
    )(x, *params)


# ---------------------------------------------------------------------------
# Pure-JAX reference (mirrors the PyTorch forward pass exactly).
# ---------------------------------------------------------------------------
def reference_forward(x, params):
    (prev, wh, wr, lnr_w, lnr_b, lna_w, lna_b,
     w_out, b_out, lno_w, lno_b) = params
    outs = []
    for i in range(NUM_SUBNETWORKS):
        h = x[:, i * HIDDEN:(i + 1) * HIDDEN]
        for l in range(NUM_LAYERS):
            rec = prev[i, l] @ wr[i, l]
            rec = _layernorm_ref(rec, lnr_w[i, l, 0], lnr_b[i, l, 0])
            stim = h @ wh[i, l]
            f = jnp.maximum(stim + rec, 0.0)
            h = _layernorm_ref(f, lna_w[i, l, 0], lna_b[i, l, 0])
        outs.append(h)
    c = jnp.concatenate(outs, axis=-1)
    y = c @ w_out + b_out
    return _layernorm_ref(y, lno_w, lno_b)


def init_params(key):
    k_heb, k_rec, k_out = jax.random.split(key, 3)
    # HebbianLayer weights ~ torch.randn(dim, dim)
    wh = jax.random.normal(k_heb, (NUM_SUBNETWORKS, NUM_LAYERS, HIDDEN, HIDDEN),
                           dtype=jnp.float32)
    wr = jax.random.normal(k_rec, (NUM_SUBNETWORKS, NUM_LAYERS, HIDDEN, HIDDEN),
                           dtype=jnp.float32)
    # LayerNorm params: ones / zeros (PyTorch default init)
    lnr_w = jnp.ones((NUM_SUBNETWORKS, NUM_LAYERS, 1, HIDDEN), jnp.float32)
    lnr_b = jnp.zeros((NUM_SUBNETWORKS, NUM_LAYERS, 1, HIDDEN), jnp.float32)
    lna_w = jnp.ones((NUM_SUBNETWORKS, NUM_LAYERS, 1, HIDDEN), jnp.float32)
    lna_b = jnp.zeros((NUM_SUBNETWORKS, NUM_LAYERS, 1, HIDDEN), jnp.float32)
    # previous_activation state: None -> zeros on first forward call
    prev = jnp.zeros((NUM_SUBNETWORKS, NUM_LAYERS, BATCH, HIDDEN), jnp.float32)
    # output_layer: Linear(768, 768), stored as (in, out)
    w_out = jax.random.normal(k_out, (INTERNAL_DIM, INTERNAL_DIM),
                              dtype=jnp.float32) * 0.02
    b_out = jnp.zeros((1, INTERNAL_DIM), jnp.float32)
    # final LayerNorm
    lno_w = jnp.ones((1, INTERNAL_DIM), jnp.float32)
    lno_b = jnp.zeros((1, INTERNAL_DIM), jnp.float32)
    return (prev, wh, wr, lnr_w, lnr_b, lna_w, lna_b,
            w_out, b_out, lno_w, lno_b)


if __name__ == "__main__":
    key = jax.random.PRNGKey(0)
    k_x, k_p = jax.random.split(key)
    x = jax.random.normal(k_x, (BATCH, INTERNAL_DIM), dtype=jnp.float32)
    params = init_params(k_p)

    out = neural_memory_forward(x, params)
    out = jax.block_until_ready(out)

    ref = reference_forward(x, params)
    np.testing.assert_allclose(np.asarray(out), np.asarray(ref),
                               rtol=2e-4, atol=2e-4)
    assert out.shape == (BATCH, INTERNAL_DIM)
    print("KERNEL_OK")
</pallas_src>

<mosaic_0001>
module attributes {stable_mosaic.version = 11 : i64} {
  func.func @fused_kernel(%arg0: memref<8x768xf32, #tpu.memory_space<vmem>>, %arg1: memref<6x2x8x128xf32, #tpu.memory_space<vmem>>, %arg2: memref<6x2x128x128xf32, #tpu.memory_space<vmem>>, %arg3: memref<6x2x128x128xf32, #tpu.memory_space<vmem>>, %arg4: memref<6x2x1x128xf32, #tpu.memory_space<vmem>>, %arg5: memref<6x2x1x128xf32, #tpu.memory_space<vmem>>, %arg6: memref<6x2x1x128xf32, #tpu.memory_space<vmem>>, %arg7: memref<6x2x1x128xf32, #tpu.memory_space<vmem>>, %arg8: memref<768x768xf32, #tpu.memory_space<vmem>>, %arg9: memref<1x768xf32, #tpu.memory_space<vmem>>, %arg10: memref<1x768xf32, #tpu.memory_space<vmem>>, %arg11: memref<1x768xf32, #tpu.memory_space<vmem>>, %arg12: memref<8x768xf32, #tpu.memory_space<vmem>>) attributes {dimension_semantics = [], scalar_prefetch = 0 : i64, scratch_operands = 0 : i64, tpu.core_type = #tpu.core_type<tc>} {
    %c0 = arith.constant 0 : index
    %c0_0 = arith.constant 0 : index
    %0 = vector.load %arg0[%c0, %c0_0] : memref<8x768xf32, #tpu.memory_space<vmem>>, vector<8x768xf32>
    %c0_1 = arith.constant 0 : index
    %c0_2 = arith.constant 0 : index
    %c0_3 = arith.constant 0 : index
    %c0_4 = arith.constant 0 : index
    %1 = vector.load %arg1[%c0_1, %c0_2, %c0_3, %c0_4] : memref<6x2x8x128xf32, #tpu.memory_space<vmem>>, vector<1x1x8x128xf32>
    %2 = vector.shape_cast %1 : vector<1x1x8x128xf32> to vector<8x128xf32>
    %c0_5 = arith.constant 0 : index
    %c0_6 = arith.constant 0 : index
    %c0_7 = arith.constant 0 : index
    %c0_8 = arith.constant 0 : index
    %3 = vector.load %arg3[%c0_5, %c0_6, %c0_7, %c0_8] : memref<6x2x128x128xf32, #tpu.memory_space<vmem>>, vector<1x1x128x128xf32>
    %4 = vector.shape_cast %3 : vector<1x1x128x128xf32> to vector<128x128xf32>
    %cst = arith.constant dense<0.000000e+00> : vector<8x128xf32>
    %5 = tpu.matmul %2, %4, %cst {dimension_numbers = #tpu.dot_dimension_numbers<[1], [0], [0], [1], [0, 0, 1, 1], [], []>} : vector<8x128xf32>, vector<128x128xf32>, vector<8x128xf32> -> vector<8x128xf32>
    %c0_9 = arith.constant 0 : index
    %c0_10 = arith.constant 0 : index
    %c0_11 = arith.constant 0 : index
    %c0_12 = arith.constant 0 : index
    %6 = vector.load %arg4[%c0_9, %c0_10, %c0_11, %c0_12] : memref<6x2x1x128xf32, #tpu.memory_space<vmem>>, vector<1x1x1x128xf32>
    %7 = vector.shape_cast %6 : vector<1x1x1x128xf32> to vector<1x128xf32>
    %c0_13 = arith.constant 0 : index
    %c0_14 = arith.constant 0 : index
    %c0_15 = arith.constant 0 : index
    %c0_16 = arith.constant 0 : index
    %8 = vector.load %arg5[%c0_13, %c0_14, %c0_15, %c0_16] : memref<6x2x1x128xf32, #tpu.memory_space<vmem>>, vector<1x1x1x128xf32>
    %9 = vector.shape_cast %8 : vector<1x1x1x128xf32> to vector<1x128xf32>
    %cst_17 = arith.constant dense<0.000000e+00> : vector<8xf32>
    %10 = vector.multi_reduction <add>, %5, %cst_17 [1] : vector<8x128xf32> to vector<8xf32>
    %11 = vector.shape_cast %10 : vector<8xf32> to vector<8x1xf32>
    %12 = arith.mulf %5, %5 : vector<8x128xf32>
    %cst_18 = arith.constant dense<0.000000e+00> : vector<8xf32>
    %13 = vector.multi_reduction <add>, %12, %cst_18 [1] : vector<8x128xf32> to vector<8xf32>
    %14 = vector.shape_cast %13 : vector<8xf32> to vector<8x1xf32>
    %cst_19 = arith.constant 7.812500e-03 : f32
    %15 = vector.broadcast %cst_19 : f32 to vector<8x1xf32>
    %16 = arith.mulf %11, %15 : vector<8x1xf32>
    %cst_20 = arith.constant 7.812500e-03 : f32
    %17 = vector.broadcast %cst_20 : f32 to vector<8x1xf32>
    %18 = arith.mulf %14, %17 : vector<8x1xf32>
    %19 = arith.mulf %16, %16 : vector<8x1xf32>
    %20 = arith.subf %18, %19 : vector<8x1xf32>
    %cst_21 = arith.constant 9.99999974E-6 : f32
    %21 = vector.broadcast %cst_21 : f32 to vector<8x1xf32>
    %22 = arith.addf %20, %21 : vector<8x1xf32>
    %23 = math.rsqrt %22 : vector<8x1xf32>
    %24 = vector.broadcast %16 : vector<8x1xf32> to vector<8x128xf32>
    %25 = arith.subf %5, %24 : vector<8x128xf32>
    %26 = vector.broadcast %23 : vector<8x1xf32> to vector<8x128xf32>
    %27 = arith.mulf %25, %26 : vector<8x128xf32>
    %28 = vector.broadcast %7 : vector<1x128xf32> to vector<8x128xf32>
    %29 = arith.mulf %27, %28 : vector<8x128xf32>
    %30 = vector.broadcast %9 : vector<1x128xf32> to vector<8x128xf32>
    %31 = arith.addf %29, %30 : vector<8x128xf32>
    %c0_22 = arith.constant 0 : index
    %c1 = arith.constant 1 : index
    %c0_23 = arith.constant 0 : index
    %c0_24 = arith.constant 0 : index
    %32 = vector.load %arg1[%c0_22, %c1, %c0_23, %c0_24] : memref<6x2x8x128xf32, #tpu.memory_space<vmem>>, vector<1x1x8x128xf32>
    %33 = vector.shape_cast %32 : vector<1x1x8x128xf32> to vector<8x128xf32>
    %c0_25 = arith.constant 0 : index
    %c1_26 = arith.constant 1 : index
    %c0_27 = arith.constant 0 : index
    %c0_28 = arith.constant 0 : index
    %34 = vector.load %arg3[%c0_25, %c1_26, %c0_27, %c0_28] : memref<6x2x128x128xf32, #tpu.memory_space<vmem>>, vector<1x1x128x128xf32>
    %35 = vector.shape_cast %34 : vector<1x1x128x128xf32> to vector<128x128xf32>
    %cst_29 = arith.constant dense<0.000000e+00> : vector<8x128xf32>
    %36 = tpu.matmul %33, %35, %cst_29 {dimension_numbers = #tpu.dot_dimension_numbers<[1], [0], [0], [1], [0, 0, 1, 1], [], []>} : vector<8x128xf32>, vector<128x128xf32>, vector<8x128xf32> -> vector<8x128xf32>
    %c0_30 = arith.constant 0 : index
    %c1_31 = arith.constant 1 : index
    %c0_32 = arith.constant 0 : index
    %c0_33 = arith.constant 0 : index
    %37 = vector.load %arg4[%c0_30, %c1_31, %c0_32, %c0_33] : memref<6x2x1x128xf32, #tpu.memory_space<vmem>>, vector<1x1x1x128xf32>
    %38 = vector.shape_cast %37 : vector<1x1x1x128xf32> to vector<1x128xf32>
    %c0_34 = arith.constant 0 : index
    %c1_35 = arith.constant 1 : index
    %c0_36 = arith.constant 0 : index
    %c0_37 = arith.constant 0 : index
    %39 = vector.load %arg5[%c0_34, %c1_35, %c0_36, %c0_37] : memref<6x2x1x128xf32, #tpu.memory_space<vmem>>, vector<1x1x1x128xf32>
    %40 = vector.shape_cast %39 : vector<1x1x1x128xf32> to vector<1x128xf32>
    %cst_38 = arith.constant dense<0.000000e+00> : vector<8xf32>
    %41 = vector.multi_reduction <add>, %36, %cst_38 [1] : vector<8x128xf32> to vector<8xf32>
    %42 = vector.shape_cast %41 : vector<8xf32> to vector<8x1xf32>
    %43 = arith.mulf %36, %36 : vector<8x128xf32>
    %cst_39 = arith.constant dense<0.000000e+00> : vector<8xf32>
    %44 = vector.multi_reduction <add>, %43, %cst_39 [1] : vector<8x128xf32> to vector<8xf32>
    %45 = vector.shape_cast %44 : vector<8xf32> to vector<8x1xf32>
    %cst_40 = arith.constant 7.812500e-03 : f32
    %46 = vector.broadcast %cst_40 : f32 to vector<8x1xf32>
    %47 = arith.mulf %42, %46 : vector<8x1xf32>
    %cst_41 = arith.constant 7.812500e-03 : f32
    %48 = vector.broadcast %cst_41 : f32 to vector<8x1xf32>
    %49 = arith.mulf %45, %48 : vector<8x1xf32>
    %50 = arith.mulf %47, %47 : vector<8x1xf32>
    %51 = arith.subf %49, %50 : vector<8x1xf32>
    %cst_42 = arith.constant 9.99999974E-6 : f32
    %52 = vector.broadcast %cst_42 : f32 to vector<8x1xf32>
    %53 = arith.addf %51, %52 : vector<8x1xf32>
    %54 = math.rsqrt %53 : vector<8x1xf32>
    %55 = vector.broadcast %47 : vector<8x1xf32> to vector<8x128xf32>
    %56 = arith.subf %36, %55 : vector<8x128xf32>
    %57 = vector.broadcast %54 : vector<8x1xf32> to vector<8x128xf32>
    %58 = arith.mulf %56, %57 : vector<8x128xf32>
    %59 = vector.broadcast %38 : vector<1x128xf32> to vector<8x128xf32>
    %60 = arith.mulf %58, %59 : vector<8x128xf32>
    %61 = vector.broadcast %40 : vector<1x128xf32> to vector<8x128xf32>
    %62 = arith.addf %60, %61 : vector<8x128xf32>
    %c1_43 = arith.constant 1 : index
    %c0_44 = arith.constant 0 : index
    %c0_45 = arith.constant 0 : index
    %c0_46 = arith.constant 0 : index
    %63 = vector.load %arg1[%c1_43, %c0_44, %c0_45, %c0_46] : memref<6x2x8x128xf32, #tpu.memory_space<vmem>>, vector<1x1x8x128xf32>
    %64 = vector.shape_cast %63 : vector<1x1x8x128xf32> to vector<8x128xf32>
    %c1_47 = arith.constant 1 : index
    %c0_48 = arith.constant 0 : index
    %c0_49 = arith.constant 0 : index
    %c0_50 = arith.constant 0 : index
    %65 = vector.load %arg3[%c1_47, %c0_48, %c0_49, %c0_50] : memref<6x2x128x128xf32, #tpu.memory_space<vmem>>, vector<1x1x128x128xf32>
    %66 = vector.shape_cast %65 : vector<1x1x128x128xf32> to vector<128x128xf32>
    %cst_51 = arith.constant dense<0.000000e+00> : vector<8x128xf32>
    %67 = tpu.matmul %64, %66, %cst_51 {dimension_numbers = #tpu.dot_dimension_numbers<[1], [0], [0], [1], [0, 0, 1, 1], [], []>} : vector<8x128xf32>, vector<128x128xf32>, vector<8x128xf32> -> vector<8x128xf32>
    %c1_52 = arith.constant 1 : index
    %c0_53 = arith.constant 0 : index
    %c0_54 = arith.constant 0 : index
    %c0_55 = arith.constant 0 : index
    %68 = vector.load %arg4[%c1_52, %c0_53, %c0_54, %c0_55] : memref<6x2x1x128xf32, #tpu.memory_space<vmem>>, vector<1x1x1x128xf32>
    %69 = vector.shape_cast %68 : vector<1x1x1x128xf32> to vector<1x128xf32>
    %c1_56 = arith.constant 1 : index
    %c0_57 = arith.constant 0 : index
    %c0_58 = arith.constant 0 : index
    %c0_59 = arith.constant 0 : index
    %70 = vector.load %arg5[%c1_56, %c0_57, %c0_58, %c0_59] : memref<6x2x1x128xf32, #tpu.memory_space<vmem>>, vector<1x1x1x128xf32>
    %71 = vector.shape_cast %70 : vector<1x1x1x128xf32> to vector<1x128xf32>
    %cst_60 = arith.constant dense<0.000000e+00> : vector<8xf32>
    %72 = vector.multi_reduction <add>, %67, %cst_60 [1] : vector<8x128xf32> to vector<8xf32>
    %73 = vector.shape_cast %72 : vector<8xf32> to vector<8x1xf32>
    %74 = arith.mulf %67, %67 : vector<8x128xf32>
    %cst_61 = arith.constant dense<0.000000e+00> : vector<8xf32>
    %75 = vector.multi_reduction <add>, %74, %cst_61 [1] : vector<8x128xf32> to vector<8xf32>
    %76 = vector.shape_cast %75 : vector<8xf32> to vector<8x1xf32>
    %cst_62 = arith.constant 7.812500e-03 : f32
    %77 = vector.broadcast %cst_62 : f32 to vector<8x1xf32>
    %78 = arith.mulf %73, %77 : vector<8x1xf32>
    %cst_63 = arith.constant 7.812500e-03 : f32
    %79 = vector.broadcast %cst_63 : f32 to vector<8x1xf32>
    %80 = arith.mulf %76, %79 : vector<8x1xf32>
    %81 = arith.mulf %78, %78 : vector<8x1xf32>
    %82 = arith.subf %80, %81 : vector<8x1xf32>
    %cst_64 = arith.constant 9.99999974E-6 : f32
    %83 = vector.broadcast %cst_64 : f32 to vector<8x1xf32>
    %84 = arith.addf %82, %83 : vector<8x1xf32>
    %85 = math.rsqrt %84 : vector<8x1xf32>
    %86 = vector.broadcast %78 : vector<8x1xf32> to vector<8x128xf32>
    %87 = arith.subf %67, %86 : vector<8x128xf32>
    %88 = vector.broadcast %85 : vector<8x1xf32> to vector<8x128xf32>
    %89 = arith.mulf %87, %88 : vector<8x128xf32>
    %90 = vector.broadcast %69 : vector<1x128xf32> to vector<8x128xf32>
    %91 = arith.mulf %89, %90 : vector<8x128xf32>
    %92 = vector.broadcast %71 : vector<1x128xf32> to vector<8x128xf32>
    %93 = arith.addf %91, %92 : vector<8x128xf32>
    %c1_65 = arith.constant 1 : index
    %c1_66 = arith.constant 1 : index
    %c0_67 = arith.constant 0 : index
    %c0_68 = arith.constant 0 : index
    %94 = vector.load %arg1[%c1_65, %c1_66, %c0_67, %c0_68] : memref<6x2x8x128xf32, #tpu.memory_space<vmem>>, vector<1x1x8x128xf32>
    %95 = vector.shape_cast %94 : vector<1x1x8x128xf32> to vector<8x128xf32>
    %c1_69 = arith.constant 1 : index
    %c1_70 = arith.constant 1 : index
    %c0_71 = arith.constant 0 : index
    %c0_72 = arith.constant 0 : index
    %96 = vector.load %arg3[%c1_69, %c1_70, %c0_71, %c0_72] : memref<6x2x128x128xf32, #tpu.memory_space<vmem>>, vector<1x1x128x128xf32>
    %97 = vector.shape_cast %96 : vector<1x1x128x128xf32> to vector<128x128xf32>
    %cst_73 = arith.constant dense<0.000000e+00> : vector<8x128xf32>
    %98 = tpu.matmul %95, %97, %cst_73 {dimension_numbers = #tpu.dot_dimension_numbers<[1], [0], [0], [1], [0, 0, 1, 1], [], []>} : vector<8x128xf32>, vector<128x128xf32>, vector<8x128xf32> -> vector<8x128xf32>
    %c1_74 = arith.constant 1 : index
    %c1_75 = arith.constant 1 : index
    %c0_76 = arith.constant 0 : index
    %c0_77 = arith.constant 0 : index
    %99 = vector.load %arg4[%c1_74, %c1_75, %c0_76, %c0_77] : memref<6x2x1x128xf32, #tpu.memory_space<vmem>>, vector<1x1x1x128xf32>
    %100 = vector.shape_cast %99 : vector<1x1x1x128xf32> to vector<1x128xf32>
    %c1_78 = arith.constant 1 : index
    %c1_79 = arith.constant 1 : index
    %c0_80 = arith.constant 0 : index
    %c0_81 = arith.constant 0 : index
    %101 = vector.load %arg5[%c1_78, %c1_79, %c0_80, %c0_81] : memref<6x2x1x128xf32, #tpu.memory_space<vmem>>, vector<1x1x1x128xf32>
    %102 = vector.shape_cast %101 : vector<1x1x1x128xf32> to vector<1x128xf32>
    %cst_82 = arith.constant dense<0.000000e+00> : vector<8xf32>
    %103 = vector.multi_reduction <add>, %98, %cst_82 [1] : vector<8x128xf32> to vector<8xf32>
    %104 = vector.shape_cast %103 : vector<8xf32> to vector<8x1xf32>
    %105 = arith.mulf %98, %98 : vector<8x128xf32>
    %cst_83 = arith.constant dense<0.000000e+00> : vector<8xf32>
    %106 = vector.multi_reduction <add>, %105, %cst_83 [1] : vector<8x128xf32> to vector<8xf32>
    %107 = vector.shape_cast %106 : vector<8xf32> to vector<8x1xf32>
    %cst_84 = arith.constant 7.812500e-03 : f32
    %108 = vector.broadcast %cst_84 : f32 to vector<8x1xf32>
    %109 = arith.mulf %104, %108 : vector<8x1xf32>
    %cst_85 = arith.constant 7.812500e-03 : f32
    %110 = vector.broadcast %cst_85 : f32 to vector<8x1xf32>
    %111 = arith.mulf %107, %110 : vector<8x1xf32>
    %112 = arith.mulf %109, %109 : vector<8x1xf32>
    %113 = arith.subf %111, %112 : vector<8x1xf32>
    %cst_86 = arith.constant 9.99999974E-6 : f32
    %114 = vector.broadcast %cst_86 : f32 to vector<8x1xf32>
    %115 = arith.addf %113, %114 : vector<8x1xf32>
    %116 = math.rsqrt %115 : vector<8x1xf32>
    %117 = vector.broadcast %109 : vector<8x1xf32> to vector<8x128xf32>
    %118 = arith.subf %98, %117 : vector<8x128xf32>
    %119 = vector.broadcast %116 : vector<8x1xf32> to vector<8x128xf32>
    %120 = arith.mulf %118, %119 : vector<8x128xf32>
    %121 = vector.broadcast %100 : vector<1x128xf32> to vector<8x128xf32>
    %122 = arith.mulf %120, %121 : vector<8x128xf32>
    %123 = vector.broadcast %102 : vector<1x128xf32> to vector<8x128xf32>
    %124 = arith.addf %122, %123 : vector<8x128xf32>
    %c2 = arith.constant 2 : index
    %c0_87 = arith.constant 0 : index
    %c0_88 = arith.constant 0 : index
    %c0_89 = arith.constant 0 : index
    %125 = vector.load %arg1[%c2, %c0_87, %c0_88, %c0_89] : memref<6x2x8x128xf32, #tpu.memory_space<vmem>>, vector<1x1x8x128xf32>
    %126 = vector.shape_cast %125 : vector<1x1x8x128xf32> to vector<8x128xf32>
    %c2_90 = arith.constant 2 : index
    %c0_91 = arith.constant 0 : index
    %c0_92 = arith.constant 0 : index
    %c0_93 = arith.constant 0 : index
    %127 = vector.load %arg3[%c2_90, %c0_91, %c0_92, %c0_93] : memref<6x2x128x128xf32, #tpu.memory_space<vmem>>, vector<1x1x128x128xf32>
    %128 = vector.shape_cast %127 : vector<1x1x128x128xf32> to vector<128x128xf32>
    %cst_94 = arith.constant dense<0.000000e+00> : vector<8x128xf32>
    %129 = tpu.matmul %126, %128, %cst_94 {dimension_numbers = #tpu.dot_dimension_numbers<[1], [0], [0], [1], [0, 0, 1, 1], [], []>} : vector<8x128xf32>, vector<128x128xf32>, vector<8x128xf32> -> vector<8x128xf32>
    %c2_95 = arith.constant 2 : index
    %c0_96 = arith.constant 0 : index
    %c0_97 = arith.constant 0 : index
    %c0_98 = arith.constant 0 : index
    %130 = vector.load %arg4[%c2_95, %c0_96, %c0_97, %c0_98] : memref<6x2x1x128xf32, #tpu.memory_space<vmem>>, vector<1x1x1x128xf32>
    %131 = vector.shape_cast %130 : vector<1x1x1x128xf32> to vector<1x128xf32>
    %c2_99 = arith.constant 2 : index
    %c0_100 = arith.constant 0 : index
    %c0_101 = arith.constant 0 : index
    %c0_102 = arith.constant 0 : index
    %132 = vector.load %arg5[%c2_99, %c0_100, %c0_101, %c0_102] : memref<6x2x1x128xf32, #tpu.memory_space<vmem>>, vector<1x1x1x128xf32>
    %133 = vector.shape_cast %132 : vector<1x1x1x128xf32> to vector<1x128xf32>
    %cst_103 = arith.constant dense<0.000000e+00> : vector<8xf32>
    %134 = vector.multi_reduction <add>, %129, %cst_103 [1] : vector<8x128xf32> to vector<8xf32>
    %135 = vector.shape_cast %134 : vector<8xf32> to vector<8x1xf32>
    %136 = arith.mulf %129, %129 : vector<8x128xf32>
    %cst_104 = arith.constant dense<0.000000e+00> : vector<8xf32>
    %137 = vector.multi_reduction <add>, %136, %cst_104 [1] : vector<8x128xf32> to vector<8xf32>
    %138 = vector.shape_cast %137 : vector<8xf32> to vector<8x1xf32>
    %cst_105 = arith.constant 7.812500e-03 : f32
    %139 = vector.broadcast %cst_105 : f32 to vector<8x1xf32>
    %140 = arith.mulf %135, %139 : vector<8x1xf32>
    %cst_106 = arith.constant 7.812500e-03 : f32
    %141 = vector.broadcast %cst_106 : f32 to vector<8x1xf32>
    %142 = arith.mulf %138, %141 : vector<8x1xf32>
    %143 = arith.mulf %140, %140 : vector<8x1xf32>
    %144 = arith.subf %142, %143 : vector<8x1xf32>
    %cst_107 = arith.constant 9.99999974E-6 : f32
    %145 = vector.broadcast %cst_107 : f32 to vector<8x1xf32>
    %146 = arith.addf %144, %145 : vector<8x1xf32>
    %147 = math.rsqrt %146 : vector<8x1xf32>
    %148 = vector.broadcast %140 : vector<8x1xf32> to vector<8x128xf32>
    %149 = arith.subf %129, %148 : vector<8x128xf32>
    %150 = vector.broadcast %147 : vector<8x1xf32> to vector<8x128xf32>
    %151 = arith.mulf %149, %150 : vector<8x128xf32>
    %152 = vector.broadcast %131 : vector<1x128xf32> to vector<8x128xf32>
    %153 = arith.mulf %151, %152 : vector<8x128xf32>
    %154 = vector.broadcast %133 : vector<1x128xf32> to vector<8x128xf32>
    %155 = arith.addf %153, %154 : vector<8x128xf32>
    %c2_108 = arith.constant 2 : index
    %c1_109 = arith.constant 1 : index
    %c0_110 = arith.constant 0 : index
    %c0_111 = arith.constant 0 : index
    %156 = vector.load %arg1[%c2_108, %c1_109, %c0_110, %c0_111] : memref<6x2x8x128xf32, #tpu.memory_space<vmem>>, vector<1x1x8x128xf32>
    %157 = vector.shape_cast %156 : vector<1x1x8x128xf32> to vector<8x128xf32>
    %c2_112 = arith.constant 2 : index
    %c1_113 = arith.constant 1 : index
    %c0_114 = arith.constant 0 : index
    %c0_115 = arith.constant 0 : index
    %158 = vector.load %arg3[%c2_112, %c1_113, %c0_114, %c0_115] : memref<6x2x128x128xf32, #tpu.memory_space<vmem>>, vector<1x1x128x128xf32>
    %159 = vector.shape_cast %158 : vector<1x1x128x128xf32> to vector<128x128xf32>
    %cst_116 = arith.constant dense<0.000000e+00> : vector<8x128xf32>
    %160 = tpu.matmul %157, %159, %cst_116 {dimension_numbers = #tpu.dot_dimension_numbers<[1], [0], [0], [1], [0, 0, 1, 1], [], []>} : vector<8x128xf32>, vector<128x128xf32>, vector<8x128xf32> -> vector<8x128xf32>
    %c2_117 = arith.constant 2 : index
    %c1_118 = arith.constant 1 : index
    %c0_119 = arith.constant 0 : index
    %c0_120 = arith.constant 0 : index
    %161 = vector.load %arg4[%c2_117, %c1_118, %c0_119, %c0_120] : memref<6x2x1x128xf32, #tpu.memory_space<vmem>>, vector<1x1x1x128xf32>
    %162 = vector.shape_cast %161 : vector<1x1x1x128xf32> to vector<1x128xf32>
    %c2_121 = arith.constant 2 : index
    %c1_122 = arith.constant 1 : index
    %c0_123 = arith.constant 0 : index
    %c0_124 = arith.constant 0 : index
    %163 = vector.load %arg5[%c2_121, %c1_122, %c0_123, %c0_124] : memref<6x2x1x128xf32, #tpu.memory_space<vmem>>, vector<1x1x1x128xf32>
    %164 = vector.shape_cast %163 : vector<1x1x1x128xf32> to vector<1x128xf32>
    %cst_125 = arith.constant dense<0.000000e+00> : vector<8xf32>
    %165 = vector.multi_reduction <add>, %160, %cst_125 [1] : vector<8x128xf32> to vector<8xf32>
    %166 = vector.shape_cast %165 : vector<8xf32> to vector<8x1xf32>
    %167 = arith.mulf %160, %160 : vector<8x128xf32>
    %cst_126 = arith.constant dense<0.000000e+00> : vector<8xf32>
    %168 = vector.multi_reduction <add>, %167, %cst_126 [1] : vector<8x128xf32> to vector<8xf32>
    %169 = vector.shape_cast %168 : vector<8xf32> to vector<8x1xf32>
    %cst_127 = arith.constant 7.812500e-03 : f32
    %170 = vector.broadcast %cst_127 : f32 to vector<8x1xf32>
    %171 = arith.mulf %166, %170 : vector<8x1xf32>
    %cst_128 = arith.constant 7.812500e-03 : f32
    %172 = vector.broadcast %cst_128 : f32 to vector<8x1xf32>
    %173 = arith.mulf %169, %172 : vector<8x1xf32>
    %174 = arith.mulf %171, %171 : vector<8x1xf32>
    %175 = arith.subf %173, %174 : vector<8x1xf32>
    %cst_129 = arith.constant 9.99999974E-6 : f32
    %176 = vector.broadcast %cst_129 : f32 to vector<8x1xf32>
    %177 = arith.addf %175, %176 : vector<8x1xf32>
    %178 = math.rsqrt %177 : vector<8x1xf32>
    %179 = vector.broadcast %171 : vector<8x1xf32> to vector<8x128xf32>
    %180 = arith.subf %160, %179 : vector<8x128xf32>
    %181 = vector.broadcast %178 : vector<8x1xf32> to vector<8x128xf32>
    %182 = arith.mulf %180, %181 : vector<8x128xf32>
    %183 = vector.broadcast %162 : vector<1x128xf32> to vector<8x128xf32>
    %184 = arith.mulf %182, %183 : vector<8x128xf32>
    %185 = vector.broadcast %164 : vector<1x128xf32> to vector<8x128xf32>
    %186 = arith.addf %184, %185 : vector<8x128xf32>
    %c3 = arith.constant 3 : index
    %c0_130 = arith.constant 0 : index
    %c0_131 = arith.constant 0 : index
    %c0_132 = arith.constant 0 : index
    %187 = vector.load %arg1[%c3, %c0_130, %c0_131, %c0_132] : memref<6x2x8x128xf32, #tpu.memory_space<vmem>>, vector<1x1x8x128xf32>
    %188 = vector.shape_cast %187 : vector<1x1x8x128xf32> to vector<8x128xf32>
    %c3_133 = arith.constant 3 : index
    %c0_134 = arith.constant 0 : index
    %c0_135 = arith.constant 0 : index
    %c0_136 = arith.constant 0 : index
    %189 = vector.load %arg3[%c3_133, %c0_134, %c0_135, %c0_136] : memref<6x2x128x128xf32, #tpu.memory_space<vmem>>, vector<1x1x128x128xf32>
    %190 = vector.shape_cast %189 : vector<1x1x128x128xf32> to vector<128x128xf32>
    %cst_137 = arith.constant dense<0.000000e+00> : vector<8x128xf32>
    %191 = tpu.matmul %188, %190, %cst_137 {dimension_numbers = #tpu.dot_dimension_numbers<[1], [0], [0], [1], [0, 0, 1, 1], [], []>} : vector<8x128xf32>, vector<128x128xf32>, vector<8x128xf32> -> vector<8x128xf32>
    %c3_138 = arith.constant 3 : index
    %c0_139 = arith.constant 0 : index
    %c0_140 = arith.constant 0 : index
    %c0_141 = arith.constant 0 : index
    %192 = vector.load %arg4[%c3_138, %c0_139, %c0_140, %c0_141] : memref<6x2x1x128xf32, #tpu.memory_space<vmem>>, vector<1x1x1x128xf32>
    %193 = vector.shape_cast %192 : vector<1x1x1x128xf32> to vector<1x128xf32>
    %c3_142 = arith.constant 3 : index
    %c0_143 = arith.constant 0 : index
    %c0_144 = arith.constant 0 : index
    %c0_145 = arith.constant 0 : index
    %194 = vector.load %arg5[%c3_142, %c0_143, %c0_144, %c0_145] : memref<6x2x1x128xf32, #tpu.memory_space<vmem>>, vector<1x1x1x128xf32>
    %195 = vector.shape_cast %194 : vector<1x1x1x128xf32> to vector<1x128xf32>
    %cst_146 = arith.constant dense<0.000000e+00> : vector<8xf32>
    %196 = vector.multi_reduction <add>, %191, %cst_146 [1] : vector<8x128xf32> to vector<8xf32>
    %197 = vector.shape_cast %196 : vector<8xf32> to vector<8x1xf32>
    %198 = arith.mulf %191, %191 : vector<8x128xf32>
    %cst_147 = arith.constant dense<0.000000e+00> : vector<8xf32>
    %199 = vector.multi_reduction <add>, %198, %cst_147 [1] : vector<8x128xf32> to vector<8xf32>
    %200 = vector.shape_cast %199 : vector<8xf32> to vector<8x1xf32>
    %cst_148 = arith.constant 7.812500e-03 : f32
    %201 = vector.broadcast %cst_148 : f32 to vector<8x1xf32>
    %202 = arith.mulf %197, %201 : vector<8x1xf32>
    %cst_149 = arith.constant 7.812500e-03 : f32
    %203 = vector.broadcast %cst_149 : f32 to vector<8x1xf32>
    %204 = arith.mulf %200, %203 : vector<8x1xf32>
    %205 = arith.mulf %202, %202 : vector<8x1xf32>
    %206 = arith.subf %204, %205 : vector<8x1xf32>
    %cst_150 = arith.constant 9.99999974E-6 : f32
    %207 = vector.broadcast %cst_150 : f32 to vector<8x1xf32>
    %208 = arith.addf %206, %207 : vector<8x1xf32>
    %209 = math.rsqrt %208 : vector<8x1xf32>
    %210 = vector.broadcast %202 : vector<8x1xf32> to vector<8x128xf32>
    %211 = arith.subf %191, %210 : vector<8x128xf32>
    %212 = vector.broadcast %209 : vector<8x1xf32> to vector<8x128xf32>
    %213 = arith.mulf %211, %212 : vector<8x128xf32>
    %214 = vector.broadcast %193 : vector<1x128xf32> to vector<8x128xf32>
    %215 = arith.mulf %213, %214 : vector<8x128xf32>
    %216 = vector.broadcast %195 : vector<1x128xf32> to vector<8x128xf32>
    %217 = arith.addf %215, %216 : vector<8x128xf32>
    %c3_151 = arith.constant 3 : index
    %c1_152 = arith.constant 1 : index
    %c0_153 = arith.constant 0 : index
    %c0_154 = arith.constant 0 : index
    %218 = vector.load %arg1[%c3_151, %c1_152, %c0_153, %c0_154] : memref<6x2x8x128xf32, #tpu.memory_space<vmem>>, vector<1x1x8x128xf32>
    %219 = vector.shape_cast %218 : vector<1x1x8x128xf32> to vector<8x128xf32>
    %c3_155 = arith.constant 3 : index
    %c1_156 = arith.constant 1 : index
    %c0_157 = arith.constant 0 : index
    %c0_158 = arith.constant 0 : index
    %220 = vector.load %arg3[%c3_155, %c1_156, %c0_157, %c0_158] : memref<6x2x128x128xf32, #tpu.memory_space<vmem>>, vector<1x1x128x128xf32>
    %221 = vector.shape_cast %220 : vector<1x1x128x128xf32> to vector<128x128xf32>
    %cst_159 = arith.constant dense<0.000000e+00> : vector<8x128xf32>
    %222 = tpu.matmul %219, %221, %cst_159 {dimension_numbers = #tpu.dot_dimension_numbers<[1], [0], [0], [1], [0, 0, 1, 1], [], []>} : vector<8x128xf32>, vector<128x128xf32>, vector<8x128xf32> -> vector<8x128xf32>
    %c3_160 = arith.constant 3 : index
    %c1_161 = arith.constant 1 : index
    %c0_162 = arith.constant 0 : index
    %c0_163 = arith.constant 0 : index
    %223 = vector.load %arg4[%c3_160, %c1_161, %c0_162, %c0_163] : memref<6x2x1x128xf32, #tpu.memory_space<vmem>>, vector<1x1x1x128xf32>
    %224 = vector.shape_cast %223 : vector<1x1x1x128xf32> to vector<1x128xf32>
    %c3_164 = arith.constant 3 : index
    %c1_165 = arith.constant 1 : index
    %c0_166 = arith.constant 0 : index
    %c0_167 = arith.constant 0 : index
    %225 = vector.load %arg5[%c3_164, %c1_165, %c0_166, %c0_167] : memref<6x2x1x128xf32, #tpu.memory_space<vmem>>, vector<1x1x1x128xf32>
    %226 = vector.shape_cast %225 : vector<1x1x1x128xf32> to vector<1x128xf32>
    %cst_168 = arith.constant dense<0.000000e+00> : vector<8xf32>
    %227 = vector.multi_reduction <add>, %222, %cst_168 [1] : vector<8x128xf32> to vector<8xf32>
    %228 = vector.shape_cast %227 : vector<8xf32> to vector<8x1xf32>
    %229 = arith.mulf %222, %222 : vector<8x128xf32>
    %cst_169 = arith.constant dense<0.000000e+00> : vector<8xf32>
    %230 = vector.multi_reduction <add>, %229, %cst_169 [1] : vector<8x128xf32> to vector<8xf32>
    %231 = vector.shape_cast %230 : vector<8xf32> to vector<8x1xf32>
    %cst_170 = arith.constant 7.812500e-03 : f32
    %232 = vector.broadcast %cst_170 : f32 to vector<8x1xf32>
    %233 = arith.mulf %228, %232 : vector<8x1xf32>
    %cst_171 = arith.constant 7.812500e-03 : f32
    %234 = vector.broadcast %cst_171 : f32 to vector<8x1xf32>
    %235 = arith.mulf %231, %234 : vector<8x1xf32>
    %236 = arith.mulf %233, %233 : vector<8x1xf32>
    %237 = arith.subf %235, %236 : vector<8x1xf32>
    %cst_172 = arith.constant 9.99999974E-6 : f32
    %238 = vector.broadcast %cst_172 : f32 to vector<8x1xf32>
    %239 = arith.addf %237, %238 : vector<8x1xf32>
    %240 = math.rsqrt %239 : vector<8x1xf32>
    %241 = vector.broadcast %233 : vector<8x1xf32> to vector<8x128xf32>
    %242 = arith.subf %222, %241 : vector<8x128xf32>
    %243 = vector.broadcast %240 : vector<8x1xf32> to vector<8x128xf32>
    %244 = arith.mulf %242, %243 : vector<8x128xf32>
    %245 = vector.broadcast %224 : vector<1x128xf32> to vector<8x128xf32>
    %246 = arith.mulf %244, %245 : vector<8x128xf32>
    %247 = vector.broadcast %226 : vector<1x128xf32> to vector<8x128xf32>
    %248 = arith.addf %246, %247 : vector<8x128xf32>
    %c4 = arith.constant 4 : index
    %c0_173 = arith.constant 0 : index
    %c0_174 = arith.constant 0 : index
    %c0_175 = arith.constant 0 : index
    %249 = vector.load %arg1[%c4, %c0_173, %c0_174, %c0_175] : memref<6x2x8x128xf32, #tpu.memory_space<vmem>>, vector<1x1x8x128xf32>
    %250 = vector.shape_cast %249 : vector<1x1x8x128xf32> to vector<8x128xf32>
    %c4_176 = arith.constant 4 : index
    %c0_177 = arith.constant 0 : index
    %c0_178 = arith.constant 0 : index
    %c0_179 = arith.constant 0 : index
    %251 = vector.load %arg3[%c4_176, %c0_177, %c0_178, %c0_179] : memref<6x2x128x128xf32, #tpu.memory_space<vmem>>, vector<1x1x128x128xf32>
    %252 = vector.shape_cast %251 : vector<1x1x128x128xf32> to vector<128x128xf32>
    %cst_180 = arith.constant dense<0.000000e+00> : vector<8x128xf32>
    %253 = tpu.matmul %250, %252, %cst_180 {dimension_numbers = #tpu.dot_dimension_numbers<[1], [0], [0], [1], [0, 0, 1, 1], [], []>} : vector<8x128xf32>, vector<128x128xf32>, vector<8x128xf32> -> vector<8x128xf32>
    %c4_181 = arith.constant 4 : index
    %c0_182 = arith.constant 0 : index
    %c0_183 = arith.constant 0 : index
    %c0_184 = arith.constant 0 : index
    %254 = vector.load %arg4[%c4_181, %c0_182, %c0_183, %c0_184] : memref<6x2x1x128xf32, #tpu.memory_space<vmem>>, vector<1x1x1x128xf32>
    %255 = vector.shape_cast %254 : vector<1x1x1x128xf32> to vector<1x128xf32>
    %c4_185 = arith.constant 4 : index
    %c0_186 = arith.constant 0 : index
    %c0_187 = arith.constant 0 : index
    %c0_188 = arith.constant 0 : index
    %256 = vector.load %arg5[%c4_185, %c0_186, %c0_187, %c0_188] : memref<6x2x1x128xf32, #tpu.memory_space<vmem>>, vector<1x1x1x128xf32>
    %257 = vector.shape_cast %256 : vector<1x1x1x128xf32> to vector<1x128xf32>
    %cst_189 = arith.constant dense<0.000000e+00> : vector<8xf32>
    %258 = vector.multi_reduction <add>, %253, %cst_189 [1] : vector<8x128xf32> to vector<8xf32>
    %259 = vector.shape_cast %258 : vector<8xf32> to vector<8x1xf32>
    %260 = arith.mulf %253, %253 : vector<8x128xf32>
    %cst_190 = arith.constant dense<0.000000e+00> : vector<8xf32>
    %261 = vector.multi_reduction <add>, %260, %cst_190 [1] : vector<8x128xf32> to vector<8xf32>
    %262 = vector.shape_cast %261 : vector<8xf32> to vector<8x1xf32>
    %cst_191 = arith.constant 7.812500e-03 : f32
    %263 = vector.broadcast %cst_191 : f32 to vector<8x1xf32>
    %264 = arith.mulf %259, %263 : vector<8x1xf32>
    %cst_192 = arith.constant 7.812500e-03 : f32
    %265 = vector.broadcast %cst_192 : f32 to vector<8x1xf32>
    %266 = arith.mulf %262, %265 : vector<8x1xf32>
    %267 = arith.mulf %264, %264 : vector<8x1xf32>
    %268 = arith.subf %266, %267 : vector<8x1xf32>
    %cst_193 = arith.constant 9.99999974E-6 : f32
    %269 = vector.broadcast %cst_193 : f32 to vector<8x1xf32>
    %270 = arith.addf %268, %269 : vector<8x1xf32>
    %271 = math.rsqrt %270 : vector<8x1xf32>
    %272 = vector.broadcast %264 : vector<8x1xf32> to vector<8x128xf32>
    %273 = arith.subf %253, %272 : vector<8x128xf32>
    %274 = vector.broadcast %271 : vector<8x1xf32> to vector<8x128xf32>
    %275 = arith.mulf %273, %274 : vector<8x128xf32>
    %276 = vector.broadcast %255 : vector<1x128xf32> to vector<8x128xf32>
    %277 = arith.mulf %275, %276 : vector<8x128xf32>
    %278 = vector.broadcast %257 : vector<1x128xf32> to vector<8x128xf32>
    %279 = arith.addf %277, %278 : vector<8x128xf32>
    %c4_194 = arith.constant 4 : index
    %c1_195 = arith.constant 1 : index
    %c0_196 = arith.constant 0 : index
    %c0_197 = arith.constant 0 : index
    %280 = vector.load %arg1[%c4_194, %c1_195, %c0_196, %c0_197] : memref<6x2x8x128xf32, #tpu.memory_space<vmem>>, vector<1x1x8x128xf32>
    %281 = vector.shape_cast %280 : vector<1x1x8x128xf32> to vector<8x128xf32>
    %c4_198 = arith.constant 4 : index
    %c1_199 = arith.constant 1 : index
    %c0_200 = arith.constant 0 : index
    %c0_201 = arith.constant 0 : index
    %282 = vector.load %arg3[%c4_198, %c1_199, %c0_200, %c0_201] : memref<6x2x128x128xf32, #tpu.memory_space<vmem>>, vector<1x1x128x128xf32>
    %283 = vector.shape_cast %282 : vector<1x1x128x128xf32> to vector<128x128xf32>
    %cst_202 = arith.constant dense<0.000000e+00> : vector<8x128xf32>
    %284 = tpu.matmul %281, %283, %cst_202 {dimension_numbers = #tpu.dot_dimension_numbers<[1], [0], [0], [1], [0, 0, 1, 1], [], []>} : vector<8x128xf32>, vector<128x128xf32>, vector<8x128xf32> -> vector<8x128xf32>
    %c4_203 = arith.constant 4 : index
    %c1_204 = arith.constant 1 : index
    %c0_205 = arith.constant 0 : index
    %c0_206 = arith.constant 0 : index
    %285 = vector.load %arg4[%c4_203, %c1_204, %c0_205, %c0_206] : memref<6x2x1x128xf32, #tpu.memory_space<vmem>>, vector<1x1x1x128xf32>
    %286 = vector.shape_cast %285 : vector<1x1x1x128xf32> to vector<1x128xf32>
    %c4_207 = arith.constant 4 : index
    %c1_208 = arith.constant 1 : index
    %c0_209 = arith.constant 0 : index
    %c0_210 = arith.constant 0 : index
    %287 = vector.load %arg5[%c4_207, %c1_208, %c0_209, %c0_210] : memref<6x2x1x128xf32, #tpu.memory_space<vmem>>, vector<1x1x1x128xf32>
    %288 = vector.shape_cast %287 : vector<1x1x1x128xf32> to vector<1x128xf32>
    %cst_211 = arith.constant dense<0.000000e+00> : vector<8xf32>
    %289 = vector.multi_reduction <add>, %284, %cst_211 [1] : vector<8x128xf32> to vector<8xf32>
    %290 = vector.shape_cast %289 : vector<8xf32> to vector<8x1xf32>
    %291 = arith.mulf %284, %284 : vector<8x128xf32>
    %cst_212 = arith.constant dense<0.000000e+00> : vector<8xf32>
    %292 = vector.multi_reduction <add>, %291, %cst_212 [1] : vector<8x128xf32> to vector<8xf32>
    %293 = vector.shape_cast %292 : vector<8xf32> to vector<8x1xf32>
    %cst_213 = arith.constant 7.812500e-03 : f32
    %294 = vector.broadcast %cst_213 : f32 to vector<8x1xf32>
    %295 = arith.mulf %290, %294 : vector<8x1xf32>
    %cst_214 = arith.constant 7.812500e-03 : f32
    %296 = vector.broadcast %cst_214 : f32 to vector<8x1xf32>
    %297 = arith.mulf %293, %296 : vector<8x1xf32>
    %298 = arith.mulf %295, %295 : vector<8x1xf32>
    %299 = arith.subf %297, %298 : vector<8x1xf32>
    %cst_215 = arith.constant 9.99999974E-6 : f32
    %300 = vector.broadcast %cst_215 : f32 to vector<8x1xf32>
    %301 = arith.addf %299, %300 : vector<8x1xf32>
    %302 = math.rsqrt %301 : vector<8x1xf32>
    %303 = vector.broadcast %295 : vector<8x1xf32> to vector<8x128xf32>
    %304 = arith.subf %284, %303 : vector<8x128xf32>
    %305 = vector.broadcast %302 : vector<8x1xf32> to vector<8x128xf32>
    %306 = arith.mulf %304, %305 : vector<8x128xf32>
    %307 = vector.broadcast %286 : vector<1x128xf32> to vector<8x128xf32>
    %308 = arith.mulf %306, %307 : vector<8x128xf32>
    %309 = vector.broadcast %288 : vector<1x128xf32> to vector<8x128xf32>
    %310 = arith.addf %308, %309 : vector<8x128xf32>
    %c5 = arith.constant 5 : index
    %c0_216 = arith.constant 0 : index
    %c0_217 = arith.constant 0 : index
    %c0_218 = arith.constant 0 : index
    %311 = vector.load %arg1[%c5, %c0_216, %c0_217, %c0_218] : memref<6x2x8x128xf32, #tpu.memory_space<vmem>>, vector<1x1x8x128xf32>
    %312 = vector.shape_cast %311 : vector<1x1x8x128xf32> to vector<8x128xf32>
    %c5_219 = arith.constant 5 : index
    %c0_220 = arith.constant 0 : index
    %c0_221 = arith.constant 0 : index
    %c0_222 = arith.constant 0 : index
    %313 = vector.load %arg3[%c5_219, %c0_220, %c0_221, %c0_222] : memref<6x2x128x128xf32, #tpu.memory_space<vmem>>, vector<1x1x128x128xf32>
    %314 = vector.shape_cast %313 : vector<1x1x128x128xf32> to vector<128x128xf32>
    %cst_223 = arith.constant dense<0.000000e+00> : vector<8x128xf32>
    %315 = tpu.matmul %312, %314, %cst_223 {dimension_numbers = #tpu.dot_dimension_numbers<[1], [0], [0], [1], [0, 0, 1, 1], [], []>} : vector<8x128xf32>, vector<128x128xf32>, vector<8x128xf32> -> vector<8x128xf32>
    %c5_224 = arith.constant 5 : index
    %c0_225 = arith.constant 0 : index
    %c0_226 = arith.constant 0 : index
    %c0_227 = arith.constant 0 : index
    %316 = vector.load %arg4[%c5_224, %c0_225, %c0_226, %c0_227] : memref<6x2x1x128xf32, #tpu.memory_space<vmem>>, vector<1x1x1x128xf32>
    %317 = vector.shape_cast %316 : vector<1x1x1x128xf32> to vector<1x128xf32>
    %c5_228 = arith.constant 5 : index
    %c0_229 = arith.constant 0 : index
    %c0_230 = arith.constant 0 : index
    %c0_231 = arith.constant 0 : index
    %318 = vector.load %arg5[%c5_228, %c0_229, %c0_230, %c0_231] : memref<6x2x1x128xf32, #tpu.memory_space<vmem>>, vector<1x1x1x128xf32>
    %319 = vector.shape_cast %318 : vector<1x1x1x128xf32> to vector<1x128xf32>
    %cst_232 = arith.constant dense<0.000000e+00> : vector<8xf32>
    %320 = vector.multi_reduction <add>, %315, %cst_232 [1] : vector<8x128xf32> to vector<8xf32>
    %321 = vector.shape_cast %320 : vector<8xf32> to vector<8x1xf32>
    %322 = arith.mulf %315, %315 : vector<8x128xf32>
    %cst_233 = arith.constant dense<0.000000e+00> : vector<8xf32>
    %323 = vector.multi_reduction <add>, %322, %cst_233 [1] : vector<8x128xf32> to vector<8xf32>
    %324 = vector.shape_cast %323 : vector<8xf32> to vector<8x1xf32>
    %cst_234 = arith.constant 7.812500e-03 : f32
    %325 = vector.broadcast %cst_234 : f32 to vector<8x1xf32>
    %326 = arith.mulf %321, %325 : vector<8x1xf32>
    %cst_235 = arith.constant 7.812500e-03 : f32
    %327 = vector.broadcast %cst_235 : f32 to vector<8x1xf32>
    %328 = arith.mulf %324, %327 : vector<8x1xf32>
    %329 = arith.mulf %326, %326 : vector<8x1xf32>
    %330 = arith.subf %328, %329 : vector<8x1xf32>
    %cst_236 = arith.constant 9.99999974E-6 : f32
    %331 = vector.broadcast %cst_236 : f32 to vector<8x1xf32>
    %332 = arith.addf %330, %331 : vector<8x1xf32>
    %333 = math.rsqrt %332 : vector<8x1xf32>
    %334 = vector.broadcast %326 : vector<8x1xf32> to vector<8x128xf32>
    %335 = arith.subf %315, %334 : vector<8x128xf32>
    %336 = vector.broadcast %333 : vector<8x1xf32> to vector<8x128xf32>
    %337 = arith.mulf %335, %336 : vector<8x128xf32>
    %338 = vector.broadcast %317 : vector<1x128xf32> to vector<8x128xf32>
    %339 = arith.mulf %337, %338 : vector<8x128xf32>
    %340 = vector.broadcast %319 : vector<1x128xf32> to vector<8x128xf32>
    %341 = arith.addf %339, %340 : vector<8x128xf32>
    %c5_237 = arith.constant 5 : index
    %c1_238 = arith.constant 1 : index
    %c0_239 = arith.constant 0 : index
    %c0_240 = arith.constant 0 : index
    %342 = vector.load %arg1[%c5_237, %c1_238, %c0_239, %c0_240] : memref<6x2x8x128xf32, #tpu.memory_space<vmem>>, vector<1x1x8x128xf32>
    %343 = vector.shape_cast %342 : vector<1x1x8x128xf32> to vector<8x128xf32>
    %c5_241 = arith.constant 5 : index
    %c1_242 = arith.constant 1 : index
    %c0_243 = arith.constant 0 : index
    %c0_244 = arith.constant 0 : index
    %344 = vector.load %arg3[%c5_241, %c1_242, %c0_243, %c0_244] : memref<6x2x128x128xf32, #tpu.memory_space<vmem>>, vector<1x1x128x128xf32>
    %345 = vector.shape_cast %344 : vector<1x1x128x128xf32> to vector<128x128xf32>
    %cst_245 = arith.constant dense<0.000000e+00> : vector<8x128xf32>
    %346 = tpu.matmul %343, %345, %cst_245 {dimension_numbers = #tpu.dot_dimension_numbers<[1], [0], [0], [1], [0, 0, 1, 1], [], []>} : vector<8x128xf32>, vector<128x128xf32>, vector<8x128xf32> -> vector<8x128xf32>
    %c5_246 = arith.constant 5 : index
    %c1_247 = arith.constant 1 : index
    %c0_248 = arith.constant 0 : index
    %c0_249 = arith.constant 0 : index
    %347 = vector.load %arg4[%c5_246, %c1_247, %c0_248, %c0_249] : memref<6x2x1x128xf32, #tpu.memory_space<vmem>>, vector<1x1x1x128xf32>
    %348 = vector.shape_cast %347 : vector<1x1x1x128xf32> to vector<1x128xf32>
    %c5_250 = arith.constant 5 : index
    %c1_251 = arith.constant 1 : index
    %c0_252 = arith.constant 0 : index
    %c0_253 = arith.constant 0 : index
    %349 = vector.load %arg5[%c5_250, %c1_251, %c0_252, %c0_253] : memref<6x2x1x128xf32, #tpu.memory_space<vmem>>, vector<1x1x1x128xf32>
    %350 = vector.shape_cast %349 : vector<1x1x1x128xf32> to vector<1x128xf32>
    %cst_254 = arith.constant dense<0.000000e+00> : vector<8xf32>
    %351 = vector.multi_reduction <add>, %346, %cst_254 [1] : vector<8x128xf32> to vector<8xf32>
    %352 = vector.shape_cast %351 : vector<8xf32> to vector<8x1xf32>
    %353 = arith.mulf %346, %346 : vector<8x128xf32>
    %cst_255 = arith.constant dense<0.000000e+00> : vector<8xf32>
    %354 = vector.multi_reduction <add>, %353, %cst_255 [1] : vector<8x128xf32> to vector<8xf32>
    %355 = vector.shape_cast %354 : vector<8xf32> to vector<8x1xf32>
    %cst_256 = arith.constant 7.812500e-03 : f32
    %356 = vector.broadcast %cst_256 : f32 to vector<8x1xf32>
    %357 = arith.mulf %352, %356 : vector<8x1xf32>
    %cst_257 = arith.constant 7.812500e-03 : f32
    %358 = vector.broadcast %cst_257 : f32 to vector<8x1xf32>
    %359 = arith.mulf %355, %358 : vector<8x1xf32>
    %360 = arith.mulf %357, %357 : vector<8x1xf32>
    %361 = arith.subf %359, %360 : vector<8x1xf32>
    %cst_258 = arith.constant 9.99999974E-6 : f32
    %362 = vector.broadcast %cst_258 : f32 to vector<8x1xf32>
    %363 = arith.addf %361, %362 : vector<8x1xf32>
    %364 = math.rsqrt %363 : vector<8x1xf32>
    %365 = vector.broadcast %357 : vector<8x1xf32> to vector<8x128xf32>
    %366 = arith.subf %346, %365 : vector<8x128xf32>
    %367 = vector.broadcast %364 : vector<8x1xf32> to vector<8x128xf32>
    %368 = arith.mulf %366, %367 : vector<8x128xf32>
    %369 = vector.broadcast %348 : vector<1x128xf32> to vector<8x128xf32>
    %370 = arith.mulf %368, %369 : vector<8x128xf32>
    %371 = vector.broadcast %350 : vector<1x128xf32> to vector<8x128xf32>
    %372 = arith.addf %370, %371 : vector<8x128xf32>
    %c0_259 = arith.constant 0 : index
    %c0_260 = arith.constant 0 : index
    %373 = vector.load %arg9[%c0_259, %c0_260] : memref<1x768xf32, #tpu.memory_space<vmem>>, vector<1x768xf32>
    %374 = vector.shape_cast %373 : vector<1x768xf32> to vector<1x768xf32>
    %375 = vector.broadcast %374 : vector<1x768xf32> to vector<8x768xf32>
    %376 = vector.extract_strided_slice %0 {offsets = [0, 0], sizes = [8, 128], strides = [1, 1]} : vector<8x768xf32> to vector<8x128xf32>
    %c0_261 = arith.constant 0 : index
    %c0_262 = arith.constant 0 : index
    %c0_263 = arith.constant 0 : index
    %c0_264 = arith.constant 0 : index
    %377 = vector.load %arg2[%c0_261, %c0_262, %c0_263, %c0_264] : memref<6x2x128x128xf32, #tpu.memory_space<vmem>>, vector<1x1x128x128xf32>
    %378 = vector.shape_cast %377 : vector<1x1x128x128xf32> to vector<128x128xf32>
    %cst_265 = arith.constant dense<0.000000e+00> : vector<8x128xf32>
    %379 = tpu.matmul %376, %378, %cst_265 {dimension_numbers = #tpu.dot_dimension_numbers<[1], [0], [0], [1], [0, 0, 1, 1], [], []>} : vector<8x128xf32>, vector<128x128xf32>, vector<8x128xf32> -> vector<8x128xf32>
    %380 = arith.addf %379, %31 : vector<8x128xf32>
    %cst_266 = arith.constant 0.000000e+00 : f32
    %381 = vector.broadcast %cst_266 : f32 to vector<8x128xf32>
    %382 = arith.maximumf %380, %381 : vector<8x128xf32>
    %c0_267 = arith.constant 0 : index
    %c0_268 = arith.constant 0 : index
    %c0_269 = arith.constant 0 : index
    %c0_270 = arith.constant 0 : index
    %383 = vector.load %arg6[%c0_267, %c0_268, %c0_269, %c0_270] : memref<6x2x1x128xf32, #tpu.memory_space<vmem>>, vector<1x1x1x128xf32>
    %384 = vector.shape_cast %383 : vector<1x1x1x128xf32> to vector<1x128xf32>
    %c0_271 = arith.constant 0 : index
    %c0_272 = arith.constant 0 : index
    %c0_273 = arith.constant 0 : index
    %c0_274 = arith.constant 0 : index
    %385 = vector.load %arg7[%c0_271, %c0_272, %c0_273, %c0_274] : memref<6x2x1x128xf32, #tpu.memory_space<vmem>>, vector<1x1x1x128xf32>
    %386 = vector.shape_cast %385 : vector<1x1x1x128xf32> to vector<1x128xf32>
    %cst_275 = arith.constant dense<0.000000e+00> : vector<8xf32>
    %387 = vector.multi_reduction <add>, %382, %cst_275 [1] : vector<8x128xf32> to vector<8xf32>
    %388 = vector.shape_cast %387 : vector<8xf32> to vector<8x1xf32>
    %389 = arith.mulf %382, %382 : vector<8x128xf32>
    %cst_276 = arith.constant dense<0.000000e+00> : vector<8xf32>
    %390 = vector.multi_reduction <add>, %389, %cst_276 [1] : vector<8x128xf32> to vector<8xf32>
    %391 = vector.shape_cast %390 : vector<8xf32> to vector<8x1xf32>
    %cst_277 = arith.constant 7.812500e-03 : f32
    %392 = vector.broadcast %cst_277 : f32 to vector<8x1xf32>
    %393 = arith.mulf %388, %392 : vector<8x1xf32>
    %cst_278 = arith.constant 7.812500e-03 : f32
    %394 = vector.broadcast %cst_278 : f32 to vector<8x1xf32>
    %395 = arith.mulf %391, %394 : vector<8x1xf32>
    %396 = arith.mulf %393, %393 : vector<8x1xf32>
    %397 = arith.subf %395, %396 : vector<8x1xf32>
    %cst_279 = arith.constant 9.99999974E-6 : f32
    %398 = vector.broadcast %cst_279 : f32 to vector<8x1xf32>
    %399 = arith.addf %397, %398 : vector<8x1xf32>
    %400 = math.rsqrt %399 : vector<8x1xf32>
    %401 = vector.broadcast %393 : vector<8x1xf32> to vector<8x128xf32>
    %402 = arith.subf %382, %401 : vector<8x128xf32>
    %403 = vector.broadcast %400 : vector<8x1xf32> to vector<8x128xf32>
    %404 = arith.mulf %402, %403 : vector<8x128xf32>
    %405 = vector.broadcast %384 : vector<1x128xf32> to vector<8x128xf32>
    %406 = arith.mulf %404, %405 : vector<8x128xf32>
    %407 = vector.broadcast %386 : vector<1x128xf32> to vector<8x128xf32>
    %408 = arith.addf %406, %407 : vector<8x128xf32>
    %c0_280 = arith.constant 0 : index
    %c1_281 = arith.constant 1 : index
    %c0_282 = arith.constant 0 : index
    %c0_283 = arith.constant 0 : index
    %409 = vector.load %arg2[%c0_280, %c1_281, %c0_282, %c0_283] : memref<6x2x128x128xf32, #tpu.memory_space<vmem>>, vector<1x1x128x128xf32>
    %410 = vector.shape_cast %409 : vector<1x1x128x128xf32> to vector<128x128xf32>
    %cst_284 = arith.constant dense<0.000000e+00> : vector<8x128xf32>
    %411 = tpu.matmul %408, %410, %cst_284 {dimension_numbers = #tpu.dot_dimension_numbers<[1], [0], [0], [1], [0, 0, 1, 1], [], []>} : vector<8x128xf32>, vector<128x128xf32>, vector<8x128xf32> -> vector<8x128xf32>
    %412 = arith.addf %411, %62 : vector<8x128xf32>
    %cst_285 = arith.constant 0.000000e+00 : f32
    %413 = vector.broadcast %cst_285 : f32 to vector<8x128xf32>
    %414 = arith.maximumf %412, %413 : vector<8x128xf32>
    %c0_286 = arith.constant 0 : index
    %c1_287 = arith.constant 1 : index
    %c0_288 = arith.constant 0 : index
    %c0_289 = arith.constant 0 : index
    %415 = vector.load %arg6[%c0_286, %c1_287, %c0_288, %c0_289] : memref<6x2x1x128xf32, #tpu.memory_space<vmem>>, vector<1x1x1x128xf32>
    %416 = vector.shape_cast %415 : vector<1x1x1x128xf32> to vector<1x128xf32>
    %c0_290 = arith.constant 0 : index
    %c1_291 = arith.constant 1 : index
    %c0_292 = arith.constant 0 : index
    %c0_293 = arith.constant 0 : index
    %417 = vector.load %arg7[%c0_290, %c1_291, %c0_292, %c0_293] : memref<6x2x1x128xf32, #tpu.memory_space<vmem>>, vector<1x1x1x128xf32>
    %418 = vector.shape_cast %417 : vector<1x1x1x128xf32> to vector<1x128xf32>
    %cst_294 = arith.constant dense<0.000000e+00> : vector<8xf32>
    %419 = vector.multi_reduction <add>, %414, %cst_294 [1] : vector<8x128xf32> to vector<8xf32>
    %420 = vector.shape_cast %419 : vector<8xf32> to vector<8x1xf32>
    %421 = arith.mulf %414, %414 : vector<8x128xf32>
    %cst_295 = arith.constant dense<0.000000e+00> : vector<8xf32>
    %422 = vector.multi_reduction <add>, %421, %cst_295 [1] : vector<8x128xf32> to vector<8xf32>
    %423 = vector.shape_cast %422 : vector<8xf32> to vector<8x1xf32>
    %cst_296 = arith.constant 7.812500e-03 : f32
    %424 = vector.broadcast %cst_296 : f32 to vector<8x1xf32>
    %425 = arith.mulf %420, %424 : vector<8x1xf32>
    %cst_297 = arith.constant 7.812500e-03 : f32
    %426 = vector.broadcast %cst_297 : f32 to vector<8x1xf32>
    %427 = arith.mulf %423, %426 : vector<8x1xf32>
    %428 = arith.mulf %425, %425 : vector<8x1xf32>
    %429 = arith.subf %427, %428 : vector<8x1xf32>
    %cst_298 = arith.constant 9.99999974E-6 : f32
    %430 = vector.broadcast %cst_298 : f32 to vector<8x1xf32>
    %431 = arith.addf %429, %430 : vector<8x1xf32>
    %432 = math.rsqrt %431 : vector<8x1xf32>
    %433 = vector.broadcast %425 : vector<8x1xf32> to vector<8x128xf32>
    %434 = arith.subf %414, %433 : vector<8x128xf32>
    %435 = vector.broadcast %432 : vector<8x1xf32> to vector<8x128xf32>
    %436 = arith.mulf %434, %435 : vector<8x128xf32>
    %437 = vector.broadcast %416 : vector<1x128xf32> to vector<8x128xf32>
    %438 = arith.mulf %436, %437 : vector<8x128xf32>
    %439 = vector.broadcast %418 : vector<1x128xf32> to vector<8x128xf32>
    %440 = arith.addf %438, %439 : vector<8x128xf32>
    %c0_299 = arith.constant 0 : index
    %c0_300 = arith.constant 0 : index
    %441 = vector.load %arg8[%c0_299, %c0_300] : memref<768x768xf32, #tpu.memory_space<vmem>>, vector<128x768xf32>
    %cst_301 = arith.constant dense<0.000000e+00> : vector<8x768xf32>
    %442 = tpu.matmul %440, %441, %cst_301 {dimension_numbers = #tpu.dot_dimension_numbers<[1], [0], [0], [1], [0, 0, 1, 1], [], []>} : vector<8x128xf32>, vector<128x768xf32>, vector<8x768xf32> -> vector<8x768xf32>
    %443 = arith.addf %375, %442 : vector<8x768xf32>
    %444 = vector.extract_strided_slice %0 {offsets = [0, 128], sizes = [8, 128], strides = [1, 1]} : vector<8x768xf32> to vector<8x128xf32>
    %c1_302 = arith.constant 1 : index
    %c0_303 = arith.constant 0 : index
    %c0_304 = arith.constant 0 : index
    %c0_305 = arith.constant 0 : index
    %445 = vector.load %arg2[%c1_302, %c0_303, %c0_304, %c0_305] : memref<6x2x128x128xf32, #tpu.memory_space<vmem>>, vector<1x1x128x128xf32>
    %446 = vector.shape_cast %445 : vector<1x1x128x128xf32> to vector<128x128xf32>
    %cst_306 = arith.constant dense<0.000000e+00> : vector<8x128xf32>
    %447 = tpu.matmul %444, %446, %cst_306 {dimension_numbers = #tpu.dot_dimension_numbers<[1], [0], [0], [1], [0, 0, 1, 1], [], []>} : vector<8x128xf32>, vector<128x128xf32>, vector<8x128xf32> -> vector<8x128xf32>
    %448 = arith.addf %447, %93 : vector<8x128xf32>
    %cst_307 = arith.constant 0.000000e+00 : f32
    %449 = vector.broadcast %cst_307 : f32 to vector<8x128xf32>
    %450 = arith.maximumf %448, %449 : vector<8x128xf32>
    %c1_308 = arith.constant 1 : index
    %c0_309 = arith.constant 0 : index
    %c0_310 = arith.constant 0 : index
    %c0_311 = arith.constant 0 : index
    %451 = vector.load %arg6[%c1_308, %c0_309, %c0_310, %c0_311] : memref<6x2x1x128xf32, #tpu.memory_space<vmem>>, vector<1x1x1x128xf32>
    %452 = vector.shape_cast %451 : vector<1x1x1x128xf32> to vector<1x128xf32>
    %c1_312 = arith.constant 1 : index
    %c0_313 = arith.constant 0 : index
    %c0_314 = arith.constant 0 : index
    %c0_315 = arith.constant 0 : index
    %453 = vector.load %arg7[%c1_312, %c0_313, %c0_314, %c0_315] : memref<6x2x1x128xf32, #tpu.memory_space<vmem>>, vector<1x1x1x128xf32>
    %454 = vector.shape_cast %453 : vector<1x1x1x128xf32> to vector<1x128xf32>
    %cst_316 = arith.constant dense<0.000000e+00> : vector<8xf32>
    %455 = vector.multi_reduction <add>, %450, %cst_316 [1] : vector<8x128xf32> to vector<8xf32>
    %456 = vector.shape_cast %455 : vector<8xf32> to vector<8x1xf32>
    %457 = arith.mulf %450, %450 : vector<8x128xf32>
    %cst_317 = arith.constant dense<0.000000e+00> : vector<8xf32>
    %458 = vector.multi_reduction <add>, %457, %cst_317 [1] : vector<8x128xf32> to vector<8xf32>
    %459 = vector.shape_cast %458 : vector<8xf32> to vector<8x1xf32>
    %cst_318 = arith.constant 7.812500e-03 : f32
    %460 = vector.broadcast %cst_318 : f32 to vector<8x1xf32>
    %461 = arith.mulf %456, %460 : vector<8x1xf32>
    %cst_319 = arith.constant 7.812500e-03 : f32
    %462 = vector.broadcast %cst_319 : f32 to vector<8x1xf32>
    %463 = arith.mulf %459, %462 : vector<8x1xf32>
    %464 = arith.mulf %461, %461 : vector<8x1xf32>
    %465 = arith.subf %463, %464 : vector<8x1xf32>
    %cst_320 = arith.constant 9.99999974E-6 : f32
    %466 = vector.broadcast %cst_320 : f32 to vector<8x1xf32>
    %467 = arith.addf %465, %466 : vector<8x1xf32>
    %468 = math.rsqrt %467 : vector<8x1xf32>
    %469 = vector.broadcast %461 : vector<8x1xf32> to vector<8x128xf32>
    %470 = arith.subf %450, %469 : vector<8x128xf32>
    %471 = vector.broadcast %468 : vector<8x1xf32> to vector<8x128xf32>
    %472 = arith.mulf %470, %471 : vector<8x128xf32>
    %473 = vector.broadcast %452 : vector<1x128xf32> to vector<8x128xf32>
    %474 = arith.mulf %472, %473 : vector<8x128xf32>
    %475 = vector.broadcast %454 : vector<1x128xf32> to vector<8x128xf32>
    %476 = arith.addf %474, %475 : vector<8x128xf32>
    %c1_321 = arith.constant 1 : index
    %c1_322 = arith.constant 1 : index
    %c0_323 = arith.constant 0 : index
    %c0_324 = arith.constant 0 : index
    %477 = vector.load %arg2[%c1_321, %c1_322, %c0_323, %c0_324] : memref<6x2x128x128xf32, #tpu.memory_space<vmem>>, vector<1x1x128x128xf32>
    %478 = vector.shape_cast %477 : vector<1x1x128x128xf32> to vector<128x128xf32>
    %cst_325 = arith.constant dense<0.000000e+00> : vector<8x128xf32>
    %479 = tpu.matmul %476, %478, %cst_325 {dimension_numbers = #tpu.dot_dimension_numbers<[1], [0], [0], [1], [0, 0, 1, 1], [], []>} : vector<8x128xf32>, vector<128x128xf32>, vector<8x128xf32> -> vector<8x128xf32>
    %480 = arith.addf %479, %124 : vector<8x128xf32>
    %cst_326 = arith.constant 0.000000e+00 : f32
    %481 = vector.broadcast %cst_326 : f32 to vector<8x128xf32>
    %482 = arith.maximumf %480, %481 : vector<8x128xf32>
    %c1_327 = arith.constant 1 : index
    %c1_328 = arith.constant 1 : index
    %c0_329 = arith.constant 0 : index
    %c0_330 = arith.constant 0 : index
    %483 = vector.load %arg6[%c1_327, %c1_328, %c0_329, %c0_330] : memref<6x2x1x128xf32, #tpu.memory_space<vmem>>, vector<1x1x1x128xf32>
    %484 = vector.shape_cast %483 : vector<1x1x1x128xf32> to vector<1x128xf32>
    %c1_331 = arith.constant 1 : index
    %c1_332 = arith.constant 1 : index
    %c0_333 = arith.constant 0 : index
    %c0_334 = arith.constant 0 : index
    %485 = vector.load %arg7[%c1_331, %c1_332, %c0_333, %c0_334] : memref<6x2x1x128xf32, #tpu.memory_space<vmem>>, vector<1x1x1x128xf32>
    %486 = vector.shape_cast %485 : vector<1x1x1x128xf32> to vector<1x128xf32>
    %cst_335 = arith.constant dense<0.000000e+00> : vector<8xf32>
    %487 = vector.multi_reduction <add>, %482, %cst_335 [1] : vector<8x128xf32> to vector<8xf32>
    %488 = vector.shape_cast %487 : vector<8xf32> to vector<8x1xf32>
    %489 = arith.mulf %482, %482 : vector<8x128xf32>
    %cst_336 = arith.constant dense<0.000000e+00> : vector<8xf32>
    %490 = vector.multi_reduction <add>, %489, %cst_336 [1] : vector<8x128xf32> to vector<8xf32>
    %491 = vector.shape_cast %490 : vector<8xf32> to vector<8x1xf32>
    %cst_337 = arith.constant 7.812500e-03 : f32
    %492 = vector.broadcast %cst_337 : f32 to vector<8x1xf32>
    %493 = arith.mulf %488, %492 : vector<8x1xf32>
    %cst_338 = arith.constant 7.812500e-03 : f32
    %494 = vector.broadcast %cst_338 : f32 to vector<8x1xf32>
    %495 = arith.mulf %491, %494 : vector<8x1xf32>
    %496 = arith.mulf %493, %493 : vector<8x1xf32>
    %497 = arith.subf %495, %496 : vector<8x1xf32>
    %cst_339 = arith.constant 9.99999974E-6 : f32
    %498 = vector.broadcast %cst_339 : f32 to vector<8x1xf32>
    %499 = arith.addf %497, %498 : vector<8x1xf32>
    %500 = math.rsqrt %499 : vector<8x1xf32>
    %501 = vector.broadcast %493 : vector<8x1xf32> to vector<8x128xf32>
    %502 = arith.subf %482, %501 : vector<8x128xf32>
    %503 = vector.broadcast %500 : vector<8x1xf32> to vector<8x128xf32>
    %504 = arith.mulf %502, %503 : vector<8x128xf32>
    %505 = vector.broadcast %484 : vector<1x128xf32> to vector<8x128xf32>
    %506 = arith.mulf %504, %505 : vector<8x128xf32>
    %507 = vector.broadcast %486 : vector<1x128xf32> to vector<8x128xf32>
    %508 = arith.addf %506, %507 : vector<8x128xf32>
    %c128 = arith.constant 128 : index
    %c0_340 = arith.constant 0 : index
    %509 = vector.load %arg8[%c128, %c0_340] : memref<768x768xf32, #tpu.memory_space<vmem>>, vector<128x768xf32>
    %cst_341 = arith.constant dense<0.000000e+00> : vector<8x768xf32>
    %510 = tpu.matmul %508, %509, %cst_341 {dimension_numbers = #tpu.dot_dimension_numbers<[1], [0], [0], [1], [0, 0, 1, 1], [], []>} : vector<8x128xf32>, vector<128x768xf32>, vector<8x768xf32> -> vector<8x768xf32>
    %511 = arith.addf %443, %510 : vector<8x768xf32>
    %512 = vector.extract_strided_slice %0 {offsets = [0, 256], sizes = [8, 128], strides = [1, 1]} : vector<8x768xf32> to vector<8x128xf32>
    %c2_342 = arith.constant 2 : index
    %c0_343 = arith.constant 0 : index
    %c0_344 = arith.constant 0 : index
    %c0_345 = arith.constant 0 : index
    %513 = vector.load %arg2[%c2_342, %c0_343, %c0_344, %c0_345] : memref<6x2x128x128xf32, #tpu.memory_space<vmem>>, vector<1x1x128x128xf32>
    %514 = vector.shape_cast %513 : vector<1x1x128x128xf32> to vector<128x128xf32>
    %cst_346 = arith.constant dense<0.000000e+00> : vector<8x128xf32>
    %515 = tpu.matmul %512, %514, %cst_346 {dimension_numbers = #tpu.dot_dimension_numbers<[1], [0], [0], [1], [0, 0, 1, 1], [], []>} : vector<8x128xf32>, vector<128x128xf32>, vector<8x128xf32> -> vector<8x128xf32>
    %516 = arith.addf %515, %155 : vector<8x128xf32>
    %cst_347 = arith.constant 0.000000e+00 : f32
    %517 = vector.broadcast %cst_347 : f32 to vector<8x128xf32>
    %518 = arith.maximumf %516, %517 : vector<8x128xf32>
    %c2_348 = arith.constant 2 : index
    %c0_349 = arith.constant 0 : index
    %c0_350 = arith.constant 0 : index
    %c0_351 = arith.constant 0 : index
    %519 = vector.load %arg6[%c2_348, %c0_349, %c0_350, %c0_351] : memref<6x2x1x128xf32, #tpu.memory_space<vmem>>, vector<1x1x1x128xf32>
    %520 = vector.shape_cast %519 : vector<1x1x1x128xf32> to vector<1x128xf32>
    %c2_352 = arith.constant 2 : index
    %c0_353 = arith.constant 0 : index
    %c0_354 = arith.constant 0 : index
    %c0_355 = arith.constant 0 : index
    %521 = vector.load %arg7[%c2_352, %c0_353, %c0_354, %c0_355] : memref<6x2x1x128xf32, #tpu.memory_space<vmem>>, vector<1x1x1x128xf32>
    %522 = vector.shape_cast %521 : vector<1x1x1x128xf32> to vector<1x128xf32>
    %cst_356 = arith.constant dense<0.000000e+00> : vector<8xf32>
    %523 = vector.multi_reduction <add>, %518, %cst_356 [1] : vector<8x128xf32> to vector<8xf32>
    %524 = vector.shape_cast %523 : vector<8xf32> to vector<8x1xf32>
    %525 = arith.mulf %518, %518 : vector<8x128xf32>
    %cst_357 = arith.constant dense<0.000000e+00> : vector<8xf32>
    %526 = vector.multi_reduction <add>, %525, %cst_357 [1] : vector<8x128xf32> to vector<8xf32>
    %527 = vector.shape_cast %526 : vector<8xf32> to vector<8x1xf32>
    %cst_358 = arith.constant 7.812500e-03 : f32
    %528 = vector.broadcast %cst_358 : f32 to vector<8x1xf32>
    %529 = arith.mulf %524, %528 : vector<8x1xf32>
    %cst_359 = arith.constant 7.812500e-03 : f32
    %530 = vector.broadcast %cst_359 : f32 to vector<8x1xf32>
    %531 = arith.mulf %527, %530 : vector<8x1xf32>
    %532 = arith.mulf %529, %529 : vector<8x1xf32>
    %533 = arith.subf %531, %532 : vector<8x1xf32>
    %cst_360 = arith.constant 9.99999974E-6 : f32
    %534 = vector.broadcast %cst_360 : f32 to vector<8x1xf32>
    %535 = arith.addf %533, %534 : vector<8x1xf32>
    %536 = math.rsqrt %535 : vector<8x1xf32>
    %537 = vector.broadcast %529 : vector<8x1xf32> to vector<8x128xf32>
    %538 = arith.subf %518, %537 : vector<8x128xf32>
    %539 = vector.broadcast %536 : vector<8x1xf32> to vector<8x128xf32>
    %540 = arith.mulf %538, %539 : vector<8x128xf32>
    %541 = vector.broadcast %520 : vector<1x128xf32> to vector<8x128xf32>
    %542 = arith.mulf %540, %541 : vector<8x128xf32>
    %543 = vector.broadcast %522 : vector<1x128xf32> to vector<8x128xf32>
    %544 = arith.addf %542, %543 : vector<8x128xf32>
    %c2_361 = arith.constant 2 : index
    %c1_362 = arith.constant 1 : index
    %c0_363 = arith.constant 0 : index
    %c0_364 = arith.constant 0 : index
    %545 = vector.load %arg2[%c2_361, %c1_362, %c0_363, %c0_364] : memref<6x2x128x128xf32, #tpu.memory_space<vmem>>, vector<1x1x128x128xf32>
    %546 = vector.shape_cast %545 : vector<1x1x128x128xf32> to vector<128x128xf32>
    %cst_365 = arith.constant dense<0.000000e+00> : vector<8x128xf32>
    %547 = tpu.matmul %544, %546, %cst_365 {dimension_numbers = #tpu.dot_dimension_numbers<[1], [0], [0], [1], [0, 0, 1, 1], [], []>} : vector<8x128xf32>, vector<128x128xf32>, vector<8x128xf32> -> vector<8x128xf32>
    %548 = arith.addf %547, %186 : vector<8x128xf32>
    %cst_366 = arith.constant 0.000000e+00 : f32
    %549 = vector.broadcast %cst_366 : f32 to vector<8x128xf32>
    %550 = arith.maximumf %548, %549 : vector<8x128xf32>
    %c2_367 = arith.constant 2 : index
    %c1_368 = arith.constant 1 : index
    %c0_369 = arith.constant 0 : index
    %c0_370 = arith.constant 0 : index
    %551 = vector.load %arg6[%c2_367, %c1_368, %c0_369, %c0_370] : memref<6x2x1x128xf32, #tpu.memory_space<vmem>>, vector<1x1x1x128xf32>
    %552 = vector.shape_cast %551 : vector<1x1x1x128xf32> to vector<1x128xf32>
    %c2_371 = arith.constant 2 : index
    %c1_372 = arith.constant 1 : index
    %c0_373 = arith.constant 0 : index
    %c0_374 = arith.constant 0 : index
    %553 = vector.load %arg7[%c2_371, %c1_372, %c0_373, %c0_374] : memref<6x2x1x128xf32, #tpu.memory_space<vmem>>, vector<1x1x1x128xf32>
    %554 = vector.shape_cast %553 : vector<1x1x1x128xf32> to vector<1x128xf32>
    %cst_375 = arith.constant dense<0.000000e+00> : vector<8xf32>
    %555 = vector.multi_reduction <add>, %550, %cst_375 [1] : vector<8x128xf32> to vector<8xf32>
    %556 = vector.shape_cast %555 : vector<8xf32> to vector<8x1xf32>
    %557 = arith.mulf %550, %550 : vector<8x128xf32>
    %cst_376 = arith.constant dense<0.000000e+00> : vector<8xf32>
    %558 = vector.multi_reduction <add>, %557, %cst_376 [1] : vector<8x128xf32> to vector<8xf32>
    %559 = vector.shape_cast %558 : vector<8xf32> to vector<8x1xf32>
    %cst_377 = arith.constant 7.812500e-03 : f32
    %560 = vector.broadcast %cst_377 : f32 to vector<8x1xf32>
    %561 = arith.mulf %556, %560 : vector<8x1xf32>
    %cst_378 = arith.constant 7.812500e-03 : f32
    %562 = vector.broadcast %cst_378 : f32 to vector<8x1xf32>
    %563 = arith.mulf %559, %562 : vector<8x1xf32>
    %564 = arith.mulf %561, %561 : vector<8x1xf32>
    %565 = arith.subf %563, %564 : vector<8x1xf32>
    %cst_379 = arith.constant 9.99999974E-6 : f32
    %566 = vector.broadcast %cst_379 : f32 to vector<8x1xf32>
    %567 = arith.addf %565, %566 : vector<8x1xf32>
    %568 = math.rsqrt %567 : vector<8x1xf32>
    %569 = vector.broadcast %561 : vector<8x1xf32> to vector<8x128xf32>
    %570 = arith.subf %550, %569 : vector<8x128xf32>
    %571 = vector.broadcast %568 : vector<8x1xf32> to vector<8x128xf32>
    %572 = arith.mulf %570, %571 : vector<8x128xf32>
    %573 = vector.broadcast %552 : vector<1x128xf32> to vector<8x128xf32>
    %574 = arith.mulf %572, %573 : vector<8x128xf32>
    %575 = vector.broadcast %554 : vector<1x128xf32> to vector<8x128xf32>
    %576 = arith.addf %574, %575 : vector<8x128xf32>
    %c256 = arith.constant 256 : index
    %c0_380 = arith.constant 0 : index
    %577 = vector.load %arg8[%c256, %c0_380] : memref<768x768xf32, #tpu.memory_space<vmem>>, vector<128x768xf32>
    %cst_381 = arith.constant dense<0.000000e+00> : vector<8x768xf32>
    %578 = tpu.matmul %576, %577, %cst_381 {dimension_numbers = #tpu.dot_dimension_numbers<[1], [0], [0], [1], [0, 0, 1, 1], [], []>} : vector<8x128xf32>, vector<128x768xf32>, vector<8x768xf32> -> vector<8x768xf32>
    %579 = arith.addf %511, %578 : vector<8x768xf32>
    %580 = vector.extract_strided_slice %0 {offsets = [0, 384], sizes = [8, 128], strides = [1, 1]} : vector<8x768xf32> to vector<8x128xf32>
    %c3_382 = arith.constant 3 : index
    %c0_383 = arith.constant 0 : index
    %c0_384 = arith.constant 0 : index
    %c0_385 = arith.constant 0 : index
    %581 = vector.load %arg2[%c3_382, %c0_383, %c0_384, %c0_385] : memref<6x2x128x128xf32, #tpu.memory_space<vmem>>, vector<1x1x128x128xf32>
    %582 = vector.shape_cast %581 : vector<1x1x128x128xf32> to vector<128x128xf32>
    %cst_386 = arith.constant dense<0.000000e+00> : vector<8x128xf32>
    %583 = tpu.matmul %580, %582, %cst_386 {dimension_numbers = #tpu.dot_dimension_numbers<[1], [0], [0], [1], [0, 0, 1, 1], [], []>} : vector<8x128xf32>, vector<128x128xf32>, vector<8x128xf32> -> vector<8x128xf32>
    %584 = arith.addf %583, %217 : vector<8x128xf32>
    %cst_387 = arith.constant 0.000000e+00 : f32
    %585 = vector.broadcast %cst_387 : f32 to vector<8x128xf32>
    %586 = arith.maximumf %584, %585 : vector<8x128xf32>
    %c3_388 = arith.constant 3 : index
    %c0_389 = arith.constant 0 : index
    %c0_390 = arith.constant 0 : index
    %c0_391 = arith.constant 0 : index
    %587 = vector.load %arg6[%c3_388, %c0_389, %c0_390, %c0_391] : memref<6x2x1x128xf32, #tpu.memory_space<vmem>>, vector<1x1x1x128xf32>
    %588 = vector.shape_cast %587 : vector<1x1x1x128xf32> to vector<1x128xf32>
    %c3_392 = arith.constant 3 : index
    %c0_393 = arith.constant 0 : index
    %c0_394 = arith.constant 0 : index
    %c0_395 = arith.constant 0 : index
    %589 = vector.load %arg7[%c3_392, %c0_393, %c0_394, %c0_395] : memref<6x2x1x128xf32, #tpu.memory_space<vmem>>, vector<1x1x1x128xf32>
    %590 = vector.shape_cast %589 : vector<1x1x1x128xf32> to vector<1x128xf32>
    %cst_396 = arith.constant dense<0.000000e+00> : vector<8xf32>
    %591 = vector.multi_reduction <add>, %586, %cst_396 [1] : vector<8x128xf32> to vector<8xf32>
    %592 = vector.shape_cast %591 : vector<8xf32> to vector<8x1xf32>
    %593 = arith.mulf %586, %586 : vector<8x128xf32>
    %cst_397 = arith.constant dense<0.000000e+00> : vector<8xf32>
    %594 = vector.multi_reduction <add>, %593, %cst_397 [1] : vector<8x128xf32> to vector<8xf32>
    %595 = vector.shape_cast %594 : vector<8xf32> to vector<8x1xf32>
    %cst_398 = arith.constant 7.812500e-03 : f32
    %596 = vector.broadcast %cst_398 : f32 to vector<8x1xf32>
    %597 = arith.mulf %592, %596 : vector<8x1xf32>
    %cst_399 = arith.constant 7.812500e-03 : f32
    %598 = vector.broadcast %cst_399 : f32 to vector<8x1xf32>
    %599 = arith.mulf %595, %598 : vector<8x1xf32>
    %600 = arith.mulf %597, %597 : vector<8x1xf32>
    %601 = arith.subf %599, %600 : vector<8x1xf32>
    %cst_400 = arith.constant 9.99999974E-6 : f32
    %602 = vector.broadcast %cst_400 : f32 to vector<8x1xf32>
    %603 = arith.addf %601, %602 : vector<8x1xf32>
    %604 = math.rsqrt %603 : vector<8x1xf32>
    %605 = vector.broadcast %597 : vector<8x1xf32> to vector<8x128xf32>
    %606 = arith.subf %586, %605 : vector<8x128xf32>
    %607 = vector.broadcast %604 : vector<8x1xf32> to vector<8x128xf32>
    %608 = arith.mulf %606, %607 : vector<8x128xf32>
    %609 = vector.broadcast %588 : vector<1x128xf32> to vector<8x128xf32>
    %610 = arith.mulf %608, %609 : vector<8x128xf32>
    %611 = vector.broadcast %590 : vector<1x128xf32> to vector<8x128xf32>
    %612 = arith.addf %610, %611 : vector<8x128xf32>
    %c3_401 = arith.constant 3 : index
    %c1_402 = arith.constant 1 : index
    %c0_403 = arith.constant 0 : index
    %c0_404 = arith.constant 0 : index
    %613 = vector.load %arg2[%c3_401, %c1_402, %c0_403, %c0_404] : memref<6x2x128x128xf32, #tpu.memory_space<vmem>>, vector<1x1x128x128xf32>
    %614 = vector.shape_cast %613 : vector<1x1x128x128xf32> to vector<128x128xf32>
    %cst_405 = arith.constant dense<0.000000e+00> : vector<8x128xf32>
    %615 = tpu.matmul %612, %614, %cst_405 {dimension_numbers = #tpu.dot_dimension_numbers<[1], [0], [0], [1], [0, 0, 1, 1], [], []>} : vector<8x128xf32>, vector<128x128xf32>, vector<8x128xf32> -> vector<8x128xf32>
    %616 = arith.addf %615, %248 : vector<8x128xf32>
    %cst_406 = arith.constant 0.000000e+00 : f32
    %617 = vector.broadcast %cst_406 : f32 to vector<8x128xf32>
    %618 = arith.maximumf %616, %617 : vector<8x128xf32>
    %c3_407 = arith.constant 3 : index
    %c1_408 = arith.constant 1 : index
    %c0_409 = arith.constant 0 : index
    %c0_410 = arith.constant 0 : index
    %619 = vector.load %arg6[%c3_407, %c1_408, %c0_409, %c0_410] : memref<6x2x1x128xf32, #tpu.memory_space<vmem>>, vector<1x1x1x128xf32>
    %620 = vector.shape_cast %619 : vector<1x1x1x128xf32> to vector<1x128xf32>
    %c3_411 = arith.constant 3 : index
    %c1_412 = arith.constant 1 : index
    %c0_413 = arith.constant 0 : index
    %c0_414 = arith.constant 0 : index
    %621 = vector.load %arg7[%c3_411, %c1_412, %c0_413, %c0_414] : memref<6x2x1x128xf32, #tpu.memory_space<vmem>>, vector<1x1x1x128xf32>
    %622 = vector.shape_cast %621 : vector<1x1x1x128xf32> to vector<1x128xf32>
    %cst_415 = arith.constant dense<0.000000e+00> : vector<8xf32>
    %623 = vector.multi_reduction <add>, %618, %cst_415 [1] : vector<8x128xf32> to vector<8xf32>
    %624 = vector.shape_cast %623 : vector<8xf32> to vector<8x1xf32>
    %625 = arith.mulf %618, %618 : vector<8x128xf32>
    %cst_416 = arith.constant dense<0.000000e+00> : vector<8xf32>
    %626 = vector.multi_reduction <add>, %625, %cst_416 [1] : vector<8x128xf32> to vector<8xf32>
    %627 = vector.shape_cast %626 : vector<8xf32> to vector<8x1xf32>
    %cst_417 = arith.constant 7.812500e-03 : f32
    %628 = vector.broadcast %cst_417 : f32 to vector<8x1xf32>
    %629 = arith.mulf %624, %628 : vector<8x1xf32>
    %cst_418 = arith.constant 7.812500e-03 : f32
    %630 = vector.broadcast %cst_418 : f32 to vector<8x1xf32>
    %631 = arith.mulf %627, %630 : vector<8x1xf32>
    %632 = arith.mulf %629, %629 : vector<8x1xf32>
    %633 = arith.subf %631, %632 : vector<8x1xf32>
    %cst_419 = arith.constant 9.99999974E-6 : f32
    %634 = vector.broadcast %cst_419 : f32 to vector<8x1xf32>
    %635 = arith.addf %633, %634 : vector<8x1xf32>
    %636 = math.rsqrt %635 : vector<8x1xf32>
    %637 = vector.broadcast %629 : vector<8x1xf32> to vector<8x128xf32>
    %638 = arith.subf %618, %637 : vector<8x128xf32>
    %639 = vector.broadcast %636 : vector<8x1xf32> to vector<8x128xf32>
    %640 = arith.mulf %638, %639 : vector<8x128xf32>
    %641 = vector.broadcast %620 : vector<1x128xf32> to vector<8x128xf32>
    %642 = arith.mulf %640, %641 : vector<8x128xf32>
    %643 = vector.broadcast %622 : vector<1x128xf32> to vector<8x128xf32>
    %644 = arith.addf %642, %643 : vector<8x128xf32>
    %c384 = arith.constant 384 : index
    %c0_420 = arith.constant 0 : index
    %645 = vector.load %arg8[%c384, %c0_420] : memref<768x768xf32, #tpu.memory_space<vmem>>, vector<128x768xf32>
    %cst_421 = arith.constant dense<0.000000e+00> : vector<8x768xf32>
    %646 = tpu.matmul %644, %645, %cst_421 {dimension_numbers = #tpu.dot_dimension_numbers<[1], [0], [0], [1], [0, 0, 1, 1], [], []>} : vector<8x128xf32>, vector<128x768xf32>, vector<8x768xf32> -> vector<8x768xf32>
    %647 = arith.addf %579, %646 : vector<8x768xf32>
    %648 = vector.extract_strided_slice %0 {offsets = [0, 512], sizes = [8, 128], strides = [1, 1]} : vector<8x768xf32> to vector<8x128xf32>
    %c4_422 = arith.constant 4 : index
    %c0_423 = arith.constant 0 : index
    %c0_424 = arith.constant 0 : index
    %c0_425 = arith.constant 0 : index
    %649 = vector.load %arg2[%c4_422, %c0_423, %c0_424, %c0_425] : memref<6x2x128x128xf32, #tpu.memory_space<vmem>>, vector<1x1x128x128xf32>
    %650 = vector.shape_cast %649 : vector<1x1x128x128xf32> to vector<128x128xf32>
    %cst_426 = arith.constant dense<0.000000e+00> : vector<8x128xf32>
    %651 = tpu.matmul %648, %650, %cst_426 {dimension_numbers = #tpu.dot_dimension_numbers<[1], [0], [0], [1], [0, 0, 1, 1], [], []>} : vector<8x128xf32>, vector<128x128xf32>, vector<8x128xf32> -> vector<8x128xf32>
    %652 = arith.addf %651, %279 : vector<8x128xf32>
    %cst_427 = arith.constant 0.000000e+00 : f32
    %653 = vector.broadcast %cst_427 : f32 to vector<8x128xf32>
    %654 = arith.maximumf %652, %653 : vector<8x128xf32>
    %c4_428 = arith.constant 4 : index
    %c0_429 = arith.constant 0 : index
    %c0_430 = arith.constant 0 : index
    %c0_431 = arith.constant 0 : index
    %655 = vector.load %arg6[%c4_428, %c0_429, %c0_430, %c0_431] : memref<6x2x1x128xf32, #tpu.memory_space<vmem>>, vector<1x1x1x128xf32>
    %656 = vector.shape_cast %655 : vector<1x1x1x128xf32> to vector<1x128xf32>
    %c4_432 = arith.constant 4 : index
    %c0_433 = arith.constant 0 : index
    %c0_434 = arith.constant 0 : index
    %c0_435 = arith.constant 0 : index
    %657 = vector.load %arg7[%c4_432, %c0_433, %c0_434, %c0_435] : memref<6x2x1x128xf32, #tpu.memory_space<vmem>>, vector<1x1x1x128xf32>
    %658 = vector.shape_cast %657 : vector<1x1x1x128xf32> to vector<1x128xf32>
    %cst_436 = arith.constant dense<0.000000e+00> : vector<8xf32>
    %659 = vector.multi_reduction <add>, %654, %cst_436 [1] : vector<8x128xf32> to vector<8xf32>
    %660 = vector.shape_cast %659 : vector<8xf32> to vector<8x1xf32>
    %661 = arith.mulf %654, %654 : vector<8x128xf32>
    %cst_437 = arith.constant dense<0.000000e+00> : vector<8xf32>
    %662 = vector.multi_reduction <add>, %661, %cst_437 [1] : vector<8x128xf32> to vector<8xf32>
    %663 = vector.shape_cast %662 : vector<8xf32> to vector<8x1xf32>
    %cst_438 = arith.constant 7.812500e-03 : f32
    %664 = vector.broadcast %cst_438 : f32 to vector<8x1xf32>
    %665 = arith.mulf %660, %664 : vector<8x1xf32>
    %cst_439 = arith.constant 7.812500e-03 : f32
    %666 = vector.broadcast %cst_439 : f32 to vector<8x1xf32>
    %667 = arith.mulf %663, %666 : vector<8x1xf32>
    %668 = arith.mulf %665, %665 : vector<8x1xf32>
    %669 = arith.subf %667, %668 : vector<8x1xf32>
    %cst_440 = arith.constant 9.99999974E-6 : f32
    %670 = vector.broadcast %cst_440 : f32 to vector<8x1xf32>
    %671 = arith.addf %669, %670 : vector<8x1xf32>
    %672 = math.rsqrt %671 : vector<8x1xf32>
    %673 = vector.broadcast %665 : vector<8x1xf32> to vector<8x128xf32>
    %674 = arith.subf %654, %673 : vector<8x128xf32>
    %675 = vector.broadcast %672 : vector<8x1xf32> to vector<8x128xf32>
    %676 = arith.mulf %674, %675 : vector<8x128xf32>
    %677 = vector.broadcast %656 : vector<1x128xf32> to vector<8x128xf32>
    %678 = arith.mulf %676, %677 : vector<8x128xf32>
    %679 = vector.broadcast %658 : vector<1x128xf32> to vector<8x128xf32>
    %680 = arith.addf %678, %679 : vector<8x128xf32>
    %c4_441 = arith.constant 4 : index
    %c1_442 = arith.constant 1 : index
    %c0_443 = arith.constant 0 : index
    %c0_444 = arith.constant 0 : index
    %681 = vector.load %arg2[%c4_441, %c1_442, %c0_443, %c0_444] : memref<6x2x128x128xf32, #tpu.memory_space<vmem>>, vector<1x1x128x128xf32>
    %682 = vector.shape_cast %681 : vector<1x1x128x128xf32> to vector<128x128xf32>
    %cst_445 = arith.constant dense<0.000000e+00> : vector<8x128xf32>
    %683 = tpu.matmul %680, %682, %cst_445 {dimension_numbers = #tpu.dot_dimension_numbers<[1], [0], [0], [1], [0, 0, 1, 1], [], []>} : vector<8x128xf32>, vector<128x128xf32>, vector<8x128xf32> -> vector<8x128xf32>
    %684 = arith.addf %683, %310 : vector<8x128xf32>
    %cst_446 = arith.constant 0.000000e+00 : f32
    %685 = vector.broadcast %cst_446 : f32 to vector<8x128xf32>
    %686 = arith.maximumf %684, %685 : vector<8x128xf32>
    %c4_447 = arith.constant 4 : index
    %c1_448 = arith.constant 1 : index
    %c0_449 = arith.constant 0 : index
    %c0_450 = arith.constant 0 : index
    %687 = vector.load %arg6[%c4_447, %c1_448, %c0_449, %c0_450] : memref<6x2x1x128xf32, #tpu.memory_space<vmem>>, vector<1x1x1x128xf32>
    %688 = vector.shape_cast %687 : vector<1x1x1x128xf32> to vector<1x128xf32>
    %c4_451 = arith.constant 4 : index
    %c1_452 = arith.constant 1 : index
    %c0_453 = arith.constant 0 : index
    %c0_454 = arith.constant 0 : index
    %689 = vector.load %arg7[%c4_451, %c1_452, %c0_453, %c0_454] : memref<6x2x1x128xf32, #tpu.memory_space<vmem>>, vector<1x1x1x128xf32>
    %690 = vector.shape_cast %689 : vector<1x1x1x128xf32> to vector<1x128xf32>
    %cst_455 = arith.constant dense<0.000000e+00> : vector<8xf32>
    %691 = vector.multi_reduction <add>, %686, %cst_455 [1] : vector<8x128xf32> to vector<8xf32>
    %692 = vector.shape_cast %691 : vector<8xf32> to vector<8x1xf32>
    %693 = arith.mulf %686, %686 : vector<8x128xf32>
    %cst_456 = arith.constant dense<0.000000e+00> : vector<8xf32>
    %694 = vector.multi_reduction <add>, %693, %cst_456 [1] : vector<8x128xf32> to vector<8xf32>
    %695 = vector.shape_cast %694 : vector<8xf32> to vector<8x1xf32>
    %cst_457 = arith.constant 7.812500e-03 : f32
    %696 = vector.broadcast %cst_457 : f32 to vector<8x1xf32>
    %697 = arith.mulf %692, %696 : vector<8x1xf32>
    %cst_458 = arith.constant 7.812500e-03 : f32
    %698 = vector.broadcast %cst_458 : f32 to vector<8x1xf32>
    %699 = arith.mulf %695, %698 : vector<8x1xf32>
    %700 = arith.mulf %697, %697 : vector<8x1xf32>
    %701 = arith.subf %699, %700 : vector<8x1xf32>
    %cst_459 = arith.constant 9.99999974E-6 : f32
    %702 = vector.broadcast %cst_459 : f32 to vector<8x1xf32>
    %703 = arith.addf %701, %702 : vector<8x1xf32>
    %704 = math.rsqrt %703 : vector<8x1xf32>
    %705 = vector.broadcast %697 : vector<8x1xf32> to vector<8x128xf32>
    %706 = arith.subf %686, %705 : vector<8x128xf32>
    %707 = vector.broadcast %704 : vector<8x1xf32> to vector<8x128xf32>
    %708 = arith.mulf %706, %707 : vector<8x128xf32>
    %709 = vector.broadcast %688 : vector<1x128xf32> to vector<8x128xf32>
    %710 = arith.mulf %708, %709 : vector<8x128xf32>
    %711 = vector.broadcast %690 : vector<1x128xf32> to vector<8x128xf32>
    %712 = arith.addf %710, %711 : vector<8x128xf32>
    %c512 = arith.constant 512 : index
    %c0_460 = arith.constant 0 : index
    %713 = vector.load %arg8[%c512, %c0_460] : memref<768x768xf32, #tpu.memory_space<vmem>>, vector<128x768xf32>
    %cst_461 = arith.constant dense<0.000000e+00> : vector<8x768xf32>
    %714 = tpu.matmul %712, %713, %cst_461 {dimension_numbers = #tpu.dot_dimension_numbers<[1], [0], [0], [1], [0, 0, 1, 1], [], []>} : vector<8x128xf32>, vector<128x768xf32>, vector<8x768xf32> -> vector<8x768xf32>
    %715 = arith.addf %647, %714 : vector<8x768xf32>
    %716 = vector.extract_strided_slice %0 {offsets = [0, 640], sizes = [8, 128], strides = [1, 1]} : vector<8x768xf32> to vector<8x128xf32>
    %c5_462 = arith.constant 5 : index
    %c0_463 = arith.constant 0 : index
    %c0_464 = arith.constant 0 : index
    %c0_465 = arith.constant 0 : index
    %717 = vector.load %arg2[%c5_462, %c0_463, %c0_464, %c0_465] : memref<6x2x128x128xf32, #tpu.memory_space<vmem>>, vector<1x1x128x128xf32>
    %718 = vector.shape_cast %717 : vector<1x1x128x128xf32> to vector<128x128xf32>
    %cst_466 = arith.constant dense<0.000000e+00> : vector<8x128xf32>
    %719 = tpu.matmul %716, %718, %cst_466 {dimension_numbers = #tpu.dot_dimension_numbers<[1], [0], [0], [1], [0, 0, 1, 1], [], []>} : vector<8x128xf32>, vector<128x128xf32>, vector<8x128xf32> -> vector<8x128xf32>
    %720 = arith.addf %719, %341 : vector<8x128xf32>
    %cst_467 = arith.constant 0.000000e+00 : f32
    %721 = vector.broadcast %cst_467 : f32 to vector<8x128xf32>
    %722 = arith.maximumf %720, %721 : vector<8x128xf32>
    %c5_468 = arith.constant 5 : index
    %c0_469 = arith.constant 0 : index
    %c0_470 = arith.constant 0 : index
    %c0_471 = arith.constant 0 : index
    %723 = vector.load %arg6[%c5_468, %c0_469, %c0_470, %c0_471] : memref<6x2x1x128xf32, #tpu.memory_space<vmem>>, vector<1x1x1x128xf32>
    %724 = vector.shape_cast %723 : vector<1x1x1x128xf32> to vector<1x128xf32>
    %c5_472 = arith.constant 5 : index
    %c0_473 = arith.constant 0 : index
    %c0_474 = arith.constant 0 : index
    %c0_475 = arith.constant 0 : index
    %725 = vector.load %arg7[%c5_472, %c0_473, %c0_474, %c0_475] : memref<6x2x1x128xf32, #tpu.memory_space<vmem>>, vector<1x1x1x128xf32>
    %726 = vector.shape_cast %725 : vector<1x1x1x128xf32> to vector<1x128xf32>
    %cst_476 = arith.constant dense<0.000000e+00> : vector<8xf32>
    %727 = vector.multi_reduction <add>, %722, %cst_476 [1] : vector<8x128xf32> to vector<8xf32>
    %728 = vector.shape_cast %727 : vector<8xf32> to vector<8x1xf32>
    %729 = arith.mulf %722, %722 : vector<8x128xf32>
    %cst_477 = arith.constant dense<0.000000e+00> : vector<8xf32>
    %730 = vector.multi_reduction <add>, %729, %cst_477 [1] : vector<8x128xf32> to vector<8xf32>
    %731 = vector.shape_cast %730 : vector<8xf32> to vector<8x1xf32>
    %cst_478 = arith.constant 7.812500e-03 : f32
    %732 = vector.broadcast %cst_478 : f32 to vector<8x1xf32>
    %733 = arith.mulf %728, %732 : vector<8x1xf32>
    %cst_479 = arith.constant 7.812500e-03 : f32
    %734 = vector.broadcast %cst_479 : f32 to vector<8x1xf32>
    %735 = arith.mulf %731, %734 : vector<8x1xf32>
    %736 = arith.mulf %733, %733 : vector<8x1xf32>
    %737 = arith.subf %735, %736 : vector<8x1xf32>
    %cst_480 = arith.constant 9.99999974E-6 : f32
    %738 = vector.broadcast %cst_480 : f32 to vector<8x1xf32>
    %739 = arith.addf %737, %738 : vector<8x1xf32>
    %740 = math.rsqrt %739 : vector<8x1xf32>
    %741 = vector.broadcast %733 : vector<8x1xf32> to vector<8x128xf32>
    %742 = arith.subf %722, %741 : vector<8x128xf32>
    %743 = vector.broadcast %740 : vector<8x1xf32> to vector<8x128xf32>
    %744 = arith.mulf %742, %743 : vector<8x128xf32>
    %745 = vector.broadcast %724 : vector<1x128xf32> to vector<8x128xf32>
    %746 = arith.mulf %744, %745 : vector<8x128xf32>
    %747 = vector.broadcast %726 : vector<1x128xf32> to vector<8x128xf32>
    %748 = arith.addf %746, %747 : vector<8x128xf32>
    %c5_481 = arith.constant 5 : index
    %c1_482 = arith.constant 1 : index
    %c0_483 = arith.constant 0 : index
    %c0_484 = arith.constant 0 : index
    %749 = vector.load %arg2[%c5_481, %c1_482, %c0_483, %c0_484] : memref<6x2x128x128xf32, #tpu.memory_space<vmem>>, vector<1x1x128x128xf32>
    %750 = vector.shape_cast %749 : vector<1x1x128x128xf32> to vector<128x128xf32>
    %cst_485 = arith.constant dense<0.000000e+00> : vector<8x128xf32>
    %751 = tpu.matmul %748, %750, %cst_485 {dimension_numbers = #tpu.dot_dimension_numbers<[1], [0], [0], [1], [0, 0, 1, 1], [], []>} : vector<8x128xf32>, vector<128x128xf32>, vector<8x128xf32> -> vector<8x128xf32>
    %752 = arith.addf %751, %372 : vector<8x128xf32>
    %cst_486 = arith.constant 0.000000e+00 : f32
    %753 = vector.broadcast %cst_486 : f32 to vector<8x128xf32>
    %754 = arith.maximumf %752, %753 : vector<8x128xf32>
    %c5_487 = arith.constant 5 : index
    %c1_488 = arith.constant 1 : index
    %c0_489 = arith.constant 0 : index
    %c0_490 = arith.constant 0 : index
    %755 = vector.load %arg6[%c5_487, %c1_488, %c0_489, %c0_490] : memref<6x2x1x128xf32, #tpu.memory_space<vmem>>, vector<1x1x1x128xf32>
    %756 = vector.shape_cast %755 : vector<1x1x1x128xf32> to vector<1x128xf32>
    %c5_491 = arith.constant 5 : index
    %c1_492 = arith.constant 1 : index
    %c0_493 = arith.constant 0 : index
    %c0_494 = arith.constant 0 : index
    %757 = vector.load %arg7[%c5_491, %c1_492, %c0_493, %c0_494] : memref<6x2x1x128xf32, #tpu.memory_space<vmem>>, vector<1x1x1x128xf32>
    %758 = vector.shape_cast %757 : vector<1x1x1x128xf32> to vector<1x128xf32>
    %cst_495 = arith.constant dense<0.000000e+00> : vector<8xf32>
    %759 = vector.multi_reduction <add>, %754, %cst_495 [1] : vector<8x128xf32> to vector<8xf32>
    %760 = vector.shape_cast %759 : vector<8xf32> to vector<8x1xf32>
    %761 = arith.mulf %754, %754 : vector<8x128xf32>
    %cst_496 = arith.constant dense<0.000000e+00> : vector<8xf32>
    %762 = vector.multi_reduction <add>, %761, %cst_496 [1] : vector<8x128xf32> to vector<8xf32>
    %763 = vector.shape_cast %762 : vector<8xf32> to vector<8x1xf32>
    %cst_497 = arith.constant 7.812500e-03 : f32
    %764 = vector.broadcast %cst_497 : f32 to vector<8x1xf32>
    %765 = arith.mulf %760, %764 : vector<8x1xf32>
    %cst_498 = arith.constant 7.812500e-03 : f32
    %766 = vector.broadcast %cst_498 : f32 to vector<8x1xf32>
    %767 = arith.mulf %763, %766 : vector<8x1xf32>
    %768 = arith.mulf %765, %765 : vector<8x1xf32>
    %769 = arith.subf %767, %768 : vector<8x1xf32>
    %cst_499 = arith.constant 9.99999974E-6 : f32
    %770 = vector.broadcast %cst_499 : f32 to vector<8x1xf32>
    %771 = arith.addf %769, %770 : vector<8x1xf32>
    %772 = math.rsqrt %771 : vector<8x1xf32>
    %773 = vector.broadcast %765 : vector<8x1xf32> to vector<8x128xf32>
    %774 = arith.subf %754, %773 : vector<8x128xf32>
    %775 = vector.broadcast %772 : vector<8x1xf32> to vector<8x128xf32>
    %776 = arith.mulf %774, %775 : vector<8x128xf32>
    %777 = vector.broadcast %756 : vector<1x128xf32> to vector<8x128xf32>
    %778 = arith.mulf %776, %777 : vector<8x128xf32>
    %779 = vector.broadcast %758 : vector<1x128xf32> to vector<8x128xf32>
    %780 = arith.addf %778, %779 : vector<8x128xf32>
    %c640 = arith.constant 640 : index
    %c0_500 = arith.constant 0 : index
    %781 = vector.load %arg8[%c640, %c0_500] : memref<768x768xf32, #tpu.memory_space<vmem>>, vector<128x768xf32>
    %cst_501 = arith.constant dense<0.000000e+00> : vector<8x768xf32>
    %782 = tpu.matmul %780, %781, %cst_501 {dimension_numbers = #tpu.dot_dimension_numbers<[1], [0], [0], [1], [0, 0, 1, 1], [], []>} : vector<8x128xf32>, vector<128x768xf32>, vector<8x768xf32> -> vector<8x768xf32>
    %783 = arith.addf %715, %782 : vector<8x768xf32>
    %c0_502 = arith.constant 0 : index
    %c0_503 = arith.constant 0 : index
    %784 = vector.load %arg10[%c0_502, %c0_503] : memref<1x768xf32, #tpu.memory_space<vmem>>, vector<1x768xf32>
    %c0_504 = arith.constant 0 : index
    %c0_505 = arith.constant 0 : index
    %785 = vector.load %arg11[%c0_504, %c0_505] : memref<1x768xf32, #tpu.memory_space<vmem>>, vector<1x768xf32>
    %cst_506 = arith.constant dense<0.000000e+00> : vector<8xf32>
    %786 = vector.multi_reduction <add>, %783, %cst_506 [1] : vector<8x768xf32> to vector<8xf32>
    %787 = vector.shape_cast %786 : vector<8xf32> to vector<8x1xf32>
    %788 = arith.mulf %783, %783 : vector<8x768xf32>
    %cst_507 = arith.constant dense<0.000000e+00> : vector<8xf32>
    %789 = vector.multi_reduction <add>, %788, %cst_507 [1] : vector<8x768xf32> to vector<8xf32>
    %790 = vector.shape_cast %789 : vector<8xf32> to vector<8x1xf32>
    %cst_508 = arith.constant 0.00130208337 : f32
    %791 = vector.broadcast %cst_508 : f32 to vector<8x1xf32>
    %792 = arith.mulf %787, %791 : vector<8x1xf32>
    %cst_509 = arith.constant 0.00130208337 : f32
    %793 = vector.broadcast %cst_509 : f32 to vector<8x1xf32>
    %794 = arith.mulf %790, %793 : vector<8x1xf32>
    %795 = arith.mulf %792, %792 : vector<8x1xf32>
    %796 = arith.subf %794, %795 : vector<8x1xf32>
    %cst_510 = arith.constant 9.99999974E-6 : f32
    %797 = vector.broadcast %cst_510 : f32 to vector<8x1xf32>
    %798 = arith.addf %796, %797 : vector<8x1xf32>
    %799 = math.rsqrt %798 : vector<8x1xf32>
    %800 = vector.broadcast %792 : vector<8x1xf32> to vector<8x768xf32>
    %801 = arith.subf %783, %800 : vector<8x768xf32>
    %802 = vector.broadcast %799 : vector<8x1xf32> to vector<8x768xf32>
    %803 = arith.mulf %801, %802 : vector<8x768xf32>
    %804 = vector.broadcast %784 : vector<1x768xf32> to vector<8x768xf32>
    %805 = arith.mulf %803, %804 : vector<8x768xf32>
    %806 = vector.broadcast %785 : vector<1x768xf32> to vector<8x768xf32>
    %807 = arith.addf %805, %806 : vector<8x768xf32>
    %c0_511 = arith.constant 0 : index
    %c0_512 = arith.constant 0 : index
    %808 = vector.load %arg12[%c0_511, %c0_512] : memref<8x768xf32, #tpu.memory_space<vmem>>, vector<8x768xf32>
    tpu.vector_store %arg12[%c0_511, %c0_512], %807 {strides = array<i32>} : memref<8x768xf32, #tpu.memory_space<vmem>>, vector<8x768xf32>,
    return
  }
}

</mosaic_0001>

<llo_original>
// kernel: tpu_custom_call.1
$region0: #{tpu_custom_call.1}
  #allocation0 [shape = 'u32[]', space=smem, size = 0x4, offset = 0x4, fixed_abs, tag = 'smem constant byte address 0x4 - core index']
  #allocation1 [shape = 'u32[144,128]{1,0:T(1,128)}', space=vmem, size = 0x12000, scoped, tag = 'internal scratch']
  %s0 = inlined_call_operand.hbm [shape: f32[8,768], index: 0, kind: input, shape index: {}]
  %s1 = inlined_call_operand.hbm [shape: f32[6,2,8,128], index: 1, kind: input, shape index: {}]
  %s2 = inlined_call_operand.hbm [shape: f32[6,2,128,128], index: 2, kind: input, shape index: {}]
  %s3 = inlined_call_operand.hbm [shape: f32[6,2,128,128], index: 3, kind: input, shape index: {}]
  %s4 = inlined_call_operand.hbm [shape: f32[6,2,1,128], index: 4, kind: input, shape index: {}]
  %s5 = inlined_call_operand.hbm [shape: f32[6,2,1,128], index: 5, kind: input, shape index: {}]
  %s6 = inlined_call_operand.hbm [shape: f32[6,2,1,128], index: 6, kind: input, shape index: {}]
  %s7 = inlined_call_operand.hbm [shape: f32[6,2,1,128], index: 7, kind: input, shape index: {}]
  %s8 = inlined_call_operand.hbm [shape: f32[768,768], index: 8, kind: input, shape index: {}]
  %s9 = inlined_call_operand.hbm [shape: f32[1,768], index: 9, kind: input, shape index: {}]
  %s10 = inlined_call_operand.hbm [shape: f32[1,768], index: 10, kind: input, shape index: {}]
  %s11 = inlined_call_operand.hbm [shape: f32[1,768], index: 11, kind: input, shape index: {}]
  %s12 = inlined_call_operand.hbm [shape: f32[8,768], index: 12, kind: output, shape index: {}]
  %s13 = sld [smem:[#allocation0]]
  $region106: #{tpu_custom_call.1} parent=0
    _
  %s15 = ssub.s32 1, %s13
  %s16 = scalar_select 0, %s15, %s13
  $region1: #{tpu_custom_call.1} parent=0
    #allocation2 [shape = 'u8[24576]{0}', space=vmem, size = 0x6000, scoped, tag = 'input window, operand 0, single buffered']
    #allocation3 [shape = 's32[1]{0}', space=sflag, size = 0x4, scoped, tag = 'scoped memory for tpu_custom_call.1']
    #allocation4 [shape = 's32[1]{0}', space=sflag, size = 0x4, scoped, tag = 'scoped memory for tpu_custom_call.1']
    #allocation5 [shape = 'u8[49152]{0}', space=vmem, size = 0xc000, scoped, tag = 'input window, operand 1, single buffered']
    #allocation6 [shape = 's32[1]{0}', space=sflag, size = 0x4, scoped, tag = 'scoped memory for tpu_custom_call.1']
    #allocation7 [shape = 'u8[786432]{0}', space=vmem, size = 0xc0000, scoped, tag = 'input window, operand 2, single buffered']
    #allocation8 [shape = 'u8[786432]{0}', space=vmem, size = 0xc0000, scoped, tag = 'input window, operand 3, single buffered']
    #allocation9 [shape = 's32[1]{0}', space=sflag, size = 0x4, scoped, tag = 'scoped memory for tpu_custom_call.1']
    #allocation10 [shape = 'u8[6144]{0}', space=vmem, size = 0x1800, scoped, tag = 'input window, operand 4, single buffered']
    #allocation11 [shape = 'u8[6144]{0}', space=vmem, size = 0x1800, scoped, tag = 'input window, operand 5, single buffered']
    #allocation12 [shape = 's32[1]{0}', space=sflag, size = 0x4, scoped, tag = 'scoped memory for tpu_custom_call.1']
    #allocation13 [shape = 'u8[6144]{0}', space=vmem, size = 0x1800, scoped, tag = 'input window, operand 6, single buffered']
    #allocation14 [shape = 'u8[6144]{0}', space=vmem, size = 0x1800, scoped, tag = 'input window, operand 7, single buffered']
    #allocation15 [shape = 's32[1]{0}', space=sflag, size = 0x4, scoped, tag = 'scoped memory for tpu_custom_call.1']
    #allocation16 [shape = 'u8[2359296]{0}', space=vmem, size = 0x240000, scoped, tag = 'input window, operand 8, single buffered']
    #allocation17 [shape = 'u8[3072]{0}', space=vmem, size = 0xc00, scoped, tag = 'input window, operand 9, single buffered']
    #allocation18 [shape = 's32[1]{0}', space=sflag, size = 0x4, scoped, tag = 'scoped memory for tpu_custom_call.1']
    #allocation19 [shape = 'u8[3072]{0}', space=vmem, size = 0xc00, scoped, tag = 'input window, operand 10, single buffered']
    #allocation20 [shape = 'u8[3072]{0}', space=vmem, size = 0xc00, scoped, tag = 'input window, operand 11, single buffered']
    #allocation21 [shape = 's32[1]{0}', space=sflag, size = 0x4, scoped, tag = 'scoped memory for tpu_custom_call.1']
    #allocation22 [shape = 'u8[24576]{0}', space=vmem, size = 0x6000, scoped, tag = 'output window, operand 0, single buffered']
    %17 = vsyncpa [#allocation3], 0
    %18 = vsyncpa [#allocation6], 0
    %19 = vsyncpa [#allocation9], 0
    %20 = vsyncpa [#allocation12], 0
    %21 = vsyncpa [#allocation15], 0
    %22 = vsyncpa [#allocation18], 0
    %23 = vsyncpa [#allocation21], 0
    %24 = vsyncpa [#allocation4], 0
    // Predicated region
    $region2: #{tpu_custom_call.1} parent=1 // pred_check
      _
    $region3: #{tpu_custom_call.1} parent=1 // pred_check_branch
      %26 = sbr.rel (0) target = $region5
    $region4: #{tpu_custom_call.1} parent=1 // pred_region
      %s28 = ssub.s32 768, 768
      %29 = vsyncadd [#allocation3], %s28
      %s31 = sshll.u32 [#allocation2], 4
      %s32 = int_to_ptr.vmem [resolvable:$true] %s31
      %34 = dma.hbm_to_vmem [thread:$0]  %s0, 768, %s32, [#allocation3]
    $region5: #{tpu_custom_call.1} parent=1 // pred_fallthru
      _
    // Predicated region
    $region6: #{tpu_custom_call.1} parent=1 // pred_check
      _
    $region7: #{tpu_custom_call.1} parent=1 // pred_check_branch
      %36 = sbr.rel (0) target = $region9
    $region8: #{tpu_custom_call.1} parent=1 // pred_region
      %s38 = ssub.s32 1536, 1536
      %39 = vsyncadd [#allocation6], %s38
      %s40 = sshll.u32 [#allocation5], 4
      %s41 = int_to_ptr.vmem [resolvable:$true] %s40
      %46 = dma.hbm_to_vmem [thread:$0]  %s1, 1536, %s41, [#allocation6], 128, 128, 8
    $region9: #{tpu_custom_call.1} parent=1 // pred_fallthru
      _
    // Predicated region
    $region10: #{tpu_custom_call.1} parent=1 // pred_check
      _
    $region11: #{tpu_custom_call.1} parent=1 // pred_check_branch
      %48 = sbr.rel (0) target = $region13
    $region12: #{tpu_custom_call.1} parent=1 // pred_region
      %s50 = ssub.s32 24576, 24576
      %51 = vsyncadd [#allocation6], %s50
      %s52 = sshll.u32 [#allocation7], 4
      %s53 = int_to_ptr.vmem [resolvable:$true] %s52
      %58 = dma.hbm_to_vmem [thread:$0]  %s2, 24576, %s53, [#allocation6], 128, 128, 8
    $region13: #{tpu_custom_call.1} parent=1 // pred_fallthru
      _
    // Predicated region
    $region14: #{tpu_custom_call.1} parent=1 // pred_check
      _
    $region15: #{tpu_custom_call.1} parent=1 // pred_check_branch
      %60 = sbr.rel (0) target = $region17
    $region16: #{tpu_custom_call.1} parent=1 // pred_region
      %s62 = ssub.s32 24576, 24576
      %63 = vsyncadd [#allocation9], %s62
      %s64 = sshll.u32 [#allocation8], 4
      %s65 = int_to_ptr.vmem [resolvable:$true] %s64
      %70 = dma.hbm_to_vmem [thread:$0]  %s3, 24576, %s65, [#allocation9], 128, 128, 8
    $region17: #{tpu_custom_call.1} parent=1 // pred_fallthru
      _
    // Predicated region
    $region18: #{tpu_custom_call.1} parent=1 // pred_check
      _
    $region19: #{tpu_custom_call.1} parent=1 // pred_check_branch
      %72 = sbr.rel (0) target = $region21
    $region20: #{tpu_custom_call.1} parent=1 // pred_region
      %s74 = ssub.s32 192, 192
      %75 = vsyncadd [#allocation9], %s74
      %s76 = sshll.u32 [#allocation10], 4
      %s77 = int_to_ptr.vmem [resolvable:$true] %s76
      %82 = dma.hbm_to_vmem [thread:$0]  %s4, 192, %s77, [#allocation9], 16, 16, 1
    $region21: #{tpu_custom_call.1} parent=1 // pred_fallthru
      _
    // Predicated region
    $region22: #{tpu_custom_call.1} parent=1 // pred_check
      _
    $region23: #{tpu_custom_call.1} parent=1 // pred_check_branch
      %84 = sbr.rel (0) target = $region25
    $region24: #{tpu_custom_call.1} parent=1 // pred_region
      %s86 = ssub.s32 192, 192
      %87 = vsyncadd [#allocation12], %s86
      %s88 = sshll.u32 [#allocation11], 4
      %s89 = int_to_ptr.vmem [resolvable:$true] %s88
      %94 = dma.hbm_to_vmem [thread:$0]  %s5, 192, %s89, [#allocation12], 16, 16, 1
    $region25: #{tpu_custom_call.1} parent=1 // pred_fallthru
      _
    // Predicated region
    $region26: #{tpu_custom_call.1} parent=1 // pred_check
      _
    $region27: #{tpu_custom_call.1} parent=1 // pred_check_branch
      %96 = sbr.rel (0) target = $region29
    $region28: #{tpu_custom_call.1} parent=1 // pred_region
      %s98 = ssub.s32 192, 192
      %99 = vsyncadd [#allocation12], %s98
      %s100 = sshll.u32 [#allocation13], 4
      %s101 = int_to_ptr.vmem [resolvable:$true] %s100
      %106 = dma.hbm_to_vmem [thread:$0]  %s6, 192, %s101, [#allocation12], 16, 16, 1
    $region29: #{tpu_custom_call.1} parent=1 // pred_fallthru
      _
    // Predicated region
    $region30: #{tpu_custom_call.1} parent=1 // pred_check
      _
    $region31: #{tpu_custom_call.1} parent=1 // pred_check_branch
      %108 = sbr.rel (0) target = $region33
    $region32: #{tpu_custom_call.1} parent=1 // pred_region
      %s110 = ssub.s32 192, 192
      %111 = vsyncadd [#allocation15], %s110
      %s112 = sshll.u32 [#allocation14], 4
      %s113 = int_to_ptr.vmem [resolvable:$true] %s112
      %118 = dma.hbm_to_vmem [thread:$0]  %s7, 192, %s113, [#allocation15], 16, 16, 1
    $region33: #{tpu_custom_call.1} parent=1 // pred_fallthru
      _
    // Predicated region
    $region34: #{tpu_custom_call.1} parent=1 // pred_check
      _
    $region35: #{tpu_custom_call.1} parent=1 // pred_check_branch
      %120 = sbr.rel (0) target = $region37
    $region36: #{tpu_custom_call.1} parent=1 // pred_region
      %s122 = ssub.s32 73728, 73728
      %123 = vsyncadd [#allocation15], %s122
      %s124 = sshll.u32 [#allocation16], 4
      %s125 = int_to_ptr.vmem [resolvable:$true] %s124
      %130 = dma.hbm_to_vmem [thread:$0]  %s8, 73728, %s125, [#allocation15], 768, 768, 48
    $region37: #{tpu_custom_call.1} parent=1 // pred_fallthru
      _
    // Predicated region
    $region38: #{tpu_custom_call.1} parent=1 // pred_check
      _
    $region39: #{tpu_custom_call.1} parent=1 // pred_check_branch
      %132 = sbr.rel (0) target = $region41
    $region40: #{tpu_custom_call.1} parent=1 // pred_region
      %s134 = ssub.s32 96, 96
      %135 = vsyncadd [#allocation18], %s134
      %s137 = sshll.u32 [#allocation17], 4
      %s138 = int_to_ptr.vmem [resolvable:$true] %s137
      %140 = dma.hbm_to_vmem [thread:$0]  %s9, 96, %s138, [#allocation18]
    $region41: #{tpu_custom_call.1} parent=1 // pred_fallthru
      _
    // Predicated region
    $region42: #{tpu_custom_call.1} parent=1 // pred_check
      _
    $region43: #{tpu_custom_call.1} parent=1 // pred_check_branch
      %142 = sbr.rel (0) target = $region45
    $region44: #{tpu_custom_call.1} parent=1 // pred_region
      %s144 = ssub.s32 96, 96
      %145 = vsyncadd [#allocation18], %s144
      %s147 = sshll.u32 [#allocation19], 4
      %s148 = int_to_ptr.vmem [resolvable:$true] %s147
      %150 = dma.hbm_to_vmem [thread:$0]  %s10, 96, %s148, [#allocation18]
    $region45: #{tpu_custom_call.1} parent=1 // pred_fallthru
      _
    // Predicated region
    $region46: #{tpu_custom_call.1} parent=1 // pred_check
      _
    $region47: #{tpu_custom_call.1} parent=1 // pred_check_branch
      %152 = sbr.rel (0) target = $region49
    $region48: #{tpu_custom_call.1} parent=1 // pred_region
      %s154 = ssub.s32 96, 96
      %155 = vsyncadd [#allocation21], %s154
      %s157 = sshll.u32 [#allocation20], 4
      %s158 = int_to_ptr.vmem [resolvable:$true] %s157
      %160 = dma.hbm_to_vmem [thread:$0]  %s11, 96, %s158, [#allocation21]
    $region49: #{tpu_custom_call.1} parent=1 // pred_fallthru
      _
    // Predicated region
    $region50: #{tpu_custom_call.1} parent=1 // pred_check
      _
    $region51: #{tpu_custom_call.1} parent=1 // pred_check_branch
      %162 = sbr.rel (0) target = $region53
    $region52: #{tpu_custom_call.1} parent=1 // pred_region
      %163 = dma.done [#allocation3], 768
    $region53: #{tpu_custom_call.1} parent=1 // pred_fallthru
      _
    // Predicated region
    $region54: #{tpu_custom_call.1} parent=1 // pred_check
      _
    $region55: #{tpu_custom_call.1} parent=1 // pred_check_branch
      %165 = sbr.rel (0) target = $region57
    $region56: #{tpu_custom_call.1} parent=1 // pred_region
      %166 = dma.done [#allocation6], 1536
    $region57: #{tpu_custom_call.1} parent=1 // pred_fallthru
      _
    // Predicated region
    $region58: #{tpu_custom_call.1} parent=1 // pred_check
      _
    $region59: #{tpu_custom_call.1} parent=1 // pred_check_branch
      %168 = sbr.rel (0) target = $region61
    $region60: #{tpu_custom_call.1} parent=1 // pred_region
      %169 = dma.done [#allocation6], 24576
    $region61: #{tpu_custom_call.1} parent=1 // pred_fallthru
      _
    // Predicated region
    $region62: #{tpu_custom_call.1} parent=1 // pred_check
      _
    $region63: #{tpu_custom_call.1} parent=1 // pred_check_branch
      %171 = sbr.rel (0) target = $region65
    $region64: #{tpu_custom_call.1} parent=1 // pred_region
      %172 = dma.done [#allocation9], 24576
    $region65: #{tpu_custom_call.1} parent=1 // pred_fallthru
      _
    // Predicated region
    $region66: #{tpu_custom_call.1} parent=1 // pred_check
      _
    $region67: #{tpu_custom_call.1} parent=1 // pred_check_branch
      %174 = sbr.rel (0) target = $region69
    $region68: #{tpu_custom_call.1} parent=1 // pred_region
      %175 = dma.done [#allocation9], 192
    $region69: #{tpu_custom_call.1} parent=1 // pred_fallthru
      _
    // Predicated region
    $region70: #{tpu_custom_call.1} parent=1 // pred_check
      _
    $region71: #{tpu_custom_call.1} parent=1 // pred_check_branch
      %177 = sbr.rel (0) target = $region73
    $region72: #{tpu_custom_call.1} parent=1 // pred_region
      %178 = dma.done [#allocation12], 192
    $region73: #{tpu_custom_call.1} parent=1 // pred_fallthru
      _
    // Predicated region
    $region74: #{tpu_custom_call.1} parent=1 // pred_check
      _
    $region75: #{tpu_custom_call.1} parent=1 // pred_check_branch
      %180 = sbr.rel (0) target = $region77
    $region76: #{tpu_custom_call.1} parent=1 // pred_region
      %181 = dma.done [#allocation12], 192
    $region77: #{tpu_custom_call.1} parent=1 // pred_fallthru
      _
    // Predicated region
    $region78: #{tpu_custom_call.1} parent=1 // pred_check
      _
    $region79: #{tpu_custom_call.1} parent=1 // pred_check_branch
      %183 = sbr.rel (0) target = $region81
    $region80: #{tpu_custom_call.1} parent=1 // pred_region
      %184 = dma.done [#allocation15], 192
    $region81: #{tpu_custom_call.1} parent=1 // pred_fallthru
      _
    // Predicated region
    $region82: #{tpu_custom_call.1} parent=1 // pred_check
      _
    $region83: #{tpu_custom_call.1} parent=1 // pred_check_branch
      %186 = sbr.rel (0) target = $region85
    $region84: #{tpu_custom_call.1} parent=1 // pred_region
      %187 = dma.done [#allocation15], 73728
    $region85: #{tpu_custom_call.1} parent=1 // pred_fallthru
      _
    // Predicated region
    $region86: #{tpu_custom_call.1} parent=1 // pred_check
      _
    $region87: #{tpu_custom_call.1} parent=1 // pred_check_branch
      %189 = sbr.rel (0) target = $region89
    $region88: #{tpu_custom_call.1} parent=1 // pred_region
      %190 = dma.done [#allocation18], 96
    $region89: #{tpu_custom_call.1} parent=1 // pred_fallthru
      _
    // Predicated region
    $region90: #{tpu_custom_call.1} parent=1 // pred_check
      _
    $region91: #{tpu_custom_call.1} parent=1 // pred_check_branch
      %192 = sbr.rel (0) target = $region93
    $region92: #{tpu_custom_call.1} parent=1 // pred_region
      %193 = dma.done [#allocation18], 96
    $region93: #{tpu_custom_call.1} parent=1 // pred_fallthru
      _
    // Predicated region
    $region94: #{tpu_custom_call.1} parent=1 // pred_check
      _
    $region95: #{tpu_custom_call.1} parent=1 // pred_check_branch
      %195 = sbr.rel (0) target = $region97
    $region96: #{tpu_custom_call.1} parent=1 // pred_region
      %196 = dma.done [#allocation21], 96
    $region97: #{tpu_custom_call.1} parent=1 // pred_fallthru
      _
    %v197 = vld [vmem:[#allocation2] sm:$0xff]
    %v198 = vld [vmem:[#allocation2 + $0x8] sm:$0xff]
    %v199 = vld [vmem:[#allocation2 + $0x10] sm:$0xff]
    %v200 = vld [vmem:[#allocation2 + $0x18] sm:$0xff]
    %v201 = vld [vmem:[#allocation2 + $0x20] sm:$0xff]
    %v202 = vld [vmem:[#allocation2 + $0x28] sm:$0xff]
    %v203 = vld [vmem:[#allocation5] sm:$0xff]
    %v204 = vld [vmem:[#allocation8] sm:$0xff]
    %v205 = vld [vmem:[#allocation8 + $0x8] sm:$0xff]
    %v206 = vld [vmem:[#allocation8 + $0x10] sm:$0xff]
    %v207 = vld [vmem:[#allocation8 + $0x18] sm:$0xff]
    %v208 = vld [vmem:[#allocation8 + $0x20] sm:$0xff]
    %v209 = vld [vmem:[#allocation8 + $0x28] sm:$0xff]
    %v210 = vld [vmem:[#allocation8 + $0x30] sm:$0xff]
    %v211 = vld [vmem:[#allocation8 + $0x38] sm:$0xff]
    %v212 = vld [vmem:[#allocation8 + $0x40] sm:$0xff]
    %v213 = vld [vmem:[#allocation8 + $0x48] sm:$0xff]
    %v214 = vld [vmem:[#allocation8 + $0x50] sm:$0xff]
    %v215 = vld [vmem:[#allocation8 + $0x58] sm:$0xff]
    %v216 = vld [vmem:[#allocation8 + $0x60] sm:$0xff]
    %v217 = vld [vmem:[#allocation8 + $0x68] sm:$0xff]
    %v218 = vld [vmem:[#allocation8 + $0x70] sm:$0xff]
    %v219 = vld [vmem:[#allocation8 + $0x78] sm:$0xff]
    %220 = vmatprep.subr.mxu0 0.0
    %221 = vmatpush1.msra.mxu0 %v204
    %222 = vmatprep.subr.mxu0 0.0
    %223 = vmatpush1.msra.mxu0 %v205
    %224 = vmatprep.subr.mxu0 0.0
    %225 = vmatpush1.msra.mxu0 %v206
    %226 = vmatprep.subr.mxu0 0.0
    %227 = vmatpush1.msra.mxu0 %v207
    %228 = vmatprep.subr.mxu0 0.0
    %229 = vmatpush1.msra.mxu0 %v208
    %230 = vmatprep.subr.mxu0 0.0
    %231 = vmatpush1.msra.mxu0 %v209
    %232 = vmatprep.subr.mxu0 0.0
    %233 = vmatpush1.msra.mxu0 %v210
    %234 = vmatprep.subr.mxu0 0.0
    %235 = vmatpush1.msra.mxu0 %v211
    %236 = vmatprep.subr.mxu0 0.0
    %237 = vmatpush1.msra.mxu0 %v212
    %238 = vmatprep.subr.mxu0 0.0
    %239 = vmatpush1.msra.mxu0 %v213
    %240 = vmatprep.subr.mxu0 0.0
    %241 = vmatpush1.msra.mxu0 %v214
    %242 = vmatprep.subr.mxu0 0.0
    %243 = vmatpush1.msra.mxu0 %v215
    %244 = vmatprep.subr.mxu0 0.0
    %245 = vmatpush1.msra.mxu0 %v216
    %246 = vmatprep.subr.mxu0 0.0
    %247 = vmatpush1.msra.mxu0 %v217
    %248 = vmatprep.subr.mxu0 0.0
    %249 = vmatpush1.msra.mxu0 %v218
    %250 = vmatprep.subr.mxu0 0.0
    %251 = vmatpush1.msra.mxu0 %v219
    %252 = vmatprep.subr.mxu0 0.0
    %253 = vmatpush1.msra.mxu0 0.0
    %254 = vmatprep.subr.mxu0 0.0
    %255 = vmatpush1.msra.mxu0 0.0
    %256 = vmatprep.subr.mxu0 0.0
    %257 = vmatpush1.msra.mxu0 0.0
    %258 = vmatprep.subr.mxu0 0.0
    %259 = vmatpush1.msra.mxu0 0.0
    %260 = vmatprep.subr.mxu0 0.0
    %261 = vmatpush1.msra.mxu0 0.0
    %262 = vmatprep.subr.mxu0 0.0
    %263 = vmatpush1.msra.mxu0 0.0
    %264 = vmatprep.subr.mxu0 0.0
    %265 = vmatpush1.msra.mxu0 0.0
    %266 = vmatprep.subr.mxu0 0.0
    %267 = vmatpush1.msra.mxu0 0.0
    %268 = vmatprep.subr.mxu0 0.0
    %269 = vmatpush1.msra.mxu0 0.0
    %270 = vmatprep.subr.mxu0 0.0
    %271 = vmatpush1.msra.mxu0 0.0
    %272 = vmatprep.subr.mxu0 0.0
    %273 = vmatpush1.msra.mxu0 0.0
    %274 = vmatprep.subr.mxu0 0.0
    %275 = vmatpush1.msra.mxu0 0.0
    %276 = vmatprep.subr.mxu0 0.0
    %277 = vmatpush1.msra.mxu0 0.0
    %278 = vmatprep.subr.mxu0 0.0
    %279 = vmatpush1.msra.mxu0 0.0
    %280 = vmatprep.subr.mxu0 0.0
    %281 = vmatpush1.msra.mxu0 0.0
    %282 = vmatprep.subr.mxu0 0.0
    %283 = vmatpush1.msra.mxu0 0.0
    %284 = vmatprep.mubr.f32.mxu0 0.0
    %285 = vmatmul.mubr.f32.gmra.mrb[0].mxu0 %v203
    %v286 = vpop.f32.mrb[0].mxu0
    %v287 = vadd.f32 0.0, %v286
    %v288 = vpop.f32.mrb[0].mxu0
    %289 = vdwg.mxu0
    %v290 = vld [vmem:[#allocation10] sm:$0x1]
    %v291 = vld [vmem:[#allocation11] sm:$0x1]
    %292 = vadd.xlane.f32.xlu0 %v287
    %v293 = vpop.xlane.xlu0 %292
    %v294 = vmul.f32 %v287, %v287
    %295 = vadd.xlane.f32.xlu0 %v294
    %v296 = vpop.xlane.xlu0 %295
    %v297 = vmul.f32 %v293, 0.0078125
    %v298 = vmul.f32 %v296, 0.0078125
    %v299 = vmul.f32 %v297, %v297
    %v300 = vsub.f32 %v298, %v299
    %v301 = vadd.f32 %v300, 1e-05
    %v302 = vrsqrt.pop %v301
    %v303 = vsub.f32 %v287, %v297
    %v304 = vmul.f32 %v303, %v302
    %v306 = vlaneseq
    %v307 = vshrl.u32 %v306, 7
    %v308 = vsub.s32 0, %v307
    %v309 = vrot.slane %v290, %v308
    %v311 = vmul.f32 %v304, %v309
    %v313 = vlaneseq
    %v314 = vshrl.u32 %v313, 7
    %v315 = vsub.s32 0, %v314
    %v316 = vrot.slane %v291, %v315
    %v318 = vadd.f32 %v311, %v316
    %s319 = scalar_lea.vmem [#allocation5], 8
    %v320 = vld [vmem:[%s319] sm:$0xff]
    %s321 = scalar_lea.vmem [#allocation8], 128
    %v322 = vld [vmem:[%s321] sm:$0xff]
    %v323 = vld [vmem:[%s321 + $0x8] sm:$0xff]
    %v324 = vld [vmem:[%s321 + $0x10] sm:$0xff]
    %v325 = vld [vmem:[%s321 + $0x18] sm:$0xff]
    %v326 = vld [vmem:[%s321 + $0x20] sm:$0xff]
    %v327 = vld [vmem:[%s321 + $0x28] sm:$0xff]
    %v328 = vld [vmem:[%s321 + $0x30] sm:$0xff]
    %v329 = vld [vmem:[%s321 + $0x38] sm:$0xff]
    %v330 = vld [vmem:[%s321 + $0x40] sm:$0xff]
    %v331 = vld [vmem:[%s321 + $0x48] sm:$0xff]
    %v332 = vld [vmem:[%s321 + $0x50] sm:$0xff]
    %v333 = vld [vmem:[%s321 + $0x58] sm:$0xff]
    %v334 = vld [vmem:[%s321 + $0x60] sm:$0xff]
    %v335 = vld [vmem:[%s321 + $0x68] sm:$0xff]
    %v336 = vld [vmem:[%s321 + $0x70] sm:$0xff]
    %v337 = vld [vmem:[%s321 + $0x78] sm:$0xff]
    %338 = vmatprep.subr.mxu0 0.0
    %339 = vmatpush1.msra.mxu0 %v322
    %340 = vmatprep.subr.mxu0 0.0
    %341 = vmatpush1.msra.mxu0 %v323
    %342 = vmatprep.subr.mxu0 0.0
    %343 = vmatpush1.msra.mxu0 %v324
    %344 = vmatprep.subr.mxu0 0.0
    %345 = vmatpush1.msra.mxu0 %v325
    %346 = vmatprep.subr.mxu0 0.0
    %347 = vmatpush1.msra.mxu0 %v326
    %348 = vmatprep.subr.mxu0 0.0
    %349 = vmatpush1.msra.mxu0 %v327
    %350 = vmatprep.subr.mxu0 0.0
    %351 = vmatpush1.msra.mxu0 %v328
    %352 = vmatprep.subr.mxu0 0.0
    %353 = vmatpush1.msra.mxu0 %v329
    %354 = vmatprep.subr.mxu0 0.0
    %355 = vmatpush1.msra.mxu0 %v330
    %356 = vmatprep.subr.mxu0 0.0
    %357 = vmatpush1.msra.mxu0 %v331
    %358 = vmatprep.subr.mxu0 0.0
    %359 = vmatpush1.msra.mxu0 %v332
    %360 = vmatprep.subr.mxu0 0.0
    %361 = vmatpush1.msra.mxu0 %v333
    %362 = vmatprep.subr.mxu0 0.0
    %363 = vmatpush1.msra.mxu0 %v334
    %364 = vmatprep.subr.mxu0 0.0
    %365 = vmatpush1.msra.mxu0 %v335
    %366 = vmatprep.subr.mxu0 0.0
    %367 = vmatpush1.msra.mxu0 %v336
    %368 = vmatprep.subr.mxu0 0.0
    %369 = vmatpush1.msra.mxu0 %v337
    %370 = vmatprep.subr.mxu0 0.0
    %371 = vmatpush1.msra.mxu0 0.0
    %372 = vmatprep.subr.mxu0 0.0
    %373 = vmatpush1.msra.mxu0 0.0
    %374 = vmatprep.subr.mxu0 0.0
    %375 = vmatpush1.msra.mxu0 0.0
    %376 = vmatprep.subr.mxu0 0.0
    %377 = vmatpush1.msra.mxu0 0.0
    %378 = vmatprep.subr.mxu0 0.0
    %379 = vmatpush1.msra.mxu0 0.0
    %380 = vmatprep.subr.mxu0 0.0
    %381 = vmatpush1.msra.mxu0 0.0
    %382 = vmatprep.subr.mxu0 0.0
    %383 = vmatpush1.msra.mxu0 0.0
    %384 = vmatprep.subr.mxu0 0.0
    %385 = vmatpush1.msra.mxu0 0.0
    %386 = vmatprep.subr.mxu0 0.0
    %387 = vmatpush1.msra.mxu0 0.0
    %388 = vmatprep.subr.mxu0 0.0
    %389 = vmatpush1.msra.mxu0 0.0
    %390 = vmatprep.subr.mxu0 0.0
    %391 = vmatpush1.msra.mxu0 0.0
    %392 = vmatprep.subr.mxu0 0.0
    %393 = vmatpush1.msra.mxu0 0.0
    %394 = vmatprep.subr.mxu0 0.0
    %395 = vmatpush1.msra.mxu0 0.0
    %396 = vmatprep.subr.mxu0 0.0
    %397 = vmatpush1.msra.mxu0 0.0
    %398 = vmatprep.subr.mxu0 0.0
    %399 = vmatpush1.msra.mxu0 0.0
    %400 = vmatprep.subr.mxu0 0.0
    %401 = vmatpush1.msra.mxu0 0.0
    %402 = vmatprep.mubr.f32.mxu0 0.0
    %403 = vmatmul.mubr.f32.gmra.mrb[0].mxu0 %v320
    %v404 = vpop.f32.mrb[0].mxu0
    %v405 = vadd.f32 0.0, %v404
    %v406 = vpop.f32.mrb[0].mxu0
    %407 = vdwg.mxu0
    %s408 = scalar_lea.vmem [#allocation10], 1
    %v409 = vld [vmem:[%s408] sm:$0x1]
    %s410 = scalar_lea.vmem [#allocation11], 1
    %v411 = vld [vmem:[%s410] sm:$0x1]
    %412 = vadd.xlane.f32.xlu0 %v405
    %v413 = vpop.xlane.xlu0 %412
    %v414 = vmul.f32 %v405, %v405
    %415 = vadd.xlane.f32.xlu0 %v414
    %v416 = vpop.xlane.xlu0 %415
    %v417 = vmul.f32 %v413, 0.0078125
    %v418 = vmul.f32 %v416, 0.0078125
    %v419 = vmul.f32 %v417, %v417
    %v420 = vsub.f32 %v418, %v419
    %v421 = vadd.f32 %v420, 1e-05
    %v422 = vrsqrt.pop %v421
    %v423 = vsub.f32 %v405, %v417
    %v424 = vmul.f32 %v423, %v422
    %v426 = vlaneseq
    %v427 = vshrl.u32 %v426, 7
    %v428 = vsub.s32 0, %v427
    %v429 = vrot.slane %v409, %v428
    %v431 = vmul.f32 %v424, %v429
    %v433 = vlaneseq
    %v434 = vshrl.u32 %v433, 7
    %v435 = vsub.s32 0, %v434
    %v436 = vrot.slane %v411, %v435
    %v438 = vadd.f32 %v431, %v436
    %s439 = scalar_lea.vmem [#allocation5], 16
    %v440 = vld [vmem:[%s439] sm:$0xff]
    %s441 = scalar_lea.vmem [#allocation8], 256
    %v442 = vld [vmem:[%s441] sm:$0xff]
    %v443 = vld [vmem:[%s441 + $0x8] sm:$0xff]
    %v444 = vld [vmem:[%s441 + $0x10] sm:$0xff]
    %v445 = vld [vmem:[%s441 + $0x18] sm:$0xff]
    %v446 = vld [vmem:[%s441 + $0x20] sm:$0xff]
    %v447 = vld [vmem:[%s441 + $0x28] sm:$0xff]
    %v448 = vld [vmem:[%s441 + $0x30] sm:$0xff]
    %v449 = vld [vmem:[%s441 + $0x38] sm:$0xff]
    %v450 = vld [vmem:[%s441 + $0x40] sm:$0xff]
    %v451 = vld [vmem:[%s441 + $0x48] sm:$0xff]
    %v452 = vld [vmem:[%s441 + $0x50] sm:$0xff]
    %v453 = vld [vmem:[%s441 + $0x58] sm:$0xff]
    %v454 = vld [vmem:[%s441 + $0x60] sm:$0xff]
    %v455 = vld [vmem:[%s441 + $0x68] sm:$0xff]
    %v456 = vld [vmem:[%s441 + $0x70] sm:$0xff]
    %v457 = vld [vmem:[%s441 + $0x78] sm:$0xff]
    %458 = vmatprep.subr.mxu0 0.0
    %459 = vmatpush1.msra.mxu0 %v442
    %460 = vmatprep.subr.mxu0 0.0
    %461 = vmatpush1.msra.mxu0 %v443
    %462 = vmatprep.subr.mxu0 0.0
    %463 = vmatpush1.msra.mxu0 %v444
    %464 = vmatprep.subr.mxu0 0.0
    %465 = vmatpush1.msra.mxu0 %v445
    %466 = vmatprep.subr.mxu0 0.0
    %467 = vmatpush1.msra.mxu0 %v446
    %468 = vmatprep.subr.mxu0 0.0
    %469 = vmatpush1.msra.mxu0 %v447
    %470 = vmatprep.subr.mxu0 0.0
    %471 = vmatpush1.msra.mxu0 %v448
    %472 = vmatprep.subr.mxu0 0.0
    %473 = vmatpush1.msra.mxu0 %v449
    %474 = vmatprep.subr.mxu0 0.0
    %475 = vmatpush1.msra.mxu0 %v450
    %476 = vmatprep.subr.mxu0 0.0
    %477 = vmatpush1.msra.mxu0 %v451
    %478 = vmatprep.subr.mxu0 0.0
    %479 = vmatpush1.msra.mxu0 %v452
    %480 = vmatprep.subr.mxu0 0.0
    %481 = vmatpush1.msra.mxu0 %v453
    %482 = vmatprep.subr.mxu0 0.0
    %483 = vmatpush1.msra.mxu0 %v454
    %484 = vmatprep.subr.mxu0 0.0
    %485 = vmatpush1.msra.mxu0 %v455
    %486 = vmatprep.subr.mxu0 0.0
    %487 = vmatpush1.msra.mxu0 %v456
    %488 = vmatprep.subr.mxu0 0.0
    %489 = vmatpush1.msra.mxu0 %v457
    %490 = vmatprep.subr.mxu0 0.0
    %491 = vmatpush1.msra.mxu0 0.0
    %492 = vmatprep.subr.mxu0 0.0
    %493 = vmatpush1.msra.mxu0 0.0
    %494 = vmatprep.subr.mxu0 0.0
    %495 = vmatpush1.msra.mxu0 0.0
    %496 = vmatprep.subr.mxu0 0.0
    %497 = vmatpush1.msra.mxu0 0.0
    %498 = vmatprep.subr.mxu0 0.0
    %499 = vmatpush1.msra.mxu0 0.0
    %500 = vmatprep.subr.mxu0 0.0
    %501 = vmatpush1.msra.mxu0 0.0
    %502 = vmatprep.subr.mxu0 0.0
    %503 = vmatpush1.msra.mxu0 0.0
    %504 = vmatprep.subr.mxu0 0.0
    %505 = vmatpush1.msra.mxu0 0.0
    %506 = vmatprep.subr.mxu0 0.0
    %507 = vmatpush1.msra.mxu0 0.0
    %508 = vmatprep.subr.mxu0 0.0
    %509 = vmatpush1.msra.mxu0 0.0
    %510 = vmatprep.subr.mxu0 0.0
    %511 = vmatpush1.msra.mxu0 0.0
    %512 = vmatprep.subr.mxu0 0.0
    %513 = vmatpush1.msra.mxu0 0.0
    %514 = vmatprep.subr.mxu0 0.0
    %515 = vmatpush1.msra.mxu0 0.0
    %516 = vmatprep.subr.mxu0 0.0
    %517 = vmatpush1.msra.mxu0 0.0
    %518 = vmatprep.subr.mxu0 0.0
    %519 = vmatpush1.msra.mxu0 0.0
    %520 = vmatprep.subr.mxu0 0.0
    %521 = vmatpush1.msra.mxu0 0.0
    %522 = vmatprep.mubr.f32.mxu0 0.0
    %523 = vmatmul.mubr.f32.gmra.mrb[0].mxu0 %v440
    %v524 = vpop.f32.mrb[0].mxu0
    %v525 = vadd.f32 0.0, %v524
    %v526 = vpop.f32.mrb[0].mxu0
    %527 = vdwg.mxu0
    %s528 = scalar_lea.vmem [#allocation10], 2
    %v529 = vld [vmem:[%s528] sm:$0x1]
    %s530 = scalar_lea.vmem [#allocation11], 2
    %v531 = vld [vmem:[%s530] sm:$0x1]
    %532 = vadd.xlane.f32.xlu0 %v525
    %v533 = vpop.xlane.xlu0 %532
    %v534 = vmul.f32 %v525, %v525
    %535 = vadd.xlane.f32.xlu0 %v534
    %v536 = vpop.xlane.xlu0 %535
    %v537 = vmul.f32 %v533, 0.0078125
    %v538 = vmul.f32 %v536, 0.0078125
    %v539 = vmul.f32 %v537, %v537
    %v540 = vsub.f32 %v538, %v539
    %v541 = vadd.f32 %v540, 1e-05
    %v542 = vrsqrt.pop %v541
    %v543 = vsub.f32 %v525, %v537
    %v544 = vmul.f32 %v543, %v542
    %v546 = vlaneseq
    %v547 = vshrl.u32 %v546, 7
    %v548 = vsub.s32 0, %v547
    %v549 = vrot.slane %v529, %v548
    %v551 = vmul.f32 %v544, %v549
    %v553 = vlaneseq
    %v554 = vshrl.u32 %v553, 7
    %v555 = vsub.s32 0, %v554
    %v556 = vrot.slane %v531, %v555
    %v558 = vadd.f32 %v551, %v556
    %s559 = scalar_lea.vmem [#allocation5], 24
    %v560 = vld [vmem:[%s559] sm:$0xff]
    %s561 = scalar_lea.vmem [#allocation8], 384
    %v562 = vld [vmem:[%s561] sm:$0xff]
    %v563 = vld [vmem:[%s561 + $0x8] sm:$0xff]
    %v564 = vld [vmem:[%s561 + $0x10] sm:$0xff]
    %v565 = vld [vmem:[%s561 + $0x18] sm:$0xff]
    %v566 = vld [vmem:[%s561 + $0x20] sm:$0xff]
    %v567 = vld [vmem:[%s561 + $0x28] sm:$0xff]
    %v568 = vld [vmem:[%s561 + $0x30] sm:$0xff]
    %v569 = vld [vmem:[%s561 + $0x38] sm:$0xff]
    %v570 = vld [vmem:[%s561 + $0x40] sm:$0xff]
    %v571 = vld [vmem:[%s561 + $0x48] sm:$0xff]
    %v572 = vld [vmem:[%s561 + $0x50] sm:$0xff]
    %v573 = vld [vmem:[%s561 + $0x58] sm:$0xff]
    %v574 = vld [vmem:[%s561 + $0x60] sm:$0xff]
    %v575 = vld [vmem:[%s561 + $0x68] sm:$0xff]
    %v576 = vld [vmem:[%s561 + $0x70] sm:$0xff]
    %v577 = vld [vmem:[%s561 + $0x78] sm:$0xff]
    %578 = vmatprep.subr.mxu0 0.0
    %579 = vmatpush1.msra.mxu0 %v562
    %580 = vmatprep.subr.mxu0 0.0
    %581 = vmatpush1.msra.mxu0 %v563
    %582 = vmatprep.subr.mxu0 0.0
    %583 = vmatpush1.msra.mxu0 %v564
    %584 = vmatprep.subr.mxu0 0.0
    %585 = vmatpush1.msra.mxu0 %v565
    %586 = vmatprep.subr.mxu0 0.0
    %587 = vmatpush1.msra.mxu0 %v566
    %588 = vmatprep.subr.mxu0 0.0
    %589 = vmatpush1.msra.mxu0 %v567
    %590 = vmatprep.subr.mxu0 0.0
    %591 = vmatpush1.msra.mxu0 %v568
    %592 = vmatprep.subr.mxu0 0.0
    %593 = vmatpush1.msra.mxu0 %v569
    %594 = vmatprep.subr.mxu0 0.0
    %595 = vmatpush1.msra.mxu0 %v570
    %596 = vmatprep.subr.mxu0 0.0
    %597 = vmatpush1.msra.mxu0 %v571
    %598 = vmatprep.subr.mxu0 0.0
    %599 = vmatpush1.msra.mxu0 %v572
    %600 = vmatprep.subr.mxu0 0.0
    %601 = vmatpush1.msra.mxu0 %v573
    %602 = vmatprep.subr.mxu0 0.0
    %603 = vmatpush1.msra.mxu0 %v574
    %604 = vmatprep.subr.mxu0 0.0
    %605 = vmatpush1.msra.mxu0 %v575
    %606 = vmatprep.subr.mxu0 0.0
    %607 = vmatpush1.msra.mxu0 %v576
    %608 = vmatprep.subr.mxu0 0.0
    %609 = vmatpush1.msra.mxu0 %v577
    %610 = vmatprep.subr.mxu0 0.0
    %611 = vmatpush1.msra.mxu0 0.0
    %612 = vmatprep.subr.mxu0 0.0
    %613 = vmatpush1.msra.mxu0 0.0
    %614 = vmatprep.subr.mxu0 0.0
    %615 = vmatpush1.msra.mxu0 0.0
    %616 = vmatprep.subr.mxu0 0.0
    %617 = vmatpush1.msra.mxu0 0.0
    %618 = vmatprep.subr.mxu0 0.0
    %619 = vmatpush1.msra.mxu0 0.0
    %620 = vmatprep.subr.mxu0 0.0
    %621 = vmatpush1.msra.mxu0 0.0
    %622 = vmatprep.subr.mxu0 0.0
    %623 = vmatpush1.msra.mxu0 0.0
    %624 = vmatprep.subr.mxu0 0.0
    %625 = vmatpush1.msra.mxu0 0.0
    %626 = vmatprep.subr.mxu0 0.0
    %627 = vmatpush1.msra.mxu0 0.0
    %628 = vmatprep.subr.mxu0 0.0
    %629 = vmatpush1.msra.mxu0 0.0
    %630 = vmatprep.subr.mxu0 0.0
    %631 = vmatpush1.msra.mxu0 0.0
    %632 = vmatprep.subr.mxu0 0.0
    %633 = vmatpush1.msra.mxu0 0.0
    %634 = vmatprep.subr.mxu0 0.0
    %635 = vmatpush1.msra.mxu0 0.0
    %636 = vmatprep.subr.mxu0 0.0
    %637 = vmatpush1.msra.mxu0 0.0
    %638 = vmatprep.subr.mxu0 0.0
    %639 = vmatpush1.msra.mxu0 0.0
    %640 = vmatprep.subr.mxu0 0.0
    %641 = vmatpush1.msra.mxu0 0.0
    %642 = vmatprep.mubr.f32.mxu0 0.0
    %643 = vmatmul.mubr.f32.gmra.mrb[0].mxu0 %v560
    %v644 = vpop.f32.mrb[0].mxu0
    %v645 = vadd.f32 0.0, %v644
    %v646 = vpop.f32.mrb[0].mxu0
    %647 = vdwg.mxu0
    %s648 = scalar_lea.vmem [#allocation10], 3
    %v649 = vld [vmem:[%s648] sm:$0x1]
    %s650 = scalar_lea.vmem [#allocation11], 3
    %v651 = vld [vmem:[%s650] sm:$0x1]
    %652 = vadd.xlane.f32.xlu0 %v645
    %v653 = vpop.xlane.xlu0 %652
    %v654 = vmul.f32 %v645, %v645
    %655 = vadd.xlane.f32.xlu0 %v654
    %v656 = vpop.xlane.xlu0 %655
    %v657 = vmul.f32 %v653, 0.0078125
    %v658 = vmul.f32 %v656, 0.0078125
    %v659 = vmul.f32 %v657, %v657
    %v660 = vsub.f32 %v658, %v659
    %v661 = vadd.f32 %v660, 1e-05
    %v662 = vrsqrt.pop %v661
    %v663 = vsub.f32 %v645, %v657
    %v664 = vmul.f32 %v663, %v662
    %v666 = vlaneseq
    %v667 = vshrl.u32 %v666, 7
    %v668 = vsub.s32 0, %v667
    %v669 = vrot.slane %v649, %v668
    %v671 = vmul.f32 %v664, %v669
    %v673 = vlaneseq
    %v674 = vshrl.u32 %v673, 7
    %v675 = vsub.s32 0, %v674
    %v676 = vrot.slane %v651, %v675
    %v678 = vadd.f32 %v671, %v676
    %s679 = scalar_lea.vmem [#allocation5], 32
    %v680 = vld [vmem:[%s679] sm:$0xff]
    %s681 = scalar_lea.vmem [#allocation8], 512
    %v682 = vld [vmem:[%s681] sm:$0xff]
    %v683 = vld [vmem:[%s681 + $0x8] sm:$0xff]
    %v684 = vld [vmem:[%s681 + $0x10] sm:$0xff]
    %v685 = vld [vmem:[%s681 + $0x18] sm:$0xff]
    %v686 = vld [vmem:[%s681 + $0x20] sm:$0xff]
    %v687 = vld [vmem:[%s681 + $0x28] sm:$0xff]
    %v688 = vld [vmem:[%s681 + $0x30] sm:$0xff]
    %v689 = vld [vmem:[%s681 + $0x38] sm:$0xff]
    %v690 = vld [vmem:[%s681 + $0x40] sm:$0xff]
    %v691 = vld [vmem:[%s681 + $0x48] sm:$0xff]
    %v692 = vld [vmem:[%s681 + $0x50] sm:$0xff]
    %v693 = vld [vmem:[%s681 + $0x58] sm:$0xff]
    %v694 = vld [vmem:[%s681 + $0x60] sm:$0xff]
    %v695 = vld [vmem:[%s681 + $0x68] sm:$0xff]
    %v696 = vld [vmem:[%s681 + $0x70] sm:$0xff]
    %v697 = vld [vmem:[%s681 + $0x78] sm:$0xff]
    %698 = vmatprep.subr.mxu0 0.0
    %699 = vmatpush1.msra.mxu0 %v682
    %700 = vmatprep.subr.mxu0 0.0
    %701 = vmatpush1.msra.mxu0 %v683
    %702 = vmatprep.subr.mxu0 0.0
    %703 = vmatpush1.msra.mxu0 %v684
    %704 = vmatprep.subr.mxu0 0.0
    %705 = vmatpush1.msra.mxu0 %v685
    %706 = vmatprep.subr.mxu0 0.0
    %707 = vmatpush1.msra.mxu0 %v686
    %708 = vmatprep.subr.mxu0 0.0
    %709 = vmatpush1.msra.mxu0 %v687
    %710 = vmatprep.subr.mxu0 0.0
    %711 = vmatpush1.msra.mxu0 %v688
    %712 = vmatprep.subr.mxu0 0.0
    %713 = vmatpush1.msra.mxu0 %v689
    %714 = vmatprep.subr.mxu0 0.0
    %715 = vmatpush1.msra.mxu0 %v690
    %716 = vmatprep.subr.mxu0 0.0
    %717 = vmatpush1.msra.mxu0 %v691
    %718 = vmatprep.subr.mxu0 0.0
    %719 = vmatpush1.msra.mxu0 %v692
    %720 = vmatprep.subr.mxu0 0.0
    %721 = vmatpush1.msra.mxu0 %v693
    %722 = vmatprep.subr.mxu0 0.0
    %723 = vmatpush1.msra.mxu0 %v694
    %724 = vmatprep.subr.mxu0 0.0
    %725 = vmatpush1.msra.mxu0 %v695
    %726 = vmatprep.subr.mxu0 0.0
    %727 = vmatpush1.msra.mxu0 %v696
    %728 = vmatprep.subr.mxu0 0.0
    %729 = vmatpush1.msra.mxu0 %v697
    %730 = vmatprep.subr.mxu0 0.0
    %731 = vmatpush1.msra.mxu0 0.0
    %732 = vmatprep.subr.mxu0 0.0
    %733 = vmatpush1.msra.mxu0 0.0
    %734 = vmatprep.subr.mxu0 0.0
    %735 = vmatpush1.msra.mxu0 0.0
    %736 = vmatprep.subr.mxu0 0.0
    %737 = vmatpush1.msra.mxu0 0.0
    %738 = vmatprep.subr.mxu0 0.0
    %739 = vmatpush1.msra.mxu0 0.0
    %740 = vmatprep.subr.mxu0 0.0
    %741 = vmatpush1.msra.mxu0 0.0
    %742 = vmatprep.subr.mxu0 0.0
    %743 = vmatpush1.msra.mxu0 0.0
    %744 = vmatprep.subr.mxu0 0.0
    %745 = vmatpush1.msra.mxu0 0.0
    %746 = vmatprep.subr.mxu0 0.0
    %747 = vmatpush1.msra.mxu0 0.0
    %748 = vmatprep.subr.mxu0 0.0
    %749 = vmatpush1.msra.mxu0 0.0
    %750 = vmatprep.subr.mxu0 0.0
    %751 = vmatpush1.msra.mxu0 0.0
    %752 = vmatprep.subr.mxu0 0.0
    %753 = vmatpush1.msra.mxu0 0.0
    %754 = vmatprep.subr.mxu0 0.0
    %755 = vmatpush1.msra.mxu0 0.0
    %756 = vmatprep.subr.mxu0 0.0
    %757 = vmatpush1.msra.mxu0 0.0
    %758 = vmatprep.subr.mxu0 0.0
    %759 = vmatpush1.msra.mxu0 0.0
    %760 = vmatprep.subr.mxu0 0.0
    %761 = vmatpush1.msra.mxu0 0.0
    %762 = vmatprep.mubr.f32.mxu0 0.0
    %763 = vmatmul.mubr.f32.gmra.mrb[0].mxu0 %v680
    %v764 = vpop.f32.mrb[0].mxu0
    %v765 = vadd.f32 0.0, %v764
    %v766 = vpop.f32.mrb[0].mxu0
    %767 = vdwg.mxu0
    %s768 = scalar_lea.vmem [#allocation10], 4
    %v769 = vld [vmem:[%s768] sm:$0x1]
    %s770 = scalar_lea.vmem [#allocation11], 4
    %v771 = vld [vmem:[%s770] sm:$0x1]
    %772 = vadd.xlane.f32.xlu0 %v765
    %v773 = vpop.xlane.xlu0 %772
    %v774 = vmul.f32 %v765, %v765
    %775 = vadd.xlane.f32.xlu0 %v774
    %v776 = vpop.xlane.xlu0 %775
    %v777 = vmul.f32 %v773, 0.0078125
    %v778 = vmul.f32 %v776, 0.0078125
    %v779 = vmul.f32 %v777, %v777
    %v780 = vsub.f32 %v778, %v779
    %v781 = vadd.f32 %v780, 1e-05
    %v782 = vrsqrt.pop %v781
    %v783 = vsub.f32 %v765, %v777
    %v784 = vmul.f32 %v783, %v782
    %v786 = vlaneseq
    %v787 = vshrl.u32 %v786, 7
    %v788 = vsub.s32 0, %v787
    %v789 = vrot.slane %v769, %v788
    %v791 = vmul.f32 %v784, %v789
    %v793 = vlaneseq
    %v794 = vshrl.u32 %v793, 7
    %v795 = vsub.s32 0, %v794
    %v796 = vrot.slane %v771, %v795
    %v798 = vadd.f32 %v791, %v796
    %s799 = scalar_lea.vmem [#allocation5], 40
    %v800 = vld [vmem:[%s799] sm:$0xff]
    %s801 = scalar_lea.vmem [#allocation8], 640
    %v802 = vld [vmem:[%s801] sm:$0xff]
    %v803 = vld [vmem:[%s801 + $0x8] sm:$0xff]
    %v804 = vld [vmem:[%s801 + $0x10] sm:$0xff]
    %v805 = vld [vmem:[%s801 + $0x18] sm:$0xff]
    %v806 = vld [vmem:[%s801 + $0x20] sm:$0xff]
    %v807 = vld [vmem:[%s801 + $0x28] sm:$0xff]
    %v808 = vld [vmem:[%s801 + $0x30] sm:$0xff]
    %v809 = vld [vmem:[%s801 + $0x38] sm:$0xff]
    %v810 = vld [vmem:[%s801 + $0x40] sm:$0xff]
    %v811 = vld [vmem:[%s801 + $0x48] sm:$0xff]
    %v812 = vld [vmem:[%s801 + $0x50] sm:$0xff]
    %v813 = vld [vmem:[%s801 + $0x58] sm:$0xff]
    %v814 = vld [vmem:[%s801 + $0x60] sm:$0xff]
    %v815 = vld [vmem:[%s801 + $0x68] sm:$0xff]
    %v816 = vld [vmem:[%s801 + $0x70] sm:$0xff]
    %v817 = vld [vmem:[%s801 + $0x78] sm:$0xff]
    %818 = vmatprep.subr.mxu0 0.0
    %819 = vmatpush1.msra.mxu0 %v802
    %820 = vmatprep.subr.mxu0 0.0
    %821 = vmatpush1.msra.mxu0 %v803
    %822 = vmatprep.subr.mxu0 0.0
    %823 = vmatpush1.msra.mxu0 %v804
    %824 = vmatprep.subr.mxu0 0.0
    %825 = vmatpush1.msra.mxu0 %v805
    %826 = vmatprep.subr.mxu0 0.0
    %827 = vmatpush1.msra.mxu0 %v806
    %828 = vmatprep.subr.mxu0 0.0
    %829 = vmatpush1.msra.mxu0 %v807
    %830 = vmatprep.subr.mxu0 0.0
    %831 = vmatpush1.msra.mxu0 %v808
    %832 = vmatprep.subr.mxu0 0.0
    %833 = vmatpush1.msra.mxu0 %v809
    %834 = vmatprep.subr.mxu0 0.0
    %835 = vmatpush1.msra.mxu0 %v810
    %836 = vmatprep.subr.mxu0 0.0
    %837 = vmatpush1.msra.mxu0 %v811
    %838 = vmatprep.subr.mxu0 0.0
    %839 = vmatpush1.msra.mxu0 %v812
    %840 = vmatprep.subr.mxu0 0.0
    %841 = vmatpush1.msra.mxu0 %v813
    %842 = vmatprep.subr.mxu0 0.0
    %843 = vmatpush1.msra.mxu0 %v814
    %844 = vmatprep.subr.mxu0 0.0
    %845 = vmatpush1.msra.mxu0 %v815
    %846 = vmatprep.subr.mxu0 0.0
    %847 = vmatpush1.msra.mxu0 %v816
    %848 = vmatprep.subr.mxu0 0.0
    %849 = vmatpush1.msra.mxu0 %v817
    %850 = vmatprep.subr.mxu0 0.0
    %851 = vmatpush1.msra.mxu0 0.0
    %852 = vmatprep.subr.mxu0 0.0
    %853 = vmatpush1.msra.mxu0 0.0
    %854 = vmatprep.subr.mxu0 0.0
    %855 = vmatpush1.msra.mxu0 0.0
    %856 = vmatprep.subr.mxu0 0.0
    %857 = vmatpush1.msra.mxu0 0.0
    %858 = vmatprep.subr.mxu0 0.0
    %859 = vmatpush1.msra.mxu0 0.0
    %860 = vmatprep.subr.mxu0 0.0
    %861 = vmatpush1.msra.mxu0 0.0
    %862 = vmatprep.subr.mxu0 0.0
    %863 = vmatpush1.msra.mxu0 0.0
    %864 = vmatprep.subr.mxu0 0.0
    %865 = vmatpush1.msra.mxu0 0.0
    %866 = vmatprep.subr.mxu0 0.0
    %867 = vmatpush1.msra.mxu0 0.0
    %868 = vmatprep.subr.mxu0 0.0
    %869 = vmatpush1.msra.mxu0 0.0
    %870 = vmatprep.subr.mxu0 0.0
    %871 = vmatpush1.msra.mxu0 0.0
    %872 = vmatprep.subr.mxu0 0.0
    %873 = vmatpush1.msra.mxu0 0.0
    %874 = vmatprep.subr.mxu0 0.0
    %875 = vmatpush1.msra.mxu0 0.0
    %876 = vmatprep.subr.mxu0 0.0
    %877 = vmatpush1.msra.mxu0 0.0
    %878 = vmatprep.subr.mxu0 0.0
    %879 = vmatpush1.msra.mxu0 0.0
    %880 = vmatprep.subr.mxu0 0.0
    %881 = vmatpush1.msra.mxu0 0.0
    %882 = vmatprep.mubr.f32.mxu0 0.0
    %883 = vmatmul.mubr.f32.gmra.mrb[0].mxu0 %v800
    %v884 = vpop.f32.mrb[0].mxu0
    %v885 = vadd.f32 0.0, %v884
    %v886 = vpop.f32.mrb[0].mxu0
    %887 = vdwg.mxu0
    %s888 = scalar_lea.vmem [#allocation10], 5
    %v889 = vld [vmem:[%s888] sm:$0x1]
    %s890 = scalar_lea.vmem [#allocation11], 5
    %v891 = vld [vmem:[%s890] sm:$0x1]
    %892 = vadd.xlane.f32.xlu0 %v885
    %v893 = vpop.xlane.xlu0 %892
    %v894 = vmul.f32 %v885, %v885
    %895 = vadd.xlane.f32.xlu0 %v894
    %v896 = vpop.xlane.xlu0 %895
    %v897 = vmul.f32 %v893, 0.0078125
    %v898 = vmul.f32 %v896, 0.0078125
    %v899 = vmul.f32 %v897, %v897
    %v900 = vsub.f32 %v898, %v899
    %v901 = vadd.f32 %v900, 1e-05
    %v902 = vrsqrt.pop %v901
    %v903 = vsub.f32 %v885, %v897
    %v904 = vmul.f32 %v903, %v902
    %v906 = vlaneseq
    %v907 = vshrl.u32 %v906, 7
    %v908 = vsub.s32 0, %v907
    %v909 = vrot.slane %v889, %v908
    %v911 = vmul.f32 %v904, %v909
    %v913 = vlaneseq
    %v914 = vshrl.u32 %v913, 7
    %v915 = vsub.s32 0, %v914
    %v916 = vrot.slane %v891, %v915
    %v918 = vadd.f32 %v911, %v916
    %s919 = scalar_lea.vmem [#allocation5], 48
    %v920 = vld [vmem:[%s919] sm:$0xff]
    %s921 = scalar_lea.vmem [#allocation8], 768
    %v922 = vld [vmem:[%s921] sm:$0xff]
    %v923 = vld [vmem:[%s921 + $0x8] sm:$0xff]
    %v924 = vld [vmem:[%s921 + $0x10] sm:$0xff]
    %v925 = vld [vmem:[%s921 + $0x18] sm:$0xff]
    %v926 = vld [vmem:[%s921 + $0x20] sm:$0xff]
    %v927 = vld [vmem:[%s921 + $0x28] sm:$0xff]
    %v928 = vld [vmem:[%s921 + $0x30] sm:$0xff]
    %v929 = vld [vmem:[%s921 + $0x38] sm:$0xff]
    %v930 = vld [vmem:[%s921 + $0x40] sm:$0xff]
    %v931 = vld [vmem:[%s921 + $0x48] sm:$0xff]
    %v932 = vld [vmem:[%s921 + $0x50] sm:$0xff]
    %v933 = vld [vmem:[%s921 + $0x58] sm:$0xff]
    %v934 = vld [vmem:[%s921 + $0x60] sm:$0xff]
    %v935 = vld [vmem:[%s921 + $0x68] sm:$0xff]
    %v936 = vld [vmem:[%s921 + $0x70] sm:$0xff]
    %v937 = vld [vmem:[%s921 + $0x78] sm:$0xff]
    %938 = vmatprep.subr.mxu0 0.0
    %939 = vmatpush1.msra.mxu0 %v922
    %940 = vmatprep.subr.mxu0 0.0
    %941 = vmatpush1.msra.mxu0 %v923
    %942 = vmatprep.subr.mxu0 0.0
    %943 = vmatpush1.msra.mxu0 %v924
    %944 = vmatprep.subr.mxu0 0.0
    %945 = vmatpush1.msra.mxu0 %v925
    %946 = vmatprep.subr.mxu0 0.0
    %947 = vmatpush1.msra.mxu0 %v926
    %948 = vmatprep.subr.mxu0 0.0
    %949 = vmatpush1.msra.mxu0 %v927
    %950 = vmatprep.subr.mxu0 0.0
    %951 = vmatpush1.msra.mxu0 %v928
    %952 = vmatprep.subr.mxu0 0.0
    %953 = vmatpush1.msra.mxu0 %v929
    %954 = vmatprep.subr.mxu0 0.0
    %955 = vmatpush1.msra.mxu0 %v930
    %956 = vmatprep.subr.mxu0 0.0
    %957 = vmatpush1.msra.mxu0 %v931
    %958 = vmatprep.subr.mxu0 0.0
    %959 = vmatpush1.msra.mxu0 %v932
    %960 = vmatprep.subr.mxu0 0.0
    %961 = vmatpush1.msra.mxu0 %v933
    %962 = vmatprep.subr.mxu0 0.0
    %963 = vmatpush1.msra.mxu0 %v934
    %964 = vmatprep.subr.mxu0 0.0
    %965 = vmatpush1.msra.mxu0 %v935
    %966 = vmatprep.subr.mxu0 0.0
    %967 = vmatpush1.msra.mxu0 %v936
    %968 = vmatprep.subr.mxu0 0.0
    %969 = vmatpush1.msra.mxu0 %v937
    %970 = vmatprep.subr.mxu0 0.0
    %971 = vmatpush1.msra.mxu0 0.0
    %972 = vmatprep.subr.mxu0 0.0
    %973 = vmatpush1.msra.mxu0 0.0
    %974 = vmatprep.subr.mxu0 0.0
    %975 = vmatpush1.msra.mxu0 0.0
    %976 = vmatprep.subr.mxu0 0.0
    %977 = vmatpush1.msra.mxu0 0.0
    %978 = vmatprep.subr.mxu0 0.0
    %979 = vmatpush1.msra.mxu0 0.0
    %980 = vmatprep.subr.mxu0 0.0
    %981 = vmatpush1.msra.mxu0 0.0
    %982 = vmatprep.subr.mxu0 0.0
    %983 = vmatpush1.msra.mxu0 0.0
    %984 = vmatprep.subr.mxu0 0.0
    %985 = vmatpush1.msra.mxu0 0.0
    %986 = vmatprep.subr.mxu0 0.0
    %987 = vmatpush1.msra.mxu0 0.0
    %988 = vmatprep.subr.mxu0 0.0
    %989 = vmatpush1.msra.mxu0 0.0
    %990 = vmatprep.subr.mxu0 0.0
    %991 = vmatpush1.msra.mxu0 0.0
    %992 = vmatprep.subr.mxu0 0.0
    %993 = vmatpush1.msra.mxu0 0.0
    %994 = vmatprep.subr.mxu0 0.0
    %995 = vmatpush1.msra.mxu0 0.0
    %996 = vmatprep.subr.mxu0 0.0
    %997 = vmatpush1.msra.mxu0 0.0
    %998 = vmatprep.subr.mxu0 0.0
    %999 = vmatpush1.msra.mxu0 0.0
    %1000 = vmatprep.subr.mxu0 0.0
    %1001 = vmatpush1.msra.mxu0 0.0
    %1002 = vmatprep.mubr.f32.mxu0 0.0
    %1003 = vmatmul.mubr.f32.gmra.mrb[0].mxu0 %v920
    %v1004 = vpop.f32.mrb[0].mxu0
    %v1005 = vadd.f32 0.0, %v1004
    %v1006 = vpop.f32.mrb[0].mxu0
    %1007 = vdwg.mxu0
    %s1008 = scalar_lea.vmem [#allocation10], 6
    %v1009 = vld [vmem:[%s1008] sm:$0x1]
    %s1010 = scalar_lea.vmem [#allocation11], 6
    %v1011 = vld [vmem:[%s1010] sm:$0x1]
    %1012 = vadd.xlane.f32.xlu0 %v1005
    %v1013 = vpop.xlane.xlu0 %1012
    %v1014 = vmul.f32 %v1005, %v1005
    %1015 = vadd.xlane.f32.xlu0 %v1014
    %v1016 = vpop.xlane.xlu0 %1015
    %v1017 = vmul.f32 %v1013, 0.0078125
    %v1018 = vmul.f32 %v1016, 0.0078125
    %v1019 = vmul.f32 %v1017, %v1017
    %v1020 = vsub.f32 %v1018, %v1019
    %v1021 = vadd.f32 %v1020, 1e-05
    %v1022 = vrsqrt.pop %v1021
    %v1023 = vsub.f32 %v1005, %v1017
    %v1024 = vmul.f32 %v1023, %v1022
    %v1026 = vlaneseq
    %v1027 = vshrl.u32 %v1026, 7
    %v1028 = vsub.s32 0, %v1027
    %v1029 = vrot.slane %v1009, %v1028
    %v1031 = vmul.f32 %v1024, %v1029
    %v1033 = vlaneseq
    %v1034 = vshrl.u32 %v1033, 7
    %v1035 = vsub.s32 0, %v1034
    %v1036 = vrot.slane %v1011, %v1035
    %v1038 = vadd.f32 %v1031, %v1036
    %s1039 = scalar_lea.vmem [#allocation5], 56
    %v1040 = vld [vmem:[%s1039] sm:$0xff]
    %s1041 = scalar_lea.vmem [#allocation8], 896
    %v1042 = vld [vmem:[%s1041] sm:$0xff]
    %v1043 = vld [vmem:[%s1041 + $0x8] sm:$0xff]
    %v1044 = vld [vmem:[%s1041 + $0x10] sm:$0xff]
    %v1045 = vld [vmem:[%s1041 + $0x18] sm:$0xff]
    %v1046 = vld [vmem:[%s1041 + $0x20] sm:$0xff]
    %v1047 = vld [vmem:[%s1041 + $0x28] sm:$0xff]
    %v1048 = vld [vmem:[%s1041 + $0x30] sm:$0xff]
    %v1049 = vld [vmem:[%s1041 + $0x38] sm:$0xff]
    %v1050 = vld [vmem:[%s1041 + $0x40] sm:$0xff]
    %v1051 = vld [vmem:[%s1041 + $0x48] sm:$0xff]
    %v1052 = vld [vmem:[%s1041 + $0x50] sm:$0xff]
    %v1053 = vld [vmem:[%s1041 + $0x58] sm:$0xff]
    %v1054 = vld [vmem:[%s1041 + $0x60] sm:$0xff]
    %v1055 = vld [vmem:[%s1041 + $0x68] sm:$0xff]
    %v1056 = vld [vmem:[%s1041 + $0x70] sm:$0xff]
    %v1057 = vld [vmem:[%s1041 + $0x78] sm:$0xff]
    %1058 = vmatprep.subr.mxu0 0.0
    %1059 = vmatpush1.msra.mxu0 %v1042
    %1060 = vmatprep.subr.mxu0 0.0
    %1061 = vmatpush1.msra.mxu0 %v1043
    %1062 = vmatprep.subr.mxu0 0.0
    %1063 = vmatpush1.msra.mxu0 %v1044
    %1064 = vmatprep.subr.mxu0 0.0
    %1065 = vmatpush1.msra.mxu0 %v1045
    %1066 = vmatprep.subr.mxu0 0.0
    %1067 = vmatpush1.msra.mxu0 %v1046
    %1068 = vmatprep.subr.mxu0 0.0
    %1069 = vmatpush1.msra.mxu0 %v1047
    %1070 = vmatprep.subr.mxu0 0.0
    %1071 = vmatpush1.msra.mxu0 %v1048
    %1072 = vmatprep.subr.mxu0 0.0
    %1073 = vmatpush1.msra.mxu0 %v1049
    %1074 = vmatprep.subr.mxu0 0.0
    %1075 = vmatpush1.msra.mxu0 %v1050
    %1076 = vmatprep.subr.mxu0 0.0
    %1077 = vmatpush1.msra.mxu0 %v1051
    %1078 = vmatprep.subr.mxu0 0.0
    %1079 = vmatpush1.msra.mxu0 %v1052
    %1080 = vmatprep.subr.mxu0 0.0
    %1081 = vmatpush1.msra.mxu0 %v1053
    %1082 = vmatprep.subr.mxu0 0.0
    %1083 = vmatpush1.msra.mxu0 %v1054
    %1084 = vmatprep.subr.mxu0 0.0
    %1085 = vmatpush1.msra.mxu0 %v1055
    %1086 = vmatprep.subr.mxu0 0.0
    %1087 = vmatpush1.msra.mxu0 %v1056
    %1088 = vmatprep.subr.mxu0 0.0
    %1089 = vmatpush1.msra.mxu0 %v1057
    %1090 = vmatprep.subr.mxu0 0.0
    %1091 = vmatpush1.msra.mxu0 0.0
    %1092 = vmatprep.subr.mxu0 0.0
    %1093 = vmatpush1.msra.mxu0 0.0
    %1094 = vmatprep.subr.mxu0 0.0
    %1095 = vmatpush1.msra.mxu0 0.0
    %1096 = vmatprep.subr.mxu0 0.0
    %1097 = vmatpush1.msra.mxu0 0.0
    %1098 = vmatprep.subr.mxu0 0.0
    %1099 = vmatpush1.msra.mxu0 0.0
    %1100 = vmatprep.subr.mxu0 0.0
    %1101 = vmatpush1.msra.mxu0 0.0
    %1102 = vmatprep.subr.mxu0 0.0
    %1103 = vmatpush1.msra.mxu0 0.0
    %1104 = vmatprep.subr.mxu0 0.0
    %1105 = vmatpush1.msra.mxu0 0.0
    %1106 = vmatprep.subr.mxu0 0.0
    %1107 = vmatpush1.msra.mxu0 0.0
    %1108 = vmatprep.subr.mxu0 0.0
    %1109 = vmatpush1.msra.mxu0 0.0
    %1110 = vmatprep.subr.mxu0 0.0
    %1111 = vmatpush1.msra.mxu0 0.0
    %1112 = vmatprep.subr.mxu0 0.0
    %1113 = vmatpush1.msra.mxu0 0.0
    %1114 = vmatprep.subr.mxu0 0.0
    %1115 = vmatpush1.msra.mxu0 0.0
    %1116 = vmatprep.subr.mxu0 0.0
    %1117 = vmatpush1.msra.mxu0 0.0
    %1118 = vmatprep.subr.mxu0 0.0
    %1119 = vmatpush1.msra.mxu0 0.0
    %1120 = vmatprep.subr.mxu0 0.0
    %1121 = vmatpush1.msra.mxu0 0.0
    %1122 = vmatprep.mubr.f32.mxu0 0.0
    %1123 = vmatmul.mubr.f32.gmra.mrb[0].mxu0 %v1040
    %v1124 = vpop.f32.mrb[0].mxu0
    %v1125 = vadd.f32 0.0, %v1124
    %v1126 = vpop.f32.mrb[0].mxu0
    %1127 = vdwg.mxu0
    %s1128 = scalar_lea.vmem [#allocation10], 7
    %v1129 = vld [vmem:[%s1128] sm:$0x1]
    %s1130 = scalar_lea.vmem [#allocation11], 7
    %v1131 = vld [vmem:[%s1130] sm:$0x1]
    %1132 = vadd.xlane.f32.xlu0 %v1125
    %v1133 = vpop.xlane.xlu0 %1132
    %v1134 = vmul.f32 %v1125, %v1125
    %1135 = vadd.xlane.f32.xlu0 %v1134
    %v1136 = vpop.xlane.xlu0 %1135
    %v1137 = vmul.f32 %v1133, 0.0078125
    %v1138 = vmul.f32 %v1136, 0.0078125
    %v1139 = vmul.f32 %v1137, %v1137
    %v1140 = vsub.f32 %v1138, %v1139
    %v1141 = vadd.f32 %v1140, 1e-05
    %v1142 = vrsqrt.pop %v1141
    %v1143 = vsub.f32 %v1125, %v1137
    %v1144 = vmul.f32 %v1143, %v1142
    %v1146 = vlaneseq
    %v1147 = vshrl.u32 %v1146, 7
    %v1148 = vsub.s32 0, %v1147
    %v1149 = vrot.slane %v1129, %v1148
    %v1151 = vmul.f32 %v1144, %v1149
    %v1153 = vlaneseq
    %v1154 = vshrl.u32 %v1153, 7
    %v1155 = vsub.s32 0, %v1154
    %v1156 = vrot.slane %v1131, %v1155
    %v1158 = vadd.f32 %v1151, %v1156
    %s1159 = scalar_lea.vmem [#allocation5], 64
    %v1160 = vld [vmem:[%s1159] sm:$0xff]
    %s1161 = scalar_lea.vmem [#allocation8], 1024
    %v1162 = vld [vmem:[%s1161] sm:$0xff]
    %v1163 = vld [vmem:[%s1161 + $0x8] sm:$0xff]
    %v1164 = vld [vmem:[%s1161 + $0x10] sm:$0xff]
    %v1165 = vld [vmem:[%s1161 + $0x18] sm:$0xff]
    %v1166 = vld [vmem:[%s1161 + $0x20] sm:$0xff]
    %v1167 = vld [vmem:[%s1161 + $0x28] sm:$0xff]
    %v1168 = vld [vmem:[%s1161 + $0x30] sm:$0xff]
    %v1169 = vld [vmem:[%s1161 + $0x38] sm:$0xff]
    %v1170 = vld [vmem:[%s1161 + $0x40] sm:$0xff]
    %v1171 = vld [vmem:[%s1161 + $0x48] sm:$0xff]
    %v1172 = vld [vmem:[%s1161 + $0x50] sm:$0xff]
    %v1173 = vld [vmem:[%s1161 + $0x58] sm:$0xff]
    %v1174 = vld [vmem:[%s1161 + $0x60] sm:$0xff]
    %v1175 = vld [vmem:[%s1161 + $0x68] sm:$0xff]
    %v1176 = vld [vmem:[%s1161 + $0x70] sm:$0xff]
    %v1177 = vld [vmem:[%s1161 + $0x78] sm:$0xff]
    %1178 = vmatprep.subr.mxu0 0.0
    %1179 = vmatpush1.msra.mxu0 %v1162
    %1180 = vmatprep.subr.mxu0 0.0
    %1181 = vmatpush1.msra.mxu0 %v1163
    %1182 = vmatprep.subr.mxu0 0.0
    %1183 = vmatpush1.msra.mxu0 %v1164
    %1184 = vmatprep.subr.mxu0 0.0
    %1185 = vmatpush1.msra.mxu0 %v1165
    %1186 = vmatprep.subr.mxu0 0.0
    %1187 = vmatpush1.msra.mxu0 %v1166
    %1188 = vmatprep.subr.mxu0 0.0
    %1189 = vmatpush1.msra.mxu0 %v1167
    %1190 = vmatprep.subr.mxu0 0.0
    %1191 = vmatpush1.msra.mxu0 %v1168
    %1192 = vmatprep.subr.mxu0 0.0
    %1193 = vmatpush1.msra.mxu0 %v1169
    %1194 = vmatprep.subr.mxu0 0.0
    %1195 = vmatpush1.msra.mxu0 %v1170
    %1196 = vmatprep.subr.mxu0 0.0
    %1197 = vmatpush1.msra.mxu0 %v1171
    %1198 = vmatprep.subr.mxu0 0.0
    %1199 = vmatpush1.msra.mxu0 %v1172
    %1200 = vmatprep.subr.mxu0 0.0
    %1201 = vmatpush1.msra.mxu0 %v1173
    %1202 = vmatprep.subr.mxu0 0.0
    %1203 = vmatpush1.msra.mxu0 %v1174
    %1204 = vmatprep.subr.mxu0 0.0
    %1205 = vmatpush1.msra.mxu0 %v1175
    %1206 = vmatprep.subr.mxu0 0.0
    %1207 = vmatpush1.msra.mxu0 %v1176
    %1208 = vmatprep.subr.mxu0 0.0
    %1209 = vmatpush1.msra.mxu0 %v1177
    %1210 = vmatprep.subr.mxu0 0.0
    %1211 = vmatpush1.msra.mxu0 0.0
    %1212 = vmatprep.subr.mxu0 0.0
    %1213 = vmatpush1.msra.mxu0 0.0
    %1214 = vmatprep.subr.mxu0 0.0
    %1215 = vmatpush1.msra.mxu0 0.0
    %1216 = vmatprep.subr.mxu0 0.0
    %1217 = vmatpush1.msra.mxu0 0.0
    %1218 = vmatprep.subr.mxu0 0.0
    %1219 = vmatpush1.msra.mxu0 0.0
    %1220 = vmatprep.subr.mxu0 0.0
    %1221 = vmatpush1.msra.mxu0 0.0
    %1222 = vmatprep.subr.mxu0 0.0
    %1223 = vmatpush1.msra.mxu0 0.0
    %1224 = vmatprep.subr.mxu0 0.0
    %1225 = vmatpush1.msra.mxu0 0.0
    %1226 = vmatprep.subr.mxu0 0.0
    %1227 = vmatpush1.msra.mxu0 0.0
    %1228 = vmatprep.subr.mxu0 0.0
    %1229 = vmatpush1.msra.mxu0 0.0
    %1230 = vmatprep.subr.mxu0 0.0
    %1231 = vmatpush1.msra.mxu0 0.0
    %1232 = vmatprep.subr.mxu0 0.0
    %1233 = vmatpush1.msra.mxu0 0.0
    %1234 = vmatprep.subr.mxu0 0.0
    %1235 = vmatpush1.msra.mxu0 0.0
    %1236 = vmatprep.subr.mxu0 0.0
    %1237 = vmatpush1.msra.mxu0 0.0
    %1238 = vmatprep.subr.mxu0 0.0
    %1239 = vmatpush1.msra.mxu0 0.0
    %1240 = vmatprep.subr.mxu0 0.0
    %1241 = vmatpush1.msra.mxu0 0.0
    %1242 = vmatprep.mubr.f32.mxu0 0.0
    %1243 = vmatmul.mubr.f32.gmra.mrb[0].mxu0 %v1160
    %v1244 = vpop.f32.mrb[0].mxu0
    %v1245 = vadd.f32 0.0, %v1244
    %v1246 = vpop.f32.mrb[0].mxu0
    %1247 = vdwg.mxu0
    %s1248 = scalar_lea.vmem [#allocation10], 8
    %v1249 = vld [vmem:[%s1248] sm:$0x1]
    %s1250 = scalar_lea.vmem [#allocation11], 8
    %v1251 = vld [vmem:[%s1250] sm:$0x1]
    %1252 = vadd.xlane.f32.xlu0 %v1245
    %v1253 = vpop.xlane.xlu0 %1252
    %v1254 = vmul.f32 %v1245, %v1245
    %1255 = vadd.xlane.f32.xlu0 %v1254
    %v1256 = vpop.xlane.xlu0 %1255
    %v1257 = vmul.f32 %v1253, 0.0078125
    %v1258 = vmul.f32 %v1256, 0.0078125
    %v1259 = vmul.f32 %v1257, %v1257
    %v1260 = vsub.f32 %v1258, %v1259
    %v1261 = vadd.f32 %v1260, 1e-05
    %v1262 = vrsqrt.pop %v1261
    %v1263 = vsub.f32 %v1245, %v1257
    %v1264 = vmul.f32 %v1263, %v1262
    %v1266 = vlaneseq
    %v1267 = vshrl.u32 %v1266, 7
    %v1268 = vsub.s32 0, %v1267
    %v1269 = vrot.slane %v1249, %v1268
    %v1271 = vmul.f32 %v1264, %v1269
    %v1273 = vlaneseq
    %v1274 = vshrl.u32 %v1273, 7
    %v1275 = vsub.s32 0, %v1274
    %v1276 = vrot.slane %v1251, %v1275
    %v1278 = vadd.f32 %v1271, %v1276
    %s1279 = scalar_lea.vmem [#allocation5], 72
    %v1280 = vld [vmem:[%s1279] sm:$0xff]
    %s1281 = scalar_lea.vmem [#allocation8], 1152
    %v1282 = vld [vmem:[%s1281] sm:$0xff]
    %v1283 = vld [vmem:[%s1281 + $0x8] sm:$0xff]
    %v1284 = vld [vmem:[%s1281 + $0x10] sm:$0xff]
    %v1285 = vld [vmem:[%s1281 + $0x18] sm:$0xff]
    %v1286 = vld [vmem:[%s1281 + $0x20] sm:$0xff]
    %v1287 = vld [vmem:[%s1281 + $0x28] sm:$0xff]
    %v1288 = vld [vmem:[%s1281 + $0x30] sm:$0xff]
    %v1289 = vld [vmem:[%s1281 + $0x38] sm:$0xff]
    %v1290 = vld [vmem:[%s1281 + $0x40] sm:$0xff]
    %v1291 = vld [vmem:[%s1281 + $0x48] sm:$0xff]
    %v1292 = vld [vmem:[%s1281 + $0x50] sm:$0xff]
    %v1293 = vld [vmem:[%s1281 + $0x58] sm:$0xff]
    %v1294 = vld [vmem:[%s1281 + $0x60] sm:$0xff]
    %v1295 = vld [vmem:[%s1281 + $0x68] sm:$0xff]
    %v1296 = vld [vmem:[%s1281 + $0x70] sm:$0xff]
    %v1297 = vld [vmem:[%s1281 + $0x78] sm:$0xff]
    %1298 = vmatprep.subr.mxu0 0.0
    %1299 = vmatpush1.msra.mxu0 %v1282
    %1300 = vmatprep.subr.mxu0 0.0
    %1301 = vmatpush1.msra.mxu0 %v1283
    %1302 = vmatprep.subr.mxu0 0.0
    %1303 = vmatpush1.msra.mxu0 %v1284
    %1304 = vmatprep.subr.mxu0 0.0
    %1305 = vmatpush1.msra.mxu0 %v1285
    %1306 = vmatprep.subr.mxu0 0.0
    %1307 = vmatpush1.msra.mxu0 %v1286
    %1308 = vmatprep.subr.mxu0 0.0
    %1309 = vmatpush1.msra.mxu0 %v1287
    %1310 = vmatprep.subr.mxu0 0.0
    %1311 = vmatpush1.msra.mxu0 %v1288
    %1312 = vmatprep.subr.mxu0 0.0
    %1313 = vmatpush1.msra.mxu0 %v1289
    %1314 = vmatprep.subr.mxu0 0.0
    %1315 = vmatpush1.msra.mxu0 %v1290
    %1316 = vmatprep.subr.mxu0 0.0
    %1317 = vmatpush1.msra.mxu0 %v1291
    %1318 = vmatprep.subr.mxu0 0.0
    %1319 = vmatpush1.msra.mxu0 %v1292
    %1320 = vmatprep.subr.mxu0 0.0
    %1321 = vmatpush1.msra.mxu0 %v1293
    %1322 = vmatprep.subr.mxu0 0.0
    %1323 = vmatpush1.msra.mxu0 %v1294
    %1324 = vmatprep.subr.mxu0 0.0
    %1325 = vmatpush1.msra.mxu0 %v1295
    %1326 = vmatprep.subr.mxu0 0.0
    %1327 = vmatpush1.msra.mxu0 %v1296
    %1328 = vmatprep.subr.mxu0 0.0
    %1329 = vmatpush1.msra.mxu0 %v1297
    %1330 = vmatprep.subr.mxu0 0.0
    %1331 = vmatpush1.msra.mxu0 0.0
    %1332 = vmatprep.subr.mxu0 0.0
    %1333 = vmatpush1.msra.mxu0 0.0
    %1334 = vmatprep.subr.mxu0 0.0
    %1335 = vmatpush1.msra.mxu0 0.0
    %1336 = vmatprep.subr.mxu0 0.0
    %1337 = vmatpush1.msra.mxu0 0.0
    %1338 = vmatprep.subr.mxu0 0.0
    %1339 = vmatpush1.msra.mxu0 0.0
    %1340 = vmatprep.subr.mxu0 0.0
    %1341 = vmatpush1.msra.mxu0 0.0
    %1342 = vmatprep.subr.mxu0 0.0
    %1343 = vmatpush1.msra.mxu0 0.0
    %1344 = vmatprep.subr.mxu0 0.0
    %1345 = vmatpush1.msra.mxu0 0.0
    %1346 = vmatprep.subr.mxu0 0.0
    %1347 = vmatpush1.msra.mxu0 0.0
    %1348 = vmatprep.subr.mxu0 0.0
    %1349 = vmatpush1.msra.mxu0 0.0
    %1350 = vmatprep.subr.mxu0 0.0
    %1351 = vmatpush1.msra.mxu0 0.0
    %1352 = vmatprep.subr.mxu0 0.0
    %1353 = vmatpush1.msra.mxu0 0.0
    %1354 = vmatprep.subr.mxu0 0.0
    %1355 = vmatpush1.msra.mxu0 0.0
    %1356 = vmatprep.subr.mxu0 0.0
    %1357 = vmatpush1.msra.mxu0 0.0
    %1358 = vmatprep.subr.mxu0 0.0
    %1359 = vmatpush1.msra.mxu0 0.0
    %1360 = vmatprep.subr.mxu0 0.0
    %1361 = vmatpush1.msra.mxu0 0.0
    %1362 = vmatprep.mubr.f32.mxu0 0.0
    %1363 = vmatmul.mubr.f32.gmra.mrb[0].mxu0 %v1280
    %v1364 = vpop.f32.mrb[0].mxu0
    %v1365 = vadd.f32 0.0, %v1364
    %v1366 = vpop.f32.mrb[0].mxu0
    %1367 = vdwg.mxu0
    %s1368 = scalar_lea.vmem [#allocation10], 9
    %v1369 = vld [vmem:[%s1368] sm:$0x1]
    %s1370 = scalar_lea.vmem [#allocation11], 9
    %v1371 = vld [vmem:[%s1370] sm:$0x1]
    %1372 = vadd.xlane.f32.xlu0 %v1365
    %v1373 = vpop.xlane.xlu0 %1372
    %v1374 = vmul.f32 %v1365, %v1365
    %1375 = vadd.xlane.f32.xlu0 %v1374
    %v1376 = vpop.xlane.xlu0 %1375
    %v1377 = vmul.f32 %v1373, 0.0078125
    %v1378 = vmul.f32 %v1376, 0.0078125
    %v1379 = vmul.f32 %v1377, %v1377
    %v1380 = vsub.f32 %v1378, %v1379
    %v1381 = vadd.f32 %v1380, 1e-05
    %v1382 = vrsqrt.pop %v1381
    %v1383 = vsub.f32 %v1365, %v1377
    %v1384 = vmul.f32 %v1383, %v1382
    %v1386 = vlaneseq
    %v1387 = vshrl.u32 %v1386, 7
    %v1388 = vsub.s32 0, %v1387
    %v1389 = vrot.slane %v1369, %v1388
    %v1391 = vmul.f32 %v1384, %v1389
    %v1393 = vlaneseq
    %v1394 = vshrl.u32 %v1393, 7
    %v1395 = vsub.s32 0, %v1394
    %v1396 = vrot.slane %v1371, %v1395
    %v1398 = vadd.f32 %v1391, %v1396
    %s1399 = scalar_lea.vmem [#allocation5], 80
    %v1400 = vld [vmem:[%s1399] sm:$0xff]
    %s1401 = scalar_lea.vmem [#allocation8], 1280
    %v1402 = vld [vmem:[%s1401] sm:$0xff]
    %v1403 = vld [vmem:[%s1401 + $0x8] sm:$0xff]
    %v1404 = vld [vmem:[%s1401 + $0x10] sm:$0xff]
    %v1405 = vld [vmem:[%s1401 + $0x18] sm:$0xff]
    %v1406 = vld [vmem:[%s1401 + $0x20] sm:$0xff]
    %v1407 = vld [vmem:[%s1401 + $0x28] sm:$0xff]
    %v1408 = vld [vmem:[%s1401 + $0x30] sm:$0xff]
    %v1409 = vld [vmem:[%s1401 + $0x38] sm:$0xff]
    %v1410 = vld [vmem:[%s1401 + $0x40] sm:$0xff]
    %v1411 = vld [vmem:[%s1401 + $0x48] sm:$0xff]
    %v1412 = vld [vmem:[%s1401 + $0x50] sm:$0xff]
    %v1413 = vld [vmem:[%s1401 + $0x58] sm:$0xff]
    %v1414 = vld [vmem:[%s1401 + $0x60] sm:$0xff]
    %v1415 = vld [vmem:[%s1401 + $0x68] sm:$0xff]
    %v1416 = vld [vmem:[%s1401 + $0x70] sm:$0xff]
    %v1417 = vld [vmem:[%s1401 + $0x78] sm:$0xff]
    %1418 = vmatprep.subr.mxu0 0.0
    %1419 = vmatpush1.msra.mxu0 %v1402
    %1420 = vmatprep.subr.mxu0 0.0
    %1421 = vmatpush1.msra.mxu0 %v1403
    %1422 = vmatprep.subr.mxu0 0.0
    %1423 = vmatpush1.msra.mxu0 %v1404
    %1424 = vmatprep.subr.mxu0 0.0
    %1425 = vmatpush1.msra.mxu0 %v1405
    %1426 = vmatprep.subr.mxu0 0.0
    %1427 = vmatpush1.msra.mxu0 %v1406
    %1428 = vmatprep.subr.mxu0 0.0
    %1429 = vmatpush1.msra.mxu0 %v1407
    %1430 = vmatprep.subr.mxu0 0.0
    %1431 = vmatpush1.msra.mxu0 %v1408
    %1432 = vmatprep.subr.mxu0 0.0
    %1433 = vmatpush1.msra.mxu0 %v1409
    %1434 = vmatprep.subr.mxu0 0.0
    %1435 = vmatpush1.msra.mxu0 %v1410
    %1436 = vmatprep.subr.mxu0 0.0
    %1437 = vmatpush1.msra.mxu0 %v1411
    %1438 = vmatprep.subr.mxu0 0.0
    %1439 = vmatpush1.msra.mxu0 %v1412
    %1440 = vmatprep.subr.mxu0 0.0
    %1441 = vmatpush1.msra.mxu0 %v1413
    %1442 = vmatprep.subr.mxu0 0.0
    %1443 = vmatpush1.msra.mxu0 %v1414
    %1444 = vmatprep.subr.mxu0 0.0
    %1445 = vmatpush1.msra.mxu0 %v1415
    %1446 = vmatprep.subr.mxu0 0.0
    %1447 = vmatpush1.msra.mxu0 %v1416
    %1448 = vmatprep.subr.mxu0 0.0
    %1449 = vmatpush1.msra.mxu0 %v1417
    %1450 = vmatprep.subr.mxu0 0.0
    %1451 = vmatpush1.msra.mxu0 0.0
    %1452 = vmatprep.subr.mxu0 0.0
    %1453 = vmatpush1.msra.mxu0 0.0
    %1454 = vmatprep.subr.mxu0 0.0
    %1455 = vmatpush1.msra.mxu0 0.0
    %1456 = vmatprep.subr.mxu0 0.0
    %1457 = vmatpush1.msra.mxu0 0.0
    %1458 = vmatprep.subr.mxu0 0.0
    %1459 = vmatpush1.msra.mxu0 0.0
    %1460 = vmatprep.subr.mxu0 0.0
    %1461 = vmatpush1.msra.mxu0 0.0
    %1462 = vmatprep.subr.mxu0 0.0
    %1463 = vmatpush1.msra.mxu0 0.0
    %1464 = vmatprep.subr.mxu0 0.0
    %1465 = vmatpush1.msra.mxu0 0.0
    %1466 = vmatprep.subr.mxu0 0.0
    %1467 = vmatpush1.msra.mxu0 0.0
    %1468 = vmatprep.subr.mxu0 0.0
    %1469 = vmatpush1.msra.mxu0 0.0
    %1470 = vmatprep.subr.mxu0 0.0
    %1471 = vmatpush1.msra.mxu0 0.0
    %1472 = vmatprep.subr.mxu0 0.0
    %1473 = vmatpush1.msra.mxu0 0.0
    %1474 = vmatprep.subr.mxu0 0.0
    %1475 = vmatpush1.msra.mxu0 0.0
    %1476 = vmatprep.subr.mxu0 0.0
    %1477 = vmatpush1.msra.mxu0 0.0
    %1478 = vmatprep.subr.mxu0 0.0
    %1479 = vmatpush1.msra.mxu0 0.0
    %1480 = vmatprep.subr.mxu0 0.0
    %1481 = vmatpush1.msra.mxu0 0.0
    %1482 = vmatprep.mubr.f32.mxu0 0.0
    %1483 = vmatmul.mubr.f32.gmra.mrb[0].mxu0 %v1400
    %v1484 = vpop.f32.mrb[0].mxu0
    %v1485 = vadd.f32 0.0, %v1484
    %v1486 = vpop.f32.mrb[0].mxu0
    %1487 = vdwg.mxu0
    %s1488 = scalar_lea.vmem [#allocation10], 10
    %v1489 = vld [vmem:[%s1488] sm:$0x1]
    %s1490 = scalar_lea.vmem [#allocation11], 10
    %v1491 = vld [vmem:[%s1490] sm:$0x1]
    %1492 = vadd.xlane.f32.xlu0 %v1485
    %v1493 = vpop.xlane.xlu0 %1492
    %v1494 = vmul.f32 %v1485, %v1485
    %1495 = vadd.xlane.f32.xlu0 %v1494
    %v1496 = vpop.xlane.xlu0 %1495
    %v1497 = vmul.f32 %v1493, 0.0078125
    %v1498 = vmul.f32 %v1496, 0.0078125
    %v1499 = vmul.f32 %v1497, %v1497
    %v1500 = vsub.f32 %v1498, %v1499
    %v1501 = vadd.f32 %v1500, 1e-05
    %v1502 = vrsqrt.pop %v1501
    %v1503 = vsub.f32 %v1485, %v1497
    %v1504 = vmul.f32 %v1503, %v1502
    %v1506 = vlaneseq
    %v1507 = vshrl.u32 %v1506, 7
    %v1508 = vsub.s32 0, %v1507
    %v1509 = vrot.slane %v1489, %v1508
    %v1511 = vmul.f32 %v1504, %v1509
    %v1513 = vlaneseq
    %v1514 = vshrl.u32 %v1513, 7
    %v1515 = vsub.s32 0, %v1514
    %v1516 = vrot.slane %v1491, %v1515
    %v1518 = vadd.f32 %v1511, %v1516
    %s1519 = scalar_lea.vmem [#allocation5], 88
    %v1520 = vld [vmem:[%s1519] sm:$0xff]
    %s1521 = scalar_lea.vmem [#allocation8], 1408
    %v1522 = vld [vmem:[%s1521] sm:$0xff]
    %v1523 = vld [vmem:[%s1521 + $0x8] sm:$0xff]
    %v1524 = vld [vmem:[%s1521 + $0x10] sm:$0xff]
    %v1525 = vld [vmem:[%s1521 + $0x18] sm:$0xff]
    %v1526 = vld [vmem:[%s1521 + $0x20] sm:$0xff]
    %v1527 = vld [vmem:[%s1521 + $0x28] sm:$0xff]
    %v1528 = vld [vmem:[%s1521 + $0x30] sm:$0xff]
    %v1529 = vld [vmem:[%s1521 + $0x38] sm:$0xff]
    %v1530 = vld [vmem:[%s1521 + $0x40] sm:$0xff]
    %v1531 = vld [vmem:[%s1521 + $0x48] sm:$0xff]
    %v1532 = vld [vmem:[%s1521 + $0x50] sm:$0xff]
    %v1533 = vld [vmem:[%s1521 + $0x58] sm:$0xff]
    %v1534 = vld [vmem:[%s1521 + $0x60] sm:$0xff]
    %v1535 = vld [vmem:[%s1521 + $0x68] sm:$0xff]
    %v1536 = vld [vmem:[%s1521 + $0x70] sm:$0xff]
    %v1537 = vld [vmem:[%s1521 + $0x78] sm:$0xff]
    %1538 = vmatprep.subr.mxu0 0.0
    %1539 = vmatpush1.msra.mxu0 %v1522
    %1540 = vmatprep.subr.mxu0 0.0
    %1541 = vmatpush1.msra.mxu0 %v1523
    %1542 = vmatprep.subr.mxu0 0.0
    %1543 = vmatpush1.msra.mxu0 %v1524
    %1544 = vmatprep.subr.mxu0 0.0
    %1545 = vmatpush1.msra.mxu0 %v1525
    %1546 = vmatprep.subr.mxu0 0.0
    %1547 = vmatpush1.msra.mxu0 %v1526
    %1548 = vmatprep.subr.mxu0 0.0
    %1549 = vmatpush1.msra.mxu0 %v1527
    %1550 = vmatprep.subr.mxu0 0.0
    %1551 = vmatpush1.msra.mxu0 %v1528
    %1552 = vmatprep.subr.mxu0 0.0
    %1553 = vmatpush1.msra.mxu0 %v1529
    %1554 = vmatprep.subr.mxu0 0.0
    %1555 = vmatpush1.msra.mxu0 %v1530
    %1556 = vmatprep.subr.mxu0 0.0
    %1557 = vmatpush1.msra.mxu0 %v1531
    %1558 = vmatprep.subr.mxu0 0.0
    %1559 = vmatpush1.msra.mxu0 %v1532
    %1560 = vmatprep.subr.mxu0 0.0
    %1561 = vmatpush1.msra.mxu0 %v1533
    %1562 = vmatprep.subr.mxu0 0.0
    %1563 = vmatpush1.msra.mxu0 %v1534
    %1564 = vmatprep.subr.mxu0 0.0
    %1565 = vmatpush1.msra.mxu0 %v1535
    %1566 = vmatprep.subr.mxu0 0.0
    %1567 = vmatpush1.msra.mxu0 %v1536
    %1568 = vmatprep.subr.mxu0 0.0
    %1569 = vmatpush1.msra.mxu0 %v1537
    %1570 = vmatprep.subr.mxu0 0.0
    %1571 = vmatpush1.msra.mxu0 0.0
    %1572 = vmatprep.subr.mxu0 0.0
    %1573 = vmatpush1.msra.mxu0 0.0
    %1574 = vmatprep.subr.mxu0 0.0
    %1575 = vmatpush1.msra.mxu0 0.0
    %1576 = vmatprep.subr.mxu0 0.0
    %1577 = vmatpush1.msra.mxu0 0.0
    %1578 = vmatprep.subr.mxu0 0.0
    %1579 = vmatpush1.msra.mxu0 0.0
    %1580 = vmatprep.subr.mxu0 0.0
    %1581 = vmatpush1.msra.mxu0 0.0
    %1582 = vmatprep.subr.mxu0 0.0
    %1583 = vmatpush1.msra.mxu0 0.0
    %1584 = vmatprep.subr.mxu0 0.0
    %1585 = vmatpush1.msra.mxu0 0.0
    %1586 = vmatprep.subr.mxu0 0.0
    %1587 = vmatpush1.msra.mxu0 0.0
    %1588 = vmatprep.subr.mxu0 0.0
    %1589 = vmatpush1.msra.mxu0 0.0
    %1590 = vmatprep.subr.mxu0 0.0
    %1591 = vmatpush1.msra.mxu0 0.0
    %1592 = vmatprep.subr.mxu0 0.0
    %1593 = vmatpush1.msra.mxu0 0.0
    %1594 = vmatprep.subr.mxu0 0.0
    %1595 = vmatpush1.msra.mxu0 0.0
    %1596 = vmatprep.subr.mxu0 0.0
    %1597 = vmatpush1.msra.mxu0 0.0
    %1598 = vmatprep.subr.mxu0 0.0
    %1599 = vmatpush1.msra.mxu0 0.0
    %1600 = vmatprep.subr.mxu0 0.0
    %1601 = vmatpush1.msra.mxu0 0.0
    %1602 = vmatprep.mubr.f32.mxu0 0.0
    %1603 = vmatmul.mubr.f32.gmra.mrb[0].mxu0 %v1520
    %v1604 = vpop.f32.mrb[0].mxu0
    %v1605 = vadd.f32 0.0, %v1604
    %v1606 = vpop.f32.mrb[0].mxu0
    %1607 = vdwg.mxu0
    %s1608 = scalar_lea.vmem [#allocation10], 11
    %v1609 = vld [vmem:[%s1608] sm:$0x1]
    %s1610 = scalar_lea.vmem [#allocation11], 11
    %v1611 = vld [vmem:[%s1610] sm:$0x1]
    %1612 = vadd.xlane.f32.xlu0 %v1605
    %v1613 = vpop.xlane.xlu0 %1612
    %v1614 = vmul.f32 %v1605, %v1605
    %1615 = vadd.xlane.f32.xlu0 %v1614
    %v1616 = vpop.xlane.xlu0 %1615
    %v1617 = vmul.f32 %v1613, 0.0078125
    %v1618 = vmul.f32 %v1616, 0.0078125
    %v1619 = vmul.f32 %v1617, %v1617
    %v1620 = vsub.f32 %v1618, %v1619
    %v1621 = vadd.f32 %v1620, 1e-05
    %v1622 = vrsqrt.pop %v1621
    %v1623 = vsub.f32 %v1605, %v1617
    %v1624 = vmul.f32 %v1623, %v1622
    %v1626 = vlaneseq
    %v1627 = vshrl.u32 %v1626, 7
    %v1628 = vsub.s32 0, %v1627
    %v1629 = vrot.slane %v1609, %v1628
    %v1631 = vmul.f32 %v1624, %v1629
    %v1633 = vlaneseq
    %v1634 = vshrl.u32 %v1633, 7
    %v1635 = vsub.s32 0, %v1634
    %v1636 = vrot.slane %v1611, %v1635
    %v1638 = vadd.f32 %v1631, %v1636
    %v1639 = vld [vmem:[#allocation17] sm:$0x3f]
    %v1641 = vlaneseq
    %v1642 = vshrl.u32 %v1641, 7
    %v1643 = vsub.s32 0, %v1642
    %v1644 = vrot.slane %v1639, %v1643
    %v1645 = vlaneseq
    %v1646 = vshrl.u32 %v1645, 7
    %v1647 = vsub.s32 1, %v1646
    %v1648 = vrot.slane %v1639, %v1647
    %v1649 = vlaneseq
    %v1650 = vshrl.u32 %v1649, 7
    %v1651 = vsub.s32 2, %v1650
    %v1652 = vrot.slane %v1639, %v1651
    %v1653 = vlaneseq
    %v1654 = vshrl.u32 %v1653, 7
    %v1655 = vsub.s32 3, %v1654
    %v1656 = vrot.slane %v1639, %v1655
    %v1657 = vlaneseq
    %v1658 = vshrl.u32 %v1657, 7
    %v1659 = vsub.s32 4, %v1658
    %v1660 = vrot.slane %v1639, %v1659
    %v1661 = vlaneseq
    %v1662 = vshrl.u32 %v1661, 7
    %v1663 = vsub.s32 5, %v1662
    %v1664 = vrot.slane %v1639, %v1663
    %v1671 = vld [vmem:[#allocation7] sm:$0xff]
    %v1672 = vld [vmem:[#allocation7 + $0x8] sm:$0xff]
    %v1673 = vld [vmem:[#allocation7 + $0x10] sm:$0xff]
    %v1674 = vld [vmem:[#allocation7 + $0x18] sm:$0xff]
    %v1675 = vld [vmem:[#allocation7 + $0x20] sm:$0xff]
    %v1676 = vld [vmem:[#allocation7 + $0x28] sm:$0xff]
    %v1677 = vld [vmem:[#allocation7 + $0x30] sm:$0xff]
    %v1678 = vld [vmem:[#allocation7 + $0x38] sm:$0xff]
    %v1679 = vld [vmem:[#allocation7 + $0x40] sm:$0xff]
    %v1680 = vld [vmem:[#allocation7 + $0x48] sm:$0xff]
    %v1681 = vld [vmem:[#allocation7 + $0x50] sm:$0xff]
    %v1682 = vld [vmem:[#allocation7 + $0x58] sm:$0xff]
    %v1683 = vld [vmem:[#allocation7 + $0x60] sm:$0xff]
    %v1684 = vld [vmem:[#allocation7 + $0x68] sm:$0xff]
    %v1685 = vld [vmem:[#allocation7 + $0x70] sm:$0xff]
    %v1686 = vld [vmem:[#allocation7 + $0x78] sm:$0xff]
    %1687 = vmatprep.subr.mxu0 0.0
    %1688 = vmatpush1.msra.mxu0 %v1671
    %1689 = vmatprep.subr.mxu0 0.0
    %1690 = vmatpush1.msra.mxu0 %v1672
    %1691 = vmatprep.subr.mxu0 0.0
    %1692 = vmatpush1.msra.mxu0 %v1673
    %1693 = vmatprep.subr.mxu0 0.0
    %1694 = vmatpush1.msra.mxu0 %v1674
    %1695 = vmatprep.subr.mxu0 0.0
    %1696 = vmatpush1.msra.mxu0 %v1675
    %1697 = vmatprep.subr.mxu0 0.0
    %1698 = vmatpush1.msra.mxu0 %v1676
    %1699 = vmatprep.subr.mxu0 0.0
    %1700 = vmatpush1.msra.mxu0 %v1677
    %1701 = vmatprep.subr.mxu0 0.0
    %1702 = vmatpush1.msra.mxu0 %v1678
    %1703 = vmatprep.subr.mxu0 0.0
    %1704 = vmatpush1.msra.mxu0 %v1679
    %1705 = vmatprep.subr.mxu0 0.0
    %1706 = vmatpush1.msra.mxu0 %v1680
    %1707 = vmatprep.subr.mxu0 0.0
    %1708 = vmatpush1.msra.mxu0 %v1681
    %1709 = vmatprep.subr.mxu0 0.0
    %1710 = vmatpush1.msra.mxu0 %v1682
    %1711 = vmatprep.subr.mxu0 0.0
    %1712 = vmatpush1.msra.mxu0 %v1683
    %1713 = vmatprep.subr.mxu0 0.0
    %1714 = vmatpush1.msra.mxu0 %v1684
    %1715 = vmatprep.subr.mxu0 0.0
    %1716 = vmatpush1.msra.mxu0 %v1685
    %1717 = vmatprep.subr.mxu0 0.0
    %1718 = vmatpush1.msra.mxu0 %v1686
    %1719 = vmatprep.subr.mxu0 0.0
    %1720 = vmatpush1.msra.mxu0 0.0
    %1721 = vmatprep.subr.mxu0 0.0
    %1722 = vmatpush1.msra.mxu0 0.0
    %1723 = vmatprep.subr.mxu0 0.0
    %1724 = vmatpush1.msra.mxu0 0.0
    %1725 = vmatprep.subr.mxu0 0.0
    %1726 = vmatpush1.msra.mxu0 0.0
    %1727 = vmatprep.subr.mxu0 0.0
    %1728 = vmatpush1.msra.mxu0 0.0
    %1729 = vmatprep.subr.mxu0 0.0
    %1730 = vmatpush1.msra.mxu0 0.0
    %1731 = vmatprep.subr.mxu0 0.0
    %1732 = vmatpush1.msra.mxu0 0.0
    %1733 = vmatprep.subr.mxu0 0.0
    %1734 = vmatpush1.msra.mxu0 0.0
    %1735 = vmatprep.subr.mxu0 0.0
    %1736 = vmatpush1.msra.mxu0 0.0
    %1737 = vmatprep.subr.mxu0 0.0
    %1738 = vmatpush1.msra.mxu0 0.0
    %1739 = vmatprep.subr.mxu0 0.0
    %1740 = vmatpush1.msra.mxu0 0.0
    %1741 = vmatprep.subr.mxu0 0.0
    %1742 = vmatpush1.msra.mxu0 0.0
    %1743 = vmatprep.subr.mxu0 0.0
    %1744 = vmatpush1.msra.mxu0 0.0
    %1745 = vmatprep.subr.mxu0 0.0
    %1746 = vmatpush1.msra.mxu0 0.0
    %1747 = vmatprep.subr.mxu0 0.0
    %1748 = vmatpush1.msra.mxu0 0.0
    %1749 = vmatprep.subr.mxu0 0.0
    %1750 = vmatpush1.msra.mxu0 0.0
    %1751 = vmatprep.mubr.f32.mxu0 0.0
    %1752 = vmatmul.mubr.f32.gmra.mrb[0].mxu0 %v197
    %v1753 = vpop.f32.mrb[0].mxu0
    %v1754 = vadd.f32 %v318, %v1753
    %v1755 = vpop.f32.mrb[0].mxu0
    %1756 = vdwg.mxu0
    %v1757 = vmax.f32 %v1754, 0.0
    %v1758 = vld [vmem:[#allocation13] sm:$0x1]
    %v1759 = vld [vmem:[#allocation14] sm:$0x1]
    %1760 = vadd.xlane.f32.xlu0 %v1757
    %v1761 = vpop.xlane.xlu0 %1760
    %v1762 = vmul.f32 %v1757, %v1757
    %1763 = vadd.xlane.f32.xlu0 %v1762
    %v1764 = vpop.xlane.xlu0 %1763
    %v1765 = vmul.f32 %v1761, 0.0078125
    %v1766 = vmul.f32 %v1764, 0.0078125
    %v1767 = vmul.f32 %v1765, %v1765
    %v1768 = vsub.f32 %v1766, %v1767
    %v1769 = vadd.f32 %v1768, 1e-05
    %v1770 = vrsqrt.pop %v1769
    %v1771 = vsub.f32 %v1757, %v1765
    %v1772 = vmul.f32 %v1771, %v1770
    %v1774 = vlaneseq
    %v1775 = vshrl.u32 %v1774, 7
    %v1776 = vsub.s32 0, %v1775
    %v1777 = vrot.slane %v1758, %v1776
    %v1779 = vmul.f32 %v1772, %v1777
    %v1781 = vlaneseq
    %v1782 = vshrl.u32 %v1781, 7
    %v1783 = vsub.s32 0, %v1782
    %v1784 = vrot.slane %v1759, %v1783
    %v1786 = vadd.f32 %v1779, %v1784
    %s1787 = scalar_lea.vmem [#allocation7], 128
    %v1788 = vld [vmem:[%s1787] sm:$0xff]
    %v1789 = vld [vmem:[%s1787 + $0x8] sm:$0xff]
    %v1790 = vld [vmem:[%s1787 + $0x10] sm:$0xff]
    %v1791 = vld [vmem:[%s1787 + $0x18] sm:$0xff]
    %v1792 = vld [vmem:[%s1787 + $0x20] sm:$0xff]
    %v1793 = vld [vmem:[%s1787 + $0x28] sm:$0xff]
    %v1794 = vld [vmem:[%s1787 + $0x30] sm:$0xff]
    %v1795 = vld [vmem:[%s1787 + $0x38] sm:$0xff]
    %v1796 = vld [vmem:[%s1787 + $0x40] sm:$0xff]
    %v1797 = vld [vmem:[%s1787 + $0x48] sm:$0xff]
    %v1798 = vld [vmem:[%s1787 + $0x50] sm:$0xff]
    %v1799 = vld [vmem:[%s1787 + $0x58] sm:$0xff]
    %v1800 = vld [vmem:[%s1787 + $0x60] sm:$0xff]
    %v1801 = vld [vmem:[%s1787 + $0x68] sm:$0xff]
    %v1802 = vld [vmem:[%s1787 + $0x70] sm:$0xff]
    %v1803 = vld [vmem:[%s1787 + $0x78] sm:$0xff]
    %1804 = vmatprep.subr.mxu0 0.0
    %1805 = vmatpush1.msra.mxu0 %v1788
    %1806 = vmatprep.subr.mxu0 0.0
    %1807 = vmatpush1.msra.mxu0 %v1789
    %1808 = vmatprep.subr.mxu0 0.0
    %1809 = vmatpush1.msra.mxu0 %v1790
    %1810 = vmatprep.subr.mxu0 0.0
    %1811 = vmatpush1.msra.mxu0 %v1791
    %1812 = vmatprep.subr.mxu0 0.0
    %1813 = vmatpush1.msra.mxu0 %v1792
    %1814 = vmatprep.subr.mxu0 0.0
    %1815 = vmatpush1.msra.mxu0 %v1793
    %1816 = vmatprep.subr.mxu0 0.0
    %1817 = vmatpush1.msra.mxu0 %v1794
    %1818 = vmatprep.subr.mxu0 0.0
    %1819 = vmatpush1.msra.mxu0 %v1795
    %1820 = vmatprep.subr.mxu0 0.0
    %1821 = vmatpush1.msra.mxu0 %v1796
    %1822 = vmatprep.subr.mxu0 0.0
    %1823 = vmatpush1.msra.mxu0 %v1797
    %1824 = vmatprep.subr.mxu0 0.0
    %1825 = vmatpush1.msra.mxu0 %v1798
    %1826 = vmatprep.subr.mxu0 0.0
    %1827 = vmatpush1.msra.mxu0 %v1799
    %1828 = vmatprep.subr.mxu0 0.0
    %1829 = vmatpush1.msra.mxu0 %v1800
    %1830 = vmatprep.subr.mxu0 0.0
    %1831 = vmatpush1.msra.mxu0 %v1801
    %1832 = vmatprep.subr.mxu0 0.0
    %1833 = vmatpush1.msra.mxu0 %v1802
    %1834 = vmatprep.subr.mxu0 0.0
    %1835 = vmatpush1.msra.mxu0 %v1803
    %1836 = vmatprep.subr.mxu0 0.0
    %1837 = vmatpush1.msra.mxu0 0.0
    %1838 = vmatprep.subr.mxu0 0.0
    %1839 = vmatpush1.msra.mxu0 0.0
    %1840 = vmatprep.subr.mxu0 0.0
    %1841 = vmatpush1.msra.mxu0 0.0
    %1842 = vmatprep.subr.mxu0 0.0
    %1843 = vmatpush1.msra.mxu0 0.0
    %1844 = vmatprep.subr.mxu0 0.0
    %1845 = vmatpush1.msra.mxu0 0.0
    %1846 = vmatprep.subr.mxu0 0.0
    %1847 = vmatpush1.msra.mxu0 0.0
    %1848 = vmatprep.subr.mxu0 0.0
    %1849 = vmatpush1.msra.mxu0 0.0
    %1850 = vmatprep.subr.mxu0 0.0
    %1851 = vmatpush1.msra.mxu0 0.0
    %1852 = vmatprep.subr.mxu0 0.0
    %1853 = vmatpush1.msra.mxu0 0.0
    %1854 = vmatprep.subr.mxu0 0.0
    %1855 = vmatpush1.msra.mxu0 0.0
    %1856 = vmatprep.subr.mxu0 0.0
    %1857 = vmatpush1.msra.mxu0 0.0
    %1858 = vmatprep.subr.mxu0 0.0
    %1859 = vmatpush1.msra.mxu0 0.0
    %1860 = vmatprep.subr.mxu0 0.0
    %1861 = vmatpush1.msra.mxu0 0.0
    %1862 = vmatprep.subr.mxu0 0.0
    %1863 = vmatpush1.msra.mxu0 0.0
    %1864 = vmatprep.subr.mxu0 0.0
    %1865 = vmatpush1.msra.mxu0 0.0
    %1866 = vmatprep.subr.mxu0 0.0
    %1867 = vmatpush1.msra.mxu0 0.0
    %1868 = vmatprep.mubr.f32.mxu0 0.0
    %1869 = vmatmul.mubr.f32.gmra.mrb[0].mxu0 %v1786
    %v1870 = vpop.f32.mrb[0].mxu0
    %v1871 = vadd.f32 %v438, %v1870
    %v1872 = vpop.f32.mrb[0].mxu0
    %1873 = vdwg.mxu0
    %v1874 = vmax.f32 %v1871, 0.0
    %s1875 = scalar_lea.vmem [#allocation13], 1
    %v1876 = vld [vmem:[%s1875] sm:$0x1]
    %s1877 = scalar_lea.vmem [#allocation14], 1
    %v1878 = vld [vmem:[%s1877] sm:$0x1]
    %1879 = vadd.xlane.f32.xlu0 %v1874
    %v1880 = vpop.xlane.xlu0 %1879
    %v1881 = vmul.f32 %v1874, %v1874
    %1882 = vadd.xlane.f32.xlu0 %v1881
    %v1883 = vpop.xlane.xlu0 %1882
    %v1884 = vmul.f32 %v1880, 0.0078125
    %v1885 = vmul.f32 %v1883, 0.0078125
    %v1886 = vmul.f32 %v1884, %v1884
    %v1887 = vsub.f32 %v1885, %v1886
    %v1888 = vadd.f32 %v1887, 1e-05
    %v1889 = vrsqrt.pop %v1888
    %v1890 = vsub.f32 %v1874, %v1884
    %v1891 = vmul.f32 %v1890, %v1889
    %v1893 = vlaneseq
    %v1894 = vshrl.u32 %v1893, 7
    %v1895 = vsub.s32 0, %v1894
    %v1896 = vrot.slane %v1876, %v1895
    %v1898 = vmul.f32 %v1891, %v1896
    %v1900 = vlaneseq
    %v1901 = vshrl.u32 %v1900, 7
    %v1902 = vsub.s32 0, %v1901
    %v1903 = vrot.slane %v1878, %v1902
    %v1905 = vadd.f32 %v1898, %v1903
    %v1906 = vld [vmem:[#allocation16] sm:$0xff]
    %v1907 = vld [vmem:[#allocation16 + $0x8] sm:$0xff]
    %v1908 = vld [vmem:[#allocation16 + $0x10] sm:$0xff]
    %v1909 = vld [vmem:[#allocation16 + $0x18] sm:$0xff]
    %v1910 = vld [vmem:[#allocation16 + $0x20] sm:$0xff]
    %v1911 = vld [vmem:[#allocation16 + $0x28] sm:$0xff]
    %v1912 = vld [vmem:[#allocation16 + $0x30] sm:$0xff]
    %v1913 = vld [vmem:[#allocation16 + $0x38] sm:$0xff]
    %v1914 = vld [vmem:[#allocation16 + $0x40] sm:$0xff]
    %v1915 = vld [vmem:[#allocation16 + $0x48] sm:$0xff]
    %v1916 = vld [vmem:[#allocation16 + $0x50] sm:$0xff]
    %v1917 = vld [vmem:[#allocation16 + $0x58] sm:$0xff]
    %v1918 = vld [vmem:[#allocation16 + $0x60] sm:$0xff]
    %v1919 = vld [vmem:[#allocation16 + $0x68] sm:$0xff]
    %v1920 = vld [vmem:[#allocation16 + $0x70] sm:$0xff]
    %v1921 = vld [vmem:[#allocation16 + $0x78] sm:$0xff]
    %v1922 = vld [vmem:[#allocation16 + $0x80] sm:$0xff]
    %v1923 = vld [vmem:[#allocation16 + $0x88] sm:$0xff]
    %v1924 = vld [vmem:[#allocation16 + $0x90] sm:$0xff]
    %v1925 = vld [vmem:[#allocation16 + $0x98] sm:$0xff]
    %v1926 = vld [vmem:[#allocation16 + $0xa0] sm:$0xff]
    %v1927 = vld [vmem:[#allocation16 + $0xa8] sm:$0xff]
    %v1928 = vld [vmem:[#allocation16 + $0xb0] sm:$0xff]
    %v1929 = vld [vmem:[#allocation16 + $0xb8] sm:$0xff]
    %v1930 = vld [vmem:[#allocation16 + $0xc0] sm:$0xff]
    %v1931 = vld [vmem:[#allocation16 + $0xc8] sm:$0xff]
    %v1932 = vld [vmem:[#allocation16 + $0xd0] sm:$0xff]
    %v1933 = vld [vmem:[#allocation16 + $0xd8] sm:$0xff]
    %v1934 = vld [vmem:[#allocation16 + $0xe0] sm:$0xff]
    %v1935 = vld [vmem:[#allocation16 + $0xe8] sm:$0xff]
    %v1936 = vld [vmem:[#allocation16 + $0xf0] sm:$0xff]
    %v1937 = vld [vmem:[#allocation16 + $0xf8] sm:$0xff]
    %v1938 = vld [vmem:[#allocation16 + $0x100] sm:$0xff]
    %v1939 = vld [vmem:[#allocation16 + $0x108] sm:$0xff]
    %v1940 = vld [vmem:[#allocation16 + $0x110] sm:$0xff]
    %v1941 = vld [vmem:[#allocation16 + $0x118] sm:$0xff]
    %v1942 = vld [vmem:[#allocation16 + $0x120] sm:$0xff]
    %v1943 = vld [vmem:[#allocation16 + $0x128] sm:$0xff]
    %v1944 = vld [vmem:[#allocation16 + $0x130] sm:$0xff]
    %v1945 = vld [vmem:[#allocation16 + $0x138] sm:$0xff]
    %v1946 = vld [vmem:[#allocation16 + $0x140] sm:$0xff]
    %v1947 = vld [vmem:[#allocation16 + $0x148] sm:$0xff]
    %v1948 = vld [vmem:[#allocation16 + $0x150] sm:$0xff]
    %v1949 = vld [vmem:[#allocation16 + $0x158] sm:$0xff]
    %v1950 = vld [vmem:[#allocation16 + $0x160] sm:$0xff]
    %v1951 = vld [vmem:[#allocation16 + $0x168] sm:$0xff]
    %v1952 = vld [vmem:[#allocation16 + $0x170] sm:$0xff]
    %v1953 = vld [vmem:[#allocation16 + $0x178] sm:$0xff]
    %v1954 = vld [vmem:[#allocation16 + $0x180] sm:$0xff]
    %v1955 = vld [vmem:[#allocation16 + $0x188] sm:$0xff]
    %v1956 = vld [vmem:[#allocation16 + $0x190] sm:$0xff]
    %v1957 = vld [vmem:[#allocation16 + $0x198] sm:$0xff]
    %v1958 = vld [vmem:[#allocation16 + $0x1a0] sm:$0xff]
    %v1959 = vld [vmem:[#allocation16 + $0x1a8] sm:$0xff]
    %v1960 = vld [vmem:[#allocation16 + $0x1b0] sm:$0xff]
    %v1961 = vld [vmem:[#allocation16 + $0x1b8] sm:$0xff]
    %v1962 = vld [vmem:[#allocation16 + $0x1c0] sm:$0xff]
    %v1963 = vld [vmem:[#allocation16 + $0x1c8] sm:$0xff]
    %v1964 = vld [vmem:[#allocation16 + $0x1d0] sm:$0xff]
    %v1965 = vld [vmem:[#allocation16 + $0x1d8] sm:$0xff]
    %v1966 = vld [vmem:[#allocation16 + $0x1e0] sm:$0xff]
    %v1967 = vld [vmem:[#allocation16 + $0x1e8] sm:$0xff]
    %v1968 = vld [vmem:[#allocation16 + $0x1f0] sm:$0xff]
    %v1969 = vld [vmem:[#allocation16 + $0x1f8] sm:$0xff]
    %v1970 = vld [vmem:[#allocation16 + $0x200] sm:$0xff]
    %v1971 = vld [vmem:[#allocation16 + $0x208] sm:$0xff]
    %v1972 = vld [vmem:[#allocation16 + $0x210] sm:$0xff]
    %v1973 = vld [vmem:[#allocation16 + $0x218] sm:$0xff]
    %v1974 = vld [vmem:[#allocation16 + $0x220] sm:$0xff]
    %v1975 = vld [vmem:[#allocation16 + $0x228] sm:$0xff]
    %v1976 = vld [vmem:[#allocation16 + $0x230] sm:$0xff]
    %v1977 = vld [vmem:[#allocation16 + $0x238] sm:$0xff]
    %v1978 = vld [vmem:[#allocation16 + $0x240] sm:$0xff]
    %v1979 = vld [vmem:[#allocation16 + $0x248] sm:$0xff]
    %v1980 = vld [vmem:[#allocation16 + $0x250] sm:$0xff]
    %v1981 = vld [vmem:[#allocation16 + $0x258] sm:$0xff]
    %v1982 = vld [vmem:[#allocation16 + $0x260] sm:$0xff]
    %v1983 = vld [vmem:[#allocation16 + $0x268] sm:$0xff]
    %v1984 = vld [vmem:[#allocation16 + $0x270] sm:$0xff]
    %v1985 = vld [vmem:[#allocation16 + $0x278] sm:$0xff]
    %v1986 = vld [vmem:[#allocation16 + $0x280] sm:$0xff]
    %v1987 = vld [vmem:[#allocation16 + $0x288] sm:$0xff]
    %v1988 = vld [vmem:[#allocation16 + $0x290] sm:$0xff]
    %v1989 = vld [vmem:[#allocation16 + $0x298] sm:$0xff]
    %v1990 = vld [vmem:[#allocation16 + $0x2a0] sm:$0xff]
    %v1991 = vld [vmem:[#allocation16 + $0x2a8] sm:$0xff]
    %v1992 = vld [vmem:[#allocation16 + $0x2b0] sm:$0xff]
    %v1993 = vld [vmem:[#allocation16 + $0x2b8] sm:$0xff]
    %v1994 = vld [vmem:[#allocation16 + $0x2c0] sm:$0xff]
    %v1995 = vld [vmem:[#allocation16 + $0x2c8] sm:$0xff]
    %v1996 = vld [vmem:[#allocation16 + $0x2d0] sm:$0xff]
    %v1997 = vld [vmem:[#allocation16 + $0x2d8] sm:$0xff]
    %v1998 = vld [vmem:[#allocation16 + $0x2e0] sm:$0xff]
    %v1999 = vld [vmem:[#allocation16 + $0x2e8] sm:$0xff]
    %v2000 = vld [vmem:[#allocation16 + $0x2f0] sm:$0xff]
    %v2001 = vld [vmem:[#allocation16 + $0x2f8] sm:$0xff]
    %2002 = vmatprep.subr.mxu0 %v1907
    %2003 = vmatpush1.msra.mxu0 %v1906
    %2004 = vmatprep.subr.mxu0 %v1913
    %2005 = vmatpush1.msra.mxu0 %v1912
    %2006 = vmatprep.subr.mxu0 %v1919
    %2007 = vmatpush1.msra.mxu0 %v1918
    %2008 = vmatprep.subr.mxu0 %v1925
    %2009 = vmatpush1.msra.mxu0 %v1924
    %2010 = vmatprep.subr.mxu0 %v1931
    %2011 = vmatpush1.msra.mxu0 %v1930
    %2012 = vmatprep.subr.mxu0 %v1937
    %2013 = vmatpush1.msra.mxu0 %v1936
    %2014 = vmatprep.subr.mxu0 %v1943
    %2015 = vmatpush1.msra.mxu0 %v1942
    %2016 = vmatprep.subr.mxu0 %v1949
    %2017 = vmatpush1.msra.mxu0 %v1948
    %2018 = vmatprep.subr.mxu0 %v1955
    %2019 = vmatpush1.msra.mxu0 %v1954
    %2020 = vmatprep.subr.mxu0 %v1961
    %2021 = vmatpush1.msra.mxu0 %v1960
    %2022 = vmatprep.subr.mxu0 %v1967
    %2023 = vmatpush1.msra.mxu0 %v1966
    %2024 = vmatprep.subr.mxu0 %v1973
    %2025 = vmatpush1.msra.mxu0 %v1972
    %2026 = vmatprep.subr.mxu0 %v1979
    %2027 = vmatpush1.msra.mxu0 %v1978
    %2028 = vmatprep.subr.mxu0 %v1985
    %2029 = vmatpush1.msra.mxu0 %v1984
    %2030 = vmatprep.subr.mxu0 %v1991
    %2031 = vmatpush1.msra.mxu0 %v1990
    %2032 = vmatprep.subr.mxu0 %v1997
    %2033 = vmatpush1.msra.mxu0 %v1996
    %2034 = vmatprep.subr.mxu0 0.0
    %2035 = vmatpush1.msra.mxu0 0.0
    %2036 = vmatprep.subr.mxu0 0.0
    %2037 = vmatpush1.msra.mxu0 0.0
    %2038 = vmatprep.subr.mxu0 0.0
    %2039 = vmatpush1.msra.mxu0 0.0
    %2040 = vmatprep.subr.mxu0 0.0
    %2041 = vmatpush1.msra.mxu0 0.0
    %2042 = vmatprep.subr.mxu0 0.0
    %2043 = vmatpush1.msra.mxu0 0.0
    %2044 = vmatprep.subr.mxu0 0.0
    %2045 = vmatpush1.msra.mxu0 0.0
    %2046 = vmatprep.subr.mxu0 0.0
    %2047 = vmatpush1.msra.mxu0 0.0
    %2048 = vmatprep.subr.mxu0 0.0
    %2049 = vmatpush1.msra.mxu0 0.0
    %2050 = vmatprep.subr.mxu0 0.0
    %2051 = vmatpush1.msra.mxu0 0.0
    %2052 = vmatprep.subr.mxu0 0.0
    %2053 = vmatpush1.msra.mxu0 0.0
    %2054 = vmatprep.subr.mxu0 0.0
    %2055 = vmatpush1.msra.mxu0 0.0
    %2056 = vmatprep.subr.mxu0 0.0
    %2057 = vmatpush1.msra.mxu0 0.0
    %2058 = vmatprep.subr.mxu0 0.0
    %2059 = vmatpush1.msra.mxu0 0.0
    %2060 = vmatprep.subr.mxu0 0.0
    %2061 = vmatpush1.msra.mxu0 0.0
    %2062 = vmatprep.subr.mxu0 0.0
    %2063 = vmatpush1.msra.mxu0 0.0
    %2064 = vmatprep.subr.mxu0 0.0
    %2065 = vmatpush1.msra.mxu0 0.0
    %2066 = vmatprep.mubr.f32.mxu0 0.0
    %2067 = vmatmul.mubr.f32.gmra.mrb[0].mxu0 %v1905
    %v2068 = vpop.f32.mrb[0].mxu0
    %v2069 = vadd.f32 0.0, %v2068
    %v2070 = vpop.f32.mrb[0].mxu0
    %v2071 = vadd.f32 0.0, %v2070
    %2072 = vdwg.mxu0
    %2073 = vmatprep.subr.mxu0 %v1909
    %2074 = vmatpush1.msra.mxu0 %v1908
    %2075 = vmatprep.subr.mxu0 %v1915
    %2076 = vmatpush1.msra.mxu0 %v1914
    %2077 = vmatprep.subr.mxu0 %v1921
    %2078 = vmatpush1.msra.mxu0 %v1920
    %2079 = vmatprep.subr.mxu0 %v1927
    %2080 = vmatpush1.msra.mxu0 %v1926
    %2081 = vmatprep.subr.mxu0 %v1933
    %2082 = vmatpush1.msra.mxu0 %v1932
    %2083 = vmatprep.subr.mxu0 %v1939
    %2084 = vmatpush1.msra.mxu0 %v1938
    %2085 = vmatprep.subr.mxu0 %v1945
    %2086 = vmatpush1.msra.mxu0 %v1944
    %2087 = vmatprep.subr.mxu0 %v1951
    %2088 = vmatpush1.msra.mxu0 %v1950
    %2089 = vmatprep.subr.mxu0 %v1957
    %2090 = vmatpush1.msra.mxu0 %v1956
    %2091 = vmatprep.subr.mxu0 %v1963
    %2092 = vmatpush1.msra.mxu0 %v1962
    %2093 = vmatprep.subr.mxu0 %v1969
    %2094 = vmatpush1.msra.mxu0 %v1968
    %2095 = vmatprep.subr.mxu0 %v1975
    %2096 = vmatpush1.msra.mxu0 %v1974
    %2097 = vmatprep.subr.mxu0 %v1981
    %2098 = vmatpush1.msra.mxu0 %v1980
    %2099 = vmatprep.subr.mxu0 %v1987
    %2100 = vmatpush1.msra.mxu0 %v1986
    %2101 = vmatprep.subr.mxu0 %v1993
    %2102 = vmatpush1.msra.mxu0 %v1992
    %2103 = vmatprep.subr.mxu0 %v1999
    %2104 = vmatpush1.msra.mxu0 %v1998
    %2105 = vmatprep.subr.mxu0 0.0
    %2106 = vmatpush1.msra.mxu0 0.0
    %2107 = vmatprep.subr.mxu0 0.0
    %2108 = vmatpush1.msra.mxu0 0.0
    %2109 = vmatprep.subr.mxu0 0.0
    %2110 = vmatpush1.msra.mxu0 0.0
    %2111 = vmatprep.subr.mxu0 0.0
    %2112 = vmatpush1.msra.mxu0 0.0
    %2113 = vmatprep.subr.mxu0 0.0
    %2114 = vmatpush1.msra.mxu0 0.0
    %2115 = vmatprep.subr.mxu0 0.0
    %2116 = vmatpush1.msra.mxu0 0.0
    %2117 = vmatprep.subr.mxu0 0.0
    %2118 = vmatpush1.msra.mxu0 0.0
    %2119 = vmatprep.subr.mxu0 0.0
    %2120 = vmatpush1.msra.mxu0 0.0
    %2121 = vmatprep.subr.mxu0 0.0
    %2122 = vmatpush1.msra.mxu0 0.0
    %2123 = vmatprep.subr.mxu0 0.0
    %2124 = vmatpush1.msra.mxu0 0.0
    %2125 = vmatprep.subr.mxu0 0.0
    %2126 = vmatpush1.msra.mxu0 0.0
    %2127 = vmatprep.subr.mxu0 0.0
    %2128 = vmatpush1.msra.mxu0 0.0
    %2129 = vmatprep.subr.mxu0 0.0
    %2130 = vmatpush1.msra.mxu0 0.0
    %2131 = vmatprep.subr.mxu0 0.0
    %2132 = vmatpush1.msra.mxu0 0.0
    %2133 = vmatprep.subr.mxu0 0.0
    %2134 = vmatpush1.msra.mxu0 0.0
    %2135 = vmatprep.subr.mxu0 0.0
    %2136 = vmatpush1.msra.mxu0 0.0
    %2137 = vmatprep.mubr.f32.mxu0 0.0
    %2138 = vmatmul.mubr.f32.gmra.mrb[0].mxu0 %v1905
    %v2139 = vpop.f32.mrb[0].mxu0
    %v2140 = vadd.f32 0.0, %v2139
    %v2141 = vpop.f32.mrb[0].mxu0
    %v2142 = vadd.f32 0.0, %v2141
    %2143 = vdwg.mxu0
    %2144 = vmatprep.subr.mxu0 %v1911
    %2145 = vmatpush1.msra.mxu0 %v1910
    %2146 = vmatprep.subr.mxu0 %v1917
    %2147 = vmatpush1.msra.mxu0 %v1916
    %2148 = vmatprep.subr.mxu0 %v1923
    %2149 = vmatpush1.msra.mxu0 %v1922
    %2150 = vmatprep.subr.mxu0 %v1929
    %2151 = vmatpush1.msra.mxu0 %v1928
    %2152 = vmatprep.subr.mxu0 %v1935
    %2153 = vmatpush1.msra.mxu0 %v1934
    %2154 = vmatprep.subr.mxu0 %v1941
    %2155 = vmatpush1.msra.mxu0 %v1940
    %2156 = vmatprep.subr.mxu0 %v1947
    %2157 = vmatpush1.msra.mxu0 %v1946
    %2158 = vmatprep.subr.mxu0 %v1953
    %2159 = vmatpush1.msra.mxu0 %v1952
    %2160 = vmatprep.subr.mxu0 %v1959
    %2161 = vmatpush1.msra.mxu0 %v1958
    %2162 = vmatprep.subr.mxu0 %v1965
    %2163 = vmatpush1.msra.mxu0 %v1964
    %2164 = vmatprep.subr.mxu0 %v1971
    %2165 = vmatpush1.msra.mxu0 %v1970
    %2166 = vmatprep.subr.mxu0 %v1977
    %2167 = vmatpush1.msra.mxu0 %v1976
    %2168 = vmatprep.subr.mxu0 %v1983
    %2169 = vmatpush1.msra.mxu0 %v1982
    %2170 = vmatprep.subr.mxu0 %v1989
    %2171 = vmatpush1.msra.mxu0 %v1988
    %2172 = vmatprep.subr.mxu0 %v1995
    %2173 = vmatpush1.msra.mxu0 %v1994
    %2174 = vmatprep.subr.mxu0 %v2001
    %2175 = vmatpush1.msra.mxu0 %v2000
    %2176 = vmatprep.subr.mxu0 0.0
    %2177 = vmatpush1.msra.mxu0 0.0
    %2178 = vmatprep.subr.mxu0 0.0
    %2179 = vmatpush1.msra.mxu0 0.0
    %2180 = vmatprep.subr.mxu0 0.0
    %2181 = vmatpush1.msra.mxu0 0.0
    %2182 = vmatprep.subr.mxu0 0.0
    %2183 = vmatpush1.msra.mxu0 0.0
    %2184 = vmatprep.subr.mxu0 0.0
    %2185 = vmatpush1.msra.mxu0 0.0
    %2186 = vmatprep.subr.mxu0 0.0
    %2187 = vmatpush1.msra.mxu0 0.0
    %2188 = vmatprep.subr.mxu0 0.0
    %2189 = vmatpush1.msra.mxu0 0.0
    %2190 = vmatprep.subr.mxu0 0.0
    %2191 = vmatpush1.msra.mxu0 0.0
    %2192 = vmatprep.subr.mxu0 0.0
    %2193 = vmatpush1.msra.mxu0 0.0
    %2194 = vmatprep.subr.mxu0 0.0
    %2195 = vmatpush1.msra.mxu0 0.0
    %2196 = vmatprep.subr.mxu0 0.0
    %2197 = vmatpush1.msra.mxu0 0.0
    %2198 = vmatprep.subr.mxu0 0.0
    %2199 = vmatpush1.msra.mxu0 0.0
    %2200 = vmatprep.subr.mxu0 0.0
    %2201 = vmatpush1.msra.mxu0 0.0
    %2202 = vmatprep.subr.mxu0 0.0
    %2203 = vmatpush1.msra.mxu0 0.0
    %2204 = vmatprep.subr.mxu0 0.0
    %2205 = vmatpush1.msra.mxu0 0.0
    %2206 = vmatprep.subr.mxu0 0.0
    %2207 = vmatpush1.msra.mxu0 0.0
    %2208 = vmatprep.mubr.f32.mxu0 0.0
    %2209 = vmatmul.mubr.f32.gmra.mrb[0].mxu0 %v1905
    %v2210 = vpop.f32.mrb[0].mxu0
    %v2211 = vadd.f32 0.0, %v2210
    %v2212 = vpop.f32.mrb[0].mxu0
    %v2213 = vadd.f32 0.0, %v2212
    %2214 = vdwg.mxu0
    %v2215 = vadd.f32 %v1644, %v2069
    %v2216 = vadd.f32 %v1648, %v2071
    %v2217 = vadd.f32 %v1652, %v2140
    %v2218 = vadd.f32 %v1656, %v2142
    %v2219 = vadd.f32 %v1660, %v2211
    %v2220 = vadd.f32 %v1664, %v2213
    %s2221 = scalar_lea.vmem [#allocation7], 256
    %v2222 = vld [vmem:[%s2221] sm:$0xff]
    %v2223 = vld [vmem:[%s2221 + $0x8] sm:$0xff]
    %v2224 = vld [vmem:[%s2221 + $0x10] sm:$0xff]
    %v2225 = vld [vmem:[%s2221 + $0x18] sm:$0xff]
    %v2226 = vld [vmem:[%s2221 + $0x20] sm:$0xff]
    %v2227 = vld [vmem:[%s2221 + $0x28] sm:$0xff]
    %v2228 = vld [vmem:[%s2221 + $0x30] sm:$0xff]
    %v2229 = vld [vmem:[%s2221 + $0x38] sm:$0xff]
    %v2230 = vld [vmem:[%s2221 + $0x40] sm:$0xff]
    %v2231 = vld [vmem:[%s2221 + $0x48] sm:$0xff]
    %v2232 = vld [vmem:[%s2221 + $0x50] sm:$0xff]
    %v2233 = vld [vmem:[%s2221 + $0x58] sm:$0xff]
    %v2234 = vld [vmem:[%s2221 + $0x60] sm:$0xff]
    %v2235 = vld [vmem:[%s2221 + $0x68] sm:$0xff]
    %v2236 = vld [vmem:[%s2221 + $0x70] sm:$0xff]
    %v2237 = vld [vmem:[%s2221 + $0x78] sm:$0xff]
    %2238 = vmatprep.subr.mxu0 0.0
    %2239 = vmatpush1.msra.mxu0 %v2222
    %2240 = vmatprep.subr.mxu0 0.0
    %2241 = vmatpush1.msra.mxu0 %v2223
    %2242 = vmatprep.subr.mxu0 0.0
    %2243 = vmatpush1.msra.mxu0 %v2224
    %2244 = vmatprep.subr.mxu0 0.0
    %2245 = vmatpush1.msra.mxu0 %v2225
    %2246 = vmatprep.subr.mxu0 0.0
    %2247 = vmatpush1.msra.mxu0 %v2226
    %2248 = vmatprep.subr.mxu0 0.0
    %2249 = vmatpush1.msra.mxu0 %v2227
    %2250 = vmatprep.subr.mxu0 0.0
    %2251 = vmatpush1.msra.mxu0 %v2228
    %2252 = vmatprep.subr.mxu0 0.0
    %2253 = vmatpush1.msra.mxu0 %v2229
    %2254 = vmatprep.subr.mxu0 0.0
    %2255 = vmatpush1.msra.mxu0 %v2230
    %2256 = vmatprep.subr.mxu0 0.0
    %2257 = vmatpush1.msra.mxu0 %v2231
    %2258 = vmatprep.subr.mxu0 0.0
    %2259 = vmatpush1.msra.mxu0 %v2232
    %2260 = vmatprep.subr.mxu0 0.0
    %2261 = vmatpush1.msra.mxu0 %v2233
    %2262 = vmatprep.subr.mxu0 0.0
    %2263 = vmatpush1.msra.mxu0 %v2234
    %2264 = vmatprep.subr.mxu0 0.0
    %2265 = vmatpush1.msra.mxu0 %v2235
    %2266 = vmatprep.subr.mxu0 0.0
    %2267 = vmatpush1.msra.mxu0 %v2236
    %2268 = vmatprep.subr.mxu0 0.0
    %2269 = vmatpush1.msra.mxu0 %v2237
    %2270 = vmatprep.subr.mxu0 0.0
    %2271 = vmatpush1.msra.mxu0 0.0
    %2272 = vmatprep.subr.mxu0 0.0
    %2273 = vmatpush1.msra.mxu0 0.0
    %2274 = vmatprep.subr.mxu0 0.0
    %2275 = vmatpush1.msra.mxu0 0.0
    %2276 = vmatprep.subr.mxu0 0.0
    %2277 = vmatpush1.msra.mxu0 0.0
    %2278 = vmatprep.subr.mxu0 0.0
    %2279 = vmatpush1.msra.mxu0 0.0
    %2280 = vmatprep.subr.mxu0 0.0
    %2281 = vmatpush1.msra.mxu0 0.0
    %2282 = vmatprep.subr.mxu0 0.0
    %2283 = vmatpush1.msra.mxu0 0.0
    %2284 = vmatprep.subr.mxu0 0.0
    %2285 = vmatpush1.msra.mxu0 0.0
    %2286 = vmatprep.subr.mxu0 0.0
    %2287 = vmatpush1.msra.mxu0 0.0
    %2288 = vmatprep.subr.mxu0 0.0
    %2289 = vmatpush1.msra.mxu0 0.0
    %2290 = vmatprep.subr.mxu0 0.0
    %2291 = vmatpush1.msra.mxu0 0.0
    %2292 = vmatprep.subr.mxu0 0.0
    %2293 = vmatpush1.msra.mxu0 0.0
    %2294 = vmatprep.subr.mxu0 0.0
    %2295 = vmatpush1.msra.mxu0 0.0
    %2296 = vmatprep.subr.mxu0 0.0
    %2297 = vmatpush1.msra.mxu0 0.0
    %2298 = vmatprep.subr.mxu0 0.0
    %2299 = vmatpush1.msra.mxu0 0.0
    %2300 = vmatprep.subr.mxu0 0.0
    %2301 = vmatpush1.msra.mxu0 0.0
    %2302 = vmatprep.mubr.f32.mxu0 0.0
    %2303 = vmatmul.mubr.f32.gmra.mrb[0].mxu0 %v198
    %v2304 = vpop.f32.mrb[0].mxu0
    %v2305 = vadd.f32 %v558, %v2304
    %v2306 = vpop.f32.mrb[0].mxu0
    %2307 = vdwg.mxu0
    %v2308 = vmax.f32 %v2305, 0.0
    %s2309 = scalar_lea.vmem [#allocation13], 2
    %v2310 = vld [vmem:[%s2309] sm:$0x1]
    %s2311 = scalar_lea.vmem [#allocation14], 2
    %v2312 = vld [vmem:[%s2311] sm:$0x1]
    %2313 = vadd.xlane.f32.xlu0 %v2308
    %v2314 = vpop.xlane.xlu0 %2313
    %v2315 = vmul.f32 %v2308, %v2308
    %2316 = vadd.xlane.f32.xlu0 %v2315
    %v2317 = vpop.xlane.xlu0 %2316
    %v2318 = vmul.f32 %v2314, 0.0078125
    %v2319 = vmul.f32 %v2317, 0.0078125
    %v2320 = vmul.f32 %v2318, %v2318
    %v2321 = vsub.f32 %v2319, %v2320
    %v2322 = vadd.f32 %v2321, 1e-05
    %v2323 = vrsqrt.pop %v2322
    %v2324 = vsub.f32 %v2308, %v2318
    %v2325 = vmul.f32 %v2324, %v2323
    %v2327 = vlaneseq
    %v2328 = vshrl.u32 %v2327, 7
    %v2329 = vsub.s32 0, %v2328
    %v2330 = vrot.slane %v2310, %v2329
    %v2332 = vmul.f32 %v2325, %v2330
    %v2334 = vlaneseq
    %v2335 = vshrl.u32 %v2334, 7
    %v2336 = vsub.s32 0, %v2335
    %v2337 = vrot.slane %v2312, %v2336
    %v2339 = vadd.f32 %v2332, %v2337
    %s2340 = scalar_lea.vmem [#allocation7], 384
    %v2341 = vld [vmem:[%s2340] sm:$0xff]
    %v2342 = vld [vmem:[%s2340 + $0x8] sm:$0xff]
    %v2343 = vld [vmem:[%s2340 + $0x10] sm:$0xff]
    %v2344 = vld [vmem:[%s2340 + $0x18] sm:$0xff]
    %v2345 = vld [vmem:[%s2340 + $0x20] sm:$0xff]
    %v2346 = vld [vmem:[%s2340 + $0x28] sm:$0xff]
    %v2347 = vld [vmem:[%s2340 + $0x30] sm:$0xff]
    %v2348 = vld [vmem:[%s2340 + $0x38] sm:$0xff]
    %v2349 = vld [vmem:[%s2340 + $0x40] sm:$0xff]
    %v2350 = vld [vmem:[%s2340 + $0x48] sm:$0xff]
    %v2351 = vld [vmem:[%s2340 + $0x50] sm:$0xff]
    %v2352 = vld [vmem:[%s2340 + $0x58] sm:$0xff]
    %v2353 = vld [vmem:[%s2340 + $0x60] sm:$0xff]
    %v2354 = vld [vmem:[%s2340 + $0x68] sm:$0xff]
    %v2355 = vld [vmem:[%s2340 + $0x70] sm:$0xff]
    %v2356 = vld [vmem:[%s2340 + $0x78] sm:$0xff]
    %2357 = vmatprep.subr.mxu0 0.0
    %2358 = vmatpush1.msra.mxu0 %v2341
    %2359 = vmatprep.subr.mxu0 0.0
    %2360 = vmatpush1.msra.mxu0 %v2342
    %2361 = vmatprep.subr.mxu0 0.0
    %2362 = vmatpush1.msra.mxu0 %v2343
    %2363 = vmatprep.subr.mxu0 0.0
    %2364 = vmatpush1.msra.mxu0 %v2344
    %2365 = vmatprep.subr.mxu0 0.0
    %2366 = vmatpush1.msra.mxu0 %v2345
    %2367 = vmatprep.subr.mxu0 0.0
    %2368 = vmatpush1.msra.mxu0 %v2346
    %2369 = vmatprep.subr.mxu0 0.0
    %2370 = vmatpush1.msra.mxu0 %v2347
    %2371 = vmatprep.subr.mxu0 0.0
    %2372 = vmatpush1.msra.mxu0 %v2348
    %2373 = vmatprep.subr.mxu0 0.0
    %2374 = vmatpush1.msra.mxu0 %v2349
    %2375 = vmatprep.subr.mxu0 0.0
    %2376 = vmatpush1.msra.mxu0 %v2350
    %2377 = vmatprep.subr.mxu0 0.0
    %2378 = vmatpush1.msra.mxu0 %v2351
    %2379 = vmatprep.subr.mxu0 0.0
    %2380 = vmatpush1.msra.mxu0 %v2352
    %2381 = vmatprep.subr.mxu0 0.0
    %2382 = vmatpush1.msra.mxu0 %v2353
    %2383 = vmatprep.subr.mxu0 0.0
    %2384 = vmatpush1.msra.mxu0 %v2354
    %2385 = vmatprep.subr.mxu0 0.0
    %2386 = vmatpush1.msra.mxu0 %v2355
    %2387 = vmatprep.subr.mxu0 0.0
    %2388 = vmatpush1.msra.mxu0 %v2356
    %2389 = vmatprep.subr.mxu0 0.0
    %2390 = vmatpush1.msra.mxu0 0.0
    %2391 = vmatprep.subr.mxu0 0.0
    %2392 = vmatpush1.msra.mxu0 0.0
    %2393 = vmatprep.subr.mxu0 0.0
    %2394 = vmatpush1.msra.mxu0 0.0
    %2395 = vmatprep.subr.mxu0 0.0
    %2396 = vmatpush1.msra.mxu0 0.0
    %2397 = vmatprep.subr.mxu0 0.0
    %2398 = vmatpush1.msra.mxu0 0.0
    %2399 = vmatprep.subr.mxu0 0.0
    %2400 = vmatpush1.msra.mxu0 0.0
    %2401 = vmatprep.subr.mxu0 0.0
    %2402 = vmatpush1.msra.mxu0 0.0
    %2403 = vmatprep.subr.mxu0 0.0
    %2404 = vmatpush1.msra.mxu0 0.0
    %2405 = vmatprep.subr.mxu0 0.0
    %2406 = vmatpush1.msra.mxu0 0.0
    %2407 = vmatprep.subr.mxu0 0.0
    %2408 = vmatpush1.msra.mxu0 0.0
    %2409 = vmatprep.subr.mxu0 0.0
    %2410 = vmatpush1.msra.mxu0 0.0
    %2411 = vmatprep.subr.mxu0 0.0
    %2412 = vmatpush1.msra.mxu0 0.0
    %2413 = vmatprep.subr.mxu0 0.0
    %2414 = vmatpush1.msra.mxu0 0.0
    %2415 = vmatprep.subr.mxu0 0.0
    %2416 = vmatpush1.msra.mxu0 0.0
    %2417 = vmatprep.subr.mxu0 0.0
    %2418 = vmatpush1.msra.mxu0 0.0
    %2419 = vmatprep.subr.mxu0 0.0
    %2420 = vmatpush1.msra.mxu0 0.0
    %2421 = vmatprep.mubr.f32.mxu0 0.0
    %2422 = vmatmul.mubr.f32.gmra.mrb[0].mxu0 %v2339
    %v2423 = vpop.f32.mrb[0].mxu0
    %v2424 = vadd.f32 %v678, %v2423
    %v2425 = vpop.f32.mrb[0].mxu0
    %2426 = vdwg.mxu0
    %v2427 = vmax.f32 %v2424, 0.0
    %s2428 = scalar_lea.vmem [#allocation13], 3
    %v2429 = vld [vmem:[%s2428] sm:$0x1]
    %s2430 = scalar_lea.vmem [#allocation14], 3
    %v2431 = vld [vmem:[%s2430] sm:$0x1]
    %2432 = vadd.xlane.f32.xlu0 %v2427
    %v2433 = vpop.xlane.xlu0 %2432
    %v2434 = vmul.f32 %v2427, %v2427
    %2435 = vadd.xlane.f32.xlu0 %v2434
    %v2436 = vpop.xlane.xlu0 %2435
    %v2437 = vmul.f32 %v2433, 0.0078125
    %v2438 = vmul.f32 %v2436, 0.0078125
    %v2439 = vmul.f32 %v2437, %v2437
    %v2440 = vsub.f32 %v2438, %v2439
    %v2441 = vadd.f32 %v2440, 1e-05
    %v2442 = vrsqrt.pop %v2441
    %v2443 = vsub.f32 %v2427, %v2437
    %v2444 = vmul.f32 %v2443, %v2442
    %v2446 = vlaneseq
    %v2447 = vshrl.u32 %v2446, 7
    %v2448 = vsub.s32 0, %v2447
    %v2449 = vrot.slane %v2429, %v2448
    %v2451 = vmul.f32 %v2444, %v2449
    %v2453 = vlaneseq
    %v2454 = vshrl.u32 %v2453, 7
    %v2455 = vsub.s32 0, %v2454
    %v2456 = vrot.slane %v2431, %v2455
    %v2458 = vadd.f32 %v2451, %v2456
    %v2459 = vld [vmem:[#allocation16 + $0x300] sm:$0xff]
    %v2460 = vld [vmem:[#allocation16 + $0x308] sm:$0xff]
    %v2461 = vld [vmem:[#allocation16 + $0x310] sm:$0xff]
    %v2462 = vld [vmem:[#allocation16 + $0x318] sm:$0xff]
    %v2463 = vld [vmem:[#allocation16 + $0x320] sm:$0xff]
    %v2464 = vld [vmem:[#allocation16 + $0x328] sm:$0xff]
    %v2465 = vld [vmem:[#allocation16 + $0x330] sm:$0xff]
    %v2466 = vld [vmem:[#allocation16 + $0x338] sm:$0xff]
    %v2467 = vld [vmem:[#allocation16 + $0x340] sm:$0xff]
    %v2468 = vld [vmem:[#allocation16 + $0x348] sm:$0xff]
    %v2469 = vld [vmem:[#allocation16 + $0x350] sm:$0xff]
    %v2470 = vld [vmem:[#allocation16 + $0x358] sm:$0xff]
    %v2471 = vld [vmem:[#allocation16 + $0x360] sm:$0xff]
    %v2472 = vld [vmem:[#allocation16 + $0x368] sm:$0xff]
    %v2473 = vld [vmem:[#allocation16 + $0x370] sm:$0xff]
    %v2474 = vld [vmem:[#allocation16 + $0x378] sm:$0xff]
    %v2475 = vld [vmem:[#allocation16 + $0x380] sm:$0xff]
    %v2476 = vld [vmem:[#allocation16 + $0x388] sm:$0xff]
    %v2477 = vld [vmem:[#allocation16 + $0x390] sm:$0xff]
    %v2478 = vld [vmem:[#allocation16 + $0x398] sm:$0xff]
    %v2479 = vld [vmem:[#allocation16 + $0x3a0] sm:$0xff]
    %v2480 = vld [vmem:[#allocation16 + $0x3a8] sm:$0xff]
    %v2481 = vld [vmem:[#allocation16 + $0x3b0] sm:$0xff]
    %v2482 = vld [vmem:[#allocation16 + $0x3b8] sm:$0xff]
    %v2483 = vld [vmem:[#allocation16 + $0x3c0] sm:$0xff]
    %v2484 = vld [vmem:[#allocation16 + $0x3c8] sm:$0xff]
    %v2485 = vld [vmem:[#allocation16 + $0x3d0] sm:$0xff]
    %v2486 = vld [vmem:[#allocation16 + $0x3d8] sm:$0xff]
    %v2487 = vld [vmem:[#allocation16 + $0x3e0] sm:$0xff]
    %v2488 = vld [vmem:[#allocation16 + $0x3e8] sm:$0xff]
    %v2489 = vld [vmem:[#allocation16 + $0x3f0] sm:$0xff]
    %v2490 = vld [vmem:[#allocation16 + $0x3f8] sm:$0xff]
    %v2491 = vld [vmem:[#allocation16 + $0x400] sm:$0xff]
    %v2492 = vld [vmem:[#allocation16 + $0x408] sm:$0xff]
    %v2493 = vld [vmem:[#allocation16 + $0x410] sm:$0xff]
    %v2494 = vld [vmem:[#allocation16 + $0x418] sm:$0xff]
    %v2495 = vld [vmem:[#allocation16 + $0x420] sm:$0xff]
    %v2496 = vld [vmem:[#allocation16 + $0x428] sm:$0xff]
    %v2497 = vld [vmem:[#allocation16 + $0x430] sm:$0xff]
    %v2498 = vld [vmem:[#allocation16 + $0x438] sm:$0xff]
    %v2499 = vld [vmem:[#allocation16 + $0x440] sm:$0xff]
    %v2500 = vld [vmem:[#allocation16 + $0x448] sm:$0xff]
    %v2501 = vld [vmem:[#allocation16 + $0x450] sm:$0xff]
    %v2502 = vld [vmem:[#allocation16 + $0x458] sm:$0xff]
    %v2503 = vld [vmem:[#allocation16 + $0x460] sm:$0xff]
    %v2504 = vld [vmem:[#allocation16 + $0x468] sm:$0xff]
    %v2505 = vld [vmem:[#allocation16 + $0x470] sm:$0xff]
    %v2506 = vld [vmem:[#allocation16 + $0x478] sm:$0xff]
    %v2507 = vld [vmem:[#allocation16 + $0x480] sm:$0xff]
    %v2508 = vld [vmem:[#allocation16 + $0x488] sm:$0xff]
    %v2509 = vld [vmem:[#allocation16 + $0x490] sm:$0xff]
    %v2510 = vld [vmem:[#allocation16 + $0x498] sm:$0xff]
    %v2511 = vld [vmem:[#allocation16 + $0x4a0] sm:$0xff]
    %v2512 = vld [vmem:[#allocation16 + $0x4a8] sm:$0xff]
    %v2513 = vld [vmem:[#allocation16 + $0x4b0] sm:$0xff]
    %v2514 = vld [vmem:[#allocation16 + $0x4b8] sm:$0xff]
    %v2515 = vld [vmem:[#allocation16 + $0x4c0] sm:$0xff]
    %v2516 = vld [vmem:[#allocation16 + $0x4c8] sm:$0xff]
    %v2517 = vld [vmem:[#allocation16 + $0x4d0] sm:$0xff]
    %v2518 = vld [vmem:[#allocation16 + $0x4d8] sm:$0xff]
    %v2519 = vld [vmem:[#allocation16 + $0x4e0] sm:$0xff]
    %v2520 = vld [vmem:[#allocation16 + $0x4e8] sm:$0xff]
    %v2521 = vld [vmem:[#allocation16 + $0x4f0] sm:$0xff]
    %v2522 = vld [vmem:[#allocation16 + $0x4f8] sm:$0xff]
    %v2523 = vld [vmem:[#allocation16 + $0x500] sm:$0xff]
    %v2524 = vld [vmem:[#allocation16 + $0x508] sm:$0xff]
    %v2525 = vld [vmem:[#allocation16 + $0x510] sm:$0xff]
    %v2526 = vld [vmem:[#allocation16 + $0x518] sm:$0xff]
    %v2527 = vld [vmem:[#allocation16 + $0x520] sm:$0xff]
    %v2528 = vld [vmem:[#allocation16 + $0x528] sm:$0xff]
    %v2529 = vld [vmem:[#allocation16 + $0x530] sm:$0xff]
    %v2530 = vld [vmem:[#allocation16 + $0x538] sm:$0xff]
    %v2531 = vld [vmem:[#allocation16 + $0x540] sm:$0xff]
    %v2532 = vld [vmem:[#allocation16 + $0x548] sm:$0xff]
    %v2533 = vld [vmem:[#allocation16 + $0x550] sm:$0xff]
    %v2534 = vld [vmem:[#allocation16 + $0x558] sm:$0xff]
    %v2535 = vld [vmem:[#allocation16 + $0x560] sm:$0xff]
    %v2536 = vld [vmem:[#allocation16 + $0x568] sm:$0xff]
    %v2537 = vld [vmem:[#allocation16 + $0x570] sm:$0xff]
    %v2538 = vld [vmem:[#allocation16 + $0x578] sm:$0xff]
    %v2539 = vld [vmem:[#allocation16 + $0x580] sm:$0xff]
    %v2540 = vld [vmem:[#allocation16 + $0x588] sm:$0xff]
    %v2541 = vld [vmem:[#allocation16 + $0x590] sm:$0xff]
    %v2542 = vld [vmem:[#allocation16 + $0x598] sm:$0xff]
    %v2543 = vld [vmem:[#allocation16 + $0x5a0] sm:$0xff]
    %v2544 = vld [vmem:[#allocation16 + $0x5a8] sm:$0xff]
    %v2545 = vld [vmem:[#allocation16 + $0x5b0] sm:$0xff]
    %v2546 = vld [vmem:[#allocation16 + $0x5b8] sm:$0xff]
    %v2547 = vld [vmem:[#allocation16 + $0x5c0] sm:$0xff]
    %v2548 = vld [vmem:[#allocation16 + $0x5c8] sm:$0xff]
    %v2549 = vld [vmem:[#allocation16 + $0x5d0] sm:$0xff]
    %v2550 = vld [vmem:[#allocation16 + $0x5d8] sm:$0xff]
    %v2551 = vld [vmem:[#allocation16 + $0x5e0] sm:$0xff]
    %v2552 = vld [vmem:[#allocation16 + $0x5e8] sm:$0xff]
    %v2553 = vld [vmem:[#allocation16 + $0x5f0] sm:$0xff]
    %v2554 = vld [vmem:[#allocation16 + $0x5f8] sm:$0xff]
    %2555 = vmatprep.subr.mxu0 %v2460
    %2556 = vmatpush1.msra.mxu0 %v2459
    %2557 = vmatprep.subr.mxu0 %v2466
    %2558 = vmatpush1.msra.mxu0 %v2465
    %2559 = vmatprep.subr.mxu0 %v2472
    %2560 = vmatpush1.msra.mxu0 %v2471
    %2561 = vmatprep.subr.mxu0 %v2478
    %2562 = vmatpush1.msra.mxu0 %v2477
    %2563 = vmatprep.subr.mxu0 %v2484
    %2564 = vmatpush1.msra.mxu0 %v2483
    %2565 = vmatprep.subr.mxu0 %v2490
    %2566 = vmatpush1.msra.mxu0 %v2489
    %2567 = vmatprep.subr.mxu0 %v2496
    %2568 = vmatpush1.msra.mxu0 %v2495
    %2569 = vmatprep.subr.mxu0 %v2502
    %2570 = vmatpush1.msra.mxu0 %v2501
    %2571 = vmatprep.subr.mxu0 %v2508
    %2572 = vmatpush1.msra.mxu0 %v2507
    %2573 = vmatprep.subr.mxu0 %v2514
    %2574 = vmatpush1.msra.mxu0 %v2513
    %2575 = vmatprep.subr.mxu0 %v2520
    %2576 = vmatpush1.msra.mxu0 %v2519
    %2577 = vmatprep.subr.mxu0 %v2526
    %2578 = vmatpush1.msra.mxu0 %v2525
    %2579 = vmatprep.subr.mxu0 %v2532
    %2580 = vmatpush1.msra.mxu0 %v2531
    %2581 = vmatprep.subr.mxu0 %v2538
    %2582 = vmatpush1.msra.mxu0 %v2537
    %2583 = vmatprep.subr.mxu0 %v2544
    %2584 = vmatpush1.msra.mxu0 %v2543
    %2585 = vmatprep.subr.mxu0 %v2550
    %2586 = vmatpush1.msra.mxu0 %v2549
    %2587 = vmatprep.subr.mxu0 0.0
    %2588 = vmatpush1.msra.mxu0 0.0
    %2589 = vmatprep.subr.mxu0 0.0
    %2590 = vmatpush1.msra.mxu0 0.0
    %2591 = vmatprep.subr.mxu0 0.0
    %2592 = vmatpush1.msra.mxu0 0.0
    %2593 = vmatprep.subr.mxu0 0.0
    %2594 = vmatpush1.msra.mxu0 0.0
    %2595 = vmatprep.subr.mxu0 0.0
    %2596 = vmatpush1.msra.mxu0 0.0
    %2597 = vmatprep.subr.mxu0 0.0
    %2598 = vmatpush1.msra.mxu0 0.0
    %2599 = vmatprep.subr.mxu0 0.0
    %2600 = vmatpush1.msra.mxu0 0.0
    %2601 = vmatprep.subr.mxu0 0.0
    %2602 = vmatpush1.msra.mxu0 0.0
    %2603 = vmatprep.subr.mxu0 0.0
    %2604 = vmatpush1.msra.mxu0 0.0
    %2605 = vmatprep.subr.mxu0 0.0
    %2606 = vmatpush1.msra.mxu0 0.0
    %2607 = vmatprep.subr.mxu0 0.0
    %2608 = vmatpush1.msra.mxu0 0.0
    %2609 = vmatprep.subr.mxu0 0.0
    %2610 = vmatpush1.msra.mxu0 0.0
    %2611 = vmatprep.subr.mxu0 0.0
    %2612 = vmatpush1.msra.mxu0 0.0
    %2613 = vmatprep.subr.mxu0 0.0
    %2614 = vmatpush1.msra.mxu0 0.0
    %2615 = vmatprep.subr.mxu0 0.0
    %2616 = vmatpush1.msra.mxu0 0.0
    %2617 = vmatprep.subr.mxu0 0.0
    %2618 = vmatpush1.msra.mxu0 0.0
    %2619 = vmatprep.mubr.f32.mxu0 0.0
    %2620 = vmatmul.mubr.f32.gmra.mrb[0].mxu0 %v2458
    %v2621 = vpop.f32.mrb[0].mxu0
    %v2622 = vadd.f32 0.0, %v2621
    %v2623 = vpop.f32.mrb[0].mxu0
    %v2624 = vadd.f32 0.0, %v2623
    %2625 = vdwg.mxu0
    %2626 = vmatprep.subr.mxu0 %v2462
    %2627 = vmatpush1.msra.mxu0 %v2461
    %2628 = vmatprep.subr.mxu0 %v2468
    %2629 = vmatpush1.msra.mxu0 %v2467
    %2630 = vmatprep.subr.mxu0 %v2474
    %2631 = vmatpush1.msra.mxu0 %v2473
    %2632 = vmatprep.subr.mxu0 %v2480
    %2633 = vmatpush1.msra.mxu0 %v2479
    %2634 = vmatprep.subr.mxu0 %v2486
    %2635 = vmatpush1.msra.mxu0 %v2485
    %2636 = vmatprep.subr.mxu0 %v2492
    %2637 = vmatpush1.msra.mxu0 %v2491
    %2638 = vmatprep.subr.mxu0 %v2498
    %2639 = vmatpush1.msra.mxu0 %v2497
    %2640 = vmatprep.subr.mxu0 %v2504
    %2641 = vmatpush1.msra.mxu0 %v2503
    %2642 = vmatprep.subr.mxu0 %v2510
    %2643 = vmatpush1.msra.mxu0 %v2509
    %2644 = vmatprep.subr.mxu0 %v2516
    %2645 = vmatpush1.msra.mxu0 %v2515
    %2646 = vmatprep.subr.mxu0 %v2522
    %2647 = vmatpush1.msra.mxu0 %v2521
    %2648 = vmatprep.subr.mxu0 %v2528
    %2649 = vmatpush1.msra.mxu0 %v2527
    %2650 = vmatprep.subr.mxu0 %v2534
    %2651 = vmatpush1.msra.mxu0 %v2533
    %2652 = vmatprep.subr.mxu0 %v2540
    %2653 = vmatpush1.msra.mxu0 %v2539
    %2654 = vmatprep.subr.mxu0 %v2546
    %2655 = vmatpush1.msra.mxu0 %v2545
    %2656 = vmatprep.subr.mxu0 %v2552
    %2657 = vmatpush1.msra.mxu0 %v2551
    %2658 = vmatprep.subr.mxu0 0.0
    %2659 = vmatpush1.msra.mxu0 0.0
    %2660 = vmatprep.subr.mxu0 0.0
    %2661 = vmatpush1.msra.mxu0 0.0
    %2662 = vmatprep.subr.mxu0 0.0
    %2663 = vmatpush1.msra.mxu0 0.0
    %2664 = vmatprep.subr.mxu0 0.0
    %2665 = vmatpush1.msra.mxu0 0.0
    %2666 = vmatprep.subr.mxu0 0.0
    %2667 = vmatpush1.msra.mxu0 0.0
    %2668 = vmatprep.subr.mxu0 0.0
    %2669 = vmatpush1.msra.mxu0 0.0
    %2670 = vmatprep.subr.mxu0 0.0
    %2671 = vmatpush1.msra.mxu0 0.0
    %2672 = vmatprep.subr.mxu0 0.0
    %2673 = vmatpush1.msra.mxu0 0.0
    %2674 = vmatprep.subr.mxu0 0.0
    %2675 = vmatpush1.msra.mxu0 0.0
    %2676 = vmatprep.subr.mxu0 0.0
    %2677 = vmatpush1.msra.mxu0 0.0
    %2678 = vmatprep.subr.mxu0 0.0
    %2679 = vmatpush1.msra.mxu0 0.0
    %2680 = vmatprep.subr.mxu0 0.0
    %2681 = vmatpush1.msra.mxu0 0.0
    %2682 = vmatprep.subr.mxu0 0.0
    %2683 = vmatpush1.msra.mxu0 0.0
    %2684 = vmatprep.subr.mxu0 0.0
    %2685 = vmatpush1.msra.mxu0 0.0
    %2686 = vmatprep.subr.mxu0 0.0
    %2687 = vmatpush1.msra.mxu0 0.0
    %2688 = vmatprep.subr.mxu0 0.0
    %2689 = vmatpush1.msra.mxu0 0.0
    %2690 = vmatprep.mubr.f32.mxu0 0.0
    %2691 = vmatmul.mubr.f32.gmra.mrb[0].mxu0 %v2458
    %v2692 = vpop.f32.mrb[0].mxu0
    %v2693 = vadd.f32 0.0, %v2692
    %v2694 = vpop.f32.mrb[0].mxu0
    %v2695 = vadd.f32 0.0, %v2694
    %2696 = vdwg.mxu0
    %2697 = vmatprep.subr.mxu0 %v2464
    %2698 = vmatpush1.msra.mxu0 %v2463
    %2699 = vmatprep.subr.mxu0 %v2470
    %2700 = vmatpush1.msra.mxu0 %v2469
    %2701 = vmatprep.subr.mxu0 %v2476
    %2702 = vmatpush1.msra.mxu0 %v2475
    %2703 = vmatprep.subr.mxu0 %v2482
    %2704 = vmatpush1.msra.mxu0 %v2481
    %2705 = vmatprep.subr.mxu0 %v2488
    %2706 = vmatpush1.msra.mxu0 %v2487
    %2707 = vmatprep.subr.mxu0 %v2494
    %2708 = vmatpush1.msra.mxu0 %v2493
    %2709 = vmatprep.subr.mxu0 %v2500
    %2710 = vmatpush1.msra.mxu0 %v2499
    %2711 = vmatprep.subr.mxu0 %v2506
    %2712 = vmatpush1.msra.mxu0 %v2505
    %2713 = vmatprep.subr.mxu0 %v2512
    %2714 = vmatpush1.msra.mxu0 %v2511
    %2715 = vmatprep.subr.mxu0 %v2518
    %2716 = vmatpush1.msra.mxu0 %v2517
    %2717 = vmatprep.subr.mxu0 %v2524
    %2718 = vmatpush1.msra.mxu0 %v2523
    %2719 = vmatprep.subr.mxu0 %v2530
    %2720 = vmatpush1.msra.mxu0 %v2529
    %2721 = vmatprep.subr.mxu0 %v2536
    %2722 = vmatpush1.msra.mxu0 %v2535
    %2723 = vmatprep.subr.mxu0 %v2542
    %2724 = vmatpush1.msra.mxu0 %v2541
    %2725 = vmatprep.subr.mxu0 %v2548
    %2726 = vmatpush1.msra.mxu0 %v2547
    %2727 = vmatprep.subr.mxu0 %v2554
    %2728 = vmatpush1.msra.mxu0 %v2553
    %2729 = vmatprep.subr.mxu0 0.0
    %2730 = vmatpush1.msra.mxu0 0.0
    %2731 = vmatprep.subr.mxu0 0.0
    %2732 = vmatpush1.msra.mxu0 0.0
    %2733 = vmatprep.subr.mxu0 0.0
    %2734 = vmatpush1.msra.mxu0 0.0
    %2735 = vmatprep.subr.mxu0 0.0
    %2736 = vmatpush1.msra.mxu0 0.0
    %2737 = vmatprep.subr.mxu0 0.0
    %2738 = vmatpush1.msra.mxu0 0.0
    %2739 = vmatprep.subr.mxu0 0.0
    %2740 = vmatpush1.msra.mxu0 0.0
    %2741 = vmatprep.subr.mxu0 0.0
    %2742 = vmatpush1.msra.mxu0 0.0
    %2743 = vmatprep.subr.mxu0 0.0
    %2744 = vmatpush1.msra.mxu0 0.0
    %2745 = vmatprep.subr.mxu0 0.0
    %2746 = vmatpush1.msra.mxu0 0.0
    %2747 = vmatprep.subr.mxu0 0.0
    %2748 = vmatpush1.msra.mxu0 0.0
    %2749 = vmatprep.subr.mxu0 0.0
    %2750 = vmatpush1.msra.mxu0 0.0
    %2751 = vmatprep.subr.mxu0 0.0
    %2752 = vmatpush1.msra.mxu0 0.0
    %2753 = vmatprep.subr.mxu0 0.0
    %2754 = vmatpush1.msra.mxu0 0.0
    %2755 = vmatprep.subr.mxu0 0.0
    %2756 = vmatpush1.msra.mxu0 0.0
    %2757 = vmatprep.subr.mxu0 0.0
    %2758 = vmatpush1.msra.mxu0 0.0
    %2759 = vmatprep.subr.mxu0 0.0
    %2760 = vmatpush1.msra.mxu0 0.0
    %2761 = vmatprep.mubr.f32.mxu0 0.0
    %2762 = vmatmul.mubr.f32.gmra.mrb[0].mxu0 %v2458
    %v2763 = vpop.f32.mrb[0].mxu0
    %v2764 = vadd.f32 0.0, %v2763
    %v2765 = vpop.f32.mrb[0].mxu0
    %v2766 = vadd.f32 0.0, %v2765
    %2767 = vdwg.mxu0
    %v2768 = vadd.f32 %v2215, %v2622
    %v2769 = vadd.f32 %v2216, %v2624
    %v2770 = vadd.f32 %v2217, %v2693
    %v2771 = vadd.f32 %v2218, %v2695
    %v2772 = vadd.f32 %v2219, %v2764
    %v2773 = vadd.f32 %v2220, %v2766
    %s2774 = scalar_lea.vmem [#allocation7], 512
    %v2775 = vld [vmem:[%s2774] sm:$0xff]
    %v2776 = vld [vmem:[%s2774 + $0x8] sm:$0xff]
    %v2777 = vld [vmem:[%s2774 + $0x10] sm:$0xff]
    %v2778 = vld [vmem:[%s2774 + $0x18] sm:$0xff]
    %v2779 = vld [vmem:[%s2774 + $0x20] sm:$0xff]
    %v2780 = vld [vmem:[%s2774 + $0x28] sm:$0xff]
    %v2781 = vld [vmem:[%s2774 + $0x30] sm:$0xff]
    %v2782 = vld [vmem:[%s2774 + $0x38] sm:$0xff]
    %v2783 = vld [vmem:[%s2774 + $0x40] sm:$0xff]
    %v2784 = vld [vmem:[%s2774 + $0x48] sm:$0xff]
    %v2785 = vld [vmem:[%s2774 + $0x50] sm:$0xff]
    %v2786 = vld [vmem:[%s2774 + $0x58] sm:$0xff]
    %v2787 = vld [vmem:[%s2774 + $0x60] sm:$0xff]
    %v2788 = vld [vmem:[%s2774 + $0x68] sm:$0xff]
    %v2789 = vld [vmem:[%s2774 + $0x70] sm:$0xff]
    %v2790 = vld [vmem:[%s2774 + $0x78] sm:$0xff]
    %2791 = vmatprep.subr.mxu0 0.0
    %2792 = vmatpush1.msra.mxu0 %v2775
    %2793 = vmatprep.subr.mxu0 0.0
    %2794 = vmatpush1.msra.mxu0 %v2776
    %2795 = vmatprep.subr.mxu0 0.0
    %2796 = vmatpush1.msra.mxu0 %v2777
    %2797 = vmatprep.subr.mxu0 0.0
    %2798 = vmatpush1.msra.mxu0 %v2778
    %2799 = vmatprep.subr.mxu0 0.0
    %2800 = vmatpush1.msra.mxu0 %v2779
    %2801 = vmatprep.subr.mxu0 0.0
    %2802 = vmatpush1.msra.mxu0 %v2780
    %2803 = vmatprep.subr.mxu0 0.0
    %2804 = vmatpush1.msra.mxu0 %v2781
    %2805 = vmatprep.subr.mxu0 0.0
    %2806 = vmatpush1.msra.mxu0 %v2782
    %2807 = vmatprep.subr.mxu0 0.0
    %2808 = vmatpush1.msra.mxu0 %v2783
    %2809 = vmatprep.subr.mxu0 0.0
    %2810 = vmatpush1.msra.mxu0 %v2784
    %2811 = vmatprep.subr.mxu0 0.0
    %2812 = vmatpush1.msra.mxu0 %v2785
    %2813 = vmatprep.subr.mxu0 0.0
    %2814 = vmatpush1.msra.mxu0 %v2786
    %2815 = vmatprep.subr.mxu0 0.0
    %2816 = vmatpush1.msra.mxu0 %v2787
    %2817 = vmatprep.subr.mxu0 0.0
    %2818 = vmatpush1.msra.mxu0 %v2788
    %2819 = vmatprep.subr.mxu0 0.0
    %2820 = vmatpush1.msra.mxu0 %v2789
    %2821 = vmatprep.subr.mxu0 0.0
    %2822 = vmatpush1.msra.mxu0 %v2790
    %2823 = vmatprep.subr.mxu0 0.0
    %2824 = vmatpush1.msra.mxu0 0.0
    %2825 = vmatprep.subr.mxu0 0.0
    %2826 = vmatpush1.msra.mxu0 0.0
    %2827 = vmatprep.subr.mxu0 0.0
    %2828 = vmatpush1.msra.mxu0 0.0
    %2829 = vmatprep.subr.mxu0 0.0
    %2830 = vmatpush1.msra.mxu0 0.0
    %2831 = vmatprep.subr.mxu0 0.0
    %2832 = vmatpush1.msra.mxu0 0.0
    %2833 = vmatprep.subr.mxu0 0.0
    %2834 = vmatpush1.msra.mxu0 0.0
    %2835 = vmatprep.subr.mxu0 0.0
    %2836 = vmatpush1.msra.mxu0 0.0
    %2837 = vmatprep.subr.mxu0 0.0
    %2838 = vmatpush1.msra.mxu0 0.0
    %2839 = vmatprep.subr.mxu0 0.0
    %2840 = vmatpush1.msra.mxu0 0.0
    %2841 = vmatprep.subr.mxu0 0.0
    %2842 = vmatpush1.msra.mxu0 0.0
    %2843 = vmatprep.subr.mxu0 0.0
    %2844 = vmatpush1.msra.mxu0 0.0
    %2845 = vmatprep.subr.mxu0 0.0
    %2846 = vmatpush1.msra.mxu0 0.0
    %2847 = vmatprep.subr.mxu0 0.0
    %2848 = vmatpush1.msra.mxu0 0.0
    %2849 = vmatprep.subr.mxu0 0.0
    %2850 = vmatpush1.msra.mxu0 0.0
    %2851 = vmatprep.subr.mxu0 0.0
    %2852 = vmatpush1.msra.mxu0 0.0
    %2853 = vmatprep.subr.mxu0 0.0
    %2854 = vmatpush1.msra.mxu0 0.0
    %2855 = vmatprep.mubr.f32.mxu0 0.0
    %2856 = vmatmul.mubr.f32.gmra.mrb[0].mxu0 %v199
    %v2857 = vpop.f32.mrb[0].mxu0
    %v2858 = vadd.f32 %v798, %v2857
    %v2859 = vpop.f32.mrb[0].mxu0
    %2860 = vdwg.mxu0
    %v2861 = vmax.f32 %v2858, 0.0
    %s2862 = scalar_lea.vmem [#allocation13], 4
    %v2863 = vld [vmem:[%s2862] sm:$0x1]
    %s2864 = scalar_lea.vmem [#allocation14], 4
    %v2865 = vld [vmem:[%s2864] sm:$0x1]
    %2866 = vadd.xlane.f32.xlu0 %v2861
    %v2867 = vpop.xlane.xlu0 %2866
    %v2868 = vmul.f32 %v2861, %v2861
    %2869 = vadd.xlane.f32.xlu0 %v2868
    %v2870 = vpop.xlane.xlu0 %2869
    %v2871 = vmul.f32 %v2867, 0.0078125
    %v2872 = vmul.f32 %v2870, 0.0078125
    %v2873 = vmul.f32 %v2871, %v2871
    %v2874 = vsub.f32 %v2872, %v2873
    %v2875 = vadd.f32 %v2874, 1e-05
    %v2876 = vrsqrt.pop %v2875
    %v2877 = vsub.f32 %v2861, %v2871
    %v2878 = vmul.f32 %v2877, %v2876
    %v2880 = vlaneseq
    %v2881 = vshrl.u32 %v2880, 7
    %v2882 = vsub.s32 0, %v2881
    %v2883 = vrot.slane %v2863, %v2882
    %v2885 = vmul.f32 %v2878, %v2883
    %v2887 = vlaneseq
    %v2888 = vshrl.u32 %v2887, 7
    %v2889 = vsub.s32 0, %v2888
    %v2890 = vrot.slane %v2865, %v2889
    %v2892 = vadd.f32 %v2885, %v2890
    %s2893 = scalar_lea.vmem [#allocation7], 640
    %v2894 = vld [vmem:[%s2893] sm:$0xff]
    %v2895 = vld [vmem:[%s2893 + $0x8] sm:$0xff]
    %v2896 = vld [vmem:[%s2893 + $0x10] sm:$0xff]
    %v2897 = vld [vmem:[%s2893 + $0x18] sm:$0xff]
    %v2898 = vld [vmem:[%s2893 + $0x20] sm:$0xff]
    %v2899 = vld [vmem:[%s2893 + $0x28] sm:$0xff]
    %v2900 = vld [vmem:[%s2893 + $0x30] sm:$0xff]
    %v2901 = vld [vmem:[%s2893 + $0x38] sm:$0xff]
    %v2902 = vld [vmem:[%s2893 + $0x40] sm:$0xff]
    %v2903 = vld [vmem:[%s2893 + $0x48] sm:$0xff]
    %v2904 = vld [vmem:[%s2893 + $0x50] sm:$0xff]
    %v2905 = vld [vmem:[%s2893 + $0x58] sm:$0xff]
    %v2906 = vld [vmem:[%s2893 + $0x60] sm:$0xff]
    %v2907 = vld [vmem:[%s2893 + $0x68] sm:$0xff]
    %v2908 = vld [vmem:[%s2893 + $0x70] sm:$0xff]
    %v2909 = vld [vmem:[%s2893 + $0x78] sm:$0xff]
    %2910 = vmatprep.subr.mxu0 0.0
    %2911 = vmatpush1.msra.mxu0 %v2894
    %2912 = vmatprep.subr.mxu0 0.0
    %2913 = vmatpush1.msra.mxu0 %v2895
    %2914 = vmatprep.subr.mxu0 0.0
    %2915 = vmatpush1.msra.mxu0 %v2896
    %2916 = vmatprep.subr.mxu0 0.0
    %2917 = vmatpush1.msra.mxu0 %v2897
    %2918 = vmatprep.subr.mxu0 0.0
    %2919 = vmatpush1.msra.mxu0 %v2898
    %2920 = vmatprep.subr.mxu0 0.0
    %2921 = vmatpush1.msra.mxu0 %v2899
    %2922 = vmatprep.subr.mxu0 0.0
    %2923 = vmatpush1.msra.mxu0 %v2900
    %2924 = vmatprep.subr.mxu0 0.0
    %2925 = vmatpush1.msra.mxu0 %v2901
    %2926 = vmatprep.subr.mxu0 0.0
    %2927 = vmatpush1.msra.mxu0 %v2902
    %2928 = vmatprep.subr.mxu0 0.0
    %2929 = vmatpush1.msra.mxu0 %v2903
    %2930 = vmatprep.subr.mxu0 0.0
    %2931 = vmatpush1.msra.mxu0 %v2904
    %2932 = vmatprep.subr.mxu0 0.0
    %2933 = vmatpush1.msra.mxu0 %v2905
    %2934 = vmatprep.subr.mxu0 0.0
    %2935 = vmatpush1.msra.mxu0 %v2906
    %2936 = vmatprep.subr.mxu0 0.0
    %2937 = vmatpush1.msra.mxu0 %v2907
    %2938 = vmatprep.subr.mxu0 0.0
    %2939 = vmatpush1.msra.mxu0 %v2908
    %2940 = vmatprep.subr.mxu0 0.0
    %2941 = vmatpush1.msra.mxu0 %v2909
    %2942 = vmatprep.subr.mxu0 0.0
    %2943 = vmatpush1.msra.mxu0 0.0
    %2944 = vmatprep.subr.mxu0 0.0
    %2945 = vmatpush1.msra.mxu0 0.0
    %2946 = vmatprep.subr.mxu0 0.0
    %2947 = vmatpush1.msra.mxu0 0.0
    %2948 = vmatprep.subr.mxu0 0.0
    %2949 = vmatpush1.msra.mxu0 0.0
    %2950 = vmatprep.subr.mxu0 0.0
    %2951 = vmatpush1.msra.mxu0 0.0
    %2952 = vmatprep.subr.mxu0 0.0
    %2953 = vmatpush1.msra.mxu0 0.0
    %2954 = vmatprep.subr.mxu0 0.0
    %2955 = vmatpush1.msra.mxu0 0.0
    %2956 = vmatprep.subr.mxu0 0.0
    %2957 = vmatpush1.msra.mxu0 0.0
    %2958 = vmatprep.subr.mxu0 0.0
    %2959 = vmatpush1.msra.mxu0 0.0
    %2960 = vmatprep.subr.mxu0 0.0
    %2961 = vmatpush1.msra.mxu0 0.0
    %2962 = vmatprep.subr.mxu0 0.0
    %2963 = vmatpush1.msra.mxu0 0.0
    %2964 = vmatprep.subr.mxu0 0.0
    %2965 = vmatpush1.msra.mxu0 0.0
    %2966 = vmatprep.subr.mxu0 0.0
    %2967 = vmatpush1.msra.mxu0 0.0
    %2968 = vmatprep.subr.mxu0 0.0
    %2969 = vmatpush1.msra.mxu0 0.0
    %2970 = vmatprep.subr.mxu0 0.0
    %2971 = vmatpush1.msra.mxu0 0.0
    %2972 = vmatprep.subr.mxu0 0.0
    %2973 = vmatpush1.msra.mxu0 0.0
    %2974 = vmatprep.mubr.f32.mxu0 0.0
    %2975 = vmatmul.mubr.f32.gmra.mrb[0].mxu0 %v2892
    %v2976 = vpop.f32.mrb[0].mxu0
    %v2977 = vadd.f32 %v918, %v2976
    %v2978 = vpop.f32.mrb[0].mxu0
    %2979 = vdwg.mxu0
    %v2980 = vmax.f32 %v2977, 0.0
    %s2981 = scalar_lea.vmem [#allocation13], 5
    %v2982 = vld [vmem:[%s2981] sm:$0x1]
    %s2983 = scalar_lea.vmem [#allocation14], 5
    %v2984 = vld [vmem:[%s2983] sm:$0x1]
    %2985 = vadd.xlane.f32.xlu0 %v2980
    %v2986 = vpop.xlane.xlu0 %2985
    %v2987 = vmul.f32 %v2980, %v2980
    %2988 = vadd.xlane.f32.xlu0 %v2987
    %v2989 = vpop.xlane.xlu0 %2988
    %v2990 = vmul.f32 %v2986, 0.0078125
    %v2991 = vmul.f32 %v2989, 0.0078125
    %v2992 = vmul.f32 %v2990, %v2990
    %v2993 = vsub.f32 %v2991, %v2992
    %v2994 = vadd.f32 %v2993, 1e-05
    %v2995 = vrsqrt.pop %v2994
    %v2996 = vsub.f32 %v2980, %v2990
    %v2997 = vmul.f32 %v2996, %v2995
    %v2999 = vlaneseq
    %v3000 = vshrl.u32 %v2999, 7
    %v3001 = vsub.s32 0, %v3000
    %v3002 = vrot.slane %v2982, %v3001
    %v3004 = vmul.f32 %v2997, %v3002
    %v3006 = vlaneseq
    %v3007 = vshrl.u32 %v3006, 7
    %v3008 = vsub.s32 0, %v3007
    %v3009 = vrot.slane %v2984, %v3008
    %v3011 = vadd.f32 %v3004, %v3009
    %v3012 = vld [vmem:[#allocation16 + $0x600] sm:$0xff]
    %v3013 = vld [vmem:[#allocation16 + $0x608] sm:$0xff]
    %v3014 = vld [vmem:[#allocation16 + $0x610] sm:$0xff]
    %v3015 = vld [vmem:[#allocation16 + $0x618] sm:$0xff]
    %v3016 = vld [vmem:[#allocation16 + $0x620] sm:$0xff]
    %v3017 = vld [vmem:[#allocation16 + $0x628] sm:$0xff]
    %v3018 = vld [vmem:[#allocation16 + $0x630] sm:$0xff]
    %v3019 = vld [vmem:[#allocation16 + $0x638] sm:$0xff]
    %v3020 = vld [vmem:[#allocation16 + $0x640] sm:$0xff]
    %v3021 = vld [vmem:[#allocation16 + $0x648] sm:$0xff]
    %v3022 = vld [vmem:[#allocation16 + $0x650] sm:$0xff]
    %v3023 = vld [vmem:[#allocation16 + $0x658] sm:$0xff]
    %v3024 = vld [vmem:[#allocation16 + $0x660] sm:$0xff]
    %v3025 = vld [vmem:[#allocation16 + $0x668] sm:$0xff]
    %v3026 = vld [vmem:[#allocation16 + $0x670] sm:$0xff]
    %v3027 = vld [vmem:[#allocation16 + $0x678] sm:$0xff]
    %v3028 = vld [vmem:[#allocation16 + $0x680] sm:$0xff]
    %v3029 = vld [vmem:[#allocation16 + $0x688] sm:$0xff]
    %v3030 = vld [vmem:[#allocation16 + $0x690] sm:$0xff]
    %v3031 = vld [vmem:[#allocation16 + $0x698] sm:$0xff]
    %v3032 = vld [vmem:[#allocation16 + $0x6a0] sm:$0xff]
    %v3033 = vld [vmem:[#allocation16 + $0x6a8] sm:$0xff]
    %v3034 = vld [vmem:[#allocation16 + $0x6b0] sm:$0xff]
    %v3035 = vld [vmem:[#allocation16 + $0x6b8] sm:$0xff]
    %v3036 = vld [vmem:[#allocation16 + $0x6c0] sm:$0xff]
    %v3037 = vld [vmem:[#allocation16 + $0x6c8] sm:$0xff]
    %v3038 = vld [vmem:[#allocation16 + $0x6d0] sm:$0xff]
    %v3039 = vld [vmem:[#allocation16 + $0x6d8] sm:$0xff]
    %v3040 = vld [vmem:[#allocation16 + $0x6e0] sm:$0xff]
    %v3041 = vld [vmem:[#allocation16 + $0x6e8] sm:$0xff]
    %v3042 = vld [vmem:[#allocation16 + $0x6f0] sm:$0xff]
    %v3043 = vld [vmem:[#allocation16 + $0x6f8] sm:$0xff]
    %v3044 = vld [vmem:[#allocation16 + $0x700] sm:$0xff]
    %v3045 = vld [vmem:[#allocation16 + $0x708] sm:$0xff]
    %v3046 = vld [vmem:[#allocation16 + $0x710] sm:$0xff]
    %v3047 = vld [vmem:[#allocation16 + $0x718] sm:$0xff]
    %v3048 = vld [vmem:[#allocation16 + $0x720] sm:$0xff]
    %v3049 = vld [vmem:[#allocation16 + $0x728] sm:$0xff]
    %v3050 = vld [vmem:[#allocation16 + $0x730] sm:$0xff]
    %v3051 = vld [vmem:[#allocation16 + $0x738] sm:$0xff]
    %v3052 = vld [vmem:[#allocation16 + $0x740] sm:$0xff]
    %v3053 = vld [vmem:[#allocation16 + $0x748] sm:$0xff]
    %v3054 = vld [vmem:[#allocation16 + $0x750] sm:$0xff]
    %v3055 = vld [vmem:[#allocation16 + $0x758] sm:$0xff]
    %v3056 = vld [vmem:[#allocation16 + $0x760] sm:$0xff]
    %v3057 = vld [vmem:[#allocation16 + $0x768] sm:$0xff]
    %v3058 = vld [vmem:[#allocation16 + $0x770] sm:$0xff]
    %v3059 = vld [vmem:[#allocation16 + $0x778] sm:$0xff]
    %v3060 = vld [vmem:[#allocation16 + $0x780] sm:$0xff]
    %v3061 = vld [vmem:[#allocation16 + $0x788] sm:$0xff]
    %v3062 = vld [vmem:[#allocation16 + $0x790] sm:$0xff]
    %v3063 = vld [vmem:[#allocation16 + $0x798] sm:$0xff]
    %v3064 = vld [vmem:[#allocation16 + $0x7a0] sm:$0xff]
    %v3065 = vld [vmem:[#allocation16 + $0x7a8] sm:$0xff]
    %v3066 = vld [vmem:[#allocation16 + $0x7b0] sm:$0xff]
    %v3067 = vld [vmem:[#allocation16 + $0x7b8] sm:$0xff]
    %v3068 = vld [vmem:[#allocation16 + $0x7c0] sm:$0xff]
    %v3069 = vld [vmem:[#allocation16 + $0x7c8] sm:$0xff]
    %v3070 = vld [vmem:[#allocation16 + $0x7d0] sm:$0xff]
    %v3071 = vld [vmem:[#allocation16 + $0x7d8] sm:$0xff]
    %v3072 = vld [vmem:[#allocation16 + $0x7e0] sm:$0xff]
    %v3073 = vld [vmem:[#allocation16 + $0x7e8] sm:$0xff]
    %v3074 = vld [vmem:[#allocation16 + $0x7f0] sm:$0xff]
    %v3075 = vld [vmem:[#allocation16 + $0x7f8] sm:$0xff]
    %v3076 = vld [vmem:[#allocation16 + $0x800] sm:$0xff]
    %v3077 = vld [vmem:[#allocation16 + $0x808] sm:$0xff]
    %v3078 = vld [vmem:[#allocation16 + $0x810] sm:$0xff]
    %v3079 = vld [vmem:[#allocation16 + $0x818] sm:$0xff]
    %v3080 = vld [vmem:[#allocation16 + $0x820] sm:$0xff]
    %v3081 = vld [vmem:[#allocation16 + $0x828] sm:$0xff]
    %v3082 = vld [vmem:[#allocation16 + $0x830] sm:$0xff]
    %v3083 = vld [vmem:[#allocation16 + $0x838] sm:$0xff]
    %v3084 = vld [vmem:[#allocation16 + $0x840] sm:$0xff]
    %v3085 = vld [vmem:[#allocation16 + $0x848] sm:$0xff]
    %v3086 = vld [vmem:[#allocation16 + $0x850] sm:$0xff]
    %v3087 = vld [vmem:[#allocation16 + $0x858] sm:$0xff]
    %v3088 = vld [vmem:[#allocation16 + $0x860] sm:$0xff]
    %v3089 = vld [vmem:[#allocation16 + $0x868] sm:$0xff]
    %v3090 = vld [vmem:[#allocation16 + $0x870] sm:$0xff]
    %v3091 = vld [vmem:[#allocation16 + $0x878] sm:$0xff]
    %v3092 = vld [vmem:[#allocation16 + $0x880] sm:$0xff]
    %v3093 = vld [vmem:[#allocation16 + $0x888] sm:$0xff]
    %v3094 = vld [vmem:[#allocation16 + $0x890] sm:$0xff]
    %v3095 = vld [vmem:[#allocation16 + $0x898] sm:$0xff]
    %v3096 = vld [vmem:[#allocation16 + $0x8a0] sm:$0xff]
    %v3097 = vld [vmem:[#allocation16 + $0x8a8] sm:$0xff]
    %v3098 = vld [vmem:[#allocation16 + $0x8b0] sm:$0xff]
    %v3099 = vld [vmem:[#allocation16 + $0x8b8] sm:$0xff]
    %v3100 = vld [vmem:[#allocation16 + $0x8c0] sm:$0xff]
    %v3101 = vld [vmem:[#allocation16 + $0x8c8] sm:$0xff]
    %v3102 = vld [vmem:[#allocation16 + $0x8d0] sm:$0xff]
    %v3103 = vld [vmem:[#allocation16 + $0x8d8] sm:$0xff]
    %v3104 = vld [vmem:[#allocation16 + $0x8e0] sm:$0xff]
    %v3105 = vld [vmem:[#allocation16 + $0x8e8] sm:$0xff]
    %v3106 = vld [vmem:[#allocation16 + $0x8f0] sm:$0xff]
    %v3107 = vld [vmem:[#allocation16 + $0x8f8] sm:$0xff]
    %3108 = vmatprep.subr.mxu0 %v3013
    %3109 = vmatpush1.msra.mxu0 %v3012
    %3110 = vmatprep.subr.mxu0 %v3019
    %3111 = vmatpush1.msra.mxu0 %v3018
    %3112 = vmatprep.subr.mxu0 %v3025
    %3113 = vmatpush1.msra.mxu0 %v3024
    %3114 = vmatprep.subr.mxu0 %v3031
    %3115 = vmatpush1.msra.mxu0 %v3030
    %3116 = vmatprep.subr.mxu0 %v3037
    %3117 = vmatpush1.msra.mxu0 %v3036
    %3118 = vmatprep.subr.mxu0 %v3043
    %3119 = vmatpush1.msra.mxu0 %v3042
    %3120 = vmatprep.subr.mxu0 %v3049
    %3121 = vmatpush1.msra.mxu0 %v3048
    %3122 = vmatprep.subr.mxu0 %v3055
    %3123 = vmatpush1.msra.mxu0 %v3054
    %3124 = vmatprep.subr.mxu0 %v3061
    %3125 = vmatpush1.msra.mxu0 %v3060
    %3126 = vmatprep.subr.mxu0 %v3067
    %3127 = vmatpush1.msra.mxu0 %v3066
    %3128 = vmatprep.subr.mxu0 %v3073
    %3129 = vmatpush1.msra.mxu0 %v3072
    %3130 = vmatprep.subr.mxu0 %v3079
    %3131 = vmatpush1.msra.mxu0 %v3078
    %3132 = vmatprep.subr.mxu0 %v3085
    %3133 = vmatpush1.msra.mxu0 %v3084
    %3134 = vmatprep.subr.mxu0 %v3091
    %3135 = vmatpush1.msra.mxu0 %v3090
    %3136 = vmatprep.subr.mxu0 %v3097
    %3137 = vmatpush1.msra.mxu0 %v3096
    %3138 = vmatprep.subr.mxu0 %v3103
    %3139 = vmatpush1.msra.mxu0 %v3102
    %3140 = vmatprep.subr.mxu0 0.0
    %3141 = vmatpush1.msra.mxu0 0.0
    %3142 = vmatprep.subr.mxu0 0.0
    %3143 = vmatpush1.msra.mxu0 0.0
    %3144 = vmatprep.subr.mxu0 0.0
    %3145 = vmatpush1.msra.mxu0 0.0
    %3146 = vmatprep.subr.mxu0 0.0
    %3147 = vmatpush1.msra.mxu0 0.0
    %3148 = vmatprep.subr.mxu0 0.0
    %3149 = vmatpush1.msra.mxu0 0.0
    %3150 = vmatprep.subr.mxu0 0.0
    %3151 = vmatpush1.msra.mxu0 0.0
    %3152 = vmatprep.subr.mxu0 0.0
    %3153 = vmatpush1.msra.mxu0 0.0
    %3154 = vmatprep.subr.mxu0 0.0
    %3155 = vmatpush1.msra.mxu0 0.0
    %3156 = vmatprep.subr.mxu0 0.0
    %3157 = vmatpush1.msra.mxu0 0.0
    %3158 = vmatprep.subr.mxu0 0.0
    %3159 = vmatpush1.msra.mxu0 0.0
    %3160 = vmatprep.subr.mxu0 0.0
    %3161 = vmatpush1.msra.mxu0 0.0
    %3162 = vmatprep.subr.mxu0 0.0
    %3163 = vmatpush1.msra.mxu0 0.0
    %3164 = vmatprep.subr.mxu0 0.0
    %3165 = vmatpush1.msra.mxu0 0.0
    %3166 = vmatprep.subr.mxu0 0.0
    %3167 = vmatpush1.msra.mxu0 0.0
    %3168 = vmatprep.subr.mxu0 0.0
    %3169 = vmatpush1.msra.mxu0 0.0
    %3170 = vmatprep.subr.mxu0 0.0
    %3171 = vmatpush1.msra.mxu0 0.0
    %3172 = vmatprep.mubr.f32.mxu0 0.0
    %3173 = vmatmul.mubr.f32.gmra.mrb[0].mxu0 %v3011
    %v3174 = vpop.f32.mrb[0].mxu0
    %v3175 = vadd.f32 0.0, %v3174
    %v3176 = vpop.f32.mrb[0].mxu0
    %v3177 = vadd.f32 0.0, %v3176
    %3178 = vdwg.mxu0
    %3179 = vmatprep.subr.mxu0 %v3015
    %3180 = vmatpush1.msra.mxu0 %v3014
    %3181 = vmatprep.subr.mxu0 %v3021
    %3182 = vmatpush1.msra.mxu0 %v3020
    %3183 = vmatprep.subr.mxu0 %v3027
    %3184 = vmatpush1.msra.mxu0 %v3026
    %3185 = vmatprep.subr.mxu0 %v3033
    %3186 = vmatpush1.msra.mxu0 %v3032
    %3187 = vmatprep.subr.mxu0 %v3039
    %3188 = vmatpush1.msra.mxu0 %v3038
    %3189 = vmatprep.subr.mxu0 %v3045
    %3190 = vmatpush1.msra.mxu0 %v3044
    %3191 = vmatprep.subr.mxu0 %v3051
    %3192 = vmatpush1.msra.mxu0 %v3050
    %3193 = vmatprep.subr.mxu0 %v3057
    %3194 = vmatpush1.msra.mxu0 %v3056
    %3195 = vmatprep.subr.mxu0 %v3063
    %3196 = vmatpush1.msra.mxu0 %v3062
    %3197 = vmatprep.subr.mxu0 %v3069
    %3198 = vmatpush1.msra.mxu0 %v3068
    %3199 = vmatprep.subr.mxu0 %v3075
    %3200 = vmatpush1.msra.mxu0 %v3074
    %3201 = vmatprep.subr.mxu0 %v3081
    %3202 = vmatpush1.msra.mxu0 %v3080
    %3203 = vmatprep.subr.mxu0 %v3087
    %3204 = vmatpush1.msra.mxu0 %v3086
    %3205 = vmatprep.subr.mxu0 %v3093
    %3206 = vmatpush1.msra.mxu0 %v3092
    %3207 = vmatprep.subr.mxu0 %v3099
    %3208 = vmatpush1.msra.mxu0 %v3098
    %3209 = vmatprep.subr.mxu0 %v3105
    %3210 = vmatpush1.msra.mxu0 %v3104
    %3211 = vmatprep.subr.mxu0 0.0
    %3212 = vmatpush1.msra.mxu0 0.0
    %3213 = vmatprep.subr.mxu0 0.0
    %3214 = vmatpush1.msra.mxu0 0.0
    %3215 = vmatprep.subr.mxu0 0.0
    %3216 = vmatpush1.msra.mxu0 0.0
    %3217 = vmatprep.subr.mxu0 0.0
    %3218 = vmatpush1.msra.mxu0 0.0
    %3219 = vmatprep.subr.mxu0 0.0
    %3220 = vmatpush1.msra.mxu0 0.0
    %3221 = vmatprep.subr.mxu0 0.0
    %3222 = vmatpush1.msra.mxu0 0.0
    %3223 = vmatprep.subr.mxu0 0.0
    %3224 = vmatpush1.msra.mxu0 0.0
    %3225 = vmatprep.subr.mxu0 0.0
    %3226 = vmatpush1.msra.mxu0 0.0
    %3227 = vmatprep.subr.mxu0 0.0
    %3228 = vmatpush1.msra.mxu0 0.0
    %3229 = vmatprep.subr.mxu0 0.0
    %3230 = vmatpush1.msra.mxu0 0.0
    %3231 = vmatprep.subr.mxu0 0.0
    %3232 = vmatpush1.msra.mxu0 0.0
    %3233 = vmatprep.subr.mxu0 0.0
    %3234 = vmatpush1.msra.mxu0 0.0
    %3235 = vmatprep.subr.mxu0 0.0
    %3236 = vmatpush1.msra.mxu0 0.0
    %3237 = vmatprep.subr.mxu0 0.0
    %3238 = vmatpush1.msra.mxu0 0.0
    %3239 = vmatprep.subr.mxu0 0.0
    %3240 = vmatpush1.msra.mxu0 0.0
    %3241 = vmatprep.subr.mxu0 0.0
    %3242 = vmatpush1.msra.mxu0 0.0
    %3243 = vmatprep.mubr.f32.mxu0 0.0
    %3244 = vmatmul.mubr.f32.gmra.mrb[0].mxu0 %v3011
    %v3245 = vpop.f32.mrb[0].mxu0
    %v3246 = vadd.f32 0.0, %v3245
    %v3247 = vpop.f32.mrb[0].mxu0
    %v3248 = vadd.f32 0.0, %v3247
    %3249 = vdwg.mxu0
    %3250 = vmatprep.subr.mxu0 %v3017
    %3251 = vmatpush1.msra.mxu0 %v3016
    %3252 = vmatprep.subr.mxu0 %v3023
    %3253 = vmatpush1.msra.mxu0 %v3022
    %3254 = vmatprep.subr.mxu0 %v3029
    %3255 = vmatpush1.msra.mxu0 %v3028
    %3256 = vmatprep.subr.mxu0 %v3035
    %3257 = vmatpush1.msra.mxu0 %v3034
    %3258 = vmatprep.subr.mxu0 %v3041
    %3259 = vmatpush1.msra.mxu0 %v3040
    %3260 = vmatprep.subr.mxu0 %v3047
    %3261 = vmatpush1.msra.mxu0 %v3046
    %3262 = vmatprep.subr.mxu0 %v3053
    %3263 = vmatpush1.msra.mxu0 %v3052
    %3264 = vmatprep.subr.mxu0 %v3059
    %3265 = vmatpush1.msra.mxu0 %v3058
    %3266 = vmatprep.subr.mxu0 %v3065
    %3267 = vmatpush1.msra.mxu0 %v3064
    %3268 = vmatprep.subr.mxu0 %v3071
    %3269 = vmatpush1.msra.mxu0 %v3070
    %3270 = vmatprep.subr.mxu0 %v3077
    %3271 = vmatpush1.msra.mxu0 %v3076
    %3272 = vmatprep.subr.mxu0 %v3083
    %3273 = vmatpush1.msra.mxu0 %v3082
    %3274 = vmatprep.subr.mxu0 %v3089
    %3275 = vmatpush1.msra.mxu0 %v3088
    %3276 = vmatprep.subr.mxu0 %v3095
    %3277 = vmatpush1.msra.mxu0 %v3094
    %3278 = vmatprep.subr.mxu0 %v3101
    %3279 = vmatpush1.msra.mxu0 %v3100
    %3280 = vmatprep.subr.mxu0 %v3107
    %3281 = vmatpush1.msra.mxu0 %v3106
    %3282 = vmatprep.subr.mxu0 0.0
    %3283 = vmatpush1.msra.mxu0 0.0
    %3284 = vmatprep.subr.mxu0 0.0
    %3285 = vmatpush1.msra.mxu0 0.0
    %3286 = vmatprep.subr.mxu0 0.0
    %3287 = vmatpush1.msra.mxu0 0.0
    %3288 = vmatprep.subr.mxu0 0.0
    %3289 = vmatpush1.msra.mxu0 0.0
    %3290 = vmatprep.subr.mxu0 0.0
    %3291 = vmatpush1.msra.mxu0 0.0
    %3292 = vmatprep.subr.mxu0 0.0
    %3293 = vmatpush1.msra.mxu0 0.0
    %3294 = vmatprep.subr.mxu0 0.0
    %3295 = vmatpush1.msra.mxu0 0.0
    %3296 = vmatprep.subr.mxu0 0.0
    %3297 = vmatpush1.msra.mxu0 0.0
    %3298 = vmatprep.subr.mxu0 0.0
    %3299 = vmatpush1.msra.mxu0 0.0
    %3300 = vmatprep.subr.mxu0 0.0
    %3301 = vmatpush1.msra.mxu0 0.0
    %3302 = vmatprep.subr.mxu0 0.0
    %3303 = vmatpush1.msra.mxu0 0.0
    %3304 = vmatprep.subr.mxu0 0.0
    %3305 = vmatpush1.msra.mxu0 0.0
    %3306 = vmatprep.subr.mxu0 0.0
    %3307 = vmatpush1.msra.mxu0 0.0
    %3308 = vmatprep.subr.mxu0 0.0
    %3309 = vmatpush1.msra.mxu0 0.0
    %3310 = vmatprep.subr.mxu0 0.0
    %3311 = vmatpush1.msra.mxu0 0.0
    %3312 = vmatprep.subr.mxu0 0.0
    %3313 = vmatpush1.msra.mxu0 0.0
    %3314 = vmatprep.mubr.f32.mxu0 0.0
    %3315 = vmatmul.mubr.f32.gmra.mrb[0].mxu0 %v3011
    %v3316 = vpop.f32.mrb[0].mxu0
    %v3317 = vadd.f32 0.0, %v3316
    %v3318 = vpop.f32.mrb[0].mxu0
    %v3319 = vadd.f32 0.0, %v3318
    %3320 = vdwg.mxu0
    %v3321 = vadd.f32 %v2768, %v3175
    %v3322 = vadd.f32 %v2769, %v3177
    %v3323 = vadd.f32 %v2770, %v3246
    %v3324 = vadd.f32 %v2771, %v3248
    %v3325 = vadd.f32 %v2772, %v3317
    %v3326 = vadd.f32 %v2773, %v3319
    %s3327 = scalar_lea.vmem [#allocation7], 768
    %v3328 = vld [vmem:[%s3327] sm:$0xff]
    %v3329 = vld [vmem:[%s3327 + $0x8] sm:$0xff]
    %v3330 = vld [vmem:[%s3327 + $0x10] sm:$0xff]
    %v3331 = vld [vmem:[%s3327 + $0x18] sm:$0xff]
    %v3332 = vld [vmem:[%s3327 + $0x20] sm:$0xff]
    %v3333 = vld [vmem:[%s3327 + $0x28] sm:$0xff]
    %v3334 = vld [vmem:[%s3327 + $0x30] sm:$0xff]
    %v3335 = vld [vmem:[%s3327 + $0x38] sm:$0xff]
    %v3336 = vld [vmem:[%s3327 + $0x40] sm:$0xff]
    %v3337 = vld [vmem:[%s3327 + $0x48] sm:$0xff]
    %v3338 = vld [vmem:[%s3327 + $0x50] sm:$0xff]
    %v3339 = vld [vmem:[%s3327 + $0x58] sm:$0xff]
    %v3340 = vld [vmem:[%s3327 + $0x60] sm:$0xff]
    %v3341 = vld [vmem:[%s3327 + $0x68] sm:$0xff]
    %v3342 = vld [vmem:[%s3327 + $0x70] sm:$0xff]
    %v3343 = vld [vmem:[%s3327 + $0x78] sm:$0xff]
    %3344 = vmatprep.subr.mxu0 0.0
    %3345 = vmatpush1.msra.mxu0 %v3328
    %3346 = vmatprep.subr.mxu0 0.0
    %3347 = vmatpush1.msra.mxu0 %v3329
    %3348 = vmatprep.subr.mxu0 0.0
    %3349 = vmatpush1.msra.mxu0 %v3330
    %3350 = vmatprep.subr.mxu0 0.0
    %3351 = vmatpush1.msra.mxu0 %v3331
    %3352 = vmatprep.subr.mxu0 0.0
    %3353 = vmatpush1.msra.mxu0 %v3332
    %3354 = vmatprep.subr.mxu0 0.0
    %3355 = vmatpush1.msra.mxu0 %v3333
    %3356 = vmatprep.subr.mxu0 0.0
    %3357 = vmatpush1.msra.mxu0 %v3334
    %3358 = vmatprep.subr.mxu0 0.0
    %3359 = vmatpush1.msra.mxu0 %v3335
    %3360 = vmatprep.subr.mxu0 0.0
    %3361 = vmatpush1.msra.mxu0 %v3336
    %3362 = vmatprep.subr.mxu0 0.0
    %3363 = vmatpush1.msra.mxu0 %v3337
    %3364 = vmatprep.subr.mxu0 0.0
    %3365 = vmatpush1.msra.mxu0 %v3338
    %3366 = vmatprep.subr.mxu0 0.0
    %3367 = vmatpush1.msra.mxu0 %v3339
    %3368 = vmatprep.subr.mxu0 0.0
    %3369 = vmatpush1.msra.mxu0 %v3340
    %3370 = vmatprep.subr.mxu0 0.0
    %3371 = vmatpush1.msra.mxu0 %v3341
    %3372 = vmatprep.subr.mxu0 0.0
    %3373 = vmatpush1.msra.mxu0 %v3342
    %3374 = vmatprep.subr.mxu0 0.0
    %3375 = vmatpush1.msra.mxu0 %v3343
    %3376 = vmatprep.subr.mxu0 0.0
    %3377 = vmatpush1.msra.mxu0 0.0
    %3378 = vmatprep.subr.mxu0 0.0
    %3379 = vmatpush1.msra.mxu0 0.0
    %3380 = vmatprep.subr.mxu0 0.0
    %3381 = vmatpush1.msra.mxu0 0.0
    %3382 = vmatprep.subr.mxu0 0.0
    %3383 = vmatpush1.msra.mxu0 0.0
    %3384 = vmatprep.subr.mxu0 0.0
    %3385 = vmatpush1.msra.mxu0 0.0
    %3386 = vmatprep.subr.mxu0 0.0
    %3387 = vmatpush1.msra.mxu0 0.0
    %3388 = vmatprep.subr.mxu0 0.0
    %3389 = vmatpush1.msra.mxu0 0.0
    %3390 = vmatprep.subr.mxu0 0.0
    %3391 = vmatpush1.msra.mxu0 0.0
    %3392 = vmatprep.subr.mxu0 0.0
    %3393 = vmatpush1.msra.mxu0 0.0
    %3394 = vmatprep.subr.mxu0 0.0
    %3395 = vmatpush1.msra.mxu0 0.0
    %3396 = vmatprep.subr.mxu0 0.0
    %3397 = vmatpush1.msra.mxu0 0.0
    %3398 = vmatprep.subr.mxu0 0.0
    %3399 = vmatpush1.msra.mxu0 0.0
    %3400 = vmatprep.subr.mxu0 0.0
    %3401 = vmatpush1.msra.mxu0 0.0
    %3402 = vmatprep.subr.mxu0 0.0
    %3403 = vmatpush1.msra.mxu0 0.0
    %3404 = vmatprep.subr.mxu0 0.0
    %3405 = vmatpush1.msra.mxu0 0.0
    %3406 = vmatprep.subr.mxu0 0.0
    %3407 = vmatpush1.msra.mxu0 0.0
    %3408 = vmatprep.mubr.f32.mxu0 0.0
    %3409 = vmatmul.mubr.f32.gmra.mrb[0].mxu0 %v200
    %v3410 = vpop.f32.mrb[0].mxu0
    %v3411 = vadd.f32 %v1038, %v3410
    %v3412 = vpop.f32.mrb[0].mxu0
    %3413 = vdwg.mxu0
    %v3414 = vmax.f32 %v3411, 0.0
    %s3415 = scalar_lea.vmem [#allocation13], 6
    %v3416 = vld [vmem:[%s3415] sm:$0x1]
    %s3417 = scalar_lea.vmem [#allocation14], 6
    %v3418 = vld [vmem:[%s3417] sm:$0x1]
    %3419 = vadd.xlane.f32.xlu0 %v3414
    %v3420 = vpop.xlane.xlu0 %3419
    %v3421 = vmul.f32 %v3414, %v3414
    %3422 = vadd.xlane.f32.xlu0 %v3421
    %v3423 = vpop.xlane.xlu0 %3422
    %v3424 = vmul.f32 %v3420, 0.0078125
    %v3425 = vmul.f32 %v3423, 0.0078125
    %v3426 = vmul.f32 %v3424, %v3424
    %v3427 = vsub.f32 %v3425, %v3426
    %v3428 = vadd.f32 %v3427, 1e-05
    %v3429 = vrsqrt.pop %v3428
    %v3430 = vsub.f32 %v3414, %v3424
    %v3431 = vmul.f32 %v3430, %v3429
    %v3433 = vlaneseq
    %v3434 = vshrl.u32 %v3433, 7
    %v3435 = vsub.s32 0, %v3434
    %v3436 = vrot.slane %v3416, %v3435
    %v3438 = vmul.f32 %v3431, %v3436
    %v3440 = vlaneseq
    %v3441 = vshrl.u32 %v3440, 7
    %v3442 = vsub.s32 0, %v3441
    %v3443 = vrot.slane %v3418, %v3442
    %v3445 = vadd.f32 %v3438, %v3443
    %s3446 = scalar_lea.vmem [#allocation7], 896
    %v3447 = vld [vmem:[%s3446] sm:$0xff]
    %v3448 = vld [vmem:[%s3446 + $0x8] sm:$0xff]
    %v3449 = vld [vmem:[%s3446 + $0x10] sm:$0xff]
    %v3450 = vld [vmem:[%s3446 + $0x18] sm:$0xff]
    %v3451 = vld [vmem:[%s3446 + $0x20] sm:$0xff]
    %v3452 = vld [vmem:[%s3446 + $0x28] sm:$0xff]
    %v3453 = vld [vmem:[%s3446 + $0x30] sm:$0xff]
    %v3454 = vld [vmem:[%s3446 + $0x38] sm:$0xff]
    %v3455 = vld [vmem:[%s3446 + $0x40] sm:$0xff]
    %v3456 = vld [vmem:[%s3446 + $0x48] sm:$0xff]
    %v3457 = vld [vmem:[%s3446 + $0x50] sm:$0xff]
    %v3458 = vld [vmem:[%s3446 + $0x58] sm:$0xff]
    %v3459 = vld [vmem:[%s3446 + $0x60] sm:$0xff]
    %v3460 = vld [vmem:[%s3446 + $0x68] sm:$0xff]
    %v3461 = vld [vmem:[%s3446 + $0x70] sm:$0xff]
    %v3462 = vld [vmem:[%s3446 + $0x78] sm:$0xff]
    %3463 = vmatprep.subr.mxu0 0.0
    %3464 = vmatpush1.msra.mxu0 %v3447
    %3465 = vmatprep.subr.mxu0 0.0
    %3466 = vmatpush1.msra.mxu0 %v3448
    %3467 = vmatprep.subr.mxu0 0.0
    %3468 = vmatpush1.msra.mxu0 %v3449
    %3469 = vmatprep.subr.mxu0 0.0
    %3470 = vmatpush1.msra.mxu0 %v3450
    %3471 = vmatprep.subr.mxu0 0.0
    %3472 = vmatpush1.msra.mxu0 %v3451
    %3473 = vmatprep.subr.mxu0 0.0
    %3474 = vmatpush1.msra.mxu0 %v3452
    %3475 = vmatprep.subr.mxu0 0.0
    %3476 = vmatpush1.msra.mxu0 %v3453
    %3477 = vmatprep.subr.mxu0 0.0
    %3478 = vmatpush1.msra.mxu0 %v3454
    %3479 = vmatprep.subr.mxu0 0.0
    %3480 = vmatpush1.msra.mxu0 %v3455
    %3481 = vmatprep.subr.mxu0 0.0
    %3482 = vmatpush1.msra.mxu0 %v3456
    %3483 = vmatprep.subr.mxu0 0.0
    %3484 = vmatpush1.msra.mxu0 %v3457
    %3485 = vmatprep.subr.mxu0 0.0
    %3486 = vmatpush1.msra.mxu0 %v3458
    %3487 = vmatprep.subr.mxu0 0.0
    %3488 = vmatpush1.msra.mxu0 %v3459
    %3489 = vmatprep.subr.mxu0 0.0
    %3490 = vmatpush1.msra.mxu0 %v3460
    %3491 = vmatprep.subr.mxu0 0.0
    %3492 = vmatpush1.msra.mxu0 %v3461
    %3493 = vmatprep.subr.mxu0 0.0
    %3494 = vmatpush1.msra.mxu0 %v3462
    %3495 = vmatprep.subr.mxu0 0.0
    %3496 = vmatpush1.msra.mxu0 0.0
    %3497 = vmatprep.subr.mxu0 0.0
    %3498 = vmatpush1.msra.mxu0 0.0
    %3499 = vmatprep.subr.mxu0 0.0
    %3500 = vmatpush1.msra.mxu0 0.0
    %3501 = vmatprep.subr.mxu0 0.0
    %3502 = vmatpush1.msra.mxu0 0.0
    %3503 = vmatprep.subr.mxu0 0.0
    %3504 = vmatpush1.msra.mxu0 0.0
    %3505 = vmatprep.subr.mxu0 0.0
    %3506 = vmatpush1.msra.mxu0 0.0
    %3507 = vmatprep.subr.mxu0 0.0
    %3508 = vmatpush1.msra.mxu0 0.0
    %3509 = vmatprep.subr.mxu0 0.0
    %3510 = vmatpush1.msra.mxu0 0.0
    %3511 = vmatprep.subr.mxu0 0.0
    %3512 = vmatpush1.msra.mxu0 0.0
    %3513 = vmatprep.subr.mxu0 0.0
    %3514 = vmatpush1.msra.mxu0 0.0
    %3515 = vmatprep.subr.mxu0 0.0
    %3516 = vmatpush1.msra.mxu0 0.0
    %3517 = vmatprep.subr.mxu0 0.0
    %3518 = vmatpush1.msra.mxu0 0.0
    %3519 = vmatprep.subr.mxu0 0.0
    %3520 = vmatpush1.msra.mxu0 0.0
    %3521 = vmatprep.subr.mxu0 0.0
    %3522 = vmatpush1.msra.mxu0 0.0
    %3523 = vmatprep.subr.mxu0 0.0
    %3524 = vmatpush1.msra.mxu0 0.0
    %3525 = vmatprep.subr.mxu0 0.0
    %3526 = vmatpush1.msra.mxu0 0.0
    %3527 = vmatprep.mubr.f32.mxu0 0.0
    %3528 = vmatmul.mubr.f32.gmra.mrb[0].mxu0 %v3445
    %v3529 = vpop.f32.mrb[0].mxu0
    %v3530 = vadd.f32 %v1158, %v3529
    %v3531 = vpop.f32.mrb[0].mxu0
    %3532 = vdwg.mxu0
    %v3533 = vmax.f32 %v3530, 0.0
    %s3534 = scalar_lea.vmem [#allocation13], 7
    %v3535 = vld [vmem:[%s3534] sm:$0x1]
    %s3536 = scalar_lea.vmem [#allocation14], 7
    %v3537 = vld [vmem:[%s3536] sm:$0x1]
    %3538 = vadd.xlane.f32.xlu0 %v3533
    %v3539 = vpop.xlane.xlu0 %3538
    %v3540 = vmul.f32 %v3533, %v3533
    %3541 = vadd.xlane.f32.xlu0 %v3540
    %v3542 = vpop.xlane.xlu0 %3541
    %v3543 = vmul.f32 %v3539, 0.0078125
    %v3544 = vmul.f32 %v3542, 0.0078125
    %v3545 = vmul.f32 %v3543, %v3543
    %v3546 = vsub.f32 %v3544, %v3545
    %v3547 = vadd.f32 %v3546, 1e-05
    %v3548 = vrsqrt.pop %v3547
    %v3549 = vsub.f32 %v3533, %v3543
    %v3550 = vmul.f32 %v3549, %v3548
    %v3552 = vlaneseq
    %v3553 = vshrl.u32 %v3552, 7
    %v3554 = vsub.s32 0, %v3553
    %v3555 = vrot.slane %v3535, %v3554
    %v3557 = vmul.f32 %v3550, %v3555
    %v3559 = vlaneseq
    %v3560 = vshrl.u32 %v3559, 7
    %v3561 = vsub.s32 0, %v3560
    %v3562 = vrot.slane %v3537, %v3561
    %v3564 = vadd.f32 %v3557, %v3562
    %v3565 = vld [vmem:[#allocation16 + $0x900] sm:$0xff]
    %v3566 = vld [vmem:[#allocation16 + $0x908] sm:$0xff]
    %v3567 = vld [vmem:[#allocation16 + $0x910] sm:$0xff]
    %v3568 = vld [vmem:[#allocation16 + $0x918] sm:$0xff]
    %v3569 = vld [vmem:[#allocation16 + $0x920] sm:$0xff]
    %v3570 = vld [vmem:[#allocation16 + $0x928] sm:$0xff]
    %v3571 = vld [vmem:[#allocation16 + $0x930] sm:$0xff]
    %v3572 = vld [vmem:[#allocation16 + $0x938] sm:$0xff]
    %v3573 = vld [vmem:[#allocation16 + $0x940] sm:$0xff]
    %v3574 = vld [vmem:[#allocation16 + $0x948] sm:$0xff]
    %v3575 = vld [vmem:[#allocation16 + $0x950] sm:$0xff]
    %v3576 = vld [vmem:[#allocation16 + $0x958] sm:$0xff]
    %v3577 = vld [vmem:[#allocation16 + $0x960] sm:$0xff]
    %v3578 = vld [vmem:[#allocation16 + $0x968] sm:$0xff]
    %v3579 = vld [vmem:[#allocation16 + $0x970] sm:$0xff]
    %v3580 = vld [vmem:[#allocation16 + $0x978] sm:$0xff]
    %v3581 = vld [vmem:[#allocation16 + $0x980] sm:$0xff]
    %v3582 = vld [vmem:[#allocation16 + $0x988] sm:$0xff]
    %v3583 = vld [vmem:[#allocation16 + $0x990] sm:$0xff]
    %v3584 = vld [vmem:[#allocation16 + $0x998] sm:$0xff]
    %v3585 = vld [vmem:[#allocation16 + $0x9a0] sm:$0xff]
    %v3586 = vld [vmem:[#allocation16 + $0x9a8] sm:$0xff]
    %v3587 = vld [vmem:[#allocation16 + $0x9b0] sm:$0xff]
    %v3588 = vld [vmem:[#allocation16 + $0x9b8] sm:$0xff]
    %v3589 = vld [vmem:[#allocation16 + $0x9c0] sm:$0xff]
    %v3590 = vld [vmem:[#allocation16 + $0x9c8] sm:$0xff]
    %v3591 = vld [vmem:[#allocation16 + $0x9d0] sm:$0xff]
    %v3592 = vld [vmem:[#allocation16 + $0x9d8] sm:$0xff]
    %v3593 = vld [vmem:[#allocation16 + $0x9e0] sm:$0xff]
    %v3594 = vld [vmem:[#allocation16 + $0x9e8] sm:$0xff]
    %v3595 = vld [vmem:[#allocation16 + $0x9f0] sm:$0xff]
    %v3596 = vld [vmem:[#allocation16 + $0x9f8] sm:$0xff]
    %v3597 = vld [vmem:[#allocation16 + $0xa00] sm:$0xff]
    %v3598 = vld [vmem:[#allocation16 + $0xa08] sm:$0xff]
    %v3599 = vld [vmem:[#allocation16 + $0xa10] sm:$0xff]
    %v3600 = vld [vmem:[#allocation16 + $0xa18] sm:$0xff]
    %v3601 = vld [vmem:[#allocation16 + $0xa20] sm:$0xff]
    %v3602 = vld [vmem:[#allocation16 + $0xa28] sm:$0xff]
    %v3603 = vld [vmem:[#allocation16 + $0xa30] sm:$0xff]
    %v3604 = vld [vmem:[#allocation16 + $0xa38] sm:$0xff]
    %v3605 = vld [vmem:[#allocation16 + $0xa40] sm:$0xff]
    %v3606 = vld [vmem:[#allocation16 + $0xa48] sm:$0xff]
    %v3607 = vld [vmem:[#allocation16 + $0xa50] sm:$0xff]
    %v3608 = vld [vmem:[#allocation16 + $0xa58] sm:$0xff]
    %v3609 = vld [vmem:[#allocation16 + $0xa60] sm:$0xff]
    %v3610 = vld [vmem:[#allocation16 + $0xa68] sm:$0xff]
    %v3611 = vld [vmem:[#allocation16 + $0xa70] sm:$0xff]
    %v3612 = vld [vmem:[#allocation16 + $0xa78] sm:$0xff]
    %v3613 = vld [vmem:[#allocation16 + $0xa80] sm:$0xff]
    %v3614 = vld [vmem:[#allocation16 + $0xa88] sm:$0xff]
    %v3615 = vld [vmem:[#allocation16 + $0xa90] sm:$0xff]
    %v3616 = vld [vmem:[#allocation16 + $0xa98] sm:$0xff]
    %v3617 = vld [vmem:[#allocation16 + $0xaa0] sm:$0xff]
    %v3618 = vld [vmem:[#allocation16 + $0xaa8] sm:$0xff]
    %v3619 = vld [vmem:[#allocation16 + $0xab0] sm:$0xff]
    %v3620 = vld [vmem:[#allocation16 + $0xab8] sm:$0xff]
    %v3621 = vld [vmem:[#allocation16 + $0xac0] sm:$0xff]
    %v3622 = vld [vmem:[#allocation16 + $0xac8] sm:$0xff]
    %v3623 = vld [vmem:[#allocation16 + $0xad0] sm:$0xff]
    %v3624 = vld [vmem:[#allocation16 + $0xad8] sm:$0xff]
    %v3625 = vld [vmem:[#allocation16 + $0xae0] sm:$0xff]
    %v3626 = vld [vmem:[#allocation16 + $0xae8] sm:$0xff]
    %v3627 = vld [vmem:[#allocation16 + $0xaf0] sm:$0xff]
    %v3628 = vld [vmem:[#allocation16 + $0xaf8] sm:$0xff]
    %v3629 = vld [vmem:[#allocation16 + $0xb00] sm:$0xff]
    %v3630 = vld [vmem:[#allocation16 + $0xb08] sm:$0xff]
    %v3631 = vld [vmem:[#allocation16 + $0xb10] sm:$0xff]
    %v3632 = vld [vmem:[#allocation16 + $0xb18] sm:$0xff]
    %v3633 = vld [vmem:[#allocation16 + $0xb20] sm:$0xff]
    %v3634 = vld [vmem:[#allocation16 + $0xb28] sm:$0xff]
    %v3635 = vld [vmem:[#allocation16 + $0xb30] sm:$0xff]
    %v3636 = vld [vmem:[#allocation16 + $0xb38] sm:$0xff]
    %v3637 = vld [vmem:[#allocation16 + $0xb40] sm:$0xff]
    %v3638 = vld [vmem:[#allocation16 + $0xb48] sm:$0xff]
    %v3639 = vld [vmem:[#allocation16 + $0xb50] sm:$0xff]
    %v3640 = vld [vmem:[#allocation16 + $0xb58] sm:$0xff]
    %v3641 = vld [vmem:[#allocation16 + $0xb60] sm:$0xff]
    %v3642 = vld [vmem:[#allocation16 + $0xb68] sm:$0xff]
    %v3643 = vld [vmem:[#allocation16 + $0xb70] sm:$0xff]
    %v3644 = vld [vmem:[#allocation16 + $0xb78] sm:$0xff]
    %v3645 = vld [vmem:[#allocation16 + $0xb80] sm:$0xff]
    %v3646 = vld [vmem:[#allocation16 + $0xb88] sm:$0xff]
    %v3647 = vld [vmem:[#allocation16 + $0xb90] sm:$0xff]
    %v3648 = vld [vmem:[#allocation16 + $0xb98] sm:$0xff]
    %v3649 = vld [vmem:[#allocation16 + $0xba0] sm:$0xff]
    %v3650 = vld [vmem:[#allocation16 + $0xba8] sm:$0xff]
    %v3651 = vld [vmem:[#allocation16 + $0xbb0] sm:$0xff]
    %v3652 = vld [vmem:[#allocation16 + $0xbb8] sm:$0xff]
    %v3653 = vld [vmem:[#allocation16 + $0xbc0] sm:$0xff]
    %v3654 = vld [vmem:[#allocation16 + $0xbc8] sm:$0xff]
    %v3655 = vld [vmem:[#allocation16 + $0xbd0] sm:$0xff]
    %v3656 = vld [vmem:[#allocation16 + $0xbd8] sm:$0xff]
    %v3657 = vld [vmem:[#allocation16 + $0xbe0] sm:$0xff]
    %v3658 = vld [vmem:[#allocation16 + $0xbe8] sm:$0xff]
    %v3659 = vld [vmem:[#allocation16 + $0xbf0] sm:$0xff]
    %v3660 = vld [vmem:[#allocation16 + $0xbf8] sm:$0xff]
    %3661 = vmatprep.subr.mxu0 %v3566
    %3662 = vmatpush1.msra.mxu0 %v3565
    %3663 = vmatprep.subr.mxu0 %v3572
    %3664 = vmatpush1.msra.mxu0 %v3571
    %3665 = vmatprep.subr.mxu0 %v3578
    %3666 = vmatpush1.msra.mxu0 %v3577
    %3667 = vmatprep.subr.mxu0 %v3584
    %3668 = vmatpush1.msra.mxu0 %v3583
    %3669 = vmatprep.subr.mxu0 %v3590
    %3670 = vmatpush1.msra.mxu0 %v3589
    %3671 = vmatprep.subr.mxu0 %v3596
    %3672 = vmatpush1.msra.mxu0 %v3595
    %3673 = vmatprep.subr.mxu0 %v3602
    %3674 = vmatpush1.msra.mxu0 %v3601
    %3675 = vmatprep.subr.mxu0 %v3608
    %3676 = vmatpush1.msra.mxu0 %v3607
    %3677 = vmatprep.subr.mxu0 %v3614
    %3678 = vmatpush1.msra.mxu0 %v3613
    %3679 = vmatprep.subr.mxu0 %v3620
    %3680 = vmatpush1.msra.mxu0 %v3619
    %3681 = vmatprep.subr.mxu0 %v3626
    %3682 = vmatpush1.msra.mxu0 %v3625
    %3683 = vmatprep.subr.mxu0 %v3632
    %3684 = vmatpush1.msra.mxu0 %v3631
    %3685 = vmatprep.subr.mxu0 %v3638
    %3686 = vmatpush1.msra.mxu0 %v3637
    %3687 = vmatprep.subr.mxu0 %v3644
    %3688 = vmatpush1.msra.mxu0 %v3643
    %3689 = vmatprep.subr.mxu0 %v3650
    %3690 = vmatpush1.msra.mxu0 %v3649
    %3691 = vmatprep.subr.mxu0 %v3656
    %3692 = vmatpush1.msra.mxu0 %v3655
    %3693 = vmatprep.subr.mxu0 0.0
    %3694 = vmatpush1.msra.mxu0 0.0
    %3695 = vmatprep.subr.mxu0 0.0
    %3696 = vmatpush1.msra.mxu0 0.0
    %3697 = vmatprep.subr.mxu0 0.0
    %3698 = vmatpush1.msra.mxu0 0.0
    %3699 = vmatprep.subr.mxu0 0.0
    %3700 = vmatpush1.msra.mxu0 0.0
    %3701 = vmatprep.subr.mxu0 0.0
    %3702 = vmatpush1.msra.mxu0 0.0
    %3703 = vmatprep.subr.mxu0 0.0
    %3704 = vmatpush1.msra.mxu0 0.0
    %3705 = vmatprep.subr.mxu0 0.0
    %3706 = vmatpush1.msra.mxu0 0.0
    %3707 = vmatprep.subr.mxu0 0.0
    %3708 = vmatpush1.msra.mxu0 0.0
    %3709 = vmatprep.subr.mxu0 0.0
    %3710 = vmatpush1.msra.mxu0 0.0
    %3711 = vmatprep.subr.mxu0 0.0
    %3712 = vmatpush1.msra.mxu0 0.0
    %3713 = vmatprep.subr.mxu0 0.0
    %3714 = vmatpush1.msra.mxu0 0.0
    %3715 = vmatprep.subr.mxu0 0.0
    %3716 = vmatpush1.msra.mxu0 0.0
    %3717 = vmatprep.subr.mxu0 0.0
    %3718 = vmatpush1.msra.mxu0 0.0
    %3719 = vmatprep.subr.mxu0 0.0
    %3720 = vmatpush1.msra.mxu0 0.0
    %3721 = vmatprep.subr.mxu0 0.0
    %3722 = vmatpush1.msra.mxu0 0.0
    %3723 = vmatprep.subr.mxu0 0.0
    %3724 = vmatpush1.msra.mxu0 0.0
    %3725 = vmatprep.mubr.f32.mxu0 0.0
    %3726 = vmatmul.mubr.f32.gmra.mrb[0].mxu0 %v3564
    %v3727 = vpop.f32.mrb[0].mxu0
    %v3728 = vadd.f32 0.0, %v3727
    %v3729 = vpop.f32.mrb[0].mxu0
    %v3730 = vadd.f32 0.0, %v3729
    %3731 = vdwg.mxu0
    %3732 = vmatprep.subr.mxu0 %v3568
    %3733 = vmatpush1.msra.mxu0 %v3567
    %3734 = vmatprep.subr.mxu0 %v3574
    %3735 = vmatpush1.msra.mxu0 %v3573
    %3736 = vmatprep.subr.mxu0 %v3580
    %3737 = vmatpush1.msra.mxu0 %v3579
    %3738 = vmatprep.subr.mxu0 %v3586
    %3739 = vmatpush1.msra.mxu0 %v3585
    %3740 = vmatprep.subr.mxu0 %v3592
    %3741 = vmatpush1.msra.mxu0 %v3591
    %3742 = vmatprep.subr.mxu0 %v3598
    %3743 = vmatpush1.msra.mxu0 %v3597
    %3744 = vmatprep.subr.mxu0 %v3604
    %3745 = vmatpush1.msra.mxu0 %v3603
    %3746 = vmatprep.subr.mxu0 %v3610
    %3747 = vmatpush1.msra.mxu0 %v3609
    %3748 = vmatprep.subr.mxu0 %v3616
    %3749 = vmatpush1.msra.mxu0 %v3615
    %3750 = vmatprep.subr.mxu0 %v3622
    %3751 = vmatpush1.msra.mxu0 %v3621
    %3752 = vmatprep.subr.mxu0 %v3628
    %3753 = vmatpush1.msra.mxu0 %v3627
    %3754 = vmatprep.subr.mxu0 %v3634
    %3755 = vmatpush1.msra.mxu0 %v3633
    %3756 = vmatprep.subr.mxu0 %v3640
    %3757 = vmatpush1.msra.mxu0 %v3639
    %3758 = vmatprep.subr.mxu0 %v3646
    %3759 = vmatpush1.msra.mxu0 %v3645
    %3760 = vmatprep.subr.mxu0 %v3652
    %3761 = vmatpush1.msra.mxu0 %v3651
    %3762 = vmatprep.subr.mxu0 %v3658
    %3763 = vmatpush1.msra.mxu0 %v3657
    %3764 = vmatprep.subr.mxu0 0.0
    %3765 = vmatpush1.msra.mxu0 0.0
    %3766 = vmatprep.subr.mxu0 0.0
    %3767 = vmatpush1.msra.mxu0 0.0
    %3768 = vmatprep.subr.mxu0 0.0
    %3769 = vmatpush1.msra.mxu0 0.0
    %3770 = vmatprep.subr.mxu0 0.0
    %3771 = vmatpush1.msra.mxu0 0.0
    %3772 = vmatprep.subr.mxu0 0.0
    %3773 = vmatpush1.msra.mxu0 0.0
    %3774 = vmatprep.subr.mxu0 0.0
    %3775 = vmatpush1.msra.mxu0 0.0
    %3776 = vmatprep.subr.mxu0 0.0
    %3777 = vmatpush1.msra.mxu0 0.0
    %3778 = vmatprep.subr.mxu0 0.0
    %3779 = vmatpush1.msra.mxu0 0.0
    %3780 = vmatprep.subr.mxu0 0.0
    %3781 = vmatpush1.msra.mxu0 0.0
    %3782 = vmatprep.subr.mxu0 0.0
    %3783 = vmatpush1.msra.mxu0 0.0
    %3784 = vmatprep.subr.mxu0 0.0
    %3785 = vmatpush1.msra.mxu0 0.0
    %3786 = vmatprep.subr.mxu0 0.0
    %3787 = vmatpush1.msra.mxu0 0.0
    %3788 = vmatprep.subr.mxu0 0.0
    %3789 = vmatpush1.msra.mxu0 0.0
    %3790 = vmatprep.subr.mxu0 0.0
    %3791 = vmatpush1.msra.mxu0 0.0
    %3792 = vmatprep.subr.mxu0 0.0
    %3793 = vmatpush1.msra.mxu0 0.0
    %3794 = vmatprep.subr.mxu0 0.0
    %3795 = vmatpush1.msra.mxu0 0.0
    %3796 = vmatprep.mubr.f32.mxu0 0.0
    %3797 = vmatmul.mubr.f32.gmra.mrb[0].mxu0 %v3564
    %v3798 = vpop.f32.mrb[0].mxu0
    %v3799 = vadd.f32 0.0, %v3798
    %v3800 = vpop.f32.mrb[0].mxu0
    %v3801 = vadd.f32 0.0, %v3800
    %3802 = vdwg.mxu0
    %3803 = vmatprep.subr.mxu0 %v3570
    %3804 = vmatpush1.msra.mxu0 %v3569
    %3805 = vmatprep.subr.mxu0 %v3576
    %3806 = vmatpush1.msra.mxu0 %v3575
    %3807 = vmatprep.subr.mxu0 %v3582
    %3808 = vmatpush1.msra.mxu0 %v3581
    %3809 = vmatprep.subr.mxu0 %v3588
    %3810 = vmatpush1.msra.mxu0 %v3587
    %3811 = vmatprep.subr.mxu0 %v3594
    %3812 = vmatpush1.msra.mxu0 %v3593
    %3813 = vmatprep.subr.mxu0 %v3600
    %3814 = vmatpush1.msra.mxu0 %v3599
    %3815 = vmatprep.subr.mxu0 %v3606
    %3816 = vmatpush1.msra.mxu0 %v3605
    %3817 = vmatprep.subr.mxu0 %v3612
    %3818 = vmatpush1.msra.mxu0 %v3611
    %3819 = vmatprep.subr.mxu0 %v3618
    %3820 = vmatpush1.msra.mxu0 %v3617
    %3821 = vmatprep.subr.mxu0 %v3624
    %3822 = vmatpush1.msra.mxu0 %v3623
    %3823 = vmatprep.subr.mxu0 %v3630
    %3824 = vmatpush1.msra.mxu0 %v3629
    %3825 = vmatprep.subr.mxu0 %v3636
    %3826 = vmatpush1.msra.mxu0 %v3635
    %3827 = vmatprep.subr.mxu0 %v3642
    %3828 = vmatpush1.msra.mxu0 %v3641
    %3829 = vmatprep.subr.mxu0 %v3648
    %3830 = vmatpush1.msra.mxu0 %v3647
    %3831 = vmatprep.subr.mxu0 %v3654
    %3832 = vmatpush1.msra.mxu0 %v3653
    %3833 = vmatprep.subr.mxu0 %v3660
    %3834 = vmatpush1.msra.mxu0 %v3659
    %3835 = vmatprep.subr.mxu0 0.0
    %3836 = vmatpush1.msra.mxu0 0.0
    %3837 = vmatprep.subr.mxu0 0.0
    %3838 = vmatpush1.msra.mxu0 0.0
    %3839 = vmatprep.subr.mxu0 0.0
    %3840 = vmatpush1.msra.mxu0 0.0
    %3841 = vmatprep.subr.mxu0 0.0
    %3842 = vmatpush1.msra.mxu0 0.0
    %3843 = vmatprep.subr.mxu0 0.0
    %3844 = vmatpush1.msra.mxu0 0.0
    %3845 = vmatprep.subr.mxu0 0.0
    %3846 = vmatpush1.msra.mxu0 0.0
    %3847 = vmatprep.subr.mxu0 0.0
    %3848 = vmatpush1.msra.mxu0 0.0
    %3849 = vmatprep.subr.mxu0 0.0
    %3850 = vmatpush1.msra.mxu0 0.0
    %3851 = vmatprep.subr.mxu0 0.0
    %3852 = vmatpush1.msra.mxu0 0.0
    %3853 = vmatprep.subr.mxu0 0.0
    %3854 = vmatpush1.msra.mxu0 0.0
    %3855 = vmatprep.subr.mxu0 0.0
    %3856 = vmatpush1.msra.mxu0 0.0
    %3857 = vmatprep.subr.mxu0 0.0
    %3858 = vmatpush1.msra.mxu0 0.0
    %3859 = vmatprep.subr.mxu0 0.0
    %3860 = vmatpush1.msra.mxu0 0.0
    %3861 = vmatprep.subr.mxu0 0.0
    %3862 = vmatpush1.msra.mxu0 0.0
    %3863 = vmatprep.subr.mxu0 0.0
    %3864 = vmatpush1.msra.mxu0 0.0
    %3865 = vmatprep.subr.mxu0 0.0
    %3866 = vmatpush1.msra.mxu0 0.0
    %3867 = vmatprep.mubr.f32.mxu0 0.0
    %3868 = vmatmul.mubr.f32.gmra.mrb[0].mxu0 %v3564
    %v3869 = vpop.f32.mrb[0].mxu0
    %v3870 = vadd.f32 0.0, %v3869
    %v3871 = vpop.f32.mrb[0].mxu0
    %v3872 = vadd.f32 0.0, %v3871
    %3873 = vdwg.mxu0
    %v3874 = vadd.f32 %v3321, %v3728
    %v3875 = vadd.f32 %v3322, %v3730
    %v3876 = vadd.f32 %v3323, %v3799
    %v3877 = vadd.f32 %v3324, %v3801
    %v3878 = vadd.f32 %v3325, %v3870
    %v3879 = vadd.f32 %v3326, %v3872
    %s3880 = scalar_lea.vmem [#allocation7], 1024
    %v3881 = vld [vmem:[%s3880] sm:$0xff]
    %v3882 = vld [vmem:[%s3880 + $0x8] sm:$0xff]
    %v3883 = vld [vmem:[%s3880 + $0x10] sm:$0xff]
    %v3884 = vld [vmem:[%s3880 + $0x18] sm:$0xff]
    %v3885 = vld [vmem:[%s3880 + $0x20] sm:$0xff]
    %v3886 = vld [vmem:[%s3880 + $0x28] sm:$0xff]
    %v3887 = vld [vmem:[%s3880 + $0x30] sm:$0xff]
    %v3888 = vld [vmem:[%s3880 + $0x38] sm:$0xff]
    %v3889 = vld [vmem:[%s3880 + $0x40] sm:$0xff]
    %v3890 = vld [vmem:[%s3880 + $0x48] sm:$0xff]
    %v3891 = vld [vmem:[%s3880 + $0x50] sm:$0xff]
    %v3892 = vld [vmem:[%s3880 + $0x58] sm:$0xff]
    %v3893 = vld [vmem:[%s3880 + $0x60] sm:$0xff]
    %v3894 = vld [vmem:[%s3880 + $0x68] sm:$0xff]
    %v3895 = vld [vmem:[%s3880 + $0x70] sm:$0xff]
    %v3896 = vld [vmem:[%s3880 + $0x78] sm:$0xff]
    %3897 = vmatprep.subr.mxu0 0.0
    %3898 = vmatpush1.msra.mxu0 %v3881
    %3899 = vmatprep.subr.mxu0 0.0
    %3900 = vmatpush1.msra.mxu0 %v3882
    %3901 = vmatprep.subr.mxu0 0.0
    %3902 = vmatpush1.msra.mxu0 %v3883
    %3903 = vmatprep.subr.mxu0 0.0
    %3904 = vmatpush1.msra.mxu0 %v3884
    %3905 = vmatprep.subr.mxu0 0.0
    %3906 = vmatpush1.msra.mxu0 %v3885
    %3907 = vmatprep.subr.mxu0 0.0
    %3908 = vmatpush1.msra.mxu0 %v3886
    %3909 = vmatprep.subr.mxu0 0.0
    %3910 = vmatpush1.msra.mxu0 %v3887
    %3911 = vmatprep.subr.mxu0 0.0
    %3912 = vmatpush1.msra.mxu0 %v3888
    %3913 = vmatprep.subr.mxu0 0.0
    %3914 = vmatpush1.msra.mxu0 %v3889
    %3915 = vmatprep.subr.mxu0 0.0
    %3916 = vmatpush1.msra.mxu0 %v3890
    %3917 = vmatprep.subr.mxu0 0.0
    %3918 = vmatpush1.msra.mxu0 %v3891
    %3919 = vmatprep.subr.mxu0 0.0
    %3920 = vmatpush1.msra.mxu0 %v3892
    %3921 = vmatprep.subr.mxu0 0.0
    %3922 = vmatpush1.msra.mxu0 %v3893
    %3923 = vmatprep.subr.mxu0 0.0
    %3924 = vmatpush1.msra.mxu0 %v3894
    %3925 = vmatprep.subr.mxu0 0.0
    %3926 = vmatpush1.msra.mxu0 %v3895
    %3927 = vmatprep.subr.mxu0 0.0
    %3928 = vmatpush1.msra.mxu0 %v3896
    %3929 = vmatprep.subr.mxu0 0.0
    %3930 = vmatpush1.msra.mxu0 0.0
    %3931 = vmatprep.subr.mxu0 0.0
    %3932 = vmatpush1.msra.mxu0 0.0
    %3933 = vmatprep.subr.mxu0 0.0
    %3934 = vmatpush1.msra.mxu0 0.0
    %3935 = vmatprep.subr.mxu0 0.0
    %3936 = vmatpush1.msra.mxu0 0.0
    %3937 = vmatprep.subr.mxu0 0.0
    %3938 = vmatpush1.msra.mxu0 0.0
    %3939 = vmatprep.subr.mxu0 0.0
    %3940 = vmatpush1.msra.mxu0 0.0
    %3941 = vmatprep.subr.mxu0 0.0
    %3942 = vmatpush1.msra.mxu0 0.0
    %3943 = vmatprep.subr.mxu0 0.0
    %3944 = vmatpush1.msra.mxu0 0.0
    %3945 = vmatprep.subr.mxu0 0.0
    %3946 = vmatpush1.msra.mxu0 0.0
    %3947 = vmatprep.subr.mxu0 0.0
    %3948 = vmatpush1.msra.mxu0 0.0
    %3949 = vmatprep.subr.mxu0 0.0
    %3950 = vmatpush1.msra.mxu0 0.0
    %3951 = vmatprep.subr.mxu0 0.0
    %3952 = vmatpush1.msra.mxu0 0.0
    %3953 = vmatprep.subr.mxu0 0.0
    %3954 = vmatpush1.msra.mxu0 0.0
    %3955 = vmatprep.subr.mxu0 0.0
    %3956 = vmatpush1.msra.mxu0 0.0
    %3957 = vmatprep.subr.mxu0 0.0
    %3958 = vmatpush1.msra.mxu0 0.0
    %3959 = vmatprep.subr.mxu0 0.0
    %3960 = vmatpush1.msra.mxu0 0.0
    %3961 = vmatprep.mubr.f32.mxu0 0.0
    %3962 = vmatmul.mubr.f32.gmra.mrb[0].mxu0 %v201
    %v3963 = vpop.f32.mrb[0].mxu0
    %v3964 = vadd.f32 %v1278, %v3963
    %v3965 = vpop.f32.mrb[0].mxu0
    %3966 = vdwg.mxu0
    %v3967 = vmax.f32 %v3964, 0.0
    %s3968 = scalar_lea.vmem [#allocation13], 8
    %v3969 = vld [vmem:[%s3968] sm:$0x1]
    %s3970 = scalar_lea.vmem [#allocation14], 8
    %v3971 = vld [vmem:[%s3970] sm:$0x1]
    %3972 = vadd.xlane.f32.xlu0 %v3967
    %v3973 = vpop.xlane.xlu0 %3972
    %v3974 = vmul.f32 %v3967, %v3967
    %3975 = vadd.xlane.f32.xlu0 %v3974
    %v3976 = vpop.xlane.xlu0 %3975
    %v3977 = vmul.f32 %v3973, 0.0078125
    %v3978 = vmul.f32 %v3976, 0.0078125
    %v3979 = vmul.f32 %v3977, %v3977
    %v3980 = vsub.f32 %v3978, %v3979
    %v3981 = vadd.f32 %v3980, 1e-05
    %v3982 = vrsqrt.pop %v3981
    %v3983 = vsub.f32 %v3967, %v3977
    %v3984 = vmul.f32 %v3983, %v3982
    %v3986 = vlaneseq
    %v3987 = vshrl.u32 %v3986, 7
    %v3988 = vsub.s32 0, %v3987
    %v3989 = vrot.slane %v3969, %v3988
    %v3991 = vmul.f32 %v3984, %v3989
    %v3993 = vlaneseq
    %v3994 = vshrl.u32 %v3993, 7
    %v3995 = vsub.s32 0, %v3994
    %v3996 = vrot.slane %v3971, %v3995
    %v3998 = vadd.f32 %v3991, %v3996
    %s3999 = scalar_lea.vmem [#allocation7], 1152
    %v4000 = vld [vmem:[%s3999] sm:$0xff]
    %v4001 = vld [vmem:[%s3999 + $0x8] sm:$0xff]
    %v4002 = vld [vmem:[%s3999 + $0x10] sm:$0xff]
    %v4003 = vld [vmem:[%s3999 + $0x18] sm:$0xff]
    %v4004 = vld [vmem:[%s3999 + $0x20] sm:$0xff]
    %v4005 = vld [vmem:[%s3999 + $0x28] sm:$0xff]
    %v4006 = vld [vmem:[%s3999 + $0x30] sm:$0xff]
    %v4007 = vld [vmem:[%s3999 + $0x38] sm:$0xff]
    %v4008 = vld [vmem:[%s3999 + $0x40] sm:$0xff]
    %v4009 = vld [vmem:[%s3999 + $0x48] sm:$0xff]
    %v4010 = vld [vmem:[%s3999 + $0x50] sm:$0xff]
    %v4011 = vld [vmem:[%s3999 + $0x58] sm:$0xff]
    %v4012 = vld [vmem:[%s3999 + $0x60] sm:$0xff]
    %v4013 = vld [vmem:[%s3999 + $0x68] sm:$0xff]
    %v4014 = vld [vmem:[%s3999 + $0x70] sm:$0xff]
    %v4015 = vld [vmem:[%s3999 + $0x78] sm:$0xff]
    %4016 = vmatprep.subr.mxu0 0.0
    %4017 = vmatpush1.msra.mxu0 %v4000
    %4018 = vmatprep.subr.mxu0 0.0
    %4019 = vmatpush1.msra.mxu0 %v4001
    %4020 = vmatprep.subr.mxu0 0.0
    %4021 = vmatpush1.msra.mxu0 %v4002
    %4022 = vmatprep.subr.mxu0 0.0
    %4023 = vmatpush1.msra.mxu0 %v4003
    %4024 = vmatprep.subr.mxu0 0.0
    %4025 = vmatpush1.msra.mxu0 %v4004
    %4026 = vmatprep.subr.mxu0 0.0
    %4027 = vmatpush1.msra.mxu0 %v4005
    %4028 = vmatprep.subr.mxu0 0.0
    %4029 = vmatpush1.msra.mxu0 %v4006
    %4030 = vmatprep.subr.mxu0 0.0
    %4031 = vmatpush1.msra.mxu0 %v4007
    %4032 = vmatprep.subr.mxu0 0.0
    %4033 = vmatpush1.msra.mxu0 %v4008
    %4034 = vmatprep.subr.mxu0 0.0
    %4035 = vmatpush1.msra.mxu0 %v4009
    %4036 = vmatprep.subr.mxu0 0.0
    %4037 = vmatpush1.msra.mxu0 %v4010
    %4038 = vmatprep.subr.mxu0 0.0
    %4039 = vmatpush1.msra.mxu0 %v4011
    %4040 = vmatprep.subr.mxu0 0.0
    %4041 = vmatpush1.msra.mxu0 %v4012
    %4042 = vmatprep.subr.mxu0 0.0
    %4043 = vmatpush1.msra.mxu0 %v4013
    %4044 = vmatprep.subr.mxu0 0.0
    %4045 = vmatpush1.msra.mxu0 %v4014
    %4046 = vmatprep.subr.mxu0 0.0
    %4047 = vmatpush1.msra.mxu0 %v4015
    %4048 = vmatprep.subr.mxu0 0.0
    %4049 = vmatpush1.msra.mxu0 0.0
    %4050 = vmatprep.subr.mxu0 0.0
    %4051 = vmatpush1.msra.mxu0 0.0
    %4052 = vmatprep.subr.mxu0 0.0
    %4053 = vmatpush1.msra.mxu0 0.0
    %4054 = vmatprep.subr.mxu0 0.0
    %4055 = vmatpush1.msra.mxu0 0.0
    %4056 = vmatprep.subr.mxu0 0.0
    %4057 = vmatpush1.msra.mxu0 0.0
    %4058 = vmatprep.subr.mxu0 0.0
    %4059 = vmatpush1.msra.mxu0 0.0
    %4060 = vmatprep.subr.mxu0 0.0
    %4061 = vmatpush1.msra.mxu0 0.0
    %4062 = vmatprep.subr.mxu0 0.0
    %4063 = vmatpush1.msra.mxu0 0.0
    %4064 = vmatprep.subr.mxu0 0.0
    %4065 = vmatpush1.msra.mxu0 0.0
    %4066 = vmatprep.subr.mxu0 0.0
    %4067 = vmatpush1.msra.mxu0 0.0
    %4068 = vmatprep.subr.mxu0 0.0
    %4069 = vmatpush1.msra.mxu0 0.0
    %4070 = vmatprep.subr.mxu0 0.0
    %4071 = vmatpush1.msra.mxu0 0.0
    %4072 = vmatprep.subr.mxu0 0.0
    %4073 = vmatpush1.msra.mxu0 0.0
    %4074 = vmatprep.subr.mxu0 0.0
    %4075 = vmatpush1.msra.mxu0 0.0
    %4076 = vmatprep.subr.mxu0 0.0
    %4077 = vmatpush1.msra.mxu0 0.0
    %4078 = vmatprep.subr.mxu0 0.0
    %4079 = vmatpush1.msra.mxu0 0.0
    %4080 = vmatprep.mubr.f32.mxu0 0.0
    %4081 = vmatmul.mubr.f32.gmra.mrb[0].mxu0 %v3998
    %v4082 = vpop.f32.mrb[0].mxu0
    %v4083 = vadd.f32 %v1398, %v4082
    %v4084 = vpop.f32.mrb[0].mxu0
    %4085 = vdwg.mxu0
    %v4086 = vmax.f32 %v4083, 0.0
    %s4087 = scalar_lea.vmem [#allocation13], 9
    %v4088 = vld [vmem:[%s4087] sm:$0x1]
    %s4089 = scalar_lea.vmem [#allocation14], 9
    %v4090 = vld [vmem:[%s4089] sm:$0x1]
    %4091 = vadd.xlane.f32.xlu0 %v4086
    %v4092 = vpop.xlane.xlu0 %4091
    %v4093 = vmul.f32 %v4086, %v4086
    %4094 = vadd.xlane.f32.xlu0 %v4093
    %v4095 = vpop.xlane.xlu0 %4094
    %v4096 = vmul.f32 %v4092, 0.0078125
    %v4097 = vmul.f32 %v4095, 0.0078125
    %v4098 = vmul.f32 %v4096, %v4096
    %v4099 = vsub.f32 %v4097, %v4098
    %v4100 = vadd.f32 %v4099, 1e-05
    %v4101 = vrsqrt.pop %v4100
    %v4102 = vsub.f32 %v4086, %v4096
    %v4103 = vmul.f32 %v4102, %v4101
    %v4105 = vlaneseq
    %v4106 = vshrl.u32 %v4105, 7
    %v4107 = vsub.s32 0, %v4106
    %v4108 = vrot.slane %v4088, %v4107
    %v4110 = vmul.f32 %v4103, %v4108
    %v4112 = vlaneseq
    %v4113 = vshrl.u32 %v4112, 7
    %v4114 = vsub.s32 0, %v4113
    %v4115 = vrot.slane %v4090, %v4114
    %v4117 = vadd.f32 %v4110, %v4115
    %v4118 = vld [vmem:[#allocation16 + $0xc00] sm:$0xff]
    %v4119 = vld [vmem:[#allocation16 + $0xc08] sm:$0xff]
    %v4120 = vld [vmem:[#allocation16 + $0xc10] sm:$0xff]
    %v4121 = vld [vmem:[#allocation16 + $0xc18] sm:$0xff]
    %v4122 = vld [vmem:[#allocation16 + $0xc20] sm:$0xff]
    %v4123 = vld [vmem:[#allocation16 + $0xc28] sm:$0xff]
    %v4124 = vld [vmem:[#allocation16 + $0xc30] sm:$0xff]
    %v4125 = vld [vmem:[#allocation16 + $0xc38] sm:$0xff]
    %v4126 = vld [vmem:[#allocation16 + $0xc40] sm:$0xff]
    %v4127 = vld [vmem:[#allocation16 + $0xc48] sm:$0xff]
    %v4128 = vld [vmem:[#allocation16 + $0xc50] sm:$0xff]
    %v4129 = vld [vmem:[#allocation16 + $0xc58] sm:$0xff]
    %v4130 = vld [vmem:[#allocation16 + $0xc60] sm:$0xff]
    %v4131 = vld [vmem:[#allocation16 + $0xc68] sm:$0xff]
    %v4132 = vld [vmem:[#allocation16 + $0xc70] sm:$0xff]
    %v4133 = vld [vmem:[#allocation16 + $0xc78] sm:$0xff]
    %v4134 = vld [vmem:[#allocation16 + $0xc80] sm:$0xff]
    %v4135 = vld [vmem:[#allocation16 + $0xc88] sm:$0xff]
    %v4136 = vld [vmem:[#allocation16 + $0xc90] sm:$0xff]
    %v4137 = vld [vmem:[#allocation16 + $0xc98] sm:$0xff]
    %v4138 = vld [vmem:[#allocation16 + $0xca0] sm:$0xff]
    %v4139 = vld [vmem:[#allocation16 + $0xca8] sm:$0xff]
    %v4140 = vld [vmem:[#allocation16 + $0xcb0] sm:$0xff]
    %v4141 = vld [vmem:[#allocation16 + $0xcb8] sm:$0xff]
    %v4142 = vld [vmem:[#allocation16 + $0xcc0] sm:$0xff]
    %v4143 = vld [vmem:[#allocation16 + $0xcc8] sm:$0xff]
    %v4144 = vld [vmem:[#allocation16 + $0xcd0] sm:$0xff]
    %v4145 = vld [vmem:[#allocation16 + $0xcd8] sm:$0xff]
    %v4146 = vld [vmem:[#allocation16 + $0xce0] sm:$0xff]
    %v4147 = vld [vmem:[#allocation16 + $0xce8] sm:$0xff]
    %v4148 = vld [vmem:[#allocation16 + $0xcf0] sm:$0xff]
    %v4149 = vld [vmem:[#allocation16 + $0xcf8] sm:$0xff]
    %v4150 = vld [vmem:[#allocation16 + $0xd00] sm:$0xff]
    %v4151 = vld [vmem:[#allocation16 + $0xd08] sm:$0xff]
    %v4152 = vld [vmem:[#allocation16 + $0xd10] sm:$0xff]
    %v4153 = vld [vmem:[#allocation16 + $0xd18] sm:$0xff]
    %v4154 = vld [vmem:[#allocation16 + $0xd20] sm:$0xff]
    %v4155 = vld [vmem:[#allocation16 + $0xd28] sm:$0xff]
    %v4156 = vld [vmem:[#allocation16 + $0xd30] sm:$0xff]
    %v4157 = vld [vmem:[#allocation16 + $0xd38] sm:$0xff]
    %v4158 = vld [vmem:[#allocation16 + $0xd40] sm:$0xff]
    %v4159 = vld [vmem:[#allocation16 + $0xd48] sm:$0xff]
    %v4160 = vld [vmem:[#allocation16 + $0xd50] sm:$0xff]
    %v4161 = vld [vmem:[#allocation16 + $0xd58] sm:$0xff]
    %v4162 = vld [vmem:[#allocation16 + $0xd60] sm:$0xff]
    %v4163 = vld [vmem:[#allocation16 + $0xd68] sm:$0xff]
    %v4164 = vld [vmem:[#allocation16 + $0xd70] sm:$0xff]
    %v4165 = vld [vmem:[#allocation16 + $0xd78] sm:$0xff]
    %v4166 = vld [vmem:[#allocation16 + $0xd80] sm:$0xff]
    %v4167 = vld [vmem:[#allocation16 + $0xd88] sm:$0xff]
    %v4168 = vld [vmem:[#allocation16 + $0xd90] sm:$0xff]
    %v4169 = vld [vmem:[#allocation16 + $0xd98] sm:$0xff]
    %v4170 = vld [vmem:[#allocation16 + $0xda0] sm:$0xff]
    %v4171 = vld [vmem:[#allocation16 + $0xda8] sm:$0xff]
    %v4172 = vld [vmem:[#allocation16 + $0xdb0] sm:$0xff]
    %v4173 = vld [vmem:[#allocation16 + $0xdb8] sm:$0xff]
    %v4174 = vld [vmem:[#allocation16 + $0xdc0] sm:$0xff]
    %v4175 = vld [vmem:[#allocation16 + $0xdc8] sm:$0xff]
    %v4176 = vld [vmem:[#allocation16 + $0xdd0] sm:$0xff]
    %v4177 = vld [vmem:[#allocation16 + $0xdd8] sm:$0xff]
    %v4178 = vld [vmem:[#allocation16 + $0xde0] sm:$0xff]
    %v4179 = vld [vmem:[#allocation16 + $0xde8] sm:$0xff]
    %v4180 = vld [vmem:[#allocation16 + $0xdf0] sm:$0xff]
    %v4181 = vld [vmem:[#allocation16 + $0xdf8] sm:$0xff]
    %v4182 = vld [vmem:[#allocation16 + $0xe00] sm:$0xff]
    %v4183 = vld [vmem:[#allocation16 + $0xe08] sm:$0xff]
    %v4184 = vld [vmem:[#allocation16 + $0xe10] sm:$0xff]
    %v4185 = vld [vmem:[#allocation16 + $0xe18] sm:$0xff]
    %v4186 = vld [vmem:[#allocation16 + $0xe20] sm:$0xff]
    %v4187 = vld [vmem:[#allocation16 + $0xe28] sm:$0xff]
    %v4188 = vld [vmem:[#allocation16 + $0xe30] sm:$0xff]
    %v4189 = vld [vmem:[#allocation16 + $0xe38] sm:$0xff]
    %v4190 = vld [vmem:[#allocation16 + $0xe40] sm:$0xff]
    %v4191 = vld [vmem:[#allocation16 + $0xe48] sm:$0xff]
    %v4192 = vld [vmem:[#allocation16 + $0xe50] sm:$0xff]
    %v4193 = vld [vmem:[#allocation16 + $0xe58] sm:$0xff]
    %v4194 = vld [vmem:[#allocation16 + $0xe60] sm:$0xff]
    %v4195 = vld [vmem:[#allocation16 + $0xe68] sm:$0xff]
    %v4196 = vld [vmem:[#allocation16 + $0xe70] sm:$0xff]
    %v4197 = vld [vmem:[#allocation16 + $0xe78] sm:$0xff]
    %v4198 = vld [vmem:[#allocation16 + $0xe80] sm:$0xff]
    %v4199 = vld [vmem:[#allocation16 + $0xe88] sm:$0xff]
    %v4200 = vld [vmem:[#allocation16 + $0xe90] sm:$0xff]
    %v4201 = vld [vmem:[#allocation16 + $0xe98] sm:$0xff]
    %v4202 = vld [vmem:[#allocation16 + $0xea0] sm:$0xff]
    %v4203 = vld [vmem:[#allocation16 + $0xea8] sm:$0xff]
    %v4204 = vld [vmem:[#allocation16 + $0xeb0] sm:$0xff]
    %v4205 = vld [vmem:[#allocation16 + $0xeb8] sm:$0xff]
    %v4206 = vld [vmem:[#allocation16 + $0xec0] sm:$0xff]
    %v4207 = vld [vmem:[#allocation16 + $0xec8] sm:$0xff]
    %v4208 = vld [vmem:[#allocation16 + $0xed0] sm:$0xff]
    %v4209 = vld [vmem:[#allocation16 + $0xed8] sm:$0xff]
    %v4210 = vld [vmem:[#allocation16 + $0xee0] sm:$0xff]
    %v4211 = vld [vmem:[#allocation16 + $0xee8] sm:$0xff]
    %v4212 = vld [vmem:[#allocation16 + $0xef0] sm:$0xff]
    %v4213 = vld [vmem:[#allocation16 + $0xef8] sm:$0xff]
    %4214 = vmatprep.subr.mxu0 %v4119
    %4215 = vmatpush1.msra.mxu0 %v4118
    %4216 = vmatprep.subr.mxu0 %v4125
    %4217 = vmatpush1.msra.mxu0 %v4124
    %4218 = vmatprep.subr.mxu0 %v4131
    %4219 = vmatpush1.msra.mxu0 %v4130
    %4220 = vmatprep.subr.mxu0 %v4137
    %4221 = vmatpush1.msra.mxu0 %v4136
    %4222 = vmatprep.subr.mxu0 %v4143
    %4223 = vmatpush1.msra.mxu0 %v4142
    %4224 = vmatprep.subr.mxu0 %v4149
    %4225 = vmatpush1.msra.mxu0 %v4148
    %4226 = vmatprep.subr.mxu0 %v4155
    %4227 = vmatpush1.msra.mxu0 %v4154
    %4228 = vmatprep.subr.mxu0 %v4161
    %4229 = vmatpush1.msra.mxu0 %v4160
    %4230 = vmatprep.subr.mxu0 %v4167
    %4231 = vmatpush1.msra.mxu0 %v4166
    %4232 = vmatprep.subr.mxu0 %v4173
    %4233 = vmatpush1.msra.mxu0 %v4172
    %4234 = vmatprep.subr.mxu0 %v4179
    %4235 = vmatpush1.msra.mxu0 %v4178
    %4236 = vmatprep.subr.mxu0 %v4185
    %4237 = vmatpush1.msra.mxu0 %v4184
    %4238 = vmatprep.subr.mxu0 %v4191
    %4239 = vmatpush1.msra.mxu0 %v4190
    %4240 = vmatprep.subr.mxu0 %v4197
    %4241 = vmatpush1.msra.mxu0 %v4196
    %4242 = vmatprep.subr.mxu0 %v4203
    %4243 = vmatpush1.msra.mxu0 %v4202
    %4244 = vmatprep.subr.mxu0 %v4209
    %4245 = vmatpush1.msra.mxu0 %v4208
    %4246 = vmatprep.subr.mxu0 0.0
    %4247 = vmatpush1.msra.mxu0 0.0
    %4248 = vmatprep.subr.mxu0 0.0
    %4249 = vmatpush1.msra.mxu0 0.0
    %4250 = vmatprep.subr.mxu0 0.0
    %4251 = vmatpush1.msra.mxu0 0.0
    %4252 = vmatprep.subr.mxu0 0.0
    %4253 = vmatpush1.msra.mxu0 0.0
    %4254 = vmatprep.subr.mxu0 0.0
    %4255 = vmatpush1.msra.mxu0 0.0
    %4256 = vmatprep.subr.mxu0 0.0
    %4257 = vmatpush1.msra.mxu0 0.0
    %4258 = vmatprep.subr.mxu0 0.0
    %4259 = vmatpush1.msra.mxu0 0.0
    %4260 = vmatprep.subr.mxu0 0.0
    %4261 = vmatpush1.msra.mxu0 0.0
    %4262 = vmatprep.subr.mxu0 0.0
    %4263 = vmatpush1.msra.mxu0 0.0
    %4264 = vmatprep.subr.mxu0 0.0
    %4265 = vmatpush1.msra.mxu0 0.0
    %4266 = vmatprep.subr.mxu0 0.0
    %4267 = vmatpush1.msra.mxu0 0.0
    %4268 = vmatprep.subr.mxu0 0.0
    %4269 = vmatpush1.msra.mxu0 0.0
    %4270 = vmatprep.subr.mxu0 0.0
    %4271 = vmatpush1.msra.mxu0 0.0
    %4272 = vmatprep.subr.mxu0 0.0
    %4273 = vmatpush1.msra.mxu0 0.0
    %4274 = vmatprep.subr.mxu0 0.0
    %4275 = vmatpush1.msra.mxu0 0.0
    %4276 = vmatprep.subr.mxu0 0.0
    %4277 = vmatpush1.msra.mxu0 0.0
    %4278 = vmatprep.mubr.f32.mxu0 0.0
    %4279 = vmatmul.mubr.f32.gmra.mrb[0].mxu0 %v4117
    %v4280 = vpop.f32.mrb[0].mxu0
    %v4281 = vadd.f32 0.0, %v4280
    %v4282 = vpop.f32.mrb[0].mxu0
    %v4283 = vadd.f32 0.0, %v4282
    %4284 = vdwg.mxu0
    %4285 = vmatprep.subr.mxu0 %v4121
    %4286 = vmatpush1.msra.mxu0 %v4120
    %4287 = vmatprep.subr.mxu0 %v4127
    %4288 = vmatpush1.msra.mxu0 %v4126
    %4289 = vmatprep.subr.mxu0 %v4133
    %4290 = vmatpush1.msra.mxu0 %v4132
    %4291 = vmatprep.subr.mxu0 %v4139
    %4292 = vmatpush1.msra.mxu0 %v4138
    %4293 = vmatprep.subr.mxu0 %v4145
    %4294 = vmatpush1.msra.mxu0 %v4144
    %4295 = vmatprep.subr.mxu0 %v4151
    %4296 = vmatpush1.msra.mxu0 %v4150
    %4297 = vmatprep.subr.mxu0 %v4157
    %4298 = vmatpush1.msra.mxu0 %v4156
    %4299 = vmatprep.subr.mxu0 %v4163
    %4300 = vmatpush1.msra.mxu0 %v4162
    %4301 = vmatprep.subr.mxu0 %v4169
    %4302 = vmatpush1.msra.mxu0 %v4168
    %4303 = vmatprep.subr.mxu0 %v4175
    %4304 = vmatpush1.msra.mxu0 %v4174
    %4305 = vmatprep.subr.mxu0 %v4181
    %4306 = vmatpush1.msra.mxu0 %v4180
    %4307 = vmatprep.subr.mxu0 %v4187
    %4308 = vmatpush1.msra.mxu0 %v4186
    %4309 = vmatprep.subr.mxu0 %v4193
    %4310 = vmatpush1.msra.mxu0 %v4192
    %4311 = vmatprep.subr.mxu0 %v4199
    %4312 = vmatpush1.msra.mxu0 %v4198
    %4313 = vmatprep.subr.mxu0 %v4205
    %4314 = vmatpush1.msra.mxu0 %v4204
    %4315 = vmatprep.subr.mxu0 %v4211
    %4316 = vmatpush1.msra.mxu0 %v4210
    %4317 = vmatprep.subr.mxu0 0.0
    %4318 = vmatpush1.msra.mxu0 0.0
    %4319 = vmatprep.subr.mxu0 0.0
    %4320 = vmatpush1.msra.mxu0 0.0
    %4321 = vmatprep.subr.mxu0 0.0
    %4322 = vmatpush1.msra.mxu0 0.0
    %4323 = vmatprep.subr.mxu0 0.0
    %4324 = vmatpush1.msra.mxu0 0.0
    %4325 = vmatprep.subr.mxu0 0.0
    %4326 = vmatpush1.msra.mxu0 0.0
    %4327 = vmatprep.subr.mxu0 0.0
    %4328 = vmatpush1.msra.mxu0 0.0
    %4329 = vmatprep.subr.mxu0 0.0
    %4330 = vmatpush1.msra.mxu0 0.0
    %4331 = vmatprep.subr.mxu0 0.0
    %4332 = vmatpush1.msra.mxu0 0.0
    %4333 = vmatprep.subr.mxu0 0.0
    %4334 = vmatpush1.msra.mxu0 0.0
    %4335 = vmatprep.subr.mxu0 0.0
    %4336 = vmatpush1.msra.mxu0 0.0
    %4337 = vmatprep.subr.mxu0 0.0
    %4338 = vmatpush1.msra.mxu0 0.0
    %4339 = vmatprep.subr.mxu0 0.0
    %4340 = vmatpush1.msra.mxu0 0.0
    %4341 = vmatprep.subr.mxu0 0.0
    %4342 = vmatpush1.msra.mxu0 0.0
    %4343 = vmatprep.subr.mxu0 0.0
    %4344 = vmatpush1.msra.mxu0 0.0
    %4345 = vmatprep.subr.mxu0 0.0
    %4346 = vmatpush1.msra.mxu0 0.0
    %4347 = vmatprep.subr.mxu0 0.0
    %4348 = vmatpush1.msra.mxu0 0.0
    %4349 = vmatprep.mubr.f32.mxu0 0.0
    %4350 = vmatmul.mubr.f32.gmra.mrb[0].mxu0 %v4117
    %v4351 = vpop.f32.mrb[0].mxu0
    %v4352 = vadd.f32 0.0, %v4351
    %v4353 = vpop.f32.mrb[0].mxu0
    %v4354 = vadd.f32 0.0, %v4353
    %4355 = vdwg.mxu0
    %4356 = vmatprep.subr.mxu0 %v4123
    %4357 = vmatpush1.msra.mxu0 %v4122
    %4358 = vmatprep.subr.mxu0 %v4129
    %4359 = vmatpush1.msra.mxu0 %v4128
    %4360 = vmatprep.subr.mxu0 %v4135
    %4361 = vmatpush1.msra.mxu0 %v4134
    %4362 = vmatprep.subr.mxu0 %v4141
    %4363 = vmatpush1.msra.mxu0 %v4140
    %4364 = vmatprep.subr.mxu0 %v4147
    %4365 = vmatpush1.msra.mxu0 %v4146
    %4366 = vmatprep.subr.mxu0 %v4153
    %4367 = vmatpush1.msra.mxu0 %v4152
    %4368 = vmatprep.subr.mxu0 %v4159
    %4369 = vmatpush1.msra.mxu0 %v4158
    %4370 = vmatprep.subr.mxu0 %v4165
    %4371 = vmatpush1.msra.mxu0 %v4164
    %4372 = vmatprep.subr.mxu0 %v4171
    %4373 = vmatpush1.msra.mxu0 %v4170
    %4374 = vmatprep.subr.mxu0 %v4177
    %4375 = vmatpush1.msra.mxu0 %v4176
    %4376 = vmatprep.subr.mxu0 %v4183
    %4377 = vmatpush1.msra.mxu0 %v4182
    %4378 = vmatprep.subr.mxu0 %v4189
    %4379 = vmatpush1.msra.mxu0 %v4188
    %4380 = vmatprep.subr.mxu0 %v4195
    %4381 = vmatpush1.msra.mxu0 %v4194
    %4382 = vmatprep.subr.mxu0 %v4201
    %4383 = vmatpush1.msra.mxu0 %v4200
    %4384 = vmatprep.subr.mxu0 %v4207
    %4385 = vmatpush1.msra.mxu0 %v4206
    %4386 = vmatprep.subr.mxu0 %v4213
    %4387 = vmatpush1.msra.mxu0 %v4212
    %4388 = vmatprep.subr.mxu0 0.0
    %4389 = vmatpush1.msra.mxu0 0.0
    %4390 = vmatprep.subr.mxu0 0.0
    %4391 = vmatpush1.msra.mxu0 0.0
    %4392 = vmatprep.subr.mxu0 0.0
    %4393 = vmatpush1.msra.mxu0 0.0
    %4394 = vmatprep.subr.mxu0 0.0
    %4395 = vmatpush1.msra.mxu0 0.0
    %4396 = vmatprep.subr.mxu0 0.0
    %4397 = vmatpush1.msra.mxu0 0.0
    %4398 = vmatprep.subr.mxu0 0.0
    %4399 = vmatpush1.msra.mxu0 0.0
    %4400 = vmatprep.subr.mxu0 0.0
    %4401 = vmatpush1.msra.mxu0 0.0
    %4402 = vmatprep.subr.mxu0 0.0
    %4403 = vmatpush1.msra.mxu0 0.0
    %4404 = vmatprep.subr.mxu0 0.0
    %4405 = vmatpush1.msra.mxu0 0.0
    %4406 = vmatprep.subr.mxu0 0.0
    %4407 = vmatpush1.msra.mxu0 0.0
    %4408 = vmatprep.subr.mxu0 0.0
    %4409 = vmatpush1.msra.mxu0 0.0
    %4410 = vmatprep.subr.mxu0 0.0
    %4411 = vmatpush1.msra.mxu0 0.0
    %4412 = vmatprep.subr.mxu0 0.0
    %4413 = vmatpush1.msra.mxu0 0.0
    %4414 = vmatprep.subr.mxu0 0.0
    %4415 = vmatpush1.msra.mxu0 0.0
    %4416 = vmatprep.subr.mxu0 0.0
    %4417 = vmatpush1.msra.mxu0 0.0
    %4418 = vmatprep.subr.mxu0 0.0
    %4419 = vmatpush1.msra.mxu0 0.0
    %4420 = vmatprep.mubr.f32.mxu0 0.0
    %4421 = vmatmul.mubr.f32.gmra.mrb[0].mxu0 %v4117
    %v4422 = vpop.f32.mrb[0].mxu0
    %v4423 = vadd.f32 0.0, %v4422
    %v4424 = vpop.f32.mrb[0].mxu0
    %v4425 = vadd.f32 0.0, %v4424
    %4426 = vdwg.mxu0
    %v4427 = vadd.f32 %v3874, %v4281
    %v4428 = vadd.f32 %v3875, %v4283
    %v4429 = vadd.f32 %v3876, %v4352
    %v4430 = vadd.f32 %v3877, %v4354
    %v4431 = vadd.f32 %v3878, %v4423
    %v4432 = vadd.f32 %v3879, %v4425
    %s4433 = scalar_lea.vmem [#allocation7], 1280
    %v4434 = vld [vmem:[%s4433] sm:$0xff]
    %v4435 = vld [vmem:[%s4433 + $0x8] sm:$0xff]
    %v4436 = vld [vmem:[%s4433 + $0x10] sm:$0xff]
    %v4437 = vld [vmem:[%s4433 + $0x18] sm:$0xff]
    %v4438 = vld [vmem:[%s4433 + $0x20] sm:$0xff]
    %v4439 = vld [vmem:[%s4433 + $0x28] sm:$0xff]
    %v4440 = vld [vmem:[%s4433 + $0x30] sm:$0xff]
    %v4441 = vld [vmem:[%s4433 + $0x38] sm:$0xff]
    %v4442 = vld [vmem:[%s4433 + $0x40] sm:$0xff]
    %v4443 = vld [vmem:[%s4433 + $0x48] sm:$0xff]
    %v4444 = vld [vmem:[%s4433 + $0x50] sm:$0xff]
    %v4445 = vld [vmem:[%s4433 + $0x58] sm:$0xff]
    %v4446 = vld [vmem:[%s4433 + $0x60] sm:$0xff]
    %v4447 = vld [vmem:[%s4433 + $0x68] sm:$0xff]
    %v4448 = vld [vmem:[%s4433 + $0x70] sm:$0xff]
    %v4449 = vld [vmem:[%s4433 + $0x78] sm:$0xff]
    %4450 = vmatprep.subr.mxu0 0.0
    %4451 = vmatpush1.msra.mxu0 %v4434
    %4452 = vmatprep.subr.mxu0 0.0
    %4453 = vmatpush1.msra.mxu0 %v4435
    %4454 = vmatprep.subr.mxu0 0.0
    %4455 = vmatpush1.msra.mxu0 %v4436
    %4456 = vmatprep.subr.mxu0 0.0
    %4457 = vmatpush1.msra.mxu0 %v4437
    %4458 = vmatprep.subr.mxu0 0.0
    %4459 = vmatpush1.msra.mxu0 %v4438
    %4460 = vmatprep.subr.mxu0 0.0
    %4461 = vmatpush1.msra.mxu0 %v4439
    %4462 = vmatprep.subr.mxu0 0.0
    %4463 = vmatpush1.msra.mxu0 %v4440
    %4464 = vmatprep.subr.mxu0 0.0
    %4465 = vmatpush1.msra.mxu0 %v4441
    %4466 = vmatprep.subr.mxu0 0.0
    %4467 = vmatpush1.msra.mxu0 %v4442
    %4468 = vmatprep.subr.mxu0 0.0
    %4469 = vmatpush1.msra.mxu0 %v4443
    %4470 = vmatprep.subr.mxu0 0.0
    %4471 = vmatpush1.msra.mxu0 %v4444
    %4472 = vmatprep.subr.mxu0 0.0
    %4473 = vmatpush1.msra.mxu0 %v4445
    %4474 = vmatprep.subr.mxu0 0.0
    %4475 = vmatpush1.msra.mxu0 %v4446
    %4476 = vmatprep.subr.mxu0 0.0
    %4477 = vmatpush1.msra.mxu0 %v4447
    %4478 = vmatprep.subr.mxu0 0.0
    %4479 = vmatpush1.msra.mxu0 %v4448
    %4480 = vmatprep.subr.mxu0 0.0
    %4481 = vmatpush1.msra.mxu0 %v4449
    %4482 = vmatprep.subr.mxu0 0.0
    %4483 = vmatpush1.msra.mxu0 0.0
    %4484 = vmatprep.subr.mxu0 0.0
    %4485 = vmatpush1.msra.mxu0 0.0
    %4486 = vmatprep.subr.mxu0 0.0
    %4487 = vmatpush1.msra.mxu0 0.0
    %4488 = vmatprep.subr.mxu0 0.0
    %4489 = vmatpush1.msra.mxu0 0.0
    %4490 = vmatprep.subr.mxu0 0.0
    %4491 = vmatpush1.msra.mxu0 0.0
    %4492 = vmatprep.subr.mxu0 0.0
    %4493 = vmatpush1.msra.mxu0 0.0
    %4494 = vmatprep.subr.mxu0 0.0
    %4495 = vmatpush1.msra.mxu0 0.0
    %4496 = vmatprep.subr.mxu0 0.0
    %4497 = vmatpush1.msra.mxu0 0.0
    %4498 = vmatprep.subr.mxu0 0.0
    %4499 = vmatpush1.msra.mxu0 0.0
    %4500 = vmatprep.subr.mxu0 0.0
    %4501 = vmatpush1.msra.mxu0 0.0
    %4502 = vmatprep.subr.mxu0 0.0
    %4503 = vmatpush1.msra.mxu0 0.0
    %4504 = vmatprep.subr.mxu0 0.0
    %4505 = vmatpush1.msra.mxu0 0.0
    %4506 = vmatprep.subr.mxu0 0.0
    %4507 = vmatpush1.msra.mxu0 0.0
    %4508 = vmatprep.subr.mxu0 0.0
    %4509 = vmatpush1.msra.mxu0 0.0
    %4510 = vmatprep.subr.mxu0 0.0
    %4511 = vmatpush1.msra.mxu0 0.0
    %4512 = vmatprep.subr.mxu0 0.0
    %4513 = vmatpush1.msra.mxu0 0.0
    %4514 = vmatprep.mubr.f32.mxu0 0.0
    %4515 = vmatmul.mubr.f32.gmra.mrb[0].mxu0 %v202
    %v4516 = vpop.f32.mrb[0].mxu0
    %v4517 = vadd.f32 %v1518, %v4516
    %v4518 = vpop.f32.mrb[0].mxu0
    %4519 = vdwg.mxu0
    %v4520 = vmax.f32 %v4517, 0.0
    %s4521 = scalar_lea.vmem [#allocation13], 10
    %v4522 = vld [vmem:[%s4521] sm:$0x1]
    %s4523 = scalar_lea.vmem [#allocation14], 10
    %v4524 = vld [vmem:[%s4523] sm:$0x1]
    %4525 = vadd.xlane.f32.xlu0 %v4520
    %v4526 = vpop.xlane.xlu0 %4525
    %v4527 = vmul.f32 %v4520, %v4520
    %4528 = vadd.xlane.f32.xlu0 %v4527
    %v4529 = vpop.xlane.xlu0 %4528
    %v4530 = vmul.f32 %v4526, 0.0078125
    %v4531 = vmul.f32 %v4529, 0.0078125
    %v4532 = vmul.f32 %v4530, %v4530
    %v4533 = vsub.f32 %v4531, %v4532
    %v4534 = vadd.f32 %v4533, 1e-05
    %v4535 = vrsqrt.pop %v4534
    %v4536 = vsub.f32 %v4520, %v4530
    %v4537 = vmul.f32 %v4536, %v4535
    %v4539 = vlaneseq
    %v4540 = vshrl.u32 %v4539, 7
    %v4541 = vsub.s32 0, %v4540
    %v4542 = vrot.slane %v4522, %v4541
    %v4544 = vmul.f32 %v4537, %v4542
    %v4546 = vlaneseq
    %v4547 = vshrl.u32 %v4546, 7
    %v4548 = vsub.s32 0, %v4547
    %v4549 = vrot.slane %v4524, %v4548
    %v4551 = vadd.f32 %v4544, %v4549
    %s4552 = scalar_lea.vmem [#allocation7], 1408
    %v4553 = vld [vmem:[%s4552] sm:$0xff]
    %v4554 = vld [vmem:[%s4552 + $0x8] sm:$0xff]
    %v4555 = vld [vmem:[%s4552 + $0x10] sm:$0xff]
    %v4556 = vld [vmem:[%s4552 + $0x18] sm:$0xff]
    %v4557 = vld [vmem:[%s4552 + $0x20] sm:$0xff]
    %v4558 = vld [vmem:[%s4552 + $0x28] sm:$0xff]
    %v4559 = vld [vmem:[%s4552 + $0x30] sm:$0xff]
    %v4560 = vld [vmem:[%s4552 + $0x38] sm:$0xff]
    %v4561 = vld [vmem:[%s4552 + $0x40] sm:$0xff]
    %v4562 = vld [vmem:[%s4552 + $0x48] sm:$0xff]
    %v4563 = vld [vmem:[%s4552 + $0x50] sm:$0xff]
    %v4564 = vld [vmem:[%s4552 + $0x58] sm:$0xff]
    %v4565 = vld [vmem:[%s4552 + $0x60] sm:$0xff]
    %v4566 = vld [vmem:[%s4552 + $0x68] sm:$0xff]
    %v4567 = vld [vmem:[%s4552 + $0x70] sm:$0xff]
    %v4568 = vld [vmem:[%s4552 + $0x78] sm:$0xff]
    %4569 = vmatprep.subr.mxu0 0.0
    %4570 = vmatpush1.msra.mxu0 %v4553
    %4571 = vmatprep.subr.mxu0 0.0
    %4572 = vmatpush1.msra.mxu0 %v4554
    %4573 = vmatprep.subr.mxu0 0.0
    %4574 = vmatpush1.msra.mxu0 %v4555
    %4575 = vmatprep.subr.mxu0 0.0
    %4576 = vmatpush1.msra.mxu0 %v4556
    %4577 = vmatprep.subr.mxu0 0.0
    %4578 = vmatpush1.msra.mxu0 %v4557
    %4579 = vmatprep.subr.mxu0 0.0
    %4580 = vmatpush1.msra.mxu0 %v4558
    %4581 = vmatprep.subr.mxu0 0.0
    %4582 = vmatpush1.msra.mxu0 %v4559
    %4583 = vmatprep.subr.mxu0 0.0
    %4584 = vmatpush1.msra.mxu0 %v4560
    %4585 = vmatprep.subr.mxu0 0.0
    %4586 = vmatpush1.msra.mxu0 %v4561
    %4587 = vmatprep.subr.mxu0 0.0
    %4588 = vmatpush1.msra.mxu0 %v4562
    %4589 = vmatprep.subr.mxu0 0.0
    %4590 = vmatpush1.msra.mxu0 %v4563
    %4591 = vmatprep.subr.mxu0 0.0
    %4592 = vmatpush1.msra.mxu0 %v4564
    %4593 = vmatprep.subr.mxu0 0.0
    %4594 = vmatpush1.msra.mxu0 %v4565
    %4595 = vmatprep.subr.mxu0 0.0
    %4596 = vmatpush1.msra.mxu0 %v4566
    %4597 = vmatprep.subr.mxu0 0.0
    %4598 = vmatpush1.msra.mxu0 %v4567
    %4599 = vmatprep.subr.mxu0 0.0
    %4600 = vmatpush1.msra.mxu0 %v4568
    %4601 = vmatprep.subr.mxu0 0.0
    %4602 = vmatpush1.msra.mxu0 0.0
    %4603 = vmatprep.subr.mxu0 0.0
    %4604 = vmatpush1.msra.mxu0 0.0
    %4605 = vmatprep.subr.mxu0 0.0
    %4606 = vmatpush1.msra.mxu0 0.0
    %4607 = vmatprep.subr.mxu0 0.0
    %4608 = vmatpush1.msra.mxu0 0.0
    %4609 = vmatprep.subr.mxu0 0.0
    %4610 = vmatpush1.msra.mxu0 0.0
    %4611 = vmatprep.subr.mxu0 0.0
    %4612 = vmatpush1.msra.mxu0 0.0
    %4613 = vmatprep.subr.mxu0 0.0
    %4614 = vmatpush1.msra.mxu0 0.0
    %4615 = vmatprep.subr.mxu0 0.0
    %4616 = vmatpush1.msra.mxu0 0.0
    %4617 = vmatprep.subr.mxu0 0.0
    %4618 = vmatpush1.msra.mxu0 0.0
    %4619 = vmatprep.subr.mxu0 0.0
    %4620 = vmatpush1.msra.mxu0 0.0
    %4621 = vmatprep.subr.mxu0 0.0
    %4622 = vmatpush1.msra.mxu0 0.0
    %4623 = vmatprep.subr.mxu0 0.0
    %4624 = vmatpush1.msra.mxu0 0.0
    %4625 = vmatprep.subr.mxu0 0.0
    %4626 = vmatpush1.msra.mxu0 0.0
    %4627 = vmatprep.subr.mxu0 0.0
    %4628 = vmatpush1.msra.mxu0 0.0
    %4629 = vmatprep.subr.mxu0 0.0
    %4630 = vmatpush1.msra.mxu0 0.0
    %4631 = vmatprep.subr.mxu0 0.0
    %4632 = vmatpush1.msra.mxu0 0.0
    %4633 = vmatprep.mubr.f32.mxu0 0.0
    %4634 = vmatmul.mubr.f32.gmra.mrb[0].mxu0 %v4551
    %v4635 = vpop.f32.mrb[0].mxu0
    %v4636 = vadd.f32 %v1638, %v4635
    %v4637 = vpop.f32.mrb[0].mxu0
    %4638 = vdwg.mxu0
    %v4639 = vmax.f32 %v4636, 0.0
    %s4640 = scalar_lea.vmem [#allocation13], 11
    %v4641 = vld [vmem:[%s4640] sm:$0x1]
    %s4642 = scalar_lea.vmem [#allocation14], 11
    %v4643 = vld [vmem:[%s4642] sm:$0x1]
    %4644 = vadd.xlane.f32.xlu0 %v4639
    %v4645 = vpop.xlane.xlu0 %4644
    %v4646 = vmul.f32 %v4639, %v4639
    %4647 = vadd.xlane.f32.xlu0 %v4646
    %v4648 = vpop.xlane.xlu0 %4647
    %v4649 = vmul.f32 %v4645, 0.0078125
    %v4650 = vmul.f32 %v4648, 0.0078125
    %v4651 = vmul.f32 %v4649, %v4649
    %v4652 = vsub.f32 %v4650, %v4651
    %v4653 = vadd.f32 %v4652, 1e-05
    %v4654 = vrsqrt.pop %v4653
    %v4655 = vsub.f32 %v4639, %v4649
    %v4656 = vmul.f32 %v4655, %v4654
    %v4658 = vlaneseq
    %v4659 = vshrl.u32 %v4658, 7
    %v4660 = vsub.s32 0, %v4659
    %v4661 = vrot.slane %v4641, %v4660
    %v4663 = vmul.f32 %v4656, %v4661
    %v4665 = vlaneseq
    %v4666 = vshrl.u32 %v4665, 7
    %v4667 = vsub.s32 0, %v4666
    %v4668 = vrot.slane %v4643, %v4667
    %v4670 = vadd.f32 %v4663, %v4668
    %v4671 = vld [vmem:[#allocation16 + $0xf00] sm:$0xff]
    %v4672 = vld [vmem:[#allocation16 + $0xf08] sm:$0xff]
    %v4673 = vld [vmem:[#allocation16 + $0xf10] sm:$0xff]
    %v4674 = vld [vmem:[#allocation16 + $0xf18] sm:$0xff]
    %v4675 = vld [vmem:[#allocation16 + $0xf20] sm:$0xff]
    %v4676 = vld [vmem:[#allocation16 + $0xf28] sm:$0xff]
    %v4677 = vld [vmem:[#allocation16 + $0xf30] sm:$0xff]
    %v4678 = vld [vmem:[#allocation16 + $0xf38] sm:$0xff]
    %v4679 = vld [vmem:[#allocation16 + $0xf40] sm:$0xff]
    %v4680 = vld [vmem:[#allocation16 + $0xf48] sm:$0xff]
    %v4681 = vld [vmem:[#allocation16 + $0xf50] sm:$0xff]
    %v4682 = vld [vmem:[#allocation16 + $0xf58] sm:$0xff]
    %v4683 = vld [vmem:[#allocation16 + $0xf60] sm:$0xff]
    %v4684 = vld [vmem:[#allocation16 + $0xf68] sm:$0xff]
    %v4685 = vld [vmem:[#allocation16 + $0xf70] sm:$0xff]
    %v4686 = vld [vmem:[#allocation16 + $0xf78] sm:$0xff]
    %v4687 = vld [vmem:[#allocation16 + $0xf80] sm:$0xff]
    %v4688 = vld [vmem:[#allocation16 + $0xf88] sm:$0xff]
    %v4689 = vld [vmem:[#allocation16 + $0xf90] sm:$0xff]
    %v4690 = vld [vmem:[#allocation16 + $0xf98] sm:$0xff]
    %v4691 = vld [vmem:[#allocation16 + $0xfa0] sm:$0xff]
    %v4692 = vld [vmem:[#allocation16 + $0xfa8] sm:$0xff]
    %v4693 = vld [vmem:[#allocation16 + $0xfb0] sm:$0xff]
    %v4694 = vld [vmem:[#allocation16 + $0xfb8] sm:$0xff]
    %v4695 = vld [vmem:[#allocation16 + $0xfc0] sm:$0xff]
    %v4696 = vld [vmem:[#allocation16 + $0xfc8] sm:$0xff]
    %v4697 = vld [vmem:[#allocation16 + $0xfd0] sm:$0xff]
    %v4698 = vld [vmem:[#allocation16 + $0xfd8] sm:$0xff]
    %v4699 = vld [vmem:[#allocation16 + $0xfe0] sm:$0xff]
    %v4700 = vld [vmem:[#allocation16 + $0xfe8] sm:$0xff]
    %v4701 = vld [vmem:[#allocation16 + $0xff0] sm:$0xff]
    %v4702 = vld [vmem:[#allocation16 + $0xff8] sm:$0xff]
    %v4703 = vld [vmem:[#allocation16 + $0x1000] sm:$0xff]
    %v4704 = vld [vmem:[#allocation16 + $0x1008] sm:$0xff]
    %v4705 = vld [vmem:[#allocation16 + $0x1010] sm:$0xff]
    %v4706 = vld [vmem:[#allocation16 + $0x1018] sm:$0xff]
    %v4707 = vld [vmem:[#allocation16 + $0x1020] sm:$0xff]
    %v4708 = vld [vmem:[#allocation16 + $0x1028] sm:$0xff]
    %v4709 = vld [vmem:[#allocation16 + $0x1030] sm:$0xff]
    %v4710 = vld [vmem:[#allocation16 + $0x1038] sm:$0xff]
    %v4711 = vld [vmem:[#allocation16 + $0x1040] sm:$0xff]
    %v4712 = vld [vmem:[#allocation16 + $0x1048] sm:$0xff]
    %v4713 = vld [vmem:[#allocation16 + $0x1050] sm:$0xff]
    %v4714 = vld [vmem:[#allocation16 + $0x1058] sm:$0xff]
    %v4715 = vld [vmem:[#allocation16 + $0x1060] sm:$0xff]
    %v4716 = vld [vmem:[#allocation16 + $0x1068] sm:$0xff]
    %v4717 = vld [vmem:[#allocation16 + $0x1070] sm:$0xff]
    %v4718 = vld [vmem:[#allocation16 + $0x1078] sm:$0xff]
    %v4719 = vld [vmem:[#allocation16 + $0x1080] sm:$0xff]
    %v4720 = vld [vmem:[#allocation16 + $0x1088] sm:$0xff]
    %v4721 = vld [vmem:[#allocation16 + $0x1090] sm:$0xff]
    %v4722 = vld [vmem:[#allocation16 + $0x1098] sm:$0xff]
    %v4723 = vld [vmem:[#allocation16 + $0x10a0] sm:$0xff]
    %v4724 = vld [vmem:[#allocation16 + $0x10a8] sm:$0xff]
    %v4725 = vld [vmem:[#allocation16 + $0x10b0] sm:$0xff]
    %v4726 = vld [vmem:[#allocation16 + $0x10b8] sm:$0xff]
    %v4727 = vld [vmem:[#allocation16 + $0x10c0] sm:$0xff]
    %v4728 = vld [vmem:[#allocation16 + $0x10c8] sm:$0xff]
    %v4729 = vld [vmem:[#allocation16 + $0x10d0] sm:$0xff]
    %v4730 = vld [vmem:[#allocation16 + $0x10d8] sm:$0xff]
    %v4731 = vld [vmem:[#allocation16 + $0x10e0] sm:$0xff]
    %v4732 = vld [vmem:[#allocation16 + $0x10e8] sm:$0xff]
    %v4733 = vld [vmem:[#allocation16 + $0x10f0] sm:$0xff]
    %v4734 = vld [vmem:[#allocation16 + $0x10f8] sm:$0xff]
    %v4735 = vld [vmem:[#allocation16 + $0x1100] sm:$0xff]
    %v4736 = vld [vmem:[#allocation16 + $0x1108] sm:$0xff]
    %v4737 = vld [vmem:[#allocation16 + $0x1110] sm:$0xff]
    %v4738 = vld [vmem:[#allocation16 + $0x1118] sm:$0xff]
    %v4739 = vld [vmem:[#allocation16 + $0x1120] sm:$0xff]
    %v4740 = vld [vmem:[#allocation16 + $0x1128] sm:$0xff]
    %v4741 = vld [vmem:[#allocation16 + $0x1130] sm:$0xff]
    %v4742 = vld [vmem:[#allocation16 + $0x1138] sm:$0xff]
    %v4743 = vld [vmem:[#allocation16 + $0x1140] sm:$0xff]
    %v4744 = vld [vmem:[#allocation16 + $0x1148] sm:$0xff]
    %v4745 = vld [vmem:[#allocation16 + $0x1150] sm:$0xff]
    %v4746 = vld [vmem:[#allocation16 + $0x1158] sm:$0xff]
    %v4747 = vld [vmem:[#allocation16 + $0x1160] sm:$0xff]
    %v4748 = vld [vmem:[#allocation16 + $0x1168] sm:$0xff]
    %v4749 = vld [vmem:[#allocation16 + $0x1170] sm:$0xff]
    %v4750 = vld [vmem:[#allocation16 + $0x1178] sm:$0xff]
    %v4751 = vld [vmem:[#allocation16 + $0x1180] sm:$0xff]
    %v4752 = vld [vmem:[#allocation16 + $0x1188] sm:$0xff]
    %v4753 = vld [vmem:[#allocation16 + $0x1190] sm:$0xff]
    %v4754 = vld [vmem:[#allocation16 + $0x1198] sm:$0xff]
    %v4755 = vld [vmem:[#allocation16 + $0x11a0] sm:$0xff]
    %v4756 = vld [vmem:[#allocation16 + $0x11a8] sm:$0xff]
    %v4757 = vld [vmem:[#allocation16 + $0x11b0] sm:$0xff]
    %v4758 = vld [vmem:[#allocation16 + $0x11b8] sm:$0xff]
    %v4759 = vld [vmem:[#allocation16 + $0x11c0] sm:$0xff]
    %v4760 = vld [vmem:[#allocation16 + $0x11c8] sm:$0xff]
    %v4761 = vld [vmem:[#allocation16 + $0x11d0] sm:$0xff]
    %v4762 = vld [vmem:[#allocation16 + $0x11d8] sm:$0xff]
    %v4763 = vld [vmem:[#allocation16 + $0x11e0] sm:$0xff]
    %v4764 = vld [vmem:[#allocation16 + $0x11e8] sm:$0xff]
    %v4765 = vld [vmem:[#allocation16 + $0x11f0] sm:$0xff]
    %v4766 = vld [vmem:[#allocation16 + $0x11f8] sm:$0xff]
    %4767 = vmatprep.subr.mxu0 %v4672
    %4768 = vmatpush1.msra.mxu0 %v4671
    %4769 = vmatprep.subr.mxu0 %v4678
    %4770 = vmatpush1.msra.mxu0 %v4677
    %4771 = vmatprep.subr.mxu0 %v4684
    %4772 = vmatpush1.msra.mxu0 %v4683
    %4773 = vmatprep.subr.mxu0 %v4690
    %4774 = vmatpush1.msra.mxu0 %v4689
    %4775 = vmatprep.subr.mxu0 %v4696
    %4776 = vmatpush1.msra.mxu0 %v4695
    %4777 = vmatprep.subr.mxu0 %v4702
    %4778 = vmatpush1.msra.mxu0 %v4701
    %4779 = vmatprep.subr.mxu0 %v4708
    %4780 = vmatpush1.msra.mxu0 %v4707
    %4781 = vmatprep.subr.mxu0 %v4714
    %4782 = vmatpush1.msra.mxu0 %v4713
    %4783 = vmatprep.subr.mxu0 %v4720
    %4784 = vmatpush1.msra.mxu0 %v4719
    %4785 = vmatprep.subr.mxu0 %v4726
    %4786 = vmatpush1.msra.mxu0 %v4725
    %4787 = vmatprep.subr.mxu0 %v4732
    %4788 = vmatpush1.msra.mxu0 %v4731
    %4789 = vmatprep.subr.mxu0 %v4738
    %4790 = vmatpush1.msra.mxu0 %v4737
    %4791 = vmatprep.subr.mxu0 %v4744
    %4792 = vmatpush1.msra.mxu0 %v4743
    %4793 = vmatprep.subr.mxu0 %v4750
    %4794 = vmatpush1.msra.mxu0 %v4749
    %4795 = vmatprep.subr.mxu0 %v4756
    %4796 = vmatpush1.msra.mxu0 %v4755
    %4797 = vmatprep.subr.mxu0 %v4762
    %4798 = vmatpush1.msra.mxu0 %v4761
    %4799 = vmatprep.subr.mxu0 0.0
    %4800 = vmatpush1.msra.mxu0 0.0
    %4801 = vmatprep.subr.mxu0 0.0
    %4802 = vmatpush1.msra.mxu0 0.0
    %4803 = vmatprep.subr.mxu0 0.0
    %4804 = vmatpush1.msra.mxu0 0.0
    %4805 = vmatprep.subr.mxu0 0.0
    %4806 = vmatpush1.msra.mxu0 0.0
    %4807 = vmatprep.subr.mxu0 0.0
    %4808 = vmatpush1.msra.mxu0 0.0
    %4809 = vmatprep.subr.mxu0 0.0
    %4810 = vmatpush1.msra.mxu0 0.0
    %4811 = vmatprep.subr.mxu0 0.0
    %4812 = vmatpush1.msra.mxu0 0.0
    %4813 = vmatprep.subr.mxu0 0.0
    %4814 = vmatpush1.msra.mxu0 0.0
    %4815 = vmatprep.subr.mxu0 0.0
    %4816 = vmatpush1.msra.mxu0 0.0
    %4817 = vmatprep.subr.mxu0 0.0
    %4818 = vmatpush1.msra.mxu0 0.0
    %4819 = vmatprep.subr.mxu0 0.0
    %4820 = vmatpush1.msra.mxu0 0.0
    %4821 = vmatprep.subr.mxu0 0.0
    %4822 = vmatpush1.msra.mxu0 0.0
    %4823 = vmatprep.subr.mxu0 0.0
    %4824 = vmatpush1.msra.mxu0 0.0
    %4825 = vmatprep.subr.mxu0 0.0
    %4826 = vmatpush1.msra.mxu0 0.0
    %4827 = vmatprep.subr.mxu0 0.0
    %4828 = vmatpush1.msra.mxu0 0.0
    %4829 = vmatprep.subr.mxu0 0.0
    %4830 = vmatpush1.msra.mxu0 0.0
    %4831 = vmatprep.mubr.f32.mxu0 0.0
    %4832 = vmatmul.mubr.f32.gmra.mrb[0].mxu0 %v4670
    %v4833 = vpop.f32.mrb[0].mxu0
    %v4834 = vadd.f32 0.0, %v4833
    %v4835 = vpop.f32.mrb[0].mxu0
    %v4836 = vadd.f32 0.0, %v4835
    %4837 = vdwg.mxu0
    %4838 = vmatprep.subr.mxu0 %v4674
    %4839 = vmatpush1.msra.mxu0 %v4673
    %4840 = vmatprep.subr.mxu0 %v4680
    %4841 = vmatpush1.msra.mxu0 %v4679
    %4842 = vmatprep.subr.mxu0 %v4686
    %4843 = vmatpush1.msra.mxu0 %v4685
    %4844 = vmatprep.subr.mxu0 %v4692
    %4845 = vmatpush1.msra.mxu0 %v4691
    %4846 = vmatprep.subr.mxu0 %v4698
    %4847 = vmatpush1.msra.mxu0 %v4697
    %4848 = vmatprep.subr.mxu0 %v4704
    %4849 = vmatpush1.msra.mxu0 %v4703
    %4850 = vmatprep.subr.mxu0 %v4710
    %4851 = vmatpush1.msra.mxu0 %v4709
    %4852 = vmatprep.subr.mxu0 %v4716
    %4853 = vmatpush1.msra.mxu0 %v4715
    %4854 = vmatprep.subr.mxu0 %v4722
    %4855 = vmatpush1.msra.mxu0 %v4721
    %4856 = vmatprep.subr.mxu0 %v4728
    %4857 = vmatpush1.msra.mxu0 %v4727
    %4858 = vmatprep.subr.mxu0 %v4734
    %4859 = vmatpush1.msra.mxu0 %v4733
    %4860 = vmatprep.subr.mxu0 %v4740
    %4861 = vmatpush1.msra.mxu0 %v4739
    %4862 = vmatprep.subr.mxu0 %v4746
    %4863 = vmatpush1.msra.mxu0 %v4745
    %4864 = vmatprep.subr.mxu0 %v4752
    %4865 = vmatpush1.msra.mxu0 %v4751
    %4866 = vmatprep.subr.mxu0 %v4758
    %4867 = vmatpush1.msra.mxu0 %v4757
    %4868 = vmatprep.subr.mxu0 %v4764
    %4869 = vmatpush1.msra.mxu0 %v4763
    %4870 = vmatprep.subr.mxu0 0.0
    %4871 = vmatpush1.msra.mxu0 0.0
    %4872 = vmatprep.subr.mxu0 0.0
    %4873 = vmatpush1.msra.mxu0 0.0
    %4874 = vmatprep.subr.mxu0 0.0
    %4875 = vmatpush1.msra.mxu0 0.0
    %4876 = vmatprep.subr.mxu0 0.0
    %4877 = vmatpush1.msra.mxu0 0.0
    %4878 = vmatprep.subr.mxu0 0.0
    %4879 = vmatpush1.msra.mxu0 0.0
    %4880 = vmatprep.subr.mxu0 0.0
    %4881 = vmatpush1.msra.mxu0 0.0
    %4882 = vmatprep.subr.mxu0 0.0
    %4883 = vmatpush1.msra.mxu0 0.0
    %4884 = vmatprep.subr.mxu0 0.0
    %4885 = vmatpush1.msra.mxu0 0.0
    %4886 = vmatprep.subr.mxu0 0.0
    %4887 = vmatpush1.msra.mxu0 0.0
    %4888 = vmatprep.subr.mxu0 0.0
    %4889 = vmatpush1.msra.mxu0 0.0
    %4890 = vmatprep.subr.mxu0 0.0
    %4891 = vmatpush1.msra.mxu0 0.0
    %4892 = vmatprep.subr.mxu0 0.0
    %4893 = vmatpush1.msra.mxu0 0.0
    %4894 = vmatprep.subr.mxu0 0.0
    %4895 = vmatpush1.msra.mxu0 0.0
    %4896 = vmatprep.subr.mxu0 0.0
    %4897 = vmatpush1.msra.mxu0 0.0
    %4898 = vmatprep.subr.mxu0 0.0
    %4899 = vmatpush1.msra.mxu0 0.0
    %4900 = vmatprep.subr.mxu0 0.0
    %4901 = vmatpush1.msra.mxu0 0.0
    %4902 = vmatprep.mubr.f32.mxu0 0.0
    %4903 = vmatmul.mubr.f32.gmra.mrb[0].mxu0 %v4670
    %v4904 = vpop.f32.mrb[0].mxu0
    %v4905 = vadd.f32 0.0, %v4904
    %v4906 = vpop.f32.mrb[0].mxu0
    %v4907 = vadd.f32 0.0, %v4906
    %4908 = vdwg.mxu0
    %4909 = vmatprep.subr.mxu0 %v4676
    %4910 = vmatpush1.msra.mxu0 %v4675
    %4911 = vmatprep.subr.mxu0 %v4682
    %4912 = vmatpush1.msra.mxu0 %v4681
    %4913 = vmatprep.subr.mxu0 %v4688
    %4914 = vmatpush1.msra.mxu0 %v4687
    %4915 = vmatprep.subr.mxu0 %v4694
    %4916 = vmatpush1.msra.mxu0 %v4693
    %4917 = vmatprep.subr.mxu0 %v4700
    %4918 = vmatpush1.msra.mxu0 %v4699
    %4919 = vmatprep.subr.mxu0 %v4706
    %4920 = vmatpush1.msra.mxu0 %v4705
    %4921 = vmatprep.subr.mxu0 %v4712
    %4922 = vmatpush1.msra.mxu0 %v4711
    %4923 = vmatprep.subr.mxu0 %v4718
    %4924 = vmatpush1.msra.mxu0 %v4717
    %4925 = vmatprep.subr.mxu0 %v4724
    %4926 = vmatpush1.msra.mxu0 %v4723
    %4927 = vmatprep.subr.mxu0 %v4730
    %4928 = vmatpush1.msra.mxu0 %v4729
    %4929 = vmatprep.subr.mxu0 %v4736
    %4930 = vmatpush1.msra.mxu0 %v4735
    %4931 = vmatprep.subr.mxu0 %v4742
    %4932 = vmatpush1.msra.mxu0 %v4741
    %4933 = vmatprep.subr.mxu0 %v4748
    %4934 = vmatpush1.msra.mxu0 %v4747
    %4935 = vmatprep.subr.mxu0 %v4754
    %4936 = vmatpush1.msra.mxu0 %v4753
    %4937 = vmatprep.subr.mxu0 %v4760
    %4938 = vmatpush1.msra.mxu0 %v4759
    %4939 = vmatprep.subr.mxu0 %v4766
    %4940 = vmatpush1.msra.mxu0 %v4765
    %4941 = vmatprep.subr.mxu0 0.0
    %4942 = vmatpush1.msra.mxu0 0.0
    %4943 = vmatprep.subr.mxu0 0.0
    %4944 = vmatpush1.msra.mxu0 0.0
    %4945 = vmatprep.subr.mxu0 0.0
    %4946 = vmatpush1.msra.mxu0 0.0
    %4947 = vmatprep.subr.mxu0 0.0
    %4948 = vmatpush1.msra.mxu0 0.0
    %4949 = vmatprep.subr.mxu0 0.0
    %4950 = vmatpush1.msra.mxu0 0.0
    %4951 = vmatprep.subr.mxu0 0.0
    %4952 = vmatpush1.msra.mxu0 0.0
    %4953 = vmatprep.subr.mxu0 0.0
    %4954 = vmatpush1.msra.mxu0 0.0
    %4955 = vmatprep.subr.mxu0 0.0
    %4956 = vmatpush1.msra.mxu0 0.0
    %4957 = vmatprep.subr.mxu0 0.0
    %4958 = vmatpush1.msra.mxu0 0.0
    %4959 = vmatprep.subr.mxu0 0.0
    %4960 = vmatpush1.msra.mxu0 0.0
    %4961 = vmatprep.subr.mxu0 0.0
    %4962 = vmatpush1.msra.mxu0 0.0
    %4963 = vmatprep.subr.mxu0 0.0
    %4964 = vmatpush1.msra.mxu0 0.0
    %4965 = vmatprep.subr.mxu0 0.0
    %4966 = vmatpush1.msra.mxu0 0.0
    %4967 = vmatprep.subr.mxu0 0.0
    %4968 = vmatpush1.msra.mxu0 0.0
    %4969 = vmatprep.subr.mxu0 0.0
    %4970 = vmatpush1.msra.mxu0 0.0
    %4971 = vmatprep.subr.mxu0 0.0
    %4972 = vmatpush1.msra.mxu0 0.0
    %4973 = vmatprep.mubr.f32.mxu0 0.0
    %4974 = vmatmul.mubr.f32.gmra.mrb[0].mxu0 %v4670
    %v4975 = vpop.f32.mrb[0].mxu0
    %v4976 = vadd.f32 0.0, %v4975
    %v4977 = vpop.f32.mrb[0].mxu0
    %v4978 = vadd.f32 0.0, %v4977
    %4979 = vdwg.mxu0
    %v4980 = vadd.f32 %v4427, %v4834
    %v4981 = vadd.f32 %v4428, %v4836
    %v4982 = vadd.f32 %v4429, %v4905
    %v4983 = vadd.f32 %v4430, %v4907
    %v4984 = vadd.f32 %v4431, %v4976
    %v4985 = vadd.f32 %v4432, %v4978
    %v4986 = vld [vmem:[#allocation19] sm:$0x3f]
    %v4987 = vld [vmem:[#allocation20] sm:$0x3f]
    %v4988 = vadd.f32 %v4980, %v4981
    %v4989 = vadd.f32 %v4988, %v4982
    %v4990 = vadd.f32 %v4989, %v4983
    %v4991 = vadd.f32 %v4990, %v4984
    %v4992 = vadd.f32 %v4991, %v4985
    %4993 = vadd.xlane.f32.xlu0 %v4992
    %v4994 = vpop.xlane.xlu0 %4993
    %v4995 = vmul.f32 %v4980, %v4980
    %v4996 = vmul.f32 %v4981, %v4981
    %v4997 = vmul.f32 %v4982, %v4982
    %v4998 = vmul.f32 %v4983, %v4983
    %v4999 = vmul.f32 %v4984, %v4984
    %v5000 = vmul.f32 %v4985, %v4985
    %v5001 = vadd.f32 %v4995, %v4996
    %v5002 = vadd.f32 %v5001, %v4997
    %v5003 = vadd.f32 %v5002, %v4998
    %v5004 = vadd.f32 %v5003, %v4999
    %v5005 = vadd.f32 %v5004, %v5000
    %5006 = vadd.xlane.f32.xlu0 %v5005
    %v5007 = vpop.xlane.xlu0 %5006
    %v5008 = vmul.f32 %v4994, 0.0013020834
    %v5009 = vmul.f32 %v5007, 0.0013020834
    %v5010 = vmul.f32 %v5008, %v5008
    %v5011 = vsub.f32 %v5009, %v5010
    %v5012 = vadd.f32 %v5011, 1e-05
    %v5013 = vrsqrt.pop %v5012
    %v5014 = vsub.f32 %v4980, %v5008
    %v5015 = vsub.f32 %v4981, %v5008
    %v5016 = vsub.f32 %v4982, %v5008
    %v5017 = vsub.f32 %v4983, %v5008
    %v5018 = vsub.f32 %v4984, %v5008
    %v5019 = vsub.f32 %v4985, %v5008
    %v5020 = vmul.f32 %v5014, %v5013
    %v5021 = vmul.f32 %v5015, %v5013
    %v5022 = vmul.f32 %v5016, %v5013
    %v5023 = vmul.f32 %v5017, %v5013
    %v5024 = vmul.f32 %v5018, %v5013
    %v5025 = vmul.f32 %v5019, %v5013
    %v5027 = vlaneseq
    %v5028 = vshrl.u32 %v5027, 7
    %v5029 = vsub.s32 0, %v5028
    %v5030 = vrot.slane %v4986, %v5029
    %v5031 = vlaneseq
    %v5032 = vshrl.u32 %v5031, 7
    %v5033 = vsub.s32 1, %v5032
    %v5034 = vrot.slane %v4986, %v5033
    %v5035 = vlaneseq
    %v5036 = vshrl.u32 %v5035, 7
    %v5037 = vsub.s32 2, %v5036
    %v5038 = vrot.slane %v4986, %v5037
    %v5039 = vlaneseq
    %v5040 = vshrl.u32 %v5039, 7
    %v5041 = vsub.s32 3, %v5040
    %v5042 = vrot.slane %v4986, %v5041
    %v5043 = vlaneseq
    %v5044 = vshrl.u32 %v5043, 7
    %v5045 = vsub.s32 4, %v5044
    %v5046 = vrot.slane %v4986, %v5045
    %v5047 = vlaneseq
    %v5048 = vshrl.u32 %v5047, 7
    %v5049 = vsub.s32 5, %v5048
    %v5050 = vrot.slane %v4986, %v5049
    %v5057 = vmul.f32 %v5020, %v5030
    %v5058 = vmul.f32 %v5021, %v5034
    %v5059 = vmul.f32 %v5022, %v5038
    %v5060 = vmul.f32 %v5023, %v5042
    %v5061 = vmul.f32 %v5024, %v5046
    %v5062 = vmul.f32 %v5025, %v5050
    %v5064 = vlaneseq
    %v5065 = vshrl.u32 %v5064, 7
    %v5066 = vsub.s32 0, %v5065
    %v5067 = vrot.slane %v4987, %v5066
    %v5068 = vlaneseq
    %v5069 = vshrl.u32 %v5068, 7
    %v5070 = vsub.s32 1, %v5069
    %v5071 = vrot.slane %v4987, %v5070
    %v5072 = vlaneseq
    %v5073 = vshrl.u32 %v5072, 7
    %v5074 = vsub.s32 2, %v5073
    %v5075 = vrot.slane %v4987, %v5074
    %v5076 = vlaneseq
    %v5077 = vshrl.u32 %v5076, 7
    %v5078 = vsub.s32 3, %v5077
    %v5079 = vrot.slane %v4987, %v5078
    %v5080 = vlaneseq
    %v5081 = vshrl.u32 %v5080, 7
    %v5082 = vsub.s32 4, %v5081
    %v5083 = vrot.slane %v4987, %v5082
    %v5084 = vlaneseq
    %v5085 = vshrl.u32 %v5084, 7
    %v5086 = vsub.s32 5, %v5085
    %v5087 = vrot.slane %v4987, %v5086
    %v5094 = vadd.f32 %v5057, %v5067
    %v5095 = vadd.f32 %v5058, %v5071
    %v5096 = vadd.f32 %v5059, %v5075
    %v5097 = vadd.f32 %v5060, %v5079
    %v5098 = vadd.f32 %v5061, %v5083
    %v5099 = vadd.f32 %v5062, %v5087
    %5100 = vst [vmem:[#allocation22] sm:$0xff] %v5094
    %5101 = vst [vmem:[#allocation22 + $0x8] sm:$0xff] %v5095
    %5102 = vst [vmem:[#allocation22 + $0x10] sm:$0xff] %v5096
    %5103 = vst [vmem:[#allocation22 + $0x18] sm:$0xff] %v5097
    %5104 = vst [vmem:[#allocation22 + $0x20] sm:$0xff] %v5098
    %5105 = vst [vmem:[#allocation22 + $0x28] sm:$0xff] %v5099
    // Predicated region
    $region98: #{tpu_custom_call.1} parent=1 // pred_check
      _
    $region99: #{tpu_custom_call.1} parent=1 // pred_check_branch
      %5107 = sbr.rel (0) target = $region101
    $region100: #{tpu_custom_call.1} parent=1 // pred_region
      %s5109 = ssub.s32 768, 768
      %5110 = vsyncadd [#allocation4], %s5109
      %s5112 = sshll.u32 [#allocation22], 4
      %s5113 = int_to_ptr.vmem [resolvable:$true] %s5112
      %5115 = dma.vmem_to_hbm [thread:$0]  %s5113, 768, %s12, [#allocation4]
    $region101: #{tpu_custom_call.1} parent=1 // pred_fallthru
      _
    // Predicated region
    $region102: #{tpu_custom_call.1} parent=1 // pred_check
      _
    $region103: #{tpu_custom_call.1} parent=1 // pred_check_branch
      %5117 = sbr.rel (0) target = $region105
    $region104: #{tpu_custom_call.1} parent=1 // pred_region
      %5118 = dma.done [#allocation4], 768
    $region105: #{tpu_custom_call.1} parent=1 // pred_fallthru
      _
    %5119 = vsyncpa [#allocation3], 1
    %5120 = vsyncpa [#allocation6], 1
    %5121 = vsyncpa [#allocation9], 1
    %5122 = vsyncpa [#allocation12], 1
    %5123 = vsyncpa [#allocation15], 1
    %5124 = vsyncpa [#allocation18], 1
    %5125 = vsyncpa [#allocation21], 1
    %5126 = vsyncpa [#allocation4], 1

</llo_original>
